<compile_context>
chip_gen: v5e
topology: v5e:2x2
jax: 0.10.0
libtpu: 0.0.40
codegen_flags: <defaults>
</compile_context>

<pallas_src>
import functools
import math
from typing import NamedTuple, Optional

import jax
import jax.numpy as jnp
from jax.experimental import pallas as pl
from jax.experimental.pallas import tpu as pltpu


class ModulationOut(NamedTuple):
    shift: jax.Array  # [B, 1, dim]
    scale: jax.Array  # [B, 1, dim]
    gate: jax.Array   # [B, 1, dim]


def _pick_tile(n: int, target: int, unit: int) -> int:
    """Largest multiple of `unit` that divides n and is <= target (else n)."""
    if n <= target:
        return n
    t = (target // unit) * unit
    while t >= unit:
        if n % t == 0:
            return t
        t -= unit
    return n


# ---------------------------------------------------------------------------
# Generic fused linear:  y = act_out( act_in(x) @ W^T + b )
# ---------------------------------------------------------------------------
def _make_linear_kernel(act_in, act_out):
    def kernel(x_ref, w_ref, b_ref, o_ref):
        x = x_ref[...]
        if act_in == "silu":
            xf = x.astype(jnp.float32)
            x = xf * jax.nn.sigmoid(xf)
        # Native-dtype MXU operands, f32 accumulator; contract x[K] with w[K]
        # (i.e. "trans_b": weight stays in PyTorch [N, K] layout).
        acc = jax.lax.dot_general(
            x.astype(w_ref.dtype), w_ref[...],
            dimension_numbers=(((1,), (1,)), ((), ())),
            preferred_element_type=jnp.float32)
        acc = acc + b_ref[...].astype(jnp.float32)
        if act_out == "gelu_tanh":
            acc = jax.nn.gelu(acc, approximate=True)
        o_ref[...] = acc.astype(o_ref.dtype)
    return kernel


def linear_pallas(x, weight, bias=None, act_in=None, act_out=None,
                  tile_m=256, tile_n=1024):
    *lead, K = x.shape
    x2 = x.reshape(-1, K)
    M = x2.shape[0]
    N, K_w = weight.shape
    assert K_w == K, (weight.shape, x.shape)
    if bias is None:
        bias = jnp.zeros((N,), dtype=weight.dtype)
    b2 = bias.reshape(1, N)

    TM = _pick_tile(M, tile_m, 8)
    TN = _pick_tile(N, tile_n, 128)
    grid = (M // TM, N // TN)

    cost = pl.CostEstimate(
        flops=2 * M * K * N,
        transcendentals=(M * K if act_in else 0) + (M * N if act_out else 0),
        bytes_accessed=(x2.size * x2.dtype.itemsize
                        + weight.size * weight.dtype.itemsize
                        + b2.size * b2.dtype.itemsize
                        + M * N * x2.dtype.itemsize))

    out = pl.pallas_call(
        _make_linear_kernel(act_in, act_out),
        out_shape=jax.ShapeDtypeStruct((M, N), x.dtype),
        grid_spec=pltpu.PrefetchScalarGridSpec(
            num_scalar_prefetch=0,
            grid=grid,
            in_specs=[
                pl.BlockSpec((TM, K), lambda i, j: (i, 0)),
                pl.BlockSpec((TN, K), lambda i, j: (j, 0)),   # [N, K] weight tile
                pl.BlockSpec((1, TN), lambda i, j: (0, j)),
            ],
            out_specs=pl.BlockSpec((TM, TN), lambda i, j: (i, j)),
        ),
        compiler_params=pltpu.CompilerParams(
            dimension_semantics=("parallel", "parallel"),
            vmem_limit_bytes=48 * 1024 * 1024),
        cost_estimate=cost,
    )(x2, weight, b2)
    return out.reshape(*lead, N)


# ---------------------------------------------------------------------------
# Modulation: Linear(silu(vec)) chunked into (shift, scale, gate) x 2
# ---------------------------------------------------------------------------
def modulation_forward(vec, weight, bias, double: bool):
    B, dim = vec.shape
    mult = 6 if double else 3
    assert weight.shape == (mult * dim, dim)
    out = linear_pallas(vec, weight, bias, act_in="silu")   # [B, mult*dim]
    out = out.reshape(B, mult, dim)                         # single lane-dense reshape
    first = ModulationOut(out[:, 0:1], out[:, 1:2], out[:, 2:3])
    second = (ModulationOut(out[:, 3:4], out[:, 4:5], out[:, 5:6])
              if double else None)
    return first, second


# ---------------------------------------------------------------------------
# Fused LayerNorm (no affine, eps=1e-6) + (1+scale)*x_norm + shift
# ---------------------------------------------------------------------------
def _ln_mod_kernel(x_ref, scale_ref, shift_ref, o_ref):
    x = x_ref[...].astype(jnp.float32)                      # (1, TL, D)
    mu = jnp.mean(x, axis=-1, keepdims=True)
    xc = x - mu
    var = jnp.mean(xc * xc, axis=-1, keepdims=True)
    xn = xc * jax.lax.rsqrt(var + 1e-6)
    y = ((1.0 + scale_ref[...].astype(jnp.float32)) * xn
         + shift_ref[...].astype(jnp.float32))
    o_ref[...] = y.astype(o_ref.dtype)


def ln_modulate(x, scale, shift, tile_l=256):
    B, L, D = x.shape
    TL = _pick_tile(L, tile_l, 8)
    return pl.pallas_call(
        _ln_mod_kernel,
        out_shape=jax.ShapeDtypeStruct(x.shape, x.dtype),
        grid_spec=pltpu.PrefetchScalarGridSpec(
            num_scalar_prefetch=0,
            grid=(B, L // TL),
            in_specs=[
                pl.BlockSpec((1, TL, D), lambda b, l: (b, l, 0)),
                pl.BlockSpec((1, 1, D), lambda b, l: (b, 0, 0)),
                pl.BlockSpec((1, 1, D), lambda b, l: (b, 0, 0)),
            ],
            out_specs=pl.BlockSpec((1, TL, D), lambda b, l: (b, l, 0)),
        ),
        compiler_params=pltpu.CompilerParams(
            dimension_semantics=("parallel", "parallel")),
    )(x, scale, shift)


# ---------------------------------------------------------------------------
# Gated residual: out = x + gate * y     (gate is [B, 1, D])
# ---------------------------------------------------------------------------
def _gated_residual_kernel(x_ref, y_ref, gate_ref, o_ref):
    x = x_ref[...].astype(jnp.float32)
    y = y_ref[...].astype(jnp.float32)
    g = gate_ref[...].astype(jnp.float32)
    o_ref[...] = (x + g * y).astype(o_ref.dtype)


def gated_residual(x, y, gate, tile_l=256):
    B, L, D = x.shape
    TL = _pick_tile(L, tile_l, 8)
    return pl.pallas_call(
        _gated_residual_kernel,
        out_shape=jax.ShapeDtypeStruct(x.shape, x.dtype),
        grid_spec=pltpu.PrefetchScalarGridSpec(
            num_scalar_prefetch=0,
            grid=(B, L // TL),
            in_specs=[
                pl.BlockSpec((1, TL, D), lambda b, l: (b, l, 0)),
                pl.BlockSpec((1, TL, D), lambda b, l: (b, l, 0)),
                pl.BlockSpec((1, 1, D), lambda b, l: (b, 0, 0)),
            ],
            out_specs=pl.BlockSpec((1, TL, D), lambda b, l: (b, l, 0)),
        ),
        compiler_params=pltpu.CompilerParams(
            dimension_semantics=("parallel", "parallel")),
    )(x, y, gate)


# ---------------------------------------------------------------------------
# Per-head RMSNorm (eps=1e-6, learned scale over head_dim)
# ---------------------------------------------------------------------------
def _rmsnorm_kernel(x_ref, scale_ref, o_ref):
    x = x_ref[...].astype(jnp.float32)                      # (1, 1, L, Dh)
    rrms = jax.lax.rsqrt(jnp.mean(x * x, axis=-1, keepdims=True) + 1e-6)
    o_ref[...] = (x * rrms * scale_ref[...].astype(jnp.float32)).astype(o_ref.dtype)


def qk_rmsnorm(x, scale):
    B, H, L, Dh = x.shape
    return pl.pallas_call(
        _rmsnorm_kernel,
        out_shape=jax.ShapeDtypeStruct(x.shape, x.dtype),
        grid_spec=pltpu.PrefetchScalarGridSpec(
            num_scalar_prefetch=0,
            grid=(B, H),
            in_specs=[
                pl.BlockSpec((1, 1, L, Dh), lambda b, h: (b, h, 0, 0)),
                pl.BlockSpec((1, Dh), lambda b, h: (0, 0)),
            ],
            out_specs=pl.BlockSpec((1, 1, L, Dh), lambda b, h: (b, h, 0, 0)),
        ),
        compiler_params=pltpu.CompilerParams(
            dimension_semantics=("parallel", "parallel")),
    )(x, scale.reshape(1, Dh))


# ---------------------------------------------------------------------------
# RoPE + attention per (batch, head).
# q/k arrive in "half-split" feature layout ([evens | odds]); attention
# scores are invariant under that permutation, and v keeps the original
# layout so the output matches the reference exactly.
# ---------------------------------------------------------------------------
def _attn_rope_kernel(q_ref, k_ref, v_ref, cos_ref, sin_ref, o_ref):
    q = q_ref[...][0, 0].astype(jnp.float32)                # [L, D]
    k = k_ref[...][0, 0].astype(jnp.float32)
    v = v_ref[...][0, 0].astype(jnp.float32)
    cos = cos_ref[...][0].astype(jnp.float32)               # [L, D//2]
    sin = sin_ref[...][0].astype(jnp.float32)
    dh2 = cos.shape[-1]

    def rope(x):
        xe, xo = x[:, :dh2], x[:, dh2:]
        return cos * xe - sin * xo, sin * xe + cos * xo

    qe, qo = rope(q)
    ke, ko = rope(k)
    scale = 1.0 / math.sqrt(q.shape[-1])
    dn = (((1,), (1,)), ((), ()))
    s = (jax.lax.dot_general(qe, ke, dn, preferred_element_type=jnp.float32)
         + jax.lax.dot_general(qo, ko, dn, preferred_element_type=jnp.float32)) * scale
    m = jnp.max(s, axis=-1, keepdims=True)
    p = jnp.exp(s - m)
    l = jnp.sum(p, axis=-1, keepdims=True)
    o = jnp.dot(p, v, preferred_element_type=jnp.float32) / l
    o_ref[...] = o.astype(o_ref.dtype)[None, None]


def rope_attention(q, k, v, cos, sin):
    # TODO(synk): flash-tile the KV axis (online softmax) and tile Q for
    # production sequence lengths; the full LxL score block per (batch, head)
    # is only appropriate for short sequences.
    B, H, L, Dh = q.shape
    Dh2 = Dh // 2
    return pl.pallas_call(
        _attn_rope_kernel,
        out_shape=jax.ShapeDtypeStruct((B, H, L, Dh), q.dtype),
        grid_spec=pltpu.PrefetchScalarGridSpec(
            num_scalar_prefetch=0,
            grid=(B, H),
            in_specs=[
                pl.BlockSpec((1, 1, L, Dh), lambda b, h: (b, h, 0, 0)),
                pl.BlockSpec((1, 1, L, Dh), lambda b, h: (b, h, 0, 0)),
                pl.BlockSpec((1, 1, L, Dh), lambda b, h: (b, h, 0, 0)),
                pl.BlockSpec((1, L, Dh2), lambda b, h: (b, 0, 0)),
                pl.BlockSpec((1, L, Dh2), lambda b, h: (b, 0, 0)),
            ],
            out_specs=pl.BlockSpec((1, 1, L, Dh), lambda b, h: (b, h, 0, 0)),
        ),
        compiler_params=pltpu.CompilerParams(
            dimension_semantics=("parallel", "parallel")),
    )(q, k, v, cos, sin)


# ---------------------------------------------------------------------------
# Layout glue (plain JAX)
# ---------------------------------------------------------------------------
def _half_split(x):
    # interleaved (even, odd) feature pairs -> [evens | odds]
    return jnp.concatenate([x[..., 0::2], x[..., 1::2]], axis=-1)


def _split_qkv(qkv, num_heads, head_dim):
    B, L, _ = qkv.shape
    qkv = qkv.reshape(B, L, 3, num_heads, head_dim).transpose(2, 0, 3, 1, 4)
    return qkv[0], qkv[1], qkv[2]


# ---------------------------------------------------------------------------
# Full DoubleStreamBlock forward
# ---------------------------------------------------------------------------
def double_stream_block_forward(params, img, txt, vec, pe, *, num_heads):
    B, L_txt, D = txt.shape
    L_img = img.shape[1]
    head_dim = D // num_heads

    img_mod1, img_mod2 = modulation_forward(
        vec, params["img_mod_w"], params["img_mod_b"], True)
    txt_mod1, txt_mod2 = modulation_forward(
        vec, params["txt_mod_w"], params["txt_mod_b"], True)

    # --- attention inputs ---------------------------------------------------
    img_mod_in = ln_modulate(img, img_mod1.scale, img_mod1.shift)
    img_qkv = linear_pallas(img_mod_in, params["img_qkv_w"], params.get("img_qkv_b"))
    img_q, img_k, img_v = _split_qkv(img_qkv, num_heads, head_dim)

    txt_mod_in = ln_modulate(txt, txt_mod1.scale, txt_mod1.shift)
    txt_qkv = linear_pallas(txt_mod_in, params["txt_qkv_w"], params.get("txt_qkv_b"))
    txt_q, txt_k, txt_v = _split_qkv(txt_qkv, num_heads, head_dim)

    # RoPE-friendly half-split feature permutation of q/k (+ matching RMS scales).
    img_q, img_k = _half_split(img_q), _half_split(img_k)
    txt_q, txt_k = _half_split(txt_q), _half_split(txt_k)

    img_q = qk_rmsnorm(img_q, _half_split(params["img_q_scale"]))
    img_k = qk_rmsnorm(img_k, _half_split(params["img_k_scale"]))
    txt_q = qk_rmsnorm(txt_q, _half_split(params["txt_q_scale"]))
    txt_k = qk_rmsnorm(txt_k, _half_split(params["txt_k_scale"]))

    q = jnp.concatenate([txt_q, img_q], axis=2)
    k = jnp.concatenate([txt_k, img_k], axis=2)
    v = jnp.concatenate([txt_v, img_v], axis=2)

    # pe: [B, 1, L, head_dim//2, 2, 2]  ->  cos/sin [B, L, head_dim//2]
    cos = pe[:, 0, :, :, 0, 0].astype(jnp.float32)
    sin = pe[:, 0, :, :, 1, 0].astype(jnp.float32)

    attn = rope_attention(q, k, v, cos, sin)                 # [B, H, L, head_dim]
    attn = attn.transpose(0, 2, 1, 3).reshape(B, L_txt + L_img, D)
    txt_attn, img_attn = attn[:, :L_txt], attn[:, L_txt:]

    # --- img stream ---------------------------------------------------------
    img = gated_residual(
        img, linear_pallas(img_attn, params["img_proj_w"], params["img_proj_b"]),
        img_mod1.gate)
    img_mlp_in = ln_modulate(img, img_mod2.scale, img_mod2.shift)
    h = linear_pallas(img_mlp_in, params["img_mlp_w1"], params["img_mlp_b1"],
                      act_out="gelu_tanh")
    img = gated_residual(
        img, linear_pallas(h, params["img_mlp_w2"], params["img_mlp_b2"]),
        img_mod2.gate)

    # --- txt stream ---------------------------------------------------------
    txt = gated_residual(
        txt, linear_pallas(txt_attn, params["txt_proj_w"], params["txt_proj_b"]),
        txt_mod1.gate)
    txt_mlp_in = ln_modulate(txt, txt_mod2.scale, txt_mod2.shift)
    h = linear_pallas(txt_mlp_in, params["txt_mlp_w1"], params["txt_mlp_b1"],
                      act_out="gelu_tanh")
    txt = gated_residual(
        txt, linear_pallas(h, params["txt_mlp_w2"], params["txt_mlp_b2"]),
        txt_mod2.gate)

    return img, txt


# ---------------------------------------------------------------------------
# Pure-JAX reference (faithful port of the PyTorch processor)
# ---------------------------------------------------------------------------
def reference_forward(params, img, txt, vec, pe, num_heads):
    B, L_txt, D = txt.shape
    L_img = img.shape[1]
    Dh = D // num_heads

    def mod(w, b):
        out = (vec * jax.nn.sigmoid(vec)) @ w.T + b
        out = out[:, None, :]
        return [out[..., i * D:(i + 1) * D] for i in range(6)]

    def ln(x):
        mu = jnp.mean(x, axis=-1, keepdims=True)
        var = jnp.mean((x - mu) ** 2, axis=-1, keepdims=True)
        return (x - mu) * jax.lax.rsqrt(var + 1e-6)

    def rms(x, scale):
        rr = jax.lax.rsqrt(jnp.mean(x * x, axis=-1, keepdims=True) + 1e-6)
        return x * rr * scale

    def split_qkv(y):
        Bq, Lq, _ = y.shape
        y = y.reshape(Bq, Lq, 3, num_heads, Dh).transpose(2, 0, 3, 1, 4)
        return y[0], y[1], y[2]

    def apply_rope(x):
        x_ = x.reshape(*x.shape[:-1], -1, 1, 2)
        out = pe[..., 0] * x_[..., 0] + pe[..., 1] * x_[..., 1]
        return out.reshape(x.shape)

    im = mod(params["img_mod_w"], params["img_mod_b"])
    tm = mod(params["txt_mod_w"], params["txt_mod_b"])

    img_m = (1 + im[1]) * ln(img) + im[0]
    iq, ik, iv = split_qkv(img_m @ params["img_qkv_w"].T)
    iq, ik = rms(iq, params["img_q_scale"]), rms(ik, params["img_k_scale"])

    txt_m = (1 + tm[1]) * ln(txt) + tm[0]
    tq, tk, tv = split_qkv(txt_m @ params["txt_qkv_w"].T)
    tq, tk = rms(tq, params["txt_q_scale"]), rms(tk, params["txt_k_scale"])

    q = jnp.concatenate([tq, iq], axis=2)
    k = jnp.concatenate([tk, ik], axis=2)
    v = jnp.concatenate([tv, iv], axis=2)
    q, k = apply_rope(q), apply_rope(k)
    s = jnp.einsum("bhqd,bhkd->bhqk", q, k) / math.sqrt(Dh)
    p = jax.nn.softmax(s, axis=-1)
    a = jnp.einsum("bhqk,bhkd->bhqd", p, v)
    a = a.transpose(0, 2, 1, 3).reshape(B, L_txt + L_img, D)
    txt_a, img_a = a[:, :L_txt], a[:, L_txt:]

    img_out = img + im[2] * (img_a @ params["img_proj_w"].T + params["img_proj_b"])
    x = (1 + im[4]) * ln(img_out) + im[3]
    h = jax.nn.gelu(x @ params["img_mlp_w1"].T + params["img_mlp_b1"], approximate=True)
    img_out = img_out + im[5] * (h @ params["img_mlp_w2"].T + params["img_mlp_b2"])

    txt_out = txt + tm[2] * (txt_a @ params["txt_proj_w"].T + params["txt_proj_b"])
    x = (1 + tm[4]) * ln(txt_out) + tm[3]
    h = jax.nn.gelu(x @ params["txt_mlp_w1"].T + params["txt_mlp_b1"], approximate=True)
    txt_out = txt_out + tm[5] * (h @ params["txt_mlp_w2"].T + params["txt_mlp_b2"])

    return img_out, txt_out


# ---------------------------------------------------------------------------
if __name__ == "__main__":
    key = jax.random.PRNGKey(0)
    B, L_txt, L_img = 2, 8, 16
    hidden, num_heads, mlp_ratio = 128, 4, 4.0
    head_dim = hidden // num_heads
    mlp_hidden = int(hidden * mlp_ratio)

    keys = iter(jax.random.split(key, 32))

    def linear_init(k, out_f, in_f, bias=True):
        bound = 1.0 / math.sqrt(in_f)
        kw, kb = jax.random.split(k)
        w = jax.random.uniform(kw, (out_f, in_f), minval=-bound, maxval=bound,
                               dtype=jnp.float32)
        if not bias:
            return w, None
        b = jax.random.uniform(kb, (out_f,), minval=-bound, maxval=bound,
                               dtype=jnp.float32)
        return w, b

    params = {}
    params["img_mod_w"], params["img_mod_b"] = linear_init(next(keys), 6 * hidden, hidden)
    params["txt_mod_w"], params["txt_mod_b"] = linear_init(next(keys), 6 * hidden, hidden)
    params["img_qkv_w"], _ = linear_init(next(keys), 3 * hidden, hidden, bias=False)
    params["txt_qkv_w"], _ = linear_init(next(keys), 3 * hidden, hidden, bias=False)
    for name in ("img_q_scale", "img_k_scale", "txt_q_scale", "txt_k_scale"):
        params[name] = jax.random.uniform(next(keys), (head_dim,),
                                          minval=0.5, maxval=1.5, dtype=jnp.float32)
    params["img_proj_w"], params["img_proj_b"] = linear_init(next(keys), hidden, hidden)
    params["txt_proj_w"], params["txt_proj_b"] = linear_init(next(keys), hidden, hidden)
    params["img_mlp_w1"], params["img_mlp_b1"] = linear_init(next(keys), mlp_hidden, hidden)
    params["img_mlp_w2"], params["img_mlp_b2"] = linear_init(next(keys), hidden, mlp_hidden)
    params["txt_mlp_w1"], params["txt_mlp_b1"] = linear_init(next(keys), mlp_hidden, hidden)
    params["txt_mlp_w2"], params["txt_mlp_b2"] = linear_init(next(keys), hidden, mlp_hidden)

    img = jax.random.normal(next(keys), (B, L_img, hidden), dtype=jnp.float32)
    txt = jax.random.normal(next(keys), (B, L_txt, hidden), dtype=jnp.float32)
    vec = jax.random.normal(next(keys), (B, hidden), dtype=jnp.float32)

    # Rotary positional embedding for the concatenated [txt, img] sequence.
    L = L_txt + L_img
    theta = 10000.0
    pos = (jnp.arange(L, dtype=jnp.float32)[None, :]
           + 3.0 * jnp.arange(B, dtype=jnp.float32)[:, None])        # [B, L]
    omega = 1.0 / (theta ** (jnp.arange(0, head_dim, 2, dtype=jnp.float32) / head_dim))
    ang = pos[..., None] * omega[None, None, :]                       # [B, L, Dh/2]
    pe = jnp.stack([jnp.cos(ang), -jnp.sin(ang), jnp.sin(ang), jnp.cos(ang)], axis=-1)
    pe = pe.reshape(B, L, head_dim // 2, 2, 2)[:, None]               # [B,1,L,Dh/2,2,2]

    fwd = jax.jit(functools.partial(double_stream_block_forward, num_heads=num_heads))
    img_out, txt_out = fwd(params, img, txt, vec, pe)
    img_out = jax.block_until_ready(img_out)
    txt_out = jax.block_until_ready(txt_out)

    img_ref, txt_ref = reference_forward(params, img, txt, vec, pe, num_heads)
    assert img_out.shape == (B, L_img, hidden)
    assert txt_out.shape == (B, L_txt, hidden)
    err_img = float(jnp.max(jnp.abs(img_out - img_ref)))
    err_txt = float(jnp.max(jnp.abs(txt_out - txt_ref)))
    assert jnp.allclose(img_out, img_ref, atol=2e-2, rtol=2e-2), err_img
    assert jnp.allclose(txt_out, txt_ref, atol=2e-2, rtol=2e-2), err_txt

    print("KERNEL_OK")
</pallas_src>

<mosaic_0001>
module attributes {stable_mosaic.version = 11 : i64} {
  func.func @kernel(%arg0: i32, %arg1: i32, %arg2: memref<2x128xf32, #tpu.memory_space<vmem>>, %arg3: memref<768x128xf32, #tpu.memory_space<vmem>>, %arg4: memref<1x768xf32, #tpu.memory_space<vmem>>, %arg5: memref<2x768xf32, #tpu.memory_space<vmem>>) attributes {dimension_semantics = [#tpu.dimension_semantics<parallel>, #tpu.dimension_semantics<parallel>], iteration_bounds = array<i64: 1, 1>, scalar_prefetch = 0 : i64, scratch_operands = 0 : i64, tpu.core_type = #tpu.core_type<tc>, window_params = [{transform_indices = @transform_0, window_bounds = array<i64: 2, 128>}, {transform_indices = @transform_1, window_bounds = array<i64: 768, 128>}, {transform_indices = @transform_2, window_bounds = array<i64: 1, 768>}, {transform_indices = @transform_3, window_bounds = array<i64: 2, 768>}]} {
    %c0 = arith.constant 0 : index
    %c0_0 = arith.constant 0 : index
    %0 = vector.load %arg2[%c0, %c0_0] : memref<2x128xf32, #tpu.memory_space<vmem>>, vector<2x128xf32>
    %1 = arith.negf %0 : vector<2x128xf32>
    %2 = math.exp %1 : vector<2x128xf32>
    %cst = arith.constant 1.000000e+00 : f32
    %3 = vector.broadcast %cst : f32 to vector<2x128xf32>
    %4 = arith.addf %3, %2 : vector<2x128xf32>
    %5 = arith.divf %3, %4 : vector<2x128xf32>
    %6 = arith.mulf %0, %5 : vector<2x128xf32>
    %c0_1 = arith.constant 0 : index
    %c0_2 = arith.constant 0 : index
    %7 = vector.load %arg3[%c0_1, %c0_2] : memref<768x128xf32, #tpu.memory_space<vmem>>, vector<768x128xf32>
    %cst_3 = arith.constant dense<0.000000e+00> : vector<2x768xf32>
    %8 = tpu.matmul %6, %7, %cst_3 {dimension_numbers = #tpu.dot_dimension_numbers<[1], [1], [0], [0], [0, 0, 1, 0], [], []>} : vector<2x128xf32>, vector<768x128xf32>, vector<2x768xf32> -> vector<2x768xf32>
    %c0_4 = arith.constant 0 : index
    %c0_5 = arith.constant 0 : index
    %9 = vector.load %arg4[%c0_4, %c0_5] : memref<1x768xf32, #tpu.memory_space<vmem>>, vector<1x768xf32>
    %10 = vector.broadcast %9 : vector<1x768xf32> to vector<2x768xf32>
    %11 = arith.addf %8, %10 : vector<2x768xf32>
    %c0_6 = arith.constant 0 : index
    %c0_7 = arith.constant 0 : index
    %12 = vector.load %arg5[%c0_6, %c0_7] : memref<2x768xf32, #tpu.memory_space<vmem>>, vector<2x768xf32>
    tpu.vector_store %arg5[%c0_6, %c0_7], %11 {strides = array<i32>} : memref<2x768xf32, #tpu.memory_space<vmem>>, vector<2x768xf32>,
    return
  }
  func.func @transform_0(%arg0: i32, %arg1: i32) -> (i32, i32) {
    %c0_i32 = arith.constant 0 : i32
    %c0_i32_0 = arith.constant 0 : i32
    return %arg0, %c0_i32 : i32, i32
  }
  func.func @transform_1(%arg0: i32, %arg1: i32) -> (i32, i32) {
    %c0_i32 = arith.constant 0 : i32
    %c0_i32_0 = arith.constant 0 : i32
    return %arg1, %c0_i32 : i32, i32
  }
  func.func @transform_2(%arg0: i32, %arg1: i32) -> (i32, i32) {
    %c0_i32 = arith.constant 0 : i32
    %c0_i32_0 = arith.constant 0 : i32
    return %c0_i32, %arg1 : i32, i32
  }
  func.func @transform_3(%arg0: i32, %arg1: i32) -> (i32, i32) {
    %c0_i32 = arith.constant 0 : i32
    return %arg0, %arg1 : i32, i32
  }
}

module attributes {stable_mosaic.version = 11 : i64} {
  func.func @_ln_mod_kernel(%arg0: i32, %arg1: i32, %arg2: memref<1x16x128xf32, #tpu.memory_space<vmem>>, %arg3: memref<1x1x128xf32, #tpu.memory_space<vmem>>, %arg4: memref<1x1x128xf32, #tpu.memory_space<vmem>>, %arg5: memref<1x16x128xf32, #tpu.memory_space<vmem>>) attributes {dimension_semantics = [#tpu.dimension_semantics<parallel>, #tpu.dimension_semantics<parallel>], iteration_bounds = array<i64: 2, 1>, scalar_prefetch = 0 : i64, scratch_operands = 0 : i64, tpu.core_type = #tpu.core_type<tc>, window_params = [{transform_indices = @transform_0, window_bounds = array<i64: 1, 16, 128>}, {transform_indices = @transform_1, window_bounds = array<i64: 1, 1, 128>}, {transform_indices = @transform_2, window_bounds = array<i64: 1, 1, 128>}, {transform_indices = @transform_3, window_bounds = array<i64: 1, 16, 128>}]} {
    %c0 = arith.constant 0 : index
    %c0_0 = arith.constant 0 : index
    %c0_1 = arith.constant 0 : index
    %0 = vector.load %arg2[%c0, %c0_0, %c0_1] : memref<1x16x128xf32, #tpu.memory_space<vmem>>, vector<1x16x128xf32>
    %cst = arith.constant dense<0.000000e+00> : vector<1x16xf32>
    %1 = vector.multi_reduction <add>, %0, %cst [2] : vector<1x16x128xf32> to vector<1x16xf32>
    %2 = vector.shape_cast %1 : vector<1x16xf32> to vector<1x16x1xf32>
    %cst_2 = arith.constant 1.280000e+02 : f32
    %3 = vector.broadcast %cst_2 : f32 to vector<1x16x1xf32>
    %4 = arith.divf %2, %3 : vector<1x16x1xf32>
    %5 = vector.broadcast %4 : vector<1x16x1xf32> to vector<1x16x128xf32>
    %6 = arith.subf %0, %5 : vector<1x16x128xf32>
    %7 = arith.mulf %6, %6 : vector<1x16x128xf32>
    %cst_3 = arith.constant dense<0.000000e+00> : vector<1x16xf32>
    %8 = vector.multi_reduction <add>, %7, %cst_3 [2] : vector<1x16x128xf32> to vector<1x16xf32>
    %9 = vector.shape_cast %8 : vector<1x16xf32> to vector<1x16x1xf32>
    %cst_4 = arith.constant 1.280000e+02 : f32
    %10 = vector.broadcast %cst_4 : f32 to vector<1x16x1xf32>
    %11 = arith.divf %9, %10 : vector<1x16x1xf32>
    %cst_5 = arith.constant 9.99999997E-7 : f32
    %12 = vector.broadcast %cst_5 : f32 to vector<1x16x1xf32>
    %13 = arith.addf %11, %12 : vector<1x16x1xf32>
    %14 = math.rsqrt %13 : vector<1x16x1xf32>
    %15 = vector.broadcast %14 : vector<1x16x1xf32> to vector<1x16x128xf32>
    %16 = arith.mulf %6, %15 : vector<1x16x128xf32>
    %c0_6 = arith.constant 0 : index
    %c0_7 = arith.constant 0 : index
    %c0_8 = arith.constant 0 : index
    %17 = vector.load %arg3[%c0_6, %c0_7, %c0_8] : memref<1x1x128xf32, #tpu.memory_space<vmem>>, vector<1x1x128xf32>
    %cst_9 = arith.constant 1.000000e+00 : f32
    %18 = vector.broadcast %cst_9 : f32 to vector<1x1x128xf32>
    %19 = arith.addf %18, %17 : vector<1x1x128xf32>
    %20 = vector.broadcast %19 : vector<1x1x128xf32> to vector<1x16x128xf32>
    %21 = arith.mulf %20, %16 : vector<1x16x128xf32>
    %c0_10 = arith.constant 0 : index
    %c0_11 = arith.constant 0 : index
    %c0_12 = arith.constant 0 : index
    %22 = vector.load %arg4[%c0_10, %c0_11, %c0_12] : memref<1x1x128xf32, #tpu.memory_space<vmem>>, vector<1x1x128xf32>
    %23 = vector.broadcast %22 : vector<1x1x128xf32> to vector<1x16x128xf32>
    %24 = arith.addf %21, %23 : vector<1x16x128xf32>
    %c0_13 = arith.constant 0 : index
    %c0_14 = arith.constant 0 : index
    %c0_15 = arith.constant 0 : index
    %25 = vector.load %arg5[%c0_13, %c0_14, %c0_15] : memref<1x16x128xf32, #tpu.memory_space<vmem>>, vector<1x16x128xf32>
    tpu.vector_store %arg5[%c0_13, %c0_14, %c0_15], %24 {strides = array<i32>} : memref<1x16x128xf32, #tpu.memory_space<vmem>>, vector<1x16x128xf32>,
    return
  }
  func.func @transform_0(%arg0: i32, %arg1: i32) -> (i32, i32, i32) {
    %c0_i32 = arith.constant 0 : i32
    %c0_i32_0 = arith.constant 0 : i32
    return %arg0, %arg1, %c0_i32 : i32, i32, i32
  }
  func.func @transform_1(%arg0: i32, %arg1: i32) -> (i32, i32, i32) {
    %c0_i32 = arith.constant 0 : i32
    %c0_i32_0 = arith.constant 0 : i32
    %c0_i32_1 = arith.constant 0 : i32
    return %arg0, %c0_i32, %c0_i32_0 : i32, i32, i32
  }
  func.func @transform_2(%arg0: i32, %arg1: i32) -> (i32, i32, i32) {
    %c0_i32 = arith.constant 0 : i32
    %c0_i32_0 = arith.constant 0 : i32
    %c0_i32_1 = arith.constant 0 : i32
    return %arg0, %c0_i32, %c0_i32_0 : i32, i32, i32
  }
  func.func @transform_3(%arg0: i32, %arg1: i32) -> (i32, i32, i32) {
    %c0_i32 = arith.constant 0 : i32
    %c0_i32_0 = arith.constant 0 : i32
    return %arg0, %arg1, %c0_i32 : i32, i32, i32
  }
}

module attributes {stable_mosaic.version = 11 : i64} {
  func.func @kernel(%arg0: i32, %arg1: i32, %arg2: memref<32x128xf32, #tpu.memory_space<vmem>>, %arg3: memref<384x128xf32, #tpu.memory_space<vmem>>, %arg4: memref<1x384xf32, #tpu.memory_space<vmem>>, %arg5: memref<32x384xf32, #tpu.memory_space<vmem>>) attributes {dimension_semantics = [#tpu.dimension_semantics<parallel>, #tpu.dimension_semantics<parallel>], iteration_bounds = array<i64: 1, 1>, scalar_prefetch = 0 : i64, scratch_operands = 0 : i64, tpu.core_type = #tpu.core_type<tc>, window_params = [{transform_indices = @transform_0, window_bounds = array<i64: 32, 128>}, {transform_indices = @transform_1, window_bounds = array<i64: 384, 128>}, {transform_indices = @transform_2, window_bounds = array<i64: 1, 384>}, {transform_indices = @transform_3, window_bounds = array<i64: 32, 384>}]} {
    %c0 = arith.constant 0 : index
    %c0_0 = arith.constant 0 : index
    %0 = vector.load %arg2[%c0, %c0_0] : memref<32x128xf32, #tpu.memory_space<vmem>>, vector<32x128xf32>
    %c0_1 = arith.constant 0 : index
    %c0_2 = arith.constant 0 : index
    %1 = vector.load %arg3[%c0_1, %c0_2] : memref<384x128xf32, #tpu.memory_space<vmem>>, vector<384x128xf32>
    %cst = arith.constant dense<0.000000e+00> : vector<32x384xf32>
    %2 = tpu.matmul %0, %1, %cst {dimension_numbers = #tpu.dot_dimension_numbers<[1], [1], [0], [0], [0, 0, 1, 0], [], []>} : vector<32x128xf32>, vector<384x128xf32>, vector<32x384xf32> -> vector<32x384xf32>
    %c0_3 = arith.constant 0 : index
    %c0_4 = arith.constant 0 : index
    %3 = vector.load %arg4[%c0_3, %c0_4] : memref<1x384xf32, #tpu.memory_space<vmem>>, vector<1x384xf32>
    %4 = vector.broadcast %3 : vector<1x384xf32> to vector<32x384xf32>
    %5 = arith.addf %2, %4 : vector<32x384xf32>
    %c0_5 = arith.constant 0 : index
    %c0_6 = arith.constant 0 : index
    %6 = vector.load %arg5[%c0_5, %c0_6] : memref<32x384xf32, #tpu.memory_space<vmem>>, vector<32x384xf32>
    tpu.vector_store %arg5[%c0_5, %c0_6], %5 {strides = array<i32>} : memref<32x384xf32, #tpu.memory_space<vmem>>, vector<32x384xf32>,
    return
  }
  func.func @transform_0(%arg0: i32, %arg1: i32) -> (i32, i32) {
    %c0_i32 = arith.constant 0 : i32
    %c0_i32_0 = arith.constant 0 : i32
    return %arg0, %c0_i32 : i32, i32
  }
  func.func @transform_1(%arg0: i32, %arg1: i32) -> (i32, i32) {
    %c0_i32 = arith.constant 0 : i32
    %c0_i32_0 = arith.constant 0 : i32
    return %arg1, %c0_i32 : i32, i32
  }
  func.func @transform_2(%arg0: i32, %arg1: i32) -> (i32, i32) {
    %c0_i32 = arith.constant 0 : i32
    %c0_i32_0 = arith.constant 0 : i32
    return %c0_i32, %arg1 : i32, i32
  }
  func.func @transform_3(%arg0: i32, %arg1: i32) -> (i32, i32) {
    %c0_i32 = arith.constant 0 : i32
    return %arg0, %arg1 : i32, i32
  }
}

module attributes {stable_mosaic.version = 11 : i64} {
  func.func @_rmsnorm_kernel(%arg0: i32, %arg1: i32, %arg2: memref<1x1x16x32xf32, #tpu.memory_space<vmem>>, %arg3: memref<1x32xf32, #tpu.memory_space<vmem>>, %arg4: memref<1x1x16x32xf32, #tpu.memory_space<vmem>>) attributes {dimension_semantics = [#tpu.dimension_semantics<parallel>, #tpu.dimension_semantics<parallel>], iteration_bounds = array<i64: 2, 4>, scalar_prefetch = 0 : i64, scratch_operands = 0 : i64, tpu.core_type = #tpu.core_type<tc>, window_params = [{transform_indices = @transform_0, window_bounds = array<i64: 1, 1, 16, 32>}, {pipeline_mode = #tpu.pipeline_mode<synchronous>, transform_indices = @transform_1, window_bounds = array<i64: 1, 32>}, {transform_indices = @transform_2, window_bounds = array<i64: 1, 1, 16, 32>}]} {
    %c0 = arith.constant 0 : index
    %c0_0 = arith.constant 0 : index
    %c0_1 = arith.constant 0 : index
    %c0_2 = arith.constant 0 : index
    %0 = vector.load %arg2[%c0, %c0_0, %c0_1, %c0_2] : memref<1x1x16x32xf32, #tpu.memory_space<vmem>>, vector<1x1x16x32xf32>
    %1 = arith.mulf %0, %0 : vector<1x1x16x32xf32>
    %cst = arith.constant dense<0.000000e+00> : vector<1x1x16xf32>
    %2 = vector.multi_reduction <add>, %1, %cst [3] : vector<1x1x16x32xf32> to vector<1x1x16xf32>
    %3 = vector.shape_cast %2 : vector<1x1x16xf32> to vector<1x1x16x1xf32>
    %cst_3 = arith.constant 3.200000e+01 : f32
    %4 = vector.broadcast %cst_3 : f32 to vector<1x1x16x1xf32>
    %5 = arith.divf %3, %4 : vector<1x1x16x1xf32>
    %cst_4 = arith.constant 9.99999997E-7 : f32
    %6 = vector.broadcast %cst_4 : f32 to vector<1x1x16x1xf32>
    %7 = arith.addf %5, %6 : vector<1x1x16x1xf32>
    %8 = math.rsqrt %7 : vector<1x1x16x1xf32>
    %9 = vector.broadcast %8 : vector<1x1x16x1xf32> to vector<1x1x16x32xf32>
    %10 = arith.mulf %0, %9 : vector<1x1x16x32xf32>
    %c0_5 = arith.constant 0 : index
    %c0_6 = arith.constant 0 : index
    %11 = vector.load %arg3[%c0_5, %c0_6] : memref<1x32xf32, #tpu.memory_space<vmem>>, vector<1x32xf32>
    %12 = vector.shape_cast %11 : vector<1x32xf32> to vector<1x1x1x32xf32>
    %13 = vector.broadcast %12 : vector<1x1x1x32xf32> to vector<1x1x16x32xf32>
    %14 = arith.mulf %10, %13 : vector<1x1x16x32xf32>
    %c0_7 = arith.constant 0 : index
    %c0_8 = arith.constant 0 : index
    %c0_9 = arith.constant 0 : index
    %c0_10 = arith.constant 0 : index
    %15 = vector.load %arg4[%c0_7, %c0_8, %c0_9, %c0_10] : memref<1x1x16x32xf32, #tpu.memory_space<vmem>>, vector<1x1x16x32xf32>
    tpu.vector_store %arg4[%c0_7, %c0_8, %c0_9, %c0_10], %14 {strides = array<i32>} : memref<1x1x16x32xf32, #tpu.memory_space<vmem>>, vector<1x1x16x32xf32>,
    return
  }
  func.func @transform_0(%arg0: i32, %arg1: i32) -> (i32, i32, i32, i32) {
    %c0_i32 = arith.constant 0 : i32
    %c0_i32_0 = arith.constant 0 : i32
    %c0_i32_1 = arith.constant 0 : i32
    return %arg0, %arg1, %c0_i32, %c0_i32_0 : i32, i32, i32, i32
  }
  func.func @transform_1(%arg0: i32, %arg1: i32) -> (i32, i32) {
    %c0_i32 = arith.constant 0 : i32
    %c0_i32_0 = arith.constant 0 : i32
    %c0_i32_1 = arith.constant 0 : i32
    return %c0_i32, %c0_i32_0 : i32, i32
  }
  func.func @transform_2(%arg0: i32, %arg1: i32) -> (i32, i32, i32, i32) {
    %c0_i32 = arith.constant 0 : i32
    %c0_i32_0 = arith.constant 0 : i32
    %c0_i32_1 = arith.constant 0 : i32
    return %arg0, %arg1, %c0_i32, %c0_i32_0 : i32, i32, i32, i32
  }
}

module attributes {stable_mosaic.version = 11 : i64} {
  func.func @kernel(%arg0: i32, %arg1: i32, %arg2: memref<16x128xf32, #tpu.memory_space<vmem>>, %arg3: memref<384x128xf32, #tpu.memory_space<vmem>>, %arg4: memref<1x384xf32, #tpu.memory_space<vmem>>, %arg5: memref<16x384xf32, #tpu.memory_space<vmem>>) attributes {dimension_semantics = [#tpu.dimension_semantics<parallel>, #tpu.dimension_semantics<parallel>], iteration_bounds = array<i64: 1, 1>, scalar_prefetch = 0 : i64, scratch_operands = 0 : i64, tpu.core_type = #tpu.core_type<tc>, window_params = [{transform_indices = @transform_0, window_bounds = array<i64: 16, 128>}, {transform_indices = @transform_1, window_bounds = array<i64: 384, 128>}, {transform_indices = @transform_2, window_bounds = array<i64: 1, 384>}, {transform_indices = @transform_3, window_bounds = array<i64: 16, 384>}]} {
    %c0 = arith.constant 0 : index
    %c0_0 = arith.constant 0 : index
    %0 = vector.load %arg2[%c0, %c0_0] : memref<16x128xf32, #tpu.memory_space<vmem>>, vector<16x128xf32>
    %c0_1 = arith.constant 0 : index
    %c0_2 = arith.constant 0 : index
    %1 = vector.load %arg3[%c0_1, %c0_2] : memref<384x128xf32, #tpu.memory_space<vmem>>, vector<384x128xf32>
    %cst = arith.constant dense<0.000000e+00> : vector<16x384xf32>
    %2 = tpu.matmul %0, %1, %cst {dimension_numbers = #tpu.dot_dimension_numbers<[1], [1], [0], [0], [0, 0, 1, 0], [], []>} : vector<16x128xf32>, vector<384x128xf32>, vector<16x384xf32> -> vector<16x384xf32>
    %c0_3 = arith.constant 0 : index
    %c0_4 = arith.constant 0 : index
    %3 = vector.load %arg4[%c0_3, %c0_4] : memref<1x384xf32, #tpu.memory_space<vmem>>, vector<1x384xf32>
    %4 = vector.broadcast %3 : vector<1x384xf32> to vector<16x384xf32>
    %5 = arith.addf %2, %4 : vector<16x384xf32>
    %c0_5 = arith.constant 0 : index
    %c0_6 = arith.constant 0 : index
    %6 = vector.load %arg5[%c0_5, %c0_6] : memref<16x384xf32, #tpu.memory_space<vmem>>, vector<16x384xf32>
    tpu.vector_store %arg5[%c0_5, %c0_6], %5 {strides = array<i32>} : memref<16x384xf32, #tpu.memory_space<vmem>>, vector<16x384xf32>,
    return
  }
  func.func @transform_0(%arg0: i32, %arg1: i32) -> (i32, i32) {
    %c0_i32 = arith.constant 0 : i32
    %c0_i32_0 = arith.constant 0 : i32
    return %arg0, %c0_i32 : i32, i32
  }
  func.func @transform_1(%arg0: i32, %arg1: i32) -> (i32, i32) {
    %c0_i32 = arith.constant 0 : i32
    %c0_i32_0 = arith.constant 0 : i32
    return %arg1, %c0_i32 : i32, i32
  }
  func.func @transform_2(%arg0: i32, %arg1: i32) -> (i32, i32) {
    %c0_i32 = arith.constant 0 : i32
    %c0_i32_0 = arith.constant 0 : i32
    return %c0_i32, %arg1 : i32, i32
  }
  func.func @transform_3(%arg0: i32, %arg1: i32) -> (i32, i32) {
    %c0_i32 = arith.constant 0 : i32
    return %arg0, %arg1 : i32, i32
  }
}

module attributes {stable_mosaic.version = 11 : i64} {
  func.func @kernel(%arg0: i32, %arg1: i32, %arg2: memref<2x128xf32, #tpu.memory_space<vmem>>, %arg3: memref<768x128xf32, #tpu.memory_space<vmem>>, %arg4: memref<1x768xf32, #tpu.memory_space<vmem>>, %arg5: memref<2x768xf32, #tpu.memory_space<vmem>>) attributes {dimension_semantics = [#tpu.dimension_semantics<parallel>, #tpu.dimension_semantics<parallel>], iteration_bounds = array<i64: 1, 1>, scalar_prefetch = 0 : i64, scratch_operands = 0 : i64, tpu.core_type = #tpu.core_type<tc>, window_params = [{transform_indices = @transform_0, window_bounds = array<i64: 2, 128>}, {transform_indices = @transform_1, window_bounds = array<i64: 768, 128>}, {transform_indices = @transform_2, window_bounds = array<i64: 1, 768>}, {transform_indices = @transform_3, window_bounds = array<i64: 2, 768>}]} {
    %c0 = arith.constant 0 : index
    %c0_0 = arith.constant 0 : index
    %0 = vector.load %arg2[%c0, %c0_0] : memref<2x128xf32, #tpu.memory_space<vmem>>, vector<2x128xf32>
    %1 = arith.negf %0 : vector<2x128xf32>
    %2 = math.exp %1 : vector<2x128xf32>
    %cst = arith.constant 1.000000e+00 : f32
    %3 = vector.broadcast %cst : f32 to vector<2x128xf32>
    %4 = arith.addf %3, %2 : vector<2x128xf32>
    %5 = arith.divf %3, %4 : vector<2x128xf32>
    %6 = arith.mulf %0, %5 : vector<2x128xf32>
    %c0_1 = arith.constant 0 : index
    %c0_2 = arith.constant 0 : index
    %7 = vector.load %arg3[%c0_1, %c0_2] : memref<768x128xf32, #tpu.memory_space<vmem>>, vector<768x128xf32>
    %cst_3 = arith.constant dense<0.000000e+00> : vector<2x768xf32>
    %8 = tpu.matmul %6, %7, %cst_3 {dimension_numbers = #tpu.dot_dimension_numbers<[1], [1], [0], [0], [0, 0, 1, 0], [], []>} : vector<2x128xf32>, vector<768x128xf32>, vector<2x768xf32> -> vector<2x768xf32>
    %c0_4 = arith.constant 0 : index
    %c0_5 = arith.constant 0 : index
    %9 = vector.load %arg4[%c0_4, %c0_5] : memref<1x768xf32, #tpu.memory_space<vmem>>, vector<1x768xf32>
    %10 = vector.broadcast %9 : vector<1x768xf32> to vector<2x768xf32>
    %11 = arith.addf %8, %10 : vector<2x768xf32>
    %c0_6 = arith.constant 0 : index
    %c0_7 = arith.constant 0 : index
    %12 = vector.load %arg5[%c0_6, %c0_7] : memref<2x768xf32, #tpu.memory_space<vmem>>, vector<2x768xf32>
    tpu.vector_store %arg5[%c0_6, %c0_7], %11 {strides = array<i32>} : memref<2x768xf32, #tpu.memory_space<vmem>>, vector<2x768xf32>,
    return
  }
  func.func @transform_0(%arg0: i32, %arg1: i32) -> (i32, i32) {
    %c0_i32 = arith.constant 0 : i32
    %c0_i32_0 = arith.constant 0 : i32
    return %arg0, %c0_i32 : i32, i32
  }
  func.func @transform_1(%arg0: i32, %arg1: i32) -> (i32, i32) {
    %c0_i32 = arith.constant 0 : i32
    %c0_i32_0 = arith.constant 0 : i32
    return %arg1, %c0_i32 : i32, i32
  }
  func.func @transform_2(%arg0: i32, %arg1: i32) -> (i32, i32) {
    %c0_i32 = arith.constant 0 : i32
    %c0_i32_0 = arith.constant 0 : i32
    return %c0_i32, %arg1 : i32, i32
  }
  func.func @transform_3(%arg0: i32, %arg1: i32) -> (i32, i32) {
    %c0_i32 = arith.constant 0 : i32
    return %arg0, %arg1 : i32, i32
  }
}

module attributes {stable_mosaic.version = 11 : i64} {
  func.func @_ln_mod_kernel(%arg0: i32, %arg1: i32, %arg2: memref<1x8x128xf32, #tpu.memory_space<vmem>>, %arg3: memref<1x1x128xf32, #tpu.memory_space<vmem>>, %arg4: memref<1x1x128xf32, #tpu.memory_space<vmem>>, %arg5: memref<1x8x128xf32, #tpu.memory_space<vmem>>) attributes {dimension_semantics = [#tpu.dimension_semantics<parallel>, #tpu.dimension_semantics<parallel>], iteration_bounds = array<i64: 2, 1>, scalar_prefetch = 0 : i64, scratch_operands = 0 : i64, tpu.core_type = #tpu.core_type<tc>, window_params = [{transform_indices = @transform_0, window_bounds = array<i64: 1, 8, 128>}, {transform_indices = @transform_1, window_bounds = array<i64: 1, 1, 128>}, {transform_indices = @transform_2, window_bounds = array<i64: 1, 1, 128>}, {transform_indices = @transform_3, window_bounds = array<i64: 1, 8, 128>}]} {
    %c0 = arith.constant 0 : index
    %c0_0 = arith.constant 0 : index
    %c0_1 = arith.constant 0 : index
    %0 = vector.load %arg2[%c0, %c0_0, %c0_1] : memref<1x8x128xf32, #tpu.memory_space<vmem>>, vector<1x8x128xf32>
    %cst = arith.constant dense<0.000000e+00> : vector<1x8xf32>
    %1 = vector.multi_reduction <add>, %0, %cst [2] : vector<1x8x128xf32> to vector<1x8xf32>
    %2 = vector.shape_cast %1 : vector<1x8xf32> to vector<1x8x1xf32>
    %cst_2 = arith.constant 1.280000e+02 : f32
    %3 = vector.broadcast %cst_2 : f32 to vector<1x8x1xf32>
    %4 = arith.divf %2, %3 : vector<1x8x1xf32>
    %5 = vector.broadcast %4 : vector<1x8x1xf32> to vector<1x8x128xf32>
    %6 = arith.subf %0, %5 : vector<1x8x128xf32>
    %7 = arith.mulf %6, %6 : vector<1x8x128xf32>
    %cst_3 = arith.constant dense<0.000000e+00> : vector<1x8xf32>
    %8 = vector.multi_reduction <add>, %7, %cst_3 [2] : vector<1x8x128xf32> to vector<1x8xf32>
    %9 = vector.shape_cast %8 : vector<1x8xf32> to vector<1x8x1xf32>
    %cst_4 = arith.constant 1.280000e+02 : f32
    %10 = vector.broadcast %cst_4 : f32 to vector<1x8x1xf32>
    %11 = arith.divf %9, %10 : vector<1x8x1xf32>
    %cst_5 = arith.constant 9.99999997E-7 : f32
    %12 = vector.broadcast %cst_5 : f32 to vector<1x8x1xf32>
    %13 = arith.addf %11, %12 : vector<1x8x1xf32>
    %14 = math.rsqrt %13 : vector<1x8x1xf32>
    %15 = vector.broadcast %14 : vector<1x8x1xf32> to vector<1x8x128xf32>
    %16 = arith.mulf %6, %15 : vector<1x8x128xf32>
    %c0_6 = arith.constant 0 : index
    %c0_7 = arith.constant 0 : index
    %c0_8 = arith.constant 0 : index
    %17 = vector.load %arg3[%c0_6, %c0_7, %c0_8] : memref<1x1x128xf32, #tpu.memory_space<vmem>>, vector<1x1x128xf32>
    %cst_9 = arith.constant 1.000000e+00 : f32
    %18 = vector.broadcast %cst_9 : f32 to vector<1x1x128xf32>
    %19 = arith.addf %18, %17 : vector<1x1x128xf32>
    %20 = vector.broadcast %19 : vector<1x1x128xf32> to vector<1x8x128xf32>
    %21 = arith.mulf %20, %16 : vector<1x8x128xf32>
    %c0_10 = arith.constant 0 : index
    %c0_11 = arith.constant 0 : index
    %c0_12 = arith.constant 0 : index
    %22 = vector.load %arg4[%c0_10, %c0_11, %c0_12] : memref<1x1x128xf32, #tpu.memory_space<vmem>>, vector<1x1x128xf32>
    %23 = vector.broadcast %22 : vector<1x1x128xf32> to vector<1x8x128xf32>
    %24 = arith.addf %21, %23 : vector<1x8x128xf32>
    %c0_13 = arith.constant 0 : index
    %c0_14 = arith.constant 0 : index
    %c0_15 = arith.constant 0 : index
    %25 = vector.load %arg5[%c0_13, %c0_14, %c0_15] : memref<1x8x128xf32, #tpu.memory_space<vmem>>, vector<1x8x128xf32>
    tpu.vector_store %arg5[%c0_13, %c0_14, %c0_15], %24 {strides = array<i32>} : memref<1x8x128xf32, #tpu.memory_space<vmem>>, vector<1x8x128xf32>,
    return
  }
  func.func @transform_0(%arg0: i32, %arg1: i32) -> (i32, i32, i32) {
    %c0_i32 = arith.constant 0 : i32
    %c0_i32_0 = arith.constant 0 : i32
    return %arg0, %arg1, %c0_i32 : i32, i32, i32
  }
  func.func @transform_1(%arg0: i32, %arg1: i32) -> (i32, i32, i32) {
    %c0_i32 = arith.constant 0 : i32
    %c0_i32_0 = arith.constant 0 : i32
    %c0_i32_1 = arith.constant 0 : i32
    return %arg0, %c0_i32, %c0_i32_0 : i32, i32, i32
  }
  func.func @transform_2(%arg0: i32, %arg1: i32) -> (i32, i32, i32) {
    %c0_i32 = arith.constant 0 : i32
    %c0_i32_0 = arith.constant 0 : i32
    %c0_i32_1 = arith.constant 0 : i32
    return %arg0, %c0_i32, %c0_i32_0 : i32, i32, i32
  }
  func.func @transform_3(%arg0: i32, %arg1: i32) -> (i32, i32, i32) {
    %c0_i32 = arith.constant 0 : i32
    %c0_i32_0 = arith.constant 0 : i32
    return %arg0, %arg1, %c0_i32 : i32, i32, i32
  }
}

module attributes {stable_mosaic.version = 11 : i64} {
  func.func @_rmsnorm_kernel(%arg0: i32, %arg1: i32, %arg2: memref<1x1x8x32xf32, #tpu.memory_space<vmem>>, %arg3: memref<1x32xf32, #tpu.memory_space<vmem>>, %arg4: memref<1x1x8x32xf32, #tpu.memory_space<vmem>>) attributes {dimension_semantics = [#tpu.dimension_semantics<parallel>, #tpu.dimension_semantics<parallel>], iteration_bounds = array<i64: 2, 4>, scalar_prefetch = 0 : i64, scratch_operands = 0 : i64, tpu.core_type = #tpu.core_type<tc>, window_params = [{transform_indices = @transform_0, window_bounds = array<i64: 1, 1, 8, 32>}, {pipeline_mode = #tpu.pipeline_mode<synchronous>, transform_indices = @transform_1, window_bounds = array<i64: 1, 32>}, {transform_indices = @transform_2, window_bounds = array<i64: 1, 1, 8, 32>}]} {
    %c0 = arith.constant 0 : index
    %c0_0 = arith.constant 0 : index
    %c0_1 = arith.constant 0 : index
    %c0_2 = arith.constant 0 : index
    %0 = vector.load %arg2[%c0, %c0_0, %c0_1, %c0_2] : memref<1x1x8x32xf32, #tpu.memory_space<vmem>>, vector<1x1x8x32xf32>
    %1 = arith.mulf %0, %0 : vector<1x1x8x32xf32>
    %cst = arith.constant dense<0.000000e+00> : vector<1x1x8xf32>
    %2 = vector.multi_reduction <add>, %1, %cst [3] : vector<1x1x8x32xf32> to vector<1x1x8xf32>
    %3 = vector.shape_cast %2 : vector<1x1x8xf32> to vector<1x1x8x1xf32>
    %cst_3 = arith.constant 3.200000e+01 : f32
    %4 = vector.broadcast %cst_3 : f32 to vector<1x1x8x1xf32>
    %5 = arith.divf %3, %4 : vector<1x1x8x1xf32>
    %cst_4 = arith.constant 9.99999997E-7 : f32
    %6 = vector.broadcast %cst_4 : f32 to vector<1x1x8x1xf32>
    %7 = arith.addf %5, %6 : vector<1x1x8x1xf32>
    %8 = math.rsqrt %7 : vector<1x1x8x1xf32>
    %9 = vector.broadcast %8 : vector<1x1x8x1xf32> to vector<1x1x8x32xf32>
    %10 = arith.mulf %0, %9 : vector<1x1x8x32xf32>
    %c0_5 = arith.constant 0 : index
    %c0_6 = arith.constant 0 : index
    %11 = vector.load %arg3[%c0_5, %c0_6] : memref<1x32xf32, #tpu.memory_space<vmem>>, vector<1x32xf32>
    %12 = vector.shape_cast %11 : vector<1x32xf32> to vector<1x1x1x32xf32>
    %13 = vector.broadcast %12 : vector<1x1x1x32xf32> to vector<1x1x8x32xf32>
    %14 = arith.mulf %10, %13 : vector<1x1x8x32xf32>
    %c0_7 = arith.constant 0 : index
    %c0_8 = arith.constant 0 : index
    %c0_9 = arith.constant 0 : index
    %c0_10 = arith.constant 0 : index
    %15 = vector.load %arg4[%c0_7, %c0_8, %c0_9, %c0_10] : memref<1x1x8x32xf32, #tpu.memory_space<vmem>>, vector<1x1x8x32xf32>
    tpu.vector_store %arg4[%c0_7, %c0_8, %c0_9, %c0_10], %14 {strides = array<i32>} : memref<1x1x8x32xf32, #tpu.memory_space<vmem>>, vector<1x1x8x32xf32>,
    return
  }
  func.func @transform_0(%arg0: i32, %arg1: i32) -> (i32, i32, i32, i32) {
    %c0_i32 = arith.constant 0 : i32
    %c0_i32_0 = arith.constant 0 : i32
    %c0_i32_1 = arith.constant 0 : i32
    return %arg0, %arg1, %c0_i32, %c0_i32_0 : i32, i32, i32, i32
  }
  func.func @transform_1(%arg0: i32, %arg1: i32) -> (i32, i32) {
    %c0_i32 = arith.constant 0 : i32
    %c0_i32_0 = arith.constant 0 : i32
    %c0_i32_1 = arith.constant 0 : i32
    return %c0_i32, %c0_i32_0 : i32, i32
  }
  func.func @transform_2(%arg0: i32, %arg1: i32) -> (i32, i32, i32, i32) {
    %c0_i32 = arith.constant 0 : i32
    %c0_i32_0 = arith.constant 0 : i32
    %c0_i32_1 = arith.constant 0 : i32
    return %arg0, %arg1, %c0_i32, %c0_i32_0 : i32, i32, i32, i32
  }
}

module attributes {stable_mosaic.version = 11 : i64} {
  func.func @kernel(%arg0: i32, %arg1: i32, %arg2: memref<16x128xf32, #tpu.memory_space<vmem>>, %arg3: memref<128x128xf32, #tpu.memory_space<vmem>>, %arg4: memref<1x128xf32, #tpu.memory_space<vmem>>, %arg5: memref<16x128xf32, #tpu.memory_space<vmem>>) attributes {dimension_semantics = [#tpu.dimension_semantics<parallel>, #tpu.dimension_semantics<parallel>], iteration_bounds = array<i64: 1, 1>, scalar_prefetch = 0 : i64, scratch_operands = 0 : i64, tpu.core_type = #tpu.core_type<tc>, window_params = [{transform_indices = @transform_0, window_bounds = array<i64: 16, 128>}, {transform_indices = @transform_1, window_bounds = array<i64: 128, 128>}, {transform_indices = @transform_2, window_bounds = array<i64: 1, 128>}, {transform_indices = @transform_3, window_bounds = array<i64: 16, 128>}]} {
    %c0 = arith.constant 0 : index
    %c0_0 = arith.constant 0 : index
    %0 = vector.load %arg2[%c0, %c0_0] : memref<16x128xf32, #tpu.memory_space<vmem>>, vector<16x128xf32>
    %c0_1 = arith.constant 0 : index
    %c0_2 = arith.constant 0 : index
    %1 = vector.load %arg3[%c0_1, %c0_2] : memref<128x128xf32, #tpu.memory_space<vmem>>, vector<128x128xf32>
    %cst = arith.constant dense<0.000000e+00> : vector<16x128xf32>
    %2 = tpu.matmul %0, %1, %cst {dimension_numbers = #tpu.dot_dimension_numbers<[1], [1], [0], [0], [0, 0, 1, 0], [], []>} : vector<16x128xf32>, vector<128x128xf32>, vector<16x128xf32> -> vector<16x128xf32>
    %c0_3 = arith.constant 0 : index
    %c0_4 = arith.constant 0 : index
    %3 = vector.load %arg4[%c0_3, %c0_4] : memref<1x128xf32, #tpu.memory_space<vmem>>, vector<1x128xf32>
    %4 = vector.broadcast %3 : vector<1x128xf32> to vector<16x128xf32>
    %5 = arith.addf %2, %4 : vector<16x128xf32>
    %c0_5 = arith.constant 0 : index
    %c0_6 = arith.constant 0 : index
    %6 = vector.load %arg5[%c0_5, %c0_6] : memref<16x128xf32, #tpu.memory_space<vmem>>, vector<16x128xf32>
    tpu.vector_store %arg5[%c0_5, %c0_6], %5 {strides = array<i32>} : memref<16x128xf32, #tpu.memory_space<vmem>>, vector<16x128xf32>,
    return
  }
  func.func @transform_0(%arg0: i32, %arg1: i32) -> (i32, i32) {
    %c0_i32 = arith.constant 0 : i32
    %c0_i32_0 = arith.constant 0 : i32
    return %arg0, %c0_i32 : i32, i32
  }
  func.func @transform_1(%arg0: i32, %arg1: i32) -> (i32, i32) {
    %c0_i32 = arith.constant 0 : i32
    %c0_i32_0 = arith.constant 0 : i32
    return %arg1, %c0_i32 : i32, i32
  }
  func.func @transform_2(%arg0: i32, %arg1: i32) -> (i32, i32) {
    %c0_i32 = arith.constant 0 : i32
    %c0_i32_0 = arith.constant 0 : i32
    return %c0_i32, %arg1 : i32, i32
  }
  func.func @transform_3(%arg0: i32, %arg1: i32) -> (i32, i32) {
    %c0_i32 = arith.constant 0 : i32
    return %arg0, %arg1 : i32, i32
  }
}

module attributes {stable_mosaic.version = 11 : i64} {
  func.func @_attn_rope_kernel(%arg0: i32, %arg1: i32, %arg2: memref<1x1x24x32xf32, #tpu.memory_space<vmem>>, %arg3: memref<1x1x24x32xf32, #tpu.memory_space<vmem>>, %arg4: memref<1x1x24x32xf32, #tpu.memory_space<vmem>>, %arg5: memref<1x24x16xf32, #tpu.memory_space<vmem>>, %arg6: memref<1x24x16xf32, #tpu.memory_space<vmem>>, %arg7: memref<1x1x24x32xf32, #tpu.memory_space<vmem>>) attributes {dimension_semantics = [#tpu.dimension_semantics<parallel>, #tpu.dimension_semantics<parallel>], iteration_bounds = array<i64: 2, 4>, scalar_prefetch = 0 : i64, scratch_operands = 0 : i64, tpu.core_type = #tpu.core_type<tc>, window_params = [{transform_indices = @transform_0, window_bounds = array<i64: 1, 1, 24, 32>}, {transform_indices = @transform_1, window_bounds = array<i64: 1, 1, 24, 32>}, {transform_indices = @transform_2, window_bounds = array<i64: 1, 1, 24, 32>}, {transform_indices = @transform_3, window_bounds = array<i64: 1, 24, 16>}, {transform_indices = @transform_4, window_bounds = array<i64: 1, 24, 16>}, {transform_indices = @transform_5, window_bounds = array<i64: 1, 1, 24, 32>}]} {
    %c0 = arith.constant 0 : index
    %c0_0 = arith.constant 0 : index
    %c0_1 = arith.constant 0 : index
    %c0_2 = arith.constant 0 : index
    %0 = vector.load %arg2[%c0, %c0_0, %c0_1, %c0_2] : memref<1x1x24x32xf32, #tpu.memory_space<vmem>>, vector<1x1x24x32xf32>
    %1 = vector.shape_cast %0 : vector<1x1x24x32xf32> to vector<24x32xf32>
    %c0_3 = arith.constant 0 : index
    %c0_4 = arith.constant 0 : index
    %c0_5 = arith.constant 0 : index
    %c0_6 = arith.constant 0 : index
    %2 = vector.load %arg3[%c0_3, %c0_4, %c0_5, %c0_6] : memref<1x1x24x32xf32, #tpu.memory_space<vmem>>, vector<1x1x24x32xf32>
    %3 = vector.shape_cast %2 : vector<1x1x24x32xf32> to vector<24x32xf32>
    %c0_7 = arith.constant 0 : index
    %c0_8 = arith.constant 0 : index
    %c0_9 = arith.constant 0 : index
    %c0_10 = arith.constant 0 : index
    %4 = vector.load %arg4[%c0_7, %c0_8, %c0_9, %c0_10] : memref<1x1x24x32xf32, #tpu.memory_space<vmem>>, vector<1x1x24x32xf32>
    %5 = vector.shape_cast %4 : vector<1x1x24x32xf32> to vector<24x32xf32>
    %c0_11 = arith.constant 0 : index
    %c0_12 = arith.constant 0 : index
    %c0_13 = arith.constant 0 : index
    %6 = vector.load %arg5[%c0_11, %c0_12, %c0_13] : memref<1x24x16xf32, #tpu.memory_space<vmem>>, vector<1x24x16xf32>
    %7 = vector.shape_cast %6 : vector<1x24x16xf32> to vector<24x16xf32>
    %c0_14 = arith.constant 0 : index
    %c0_15 = arith.constant 0 : index
    %c0_16 = arith.constant 0 : index
    %8 = vector.load %arg6[%c0_14, %c0_15, %c0_16] : memref<1x24x16xf32, #tpu.memory_space<vmem>>, vector<1x24x16xf32>
    %9 = vector.shape_cast %8 : vector<1x24x16xf32> to vector<24x16xf32>
    %10 = vector.extract_strided_slice %1 {offsets = [0, 0], sizes = [24, 16], strides = [1, 1]} : vector<24x32xf32> to vector<24x16xf32>
    %11 = vector.extract_strided_slice %1 {offsets = [0, 16], sizes = [24, 16], strides = [1, 1]} : vector<24x32xf32> to vector<24x16xf32>
    %12 = arith.mulf %7, %10 : vector<24x16xf32>
    %13 = arith.mulf %9, %11 : vector<24x16xf32>
    %14 = arith.subf %12, %13 : vector<24x16xf32>
    %15 = arith.mulf %9, %10 : vector<24x16xf32>
    %16 = arith.mulf %7, %11 : vector<24x16xf32>
    %17 = arith.addf %15, %16 : vector<24x16xf32>
    %18 = vector.extract_strided_slice %3 {offsets = [0, 0], sizes = [24, 16], strides = [1, 1]} : vector<24x32xf32> to vector<24x16xf32>
    %19 = vector.extract_strided_slice %3 {offsets = [0, 16], sizes = [24, 16], strides = [1, 1]} : vector<24x32xf32> to vector<24x16xf32>
    %20 = arith.mulf %7, %18 : vector<24x16xf32>
    %21 = arith.mulf %9, %19 : vector<24x16xf32>
    %22 = arith.subf %20, %21 : vector<24x16xf32>
    %23 = arith.mulf %9, %18 : vector<24x16xf32>
    %24 = arith.mulf %7, %19 : vector<24x16xf32>
    %25 = arith.addf %23, %24 : vector<24x16xf32>
    %cst = arith.constant dense<0.000000e+00> : vector<24x24xf32>
    %26 = tpu.matmul %14, %22, %cst {dimension_numbers = #tpu.dot_dimension_numbers<[1], [1], [0], [0], [0, 0, 1, 0], [], []>} : vector<24x16xf32>, vector<24x16xf32>, vector<24x24xf32> -> vector<24x24xf32>
    %cst_17 = arith.constant dense<0.000000e+00> : vector<24x24xf32>
    %27 = tpu.matmul %17, %25, %cst_17 {dimension_numbers = #tpu.dot_dimension_numbers<[1], [1], [0], [0], [0, 0, 1, 0], [], []>} : vector<24x16xf32>, vector<24x16xf32>, vector<24x24xf32> -> vector<24x24xf32>
    %28 = arith.addf %26, %27 : vector<24x24xf32>
    %cst_18 = arith.constant 0.176776692 : f32
    %29 = vector.broadcast %cst_18 : f32 to vector<24x24xf32>
    %30 = arith.mulf %28, %29 : vector<24x24xf32>
    %cst_19 = arith.constant dense<0xFF800000> : vector<24xf32>
    %31 = vector.multi_reduction <maximumf>, %30, %cst_19 [1] : vector<24x24xf32> to vector<24xf32>
    %32 = vector.shape_cast %31 : vector<24xf32> to vector<24x1xf32>
    %33 = vector.broadcast %32 : vector<24x1xf32> to vector<24x24xf32>
    %34 = arith.subf %30, %33 : vector<24x24xf32>
    %35 = math.exp %34 : vector<24x24xf32>
    %cst_20 = arith.constant dense<0.000000e+00> : vector<24xf32>
    %36 = vector.multi_reduction <add>, %35, %cst_20 [1] : vector<24x24xf32> to vector<24xf32>
    %37 = vector.shape_cast %36 : vector<24xf32> to vector<24x1xf32>
    %cst_21 = arith.constant dense<0.000000e+00> : vector<24x32xf32>
    %38 = tpu.matmul %35, %5, %cst_21 {dimension_numbers = #tpu.dot_dimension_numbers<[1], [0], [0], [1], [0, 0, 1, 1], [], []>} : vector<24x24xf32>, vector<24x32xf32>, vector<24x32xf32> -> vector<24x32xf32>
    %39 = vector.broadcast %37 : vector<24x1xf32> to vector<24x32xf32>
    %40 = arith.divf %38, %39 : vector<24x32xf32>
    %41 = vector.shape_cast %40 : vector<24x32xf32> to vector<1x1x24x32xf32>
    %c0_22 = arith.constant 0 : index
    %c0_23 = arith.constant 0 : index
    %c0_24 = arith.constant 0 : index
    %c0_25 = arith.constant 0 : index
    %42 = vector.load %arg7[%c0_22, %c0_23, %c0_24, %c0_25] : memref<1x1x24x32xf32, #tpu.memory_space<vmem>>, vector<1x1x24x32xf32>
    tpu.vector_store %arg7[%c0_22, %c0_23, %c0_24, %c0_25], %41 {strides = array<i32>} : memref<1x1x24x32xf32, #tpu.memory_space<vmem>>, vector<1x1x24x32xf32>,
    return
  }
  func.func @transform_0(%arg0: i32, %arg1: i32) -> (i32, i32, i32, i32) {
    %c0_i32 = arith.constant 0 : i32
    %c0_i32_0 = arith.constant 0 : i32
    %c0_i32_1 = arith.constant 0 : i32
    return %arg0, %arg1, %c0_i32, %c0_i32_0 : i32, i32, i32, i32
  }
  func.func @transform_1(%arg0: i32, %arg1: i32) -> (i32, i32, i32, i32) {
    %c0_i32 = arith.constant 0 : i32
    %c0_i32_0 = arith.constant 0 : i32
    %c0_i32_1 = arith.constant 0 : i32
    return %arg0, %arg1, %c0_i32, %c0_i32_0 : i32, i32, i32, i32
  }
  func.func @transform_2(%arg0: i32, %arg1: i32) -> (i32, i32, i32, i32) {
    %c0_i32 = arith.constant 0 : i32
    %c0_i32_0 = arith.constant 0 : i32
    %c0_i32_1 = arith.constant 0 : i32
    return %arg0, %arg1, %c0_i32, %c0_i32_0 : i32, i32, i32, i32
  }
  func.func @transform_3(%arg0: i32, %arg1: i32) -> (i32, i32, i32) {
    %c0_i32 = arith.constant 0 : i32
    %c0_i32_0 = arith.constant 0 : i32
    %c0_i32_1 = arith.constant 0 : i32
    return %arg0, %c0_i32, %c0_i32_0 : i32, i32, i32
  }
  func.func @transform_4(%arg0: i32, %arg1: i32) -> (i32, i32, i32) {
    %c0_i32 = arith.constant 0 : i32
    %c0_i32_0 = arith.constant 0 : i32
    %c0_i32_1 = arith.constant 0 : i32
    return %arg0, %c0_i32, %c0_i32_0 : i32, i32, i32
  }
  func.func @transform_5(%arg0: i32, %arg1: i32) -> (i32, i32, i32, i32) {
    %c0_i32 = arith.constant 0 : i32
    %c0_i32_0 = arith.constant 0 : i32
    %c0_i32_1 = arith.constant 0 : i32
    return %arg0, %arg1, %c0_i32, %c0_i32_0 : i32, i32, i32, i32
  }
}

module attributes {stable_mosaic.version = 11 : i64} {
  func.func @_gated_residual_kernel(%arg0: i32, %arg1: i32, %arg2: memref<1x8x128xf32, #tpu.memory_space<vmem>>, %arg3: memref<1x8x128xf32, #tpu.memory_space<vmem>>, %arg4: memref<1x1x128xf32, #tpu.memory_space<vmem>>, %arg5: memref<1x8x128xf32, #tpu.memory_space<vmem>>) attributes {dimension_semantics = [#tpu.dimension_semantics<parallel>, #tpu.dimension_semantics<parallel>], iteration_bounds = array<i64: 2, 1>, scalar_prefetch = 0 : i64, scratch_operands = 0 : i64, tpu.core_type = #tpu.core_type<tc>, window_params = [{transform_indices = @transform_0, window_bounds = array<i64: 1, 8, 128>}, {transform_indices = @transform_1, window_bounds = array<i64: 1, 8, 128>}, {transform_indices = @transform_2, window_bounds = array<i64: 1, 1, 128>}, {transform_indices = @transform_3, window_bounds = array<i64: 1, 8, 128>}]} {
    %c0 = arith.constant 0 : index
    %c0_0 = arith.constant 0 : index
    %c0_1 = arith.constant 0 : index
    %0 = vector.load %arg2[%c0, %c0_0, %c0_1] : memref<1x8x128xf32, #tpu.memory_space<vmem>>, vector<1x8x128xf32>
    %c0_2 = arith.constant 0 : index
    %c0_3 = arith.constant 0 : index
    %c0_4 = arith.constant 0 : index
    %1 = vector.load %arg3[%c0_2, %c0_3, %c0_4] : memref<1x8x128xf32, #tpu.memory_space<vmem>>, vector<1x8x128xf32>
    %c0_5 = arith.constant 0 : index
    %c0_6 = arith.constant 0 : index
    %c0_7 = arith.constant 0 : index
    %2 = vector.load %arg4[%c0_5, %c0_6, %c0_7] : memref<1x1x128xf32, #tpu.memory_space<vmem>>, vector<1x1x128xf32>
    %3 = vector.broadcast %2 : vector<1x1x128xf32> to vector<1x8x128xf32>
    %4 = arith.mulf %3, %1 : vector<1x8x128xf32>
    %5 = arith.addf %0, %4 : vector<1x8x128xf32>
    %c0_8 = arith.constant 0 : index
    %c0_9 = arith.constant 0 : index
    %c0_10 = arith.constant 0 : index
    %6 = vector.load %arg5[%c0_8, %c0_9, %c0_10] : memref<1x8x128xf32, #tpu.memory_space<vmem>>, vector<1x8x128xf32>
    tpu.vector_store %arg5[%c0_8, %c0_9, %c0_10], %5 {strides = array<i32>} : memref<1x8x128xf32, #tpu.memory_space<vmem>>, vector<1x8x128xf32>,
    return
  }
  func.func @transform_0(%arg0: i32, %arg1: i32) -> (i32, i32, i32) {
    %c0_i32 = arith.constant 0 : i32
    %c0_i32_0 = arith.constant 0 : i32
    return %arg0, %arg1, %c0_i32 : i32, i32, i32
  }
  func.func @transform_1(%arg0: i32, %arg1: i32) -> (i32, i32, i32) {
    %c0_i32 = arith.constant 0 : i32
    %c0_i32_0 = arith.constant 0 : i32
    return %arg0, %arg1, %c0_i32 : i32, i32, i32
  }
  func.func @transform_2(%arg0: i32, %arg1: i32) -> (i32, i32, i32) {
    %c0_i32 = arith.constant 0 : i32
    %c0_i32_0 = arith.constant 0 : i32
    %c0_i32_1 = arith.constant 0 : i32
    return %arg0, %c0_i32, %c0_i32_0 : i32, i32, i32
  }
  func.func @transform_3(%arg0: i32, %arg1: i32) -> (i32, i32, i32) {
    %c0_i32 = arith.constant 0 : i32
    %c0_i32_0 = arith.constant 0 : i32
    return %arg0, %arg1, %c0_i32 : i32, i32, i32
  }
}

module attributes {stable_mosaic.version = 11 : i64} {
  func.func @kernel(%arg0: i32, %arg1: i32, %arg2: memref<16x128xf32, #tpu.memory_space<vmem>>, %arg3: memref<512x128xf32, #tpu.memory_space<vmem>>, %arg4: memref<1x512xf32, #tpu.memory_space<vmem>>, %arg5: memref<16x512xf32, #tpu.memory_space<vmem>>) attributes {dimension_semantics = [#tpu.dimension_semantics<parallel>, #tpu.dimension_semantics<parallel>], iteration_bounds = array<i64: 1, 1>, scalar_prefetch = 0 : i64, scratch_operands = 0 : i64, tpu.core_type = #tpu.core_type<tc>, window_params = [{transform_indices = @transform_0, window_bounds = array<i64: 16, 128>}, {transform_indices = @transform_1, window_bounds = array<i64: 512, 128>}, {transform_indices = @transform_2, window_bounds = array<i64: 1, 512>}, {transform_indices = @transform_3, window_bounds = array<i64: 16, 512>}]} {
    %c0 = arith.constant 0 : index
    %c0_0 = arith.constant 0 : index
    %0 = vector.load %arg2[%c0, %c0_0] : memref<16x128xf32, #tpu.memory_space<vmem>>, vector<16x128xf32>
    %c0_1 = arith.constant 0 : index
    %c0_2 = arith.constant 0 : index
    %1 = vector.load %arg3[%c0_1, %c0_2] : memref<512x128xf32, #tpu.memory_space<vmem>>, vector<512x128xf32>
    %cst = arith.constant dense<0.000000e+00> : vector<16x512xf32>
    %2 = tpu.matmul %0, %1, %cst {dimension_numbers = #tpu.dot_dimension_numbers<[1], [1], [0], [0], [0, 0, 1, 0], [], []>} : vector<16x128xf32>, vector<512x128xf32>, vector<16x512xf32> -> vector<16x512xf32>
    %c0_3 = arith.constant 0 : index
    %c0_4 = arith.constant 0 : index
    %3 = vector.load %arg4[%c0_3, %c0_4] : memref<1x512xf32, #tpu.memory_space<vmem>>, vector<1x512xf32>
    %4 = vector.broadcast %3 : vector<1x512xf32> to vector<16x512xf32>
    %5 = arith.addf %2, %4 : vector<16x512xf32>
    %6 = arith.mulf %5, %5 : vector<16x512xf32>
    %7 = arith.mulf %5, %6 : vector<16x512xf32>
    %cst_5 = arith.constant 4.471500e-02 : f32
    %8 = vector.broadcast %cst_5 : f32 to vector<16x512xf32>
    %9 = arith.mulf %8, %7 : vector<16x512xf32>
    %10 = arith.addf %5, %9 : vector<16x512xf32>
    %cst_6 = arith.constant 0.797884583 : f32
    %11 = vector.broadcast %cst_6 : f32 to vector<16x512xf32>
    %12 = arith.mulf %11, %10 : vector<16x512xf32>
    %13 = math.tanh %12 : vector<16x512xf32>
    %cst_7 = arith.constant 1.000000e+00 : f32
    %14 = vector.broadcast %cst_7 : f32 to vector<16x512xf32>
    %15 = arith.addf %14, %13 : vector<16x512xf32>
    %cst_8 = arith.constant 5.000000e-01 : f32
    %16 = vector.broadcast %cst_8 : f32 to vector<16x512xf32>
    %17 = arith.mulf %16, %15 : vector<16x512xf32>
    %18 = arith.mulf %5, %17 : vector<16x512xf32>
    %c0_9 = arith.constant 0 : index
    %c0_10 = arith.constant 0 : index
    %19 = vector.load %arg5[%c0_9, %c0_10] : memref<16x512xf32, #tpu.memory_space<vmem>>, vector<16x512xf32>
    tpu.vector_store %arg5[%c0_9, %c0_10], %18 {strides = array<i32>} : memref<16x512xf32, #tpu.memory_space<vmem>>, vector<16x512xf32>,
    return
  }
  func.func @transform_0(%arg0: i32, %arg1: i32) -> (i32, i32) {
    %c0_i32 = arith.constant 0 : i32
    %c0_i32_0 = arith.constant 0 : i32
    return %arg0, %c0_i32 : i32, i32
  }
  func.func @transform_1(%arg0: i32, %arg1: i32) -> (i32, i32) {
    %c0_i32 = arith.constant 0 : i32
    %c0_i32_0 = arith.constant 0 : i32
    return %arg1, %c0_i32 : i32, i32
  }
  func.func @transform_2(%arg0: i32, %arg1: i32) -> (i32, i32) {
    %c0_i32 = arith.constant 0 : i32
    %c0_i32_0 = arith.constant 0 : i32
    return %c0_i32, %arg1 : i32, i32
  }
  func.func @transform_3(%arg0: i32, %arg1: i32) -> (i32, i32) {
    %c0_i32 = arith.constant 0 : i32
    return %arg0, %arg1 : i32, i32
  }
}

module attributes {stable_mosaic.version = 11 : i64} {
  func.func @kernel(%arg0: i32, %arg1: i32, %arg2: memref<16x512xf32, #tpu.memory_space<vmem>>, %arg3: memref<128x512xf32, #tpu.memory_space<vmem>>, %arg4: memref<1x128xf32, #tpu.memory_space<vmem>>, %arg5: memref<16x128xf32, #tpu.memory_space<vmem>>) attributes {dimension_semantics = [#tpu.dimension_semantics<parallel>, #tpu.dimension_semantics<parallel>], iteration_bounds = array<i64: 1, 1>, scalar_prefetch = 0 : i64, scratch_operands = 0 : i64, tpu.core_type = #tpu.core_type<tc>, window_params = [{transform_indices = @transform_0, window_bounds = array<i64: 16, 512>}, {transform_indices = @transform_1, window_bounds = array<i64: 128, 512>}, {transform_indices = @transform_2, window_bounds = array<i64: 1, 128>}, {transform_indices = @transform_3, window_bounds = array<i64: 16, 128>}]} {
    %c0 = arith.constant 0 : index
    %c0_0 = arith.constant 0 : index
    %0 = vector.load %arg2[%c0, %c0_0] : memref<16x512xf32, #tpu.memory_space<vmem>>, vector<16x512xf32>
    %c0_1 = arith.constant 0 : index
    %c0_2 = arith.constant 0 : index
    %1 = vector.load %arg3[%c0_1, %c0_2] : memref<128x512xf32, #tpu.memory_space<vmem>>, vector<128x512xf32>
    %cst = arith.constant dense<0.000000e+00> : vector<16x128xf32>
    %2 = tpu.matmul %0, %1, %cst {dimension_numbers = #tpu.dot_dimension_numbers<[1], [1], [0], [0], [0, 0, 1, 0], [], []>} : vector<16x512xf32>, vector<128x512xf32>, vector<16x128xf32> -> vector<16x128xf32>
    %c0_3 = arith.constant 0 : index
    %c0_4 = arith.constant 0 : index
    %3 = vector.load %arg4[%c0_3, %c0_4] : memref<1x128xf32, #tpu.memory_space<vmem>>, vector<1x128xf32>
    %4 = vector.broadcast %3 : vector<1x128xf32> to vector<16x128xf32>
    %5 = arith.addf %2, %4 : vector<16x128xf32>
    %c0_5 = arith.constant 0 : index
    %c0_6 = arith.constant 0 : index
    %6 = vector.load %arg5[%c0_5, %c0_6] : memref<16x128xf32, #tpu.memory_space<vmem>>, vector<16x128xf32>
    tpu.vector_store %arg5[%c0_5, %c0_6], %5 {strides = array<i32>} : memref<16x128xf32, #tpu.memory_space<vmem>>, vector<16x128xf32>,
    return
  }
  func.func @transform_0(%arg0: i32, %arg1: i32) -> (i32, i32) {
    %c0_i32 = arith.constant 0 : i32
    %c0_i32_0 = arith.constant 0 : i32
    return %arg0, %c0_i32 : i32, i32
  }
  func.func @transform_1(%arg0: i32, %arg1: i32) -> (i32, i32) {
    %c0_i32 = arith.constant 0 : i32
    %c0_i32_0 = arith.constant 0 : i32
    return %arg1, %c0_i32 : i32, i32
  }
  func.func @transform_2(%arg0: i32, %arg1: i32) -> (i32, i32) {
    %c0_i32 = arith.constant 0 : i32
    %c0_i32_0 = arith.constant 0 : i32
    return %c0_i32, %arg1 : i32, i32
  }
  func.func @transform_3(%arg0: i32, %arg1: i32) -> (i32, i32) {
    %c0_i32 = arith.constant 0 : i32
    return %arg0, %arg1 : i32, i32
  }
}

module attributes {stable_mosaic.version = 11 : i64} {
  func.func @_gated_residual_kernel(%arg0: i32, %arg1: i32, %arg2: memref<1x8x128xf32, #tpu.memory_space<vmem>>, %arg3: memref<1x8x128xf32, #tpu.memory_space<vmem>>, %arg4: memref<1x1x128xf32, #tpu.memory_space<vmem>>, %arg5: memref<1x8x128xf32, #tpu.memory_space<vmem>>) attributes {dimension_semantics = [#tpu.dimension_semantics<parallel>, #tpu.dimension_semantics<parallel>], iteration_bounds = array<i64: 2, 1>, scalar_prefetch = 0 : i64, scratch_operands = 0 : i64, tpu.core_type = #tpu.core_type<tc>, window_params = [{transform_indices = @transform_0, window_bounds = array<i64: 1, 8, 128>}, {transform_indices = @transform_1, window_bounds = array<i64: 1, 8, 128>}, {transform_indices = @transform_2, window_bounds = array<i64: 1, 1, 128>}, {transform_indices = @transform_3, window_bounds = array<i64: 1, 8, 128>}]} {
    %c0 = arith.constant 0 : index
    %c0_0 = arith.constant 0 : index
    %c0_1 = arith.constant 0 : index
    %0 = vector.load %arg2[%c0, %c0_0, %c0_1] : memref<1x8x128xf32, #tpu.memory_space<vmem>>, vector<1x8x128xf32>
    %c0_2 = arith.constant 0 : index
    %c0_3 = arith.constant 0 : index
    %c0_4 = arith.constant 0 : index
    %1 = vector.load %arg3[%c0_2, %c0_3, %c0_4] : memref<1x8x128xf32, #tpu.memory_space<vmem>>, vector<1x8x128xf32>
    %c0_5 = arith.constant 0 : index
    %c0_6 = arith.constant 0 : index
    %c0_7 = arith.constant 0 : index
    %2 = vector.load %arg4[%c0_5, %c0_6, %c0_7] : memref<1x1x128xf32, #tpu.memory_space<vmem>>, vector<1x1x128xf32>
    %3 = vector.broadcast %2 : vector<1x1x128xf32> to vector<1x8x128xf32>
    %4 = arith.mulf %3, %1 : vector<1x8x128xf32>
    %5 = arith.addf %0, %4 : vector<1x8x128xf32>
    %c0_8 = arith.constant 0 : index
    %c0_9 = arith.constant 0 : index
    %c0_10 = arith.constant 0 : index
    %6 = vector.load %arg5[%c0_8, %c0_9, %c0_10] : memref<1x8x128xf32, #tpu.memory_space<vmem>>, vector<1x8x128xf32>
    tpu.vector_store %arg5[%c0_8, %c0_9, %c0_10], %5 {strides = array<i32>} : memref<1x8x128xf32, #tpu.memory_space<vmem>>, vector<1x8x128xf32>,
    return
  }
  func.func @transform_0(%arg0: i32, %arg1: i32) -> (i32, i32, i32) {
    %c0_i32 = arith.constant 0 : i32
    %c0_i32_0 = arith.constant 0 : i32
    return %arg0, %arg1, %c0_i32 : i32, i32, i32
  }
  func.func @transform_1(%arg0: i32, %arg1: i32) -> (i32, i32, i32) {
    %c0_i32 = arith.constant 0 : i32
    %c0_i32_0 = arith.constant 0 : i32
    return %arg0, %arg1, %c0_i32 : i32, i32, i32
  }
  func.func @transform_2(%arg0: i32, %arg1: i32) -> (i32, i32, i32) {
    %c0_i32 = arith.constant 0 : i32
    %c0_i32_0 = arith.constant 0 : i32
    %c0_i32_1 = arith.constant 0 : i32
    return %arg0, %c0_i32, %c0_i32_0 : i32, i32, i32
  }
  func.func @transform_3(%arg0: i32, %arg1: i32) -> (i32, i32, i32) {
    %c0_i32 = arith.constant 0 : i32
    %c0_i32_0 = arith.constant 0 : i32
    return %arg0, %arg1, %c0_i32 : i32, i32, i32
  }
}

module attributes {stable_mosaic.version = 11 : i64} {
  func.func @kernel(%arg0: i32, %arg1: i32, %arg2: memref<32x128xf32, #tpu.memory_space<vmem>>, %arg3: memref<128x128xf32, #tpu.memory_space<vmem>>, %arg4: memref<1x128xf32, #tpu.memory_space<vmem>>, %arg5: memref<32x128xf32, #tpu.memory_space<vmem>>) attributes {dimension_semantics = [#tpu.dimension_semantics<parallel>, #tpu.dimension_semantics<parallel>], iteration_bounds = array<i64: 1, 1>, scalar_prefetch = 0 : i64, scratch_operands = 0 : i64, tpu.core_type = #tpu.core_type<tc>, window_params = [{transform_indices = @transform_0, window_bounds = array<i64: 32, 128>}, {transform_indices = @transform_1, window_bounds = array<i64: 128, 128>}, {transform_indices = @transform_2, window_bounds = array<i64: 1, 128>}, {transform_indices = @transform_3, window_bounds = array<i64: 32, 128>}]} {
    %c0 = arith.constant 0 : index
    %c0_0 = arith.constant 0 : index
    %0 = vector.load %arg2[%c0, %c0_0] : memref<32x128xf32, #tpu.memory_space<vmem>>, vector<32x128xf32>
    %c0_1 = arith.constant 0 : index
    %c0_2 = arith.constant 0 : index
    %1 = vector.load %arg3[%c0_1, %c0_2] : memref<128x128xf32, #tpu.memory_space<vmem>>, vector<128x128xf32>
    %cst = arith.constant dense<0.000000e+00> : vector<32x128xf32>
    %2 = tpu.matmul %0, %1, %cst {dimension_numbers = #tpu.dot_dimension_numbers<[1], [1], [0], [0], [0, 0, 1, 0], [], []>} : vector<32x128xf32>, vector<128x128xf32>, vector<32x128xf32> -> vector<32x128xf32>
    %c0_3 = arith.constant 0 : index
    %c0_4 = arith.constant 0 : index
    %3 = vector.load %arg4[%c0_3, %c0_4] : memref<1x128xf32, #tpu.memory_space<vmem>>, vector<1x128xf32>
    %4 = vector.broadcast %3 : vector<1x128xf32> to vector<32x128xf32>
    %5 = arith.addf %2, %4 : vector<32x128xf32>
    %c0_5 = arith.constant 0 : index
    %c0_6 = arith.constant 0 : index
    %6 = vector.load %arg5[%c0_5, %c0_6] : memref<32x128xf32, #tpu.memory_space<vmem>>, vector<32x128xf32>
    tpu.vector_store %arg5[%c0_5, %c0_6], %5 {strides = array<i32>} : memref<32x128xf32, #tpu.memory_space<vmem>>, vector<32x128xf32>,
    return
  }
  func.func @transform_0(%arg0: i32, %arg1: i32) -> (i32, i32) {
    %c0_i32 = arith.constant 0 : i32
    %c0_i32_0 = arith.constant 0 : i32
    return %arg0, %c0_i32 : i32, i32
  }
  func.func @transform_1(%arg0: i32, %arg1: i32) -> (i32, i32) {
    %c0_i32 = arith.constant 0 : i32
    %c0_i32_0 = arith.constant 0 : i32
    return %arg1, %c0_i32 : i32, i32
  }
  func.func @transform_2(%arg0: i32, %arg1: i32) -> (i32, i32) {
    %c0_i32 = arith.constant 0 : i32
    %c0_i32_0 = arith.constant 0 : i32
    return %c0_i32, %arg1 : i32, i32
  }
  func.func @transform_3(%arg0: i32, %arg1: i32) -> (i32, i32) {
    %c0_i32 = arith.constant 0 : i32
    return %arg0, %arg1 : i32, i32
  }
}

module attributes {stable_mosaic.version = 11 : i64} {
  func.func @kernel(%arg0: i32, %arg1: i32, %arg2: memref<32x128xf32, #tpu.memory_space<vmem>>, %arg3: memref<512x128xf32, #tpu.memory_space<vmem>>, %arg4: memref<1x512xf32, #tpu.memory_space<vmem>>, %arg5: memref<32x512xf32, #tpu.memory_space<vmem>>) attributes {dimension_semantics = [#tpu.dimension_semantics<parallel>, #tpu.dimension_semantics<parallel>], iteration_bounds = array<i64: 1, 1>, scalar_prefetch = 0 : i64, scratch_operands = 0 : i64, tpu.core_type = #tpu.core_type<tc>, window_params = [{transform_indices = @transform_0, window_bounds = array<i64: 32, 128>}, {transform_indices = @transform_1, window_bounds = array<i64: 512, 128>}, {transform_indices = @transform_2, window_bounds = array<i64: 1, 512>}, {transform_indices = @transform_3, window_bounds = array<i64: 32, 512>}]} {
    %c0 = arith.constant 0 : index
    %c0_0 = arith.constant 0 : index
    %0 = vector.load %arg2[%c0, %c0_0] : memref<32x128xf32, #tpu.memory_space<vmem>>, vector<32x128xf32>
    %c0_1 = arith.constant 0 : index
    %c0_2 = arith.constant 0 : index
    %1 = vector.load %arg3[%c0_1, %c0_2] : memref<512x128xf32, #tpu.memory_space<vmem>>, vector<512x128xf32>
    %cst = arith.constant dense<0.000000e+00> : vector<32x512xf32>
    %2 = tpu.matmul %0, %1, %cst {dimension_numbers = #tpu.dot_dimension_numbers<[1], [1], [0], [0], [0, 0, 1, 0], [], []>} : vector<32x128xf32>, vector<512x128xf32>, vector<32x512xf32> -> vector<32x512xf32>
    %c0_3 = arith.constant 0 : index
    %c0_4 = arith.constant 0 : index
    %3 = vector.load %arg4[%c0_3, %c0_4] : memref<1x512xf32, #tpu.memory_space<vmem>>, vector<1x512xf32>
    %4 = vector.broadcast %3 : vector<1x512xf32> to vector<32x512xf32>
    %5 = arith.addf %2, %4 : vector<32x512xf32>
    %6 = arith.mulf %5, %5 : vector<32x512xf32>
    %7 = arith.mulf %5, %6 : vector<32x512xf32>
    %cst_5 = arith.constant 4.471500e-02 : f32
    %8 = vector.broadcast %cst_5 : f32 to vector<32x512xf32>
    %9 = arith.mulf %8, %7 : vector<32x512xf32>
    %10 = arith.addf %5, %9 : vector<32x512xf32>
    %cst_6 = arith.constant 0.797884583 : f32
    %11 = vector.broadcast %cst_6 : f32 to vector<32x512xf32>
    %12 = arith.mulf %11, %10 : vector<32x512xf32>
    %13 = math.tanh %12 : vector<32x512xf32>
    %cst_7 = arith.constant 1.000000e+00 : f32
    %14 = vector.broadcast %cst_7 : f32 to vector<32x512xf32>
    %15 = arith.addf %14, %13 : vector<32x512xf32>
    %cst_8 = arith.constant 5.000000e-01 : f32
    %16 = vector.broadcast %cst_8 : f32 to vector<32x512xf32>
    %17 = arith.mulf %16, %15 : vector<32x512xf32>
    %18 = arith.mulf %5, %17 : vector<32x512xf32>
    %c0_9 = arith.constant 0 : index
    %c0_10 = arith.constant 0 : index
    %19 = vector.load %arg5[%c0_9, %c0_10] : memref<32x512xf32, #tpu.memory_space<vmem>>, vector<32x512xf32>
    tpu.vector_store %arg5[%c0_9, %c0_10], %18 {strides = array<i32>} : memref<32x512xf32, #tpu.memory_space<vmem>>, vector<32x512xf32>,
    return
  }
  func.func @transform_0(%arg0: i32, %arg1: i32) -> (i32, i32) {
    %c0_i32 = arith.constant 0 : i32
    %c0_i32_0 = arith.constant 0 : i32
    return %arg0, %c0_i32 : i32, i32
  }
  func.func @transform_1(%arg0: i32, %arg1: i32) -> (i32, i32) {
    %c0_i32 = arith.constant 0 : i32
    %c0_i32_0 = arith.constant 0 : i32
    return %arg1, %c0_i32 : i32, i32
  }
  func.func @transform_2(%arg0: i32, %arg1: i32) -> (i32, i32) {
    %c0_i32 = arith.constant 0 : i32
    %c0_i32_0 = arith.constant 0 : i32
    return %c0_i32, %arg1 : i32, i32
  }
  func.func @transform_3(%arg0: i32, %arg1: i32) -> (i32, i32) {
    %c0_i32 = arith.constant 0 : i32
    return %arg0, %arg1 : i32, i32
  }
}

module attributes {stable_mosaic.version = 11 : i64} {
  func.func @_gated_residual_kernel(%arg0: i32, %arg1: i32, %arg2: memref<1x16x128xf32, #tpu.memory_space<vmem>>, %arg3: memref<1x16x128xf32, #tpu.memory_space<vmem>>, %arg4: memref<1x1x128xf32, #tpu.memory_space<vmem>>, %arg5: memref<1x16x128xf32, #tpu.memory_space<vmem>>) attributes {dimension_semantics = [#tpu.dimension_semantics<parallel>, #tpu.dimension_semantics<parallel>], iteration_bounds = array<i64: 2, 1>, scalar_prefetch = 0 : i64, scratch_operands = 0 : i64, tpu.core_type = #tpu.core_type<tc>, window_params = [{transform_indices = @transform_0, window_bounds = array<i64: 1, 16, 128>}, {transform_indices = @transform_1, window_bounds = array<i64: 1, 16, 128>}, {transform_indices = @transform_2, window_bounds = array<i64: 1, 1, 128>}, {transform_indices = @transform_3, window_bounds = array<i64: 1, 16, 128>}]} {
    %c0 = arith.constant 0 : index
    %c0_0 = arith.constant 0 : index
    %c0_1 = arith.constant 0 : index
    %0 = vector.load %arg2[%c0, %c0_0, %c0_1] : memref<1x16x128xf32, #tpu.memory_space<vmem>>, vector<1x16x128xf32>
    %c0_2 = arith.constant 0 : index
    %c0_3 = arith.constant 0 : index
    %c0_4 = arith.constant 0 : index
    %1 = vector.load %arg3[%c0_2, %c0_3, %c0_4] : memref<1x16x128xf32, #tpu.memory_space<vmem>>, vector<1x16x128xf32>
    %c0_5 = arith.constant 0 : index
    %c0_6 = arith.constant 0 : index
    %c0_7 = arith.constant 0 : index
    %2 = vector.load %arg4[%c0_5, %c0_6, %c0_7] : memref<1x1x128xf32, #tpu.memory_space<vmem>>, vector<1x1x128xf32>
    %3 = vector.broadcast %2 : vector<1x1x128xf32> to vector<1x16x128xf32>
    %4 = arith.mulf %3, %1 : vector<1x16x128xf32>
    %5 = arith.addf %0, %4 : vector<1x16x128xf32>
    %c0_8 = arith.constant 0 : index
    %c0_9 = arith.constant 0 : index
    %c0_10 = arith.constant 0 : index
    %6 = vector.load %arg5[%c0_8, %c0_9, %c0_10] : memref<1x16x128xf32, #tpu.memory_space<vmem>>, vector<1x16x128xf32>
    tpu.vector_store %arg5[%c0_8, %c0_9, %c0_10], %5 {strides = array<i32>} : memref<1x16x128xf32, #tpu.memory_space<vmem>>, vector<1x16x128xf32>,
    return
  }
  func.func @transform_0(%arg0: i32, %arg1: i32) -> (i32, i32, i32) {
    %c0_i32 = arith.constant 0 : i32
    %c0_i32_0 = arith.constant 0 : i32
    return %arg0, %arg1, %c0_i32 : i32, i32, i32
  }
  func.func @transform_1(%arg0: i32, %arg1: i32) -> (i32, i32, i32) {
    %c0_i32 = arith.constant 0 : i32
    %c0_i32_0 = arith.constant 0 : i32
    return %arg0, %arg1, %c0_i32 : i32, i32, i32
  }
  func.func @transform_2(%arg0: i32, %arg1: i32) -> (i32, i32, i32) {
    %c0_i32 = arith.constant 0 : i32
    %c0_i32_0 = arith.constant 0 : i32
    %c0_i32_1 = arith.constant 0 : i32
    return %arg0, %c0_i32, %c0_i32_0 : i32, i32, i32
  }
  func.func @transform_3(%arg0: i32, %arg1: i32) -> (i32, i32, i32) {
    %c0_i32 = arith.constant 0 : i32
    %c0_i32_0 = arith.constant 0 : i32
    return %arg0, %arg1, %c0_i32 : i32, i32, i32
  }
}

module attributes {stable_mosaic.version = 11 : i64} {
  func.func @_gated_residual_kernel(%arg0: i32, %arg1: i32, %arg2: memref<1x16x128xf32, #tpu.memory_space<vmem>>, %arg3: memref<1x16x128xf32, #tpu.memory_space<vmem>>, %arg4: memref<1x1x128xf32, #tpu.memory_space<vmem>>, %arg5: memref<1x16x128xf32, #tpu.memory_space<vmem>>) attributes {dimension_semantics = [#tpu.dimension_semantics<parallel>, #tpu.dimension_semantics<parallel>], iteration_bounds = array<i64: 2, 1>, scalar_prefetch = 0 : i64, scratch_operands = 0 : i64, tpu.core_type = #tpu.core_type<tc>, window_params = [{transform_indices = @transform_0, window_bounds = array<i64: 1, 16, 128>}, {transform_indices = @transform_1, window_bounds = array<i64: 1, 16, 128>}, {transform_indices = @transform_2, window_bounds = array<i64: 1, 1, 128>}, {transform_indices = @transform_3, window_bounds = array<i64: 1, 16, 128>}]} {
    %c0 = arith.constant 0 : index
    %c0_0 = arith.constant 0 : index
    %c0_1 = arith.constant 0 : index
    %0 = vector.load %arg2[%c0, %c0_0, %c0_1] : memref<1x16x128xf32, #tpu.memory_space<vmem>>, vector<1x16x128xf32>
    %c0_2 = arith.constant 0 : index
    %c0_3 = arith.constant 0 : index
    %c0_4 = arith.constant 0 : index
    %1 = vector.load %arg3[%c0_2, %c0_3, %c0_4] : memref<1x16x128xf32, #tpu.memory_space<vmem>>, vector<1x16x128xf32>
    %c0_5 = arith.constant 0 : index
    %c0_6 = arith.constant 0 : index
    %c0_7 = arith.constant 0 : index
    %2 = vector.load %arg4[%c0_5, %c0_6, %c0_7] : memref<1x1x128xf32, #tpu.memory_space<vmem>>, vector<1x1x128xf32>
    %3 = vector.broadcast %2 : vector<1x1x128xf32> to vector<1x16x128xf32>
    %4 = arith.mulf %3, %1 : vector<1x16x128xf32>
    %5 = arith.addf %0, %4 : vector<1x16x128xf32>
    %c0_8 = arith.constant 0 : index
    %c0_9 = arith.constant 0 : index
    %c0_10 = arith.constant 0 : index
    %6 = vector.load %arg5[%c0_8, %c0_9, %c0_10] : memref<1x16x128xf32, #tpu.memory_space<vmem>>, vector<1x16x128xf32>
    tpu.vector_store %arg5[%c0_8, %c0_9, %c0_10], %5 {strides = array<i32>} : memref<1x16x128xf32, #tpu.memory_space<vmem>>, vector<1x16x128xf32>,
    return
  }
  func.func @transform_0(%arg0: i32, %arg1: i32) -> (i32, i32, i32) {
    %c0_i32 = arith.constant 0 : i32
    %c0_i32_0 = arith.constant 0 : i32
    return %arg0, %arg1, %c0_i32 : i32, i32, i32
  }
  func.func @transform_1(%arg0: i32, %arg1: i32) -> (i32, i32, i32) {
    %c0_i32 = arith.constant 0 : i32
    %c0_i32_0 = arith.constant 0 : i32
    return %arg0, %arg1, %c0_i32 : i32, i32, i32
  }
  func.func @transform_2(%arg0: i32, %arg1: i32) -> (i32, i32, i32) {
    %c0_i32 = arith.constant 0 : i32
    %c0_i32_0 = arith.constant 0 : i32
    %c0_i32_1 = arith.constant 0 : i32
    return %arg0, %c0_i32, %c0_i32_0 : i32, i32, i32
  }
  func.func @transform_3(%arg0: i32, %arg1: i32) -> (i32, i32, i32) {
    %c0_i32 = arith.constant 0 : i32
    %c0_i32_0 = arith.constant 0 : i32
    return %arg0, %arg1, %c0_i32 : i32, i32, i32
  }
}

module attributes {stable_mosaic.version = 11 : i64} {
  func.func @kernel(%arg0: i32, %arg1: i32, %arg2: memref<32x512xf32, #tpu.memory_space<vmem>>, %arg3: memref<128x512xf32, #tpu.memory_space<vmem>>, %arg4: memref<1x128xf32, #tpu.memory_space<vmem>>, %arg5: memref<32x128xf32, #tpu.memory_space<vmem>>) attributes {dimension_semantics = [#tpu.dimension_semantics<parallel>, #tpu.dimension_semantics<parallel>], iteration_bounds = array<i64: 1, 1>, scalar_prefetch = 0 : i64, scratch_operands = 0 : i64, tpu.core_type = #tpu.core_type<tc>, window_params = [{transform_indices = @transform_0, window_bounds = array<i64: 32, 512>}, {transform_indices = @transform_1, window_bounds = array<i64: 128, 512>}, {transform_indices = @transform_2, window_bounds = array<i64: 1, 128>}, {transform_indices = @transform_3, window_bounds = array<i64: 32, 128>}]} {
    %c0 = arith.constant 0 : index
    %c0_0 = arith.constant 0 : index
    %0 = vector.load %arg2[%c0, %c0_0] : memref<32x512xf32, #tpu.memory_space<vmem>>, vector<32x512xf32>
    %c0_1 = arith.constant 0 : index
    %c0_2 = arith.constant 0 : index
    %1 = vector.load %arg3[%c0_1, %c0_2] : memref<128x512xf32, #tpu.memory_space<vmem>>, vector<128x512xf32>
    %cst = arith.constant dense<0.000000e+00> : vector<32x128xf32>
    %2 = tpu.matmul %0, %1, %cst {dimension_numbers = #tpu.dot_dimension_numbers<[1], [1], [0], [0], [0, 0, 1, 0], [], []>} : vector<32x512xf32>, vector<128x512xf32>, vector<32x128xf32> -> vector<32x128xf32>
    %c0_3 = arith.constant 0 : index
    %c0_4 = arith.constant 0 : index
    %3 = vector.load %arg4[%c0_3, %c0_4] : memref<1x128xf32, #tpu.memory_space<vmem>>, vector<1x128xf32>
    %4 = vector.broadcast %3 : vector<1x128xf32> to vector<32x128xf32>
    %5 = arith.addf %2, %4 : vector<32x128xf32>
    %c0_5 = arith.constant 0 : index
    %c0_6 = arith.constant 0 : index
    %6 = vector.load %arg5[%c0_5, %c0_6] : memref<32x128xf32, #tpu.memory_space<vmem>>, vector<32x128xf32>
    tpu.vector_store %arg5[%c0_5, %c0_6], %5 {strides = array<i32>} : memref<32x128xf32, #tpu.memory_space<vmem>>, vector<32x128xf32>,
    return
  }
  func.func @transform_0(%arg0: i32, %arg1: i32) -> (i32, i32) {
    %c0_i32 = arith.constant 0 : i32
    %c0_i32_0 = arith.constant 0 : i32
    return %arg0, %c0_i32 : i32, i32
  }
  func.func @transform_1(%arg0: i32, %arg1: i32) -> (i32, i32) {
    %c0_i32 = arith.constant 0 : i32
    %c0_i32_0 = arith.constant 0 : i32
    return %arg1, %c0_i32 : i32, i32
  }
  func.func @transform_2(%arg0: i32, %arg1: i32) -> (i32, i32) {
    %c0_i32 = arith.constant 0 : i32
    %c0_i32_0 = arith.constant 0 : i32
    return %c0_i32, %arg1 : i32, i32
  }
  func.func @transform_3(%arg0: i32, %arg1: i32) -> (i32, i32) {
    %c0_i32 = arith.constant 0 : i32
    return %arg0, %arg1 : i32, i32
  }
}

</mosaic_0001>

<llo_original>
// kernel: double_stream_block_forward.25
$region0: #{double_stream_block_forward.25}
  #allocation0 [shape = 'u32[]', space=smem, size = 0x4, offset = 0x4, fixed_abs, tag = 'smem constant byte address 0x4 - core index']
  #allocation1 [shape = 'u32[72,128]{1,0:T(1,128)}', space=vmem, size = 0x9000, scoped, tag = 'internal scratch']
  %s0 = inlined_call_operand.vmem [shape: f32[2,16,128], index: 0, kind: input, shape index: {}]
  %s1 = inlined_call_operand.vmem [shape: f32[2,1,128], index: 1, kind: input, shape index: {}]
  %s2 = inlined_call_operand.vmem [shape: f32[2,1,128], index: 2, kind: input, shape index: {}]
  %s3 = inlined_call_operand.vmem [shape: f32[2,16,128], index: 3, kind: output, shape index: {}]
  %s4 = sld [smem:[#allocation0]]
  $region45: #{double_stream_block_forward.25} parent=0
    _
  %s6 = ssub.s32 1, %s4
  %s7 = scalar_select 0, %s6, %s4
  loop: start=0, step=1, limit=4
  $region2: #{double_stream_block_forward.25} parent=0 // loop_pre_header
    _
  $region3: #{double_stream_block_forward.25} parent=0 // loop_header
    %s9 = sphi 0, %s13
    %p10 = scmp.ge.s32.totalorder %s9, 4
    %s16 = sphi 0, %s28
    %s17 = sphi 0, %s24
    %s18 = sphi 0, %s16
    %s19 = sphi 0, %s17
    %s20 = sphi 0, %s18
    %s21 = sphi 0, %s19
    %s33 = sphi 0, %s35
    %s36 = sphi 0, %s33
    %s37 = sphi 0, %s36
    %s53 = sphi 0, %s37
    %s59 = sphi 0, %s61
    %s62 = sphi 0, %s59
    %s63 = sphi 0, %s62
    %s79 = sphi 0, %s63
    %s85 = sphi 0, %s87
    %s88 = sphi 0, %s85
    %s89 = sphi 0, %s88
    %s105 = sphi 0, %s89
    %s113 = sphi 0, %s115
    %s116 = sphi 0, %s113
    %s117 = sphi 0, %s116
    %s133 = sphi 0, %s117
  $region4: #{double_stream_block_forward.25} parent=0 // loop_header_branch
    %12 = sbr.rel (%p10) target = $region8
  $region5: #{double_stream_block_forward.25} parent=0 // loop_body
    %s14 = ssub.s32 %s9, 1
    %s15 = ssub.s32 %s9, 2
    %s22 = sadd.s32 1, %s17
    %p23 = scmp.ge.s32.totalorder %s22, 1
    %s24 = scalar_select %p23, 0, %s22
    %s25 = sadd.s32 1, %s16
    %s26 = scalar_select %p23, %s25, %s16
    %p27 = scmp.ge.s32.totalorder %s26, 2
    %s28 = scalar_select %p27, 0, %s26
    %s29 = ssub.s32 %s16, %s28
    %s30 = ssub.s32 %s17, %s24
    %s31 = sor.u32 %s29, %s30
    %p32 = scmp.eq.s32.totalorder %s31, 0
    %s34 = sadd.s32 %s33, 1
    %s35 = scalar_select %p32, %s33, %s34
    %p38 = pneg %p32
    %p39 = scmp.eq.s32.totalorder %s9, 1
    %p40 = por %p38, %p39
    %p41 = scmp.ne.s32.totalorder %s33, %s36
    %p42 = scmp.eq.s32.totalorder %s9, 0
    %p43 = por %p41, %p42
    %p44 = scmp.ne.s32.totalorder %s33, %s36
    %p45 = scmp.eq.s32.totalorder %s14, 1
    %p46 = por %p44, %p45
    %p47 = scmp.ne.s32.totalorder %s36, %s37
    %p48 = scmp.eq.s32.totalorder %s14, 0
    %p49 = por %p47, %p48
    %p50 = scmp.ne.s32.totalorder %s36, %s37
    %p51 = scmp.eq.s32.totalorder %s15, 1
    %p52 = por %p50, %p51
    %p54 = scmp.ne.s32.totalorder %s37, %s53
    %p55 = scmp.eq.s32.totalorder %s15, 0
    %p56 = por %p54, %p55
    %s57 = ssub.s32 %s16, %s28
    %p58 = scmp.eq.s32.totalorder %s57, 0
    %s60 = sadd.s32 %s59, 1
    %s61 = scalar_select %p58, %s59, %s60
    %p64 = pneg %p58
    %p65 = scmp.eq.s32.totalorder %s9, 1
    %p66 = por %p64, %p65
    %p67 = scmp.ne.s32.totalorder %s59, %s62
    %p68 = scmp.eq.s32.totalorder %s9, 0
    %p69 = por %p67, %p68
    %p70 = scmp.ne.s32.totalorder %s59, %s62
    %p71 = scmp.eq.s32.totalorder %s14, 1
    %p72 = por %p70, %p71
    %p73 = scmp.ne.s32.totalorder %s62, %s63
    %p74 = scmp.eq.s32.totalorder %s14, 0
    %p75 = por %p73, %p74
    %p76 = scmp.ne.s32.totalorder %s62, %s63
    %p77 = scmp.eq.s32.totalorder %s15, 1
    %p78 = por %p76, %p77
    %p80 = scmp.ne.s32.totalorder %s63, %s79
    %p81 = scmp.eq.s32.totalorder %s15, 0
    %p82 = por %p80, %p81
    %s83 = ssub.s32 %s16, %s28
    %p84 = scmp.eq.s32.totalorder %s83, 0
    %s86 = sadd.s32 %s85, 1
    %s87 = scalar_select %p84, %s85, %s86
    %p90 = pneg %p84
    %p91 = scmp.eq.s32.totalorder %s9, 1
    %p92 = por %p90, %p91
    %p93 = scmp.ne.s32.totalorder %s85, %s88
    %p94 = scmp.eq.s32.totalorder %s9, 0
    %p95 = por %p93, %p94
    %p96 = scmp.ne.s32.totalorder %s85, %s88
    %p97 = scmp.eq.s32.totalorder %s14, 1
    %p98 = por %p96, %p97
    %p99 = scmp.ne.s32.totalorder %s88, %s89
    %p100 = scmp.eq.s32.totalorder %s14, 0
    %p101 = por %p99, %p100
    %p102 = scmp.ne.s32.totalorder %s88, %s89
    %p103 = scmp.eq.s32.totalorder %s15, 1
    %p104 = por %p102, %p103
    %p106 = scmp.ne.s32.totalorder %s89, %s105
    %p107 = scmp.eq.s32.totalorder %s15, 0
    %p108 = por %p106, %p107
    %s109 = ssub.s32 %s16, %s28
    %s110 = ssub.s32 %s17, %s24
    %s111 = sor.u32 %s109, %s110
    %p112 = scmp.eq.s32.totalorder %s111, 0
    %s114 = sadd.s32 %s113, 1
    %s115 = scalar_select %p112, %s113, %s114
    %p118 = pneg %p112
    %p119 = scmp.eq.s32.totalorder %s9, 1
    %p120 = por %p118, %p119
    %p121 = scmp.ne.s32.totalorder %s113, %s116
    %p122 = scmp.eq.s32.totalorder %s9, 0
    %p123 = por %p121, %p122
    %p124 = scmp.ne.s32.totalorder %s113, %s116
    %p125 = scmp.eq.s32.totalorder %s14, 1
    %p126 = por %p124, %p125
    %p127 = scmp.ne.s32.totalorder %s116, %s117
    %p128 = scmp.eq.s32.totalorder %s14, 0
    %p129 = por %p127, %p128
    %p130 = scmp.ne.s32.totalorder %s116, %s117
    %p131 = scmp.eq.s32.totalorder %s15, 1
    %p132 = por %p130, %p131
    %p134 = scmp.ne.s32.totalorder %s117, %s133
    %p135 = scmp.eq.s32.totalorder %s15, 0
    %p136 = por %p134, %p135
    %p137 = scmp.le.s32.totalorder 1, %s9
    %p138 = scmp.lt.s32.totalorder %s9, 3
    %p139 = pnand %p137, %p138
    %p140 = pneg %p139
    // Predicated region
    $region9: #{double_stream_block_forward.25} parent=5 // pred_check
      _
    $region10: #{double_stream_block_forward.25} parent=5 // pred_check_branch
      %142 = sbr.rel (%p139) target = $region12
    $region11: #{double_stream_block_forward.25} parent=5 // pred_region
      %s143 = ssub.s32 %s9, 1
    $region12: #{double_stream_block_forward.25} parent=5 // pred_fallthru
      _
    %p144 = scmp.lt.s32.totalorder %s9, 2
    // Predicated region
    $region13: #{double_stream_block_forward.25} parent=5 // pred_check
      %p145 = pneg %p144
    $region14: #{double_stream_block_forward.25} parent=5 // pred_check_branch
      %147 = sbr.rel (%p145) target = $region16
    $region15: #{double_stream_block_forward.25} parent=5 // pred_region
      // Predicated region
      $region17: #{double_stream_block_forward.25} parent=15 // pred_check
        %p148 = pneg %p43
      $region18: #{double_stream_block_forward.25} parent=15 // pred_check_branch
        %150 = sbr.rel (%p148) target = $region20
      $region19: #{double_stream_block_forward.25} parent=15 // pred_region
        %s151 = smul.u32 2, %s17
        %p152 = scmp.lt.s32.totalorder %s16, 1
        %s153 = scalar_select %p152, %s16, 1
        %p154 = scmp.lt.s32.totalorder %s151, 1
        %s155 = scalar_select %p154, %s151, 1
        %s156 = smul.addr %s153, 2
        %s157 = sadd.s32 %s155, %s156
        %s158 = smul.addr %s157, 8
        %s159 = scalar_lea.vmem %s0, %s158
        %s160 = smul.u32 2, %s17
      $region20: #{double_stream_block_forward.25} parent=15 // pred_fallthru
        _
      // Predicated region
      $region21: #{double_stream_block_forward.25} parent=15 // pred_check
        %p161 = pneg %p69
      $region22: #{double_stream_block_forward.25} parent=15 // pred_check_branch
        %163 = sbr.rel (%p161) target = $region24
      $region23: #{double_stream_block_forward.25} parent=15 // pred_region
        %p164 = scmp.lt.s32.totalorder %s16, 1
        %s165 = scalar_select %p164, %s16, 1
        %s166 = scalar_lea.vmem %s1, %s165
      $region24: #{double_stream_block_forward.25} parent=15 // pred_fallthru
        _
      // Predicated region
      $region25: #{double_stream_block_forward.25} parent=15 // pred_check
        %p167 = pneg %p95
      $region26: #{double_stream_block_forward.25} parent=15 // pred_check_branch
        %169 = sbr.rel (%p167) target = $region28
      $region27: #{double_stream_block_forward.25} parent=15 // pred_region
        %p170 = scmp.lt.s32.totalorder %s16, 1
        %s171 = scalar_select %p170, %s16, 1
        %s172 = scalar_lea.vmem %s2, %s171
      $region28: #{double_stream_block_forward.25} parent=15 // pred_fallthru
        _
    $region16: #{double_stream_block_forward.25} parent=5 // pred_fallthru
      _
    %p173 = scmp.le.s32.totalorder 1, %s9
    %p174 = scmp.lt.s32.totalorder %s9, 3
    %p175 = pnand %p173, %p174
    %p176 = pneg %p175
    // Predicated region
    $region29: #{double_stream_block_forward.25} parent=5 // pred_check
      _
    $region30: #{double_stream_block_forward.25} parent=5 // pred_check_branch
      %178 = sbr.rel (%p175) target = $region32
    $region31: #{double_stream_block_forward.25} parent=5 // pred_region
      %s179 = ssub.s32 %s9, 1
      %s180 = smul.u32 2, %s19
      %p181 = scmp.lt.s32.totalorder %s18, 1
      %s182 = scalar_select %p181, %s18, 1
      %p183 = scmp.lt.s32.totalorder %s180, 1
      %s184 = scalar_select %p183, %s180, 1
      %s185 = smul.addr %s182, 2
      %s186 = sadd.s32 %s184, %s185
      %s187 = smul.addr %s186, 8
      %s188 = scalar_lea.vmem %s0, %s187
      %p189 = pneg %p49
      %p190 = pneg %p46
      %p191 = scmp.lt.s32.totalorder %s18, 1
      %s192 = scalar_select %p191, %s18, 1
      %s193 = scalar_lea.vmem %s1, %s192
      %p194 = pneg %p75
      %p195 = pneg %p72
      %p196 = scmp.lt.s32.totalorder %s18, 1
      %s197 = scalar_select %p196, %s18, 1
      %s198 = scalar_lea.vmem %s2, %s197
      %p199 = pneg %p101
      %p200 = pneg %p98
      %p201 = pneg %p129
      %p202 = pneg %p126
      %s203 = smul.u32 2, %s19
      %p204 = scmp.lt.s32.totalorder %s18, 1
      %s205 = scalar_select %p204, %s18, 1
      %p206 = scmp.lt.s32.totalorder %s203, 1
      %s207 = scalar_select %p206, %s203, 1
      %s208 = smul.addr %s205, 2
      %s209 = sadd.s32 %s207, %s208
      %s210 = smul.addr %s209, 8
      %s211 = scalar_lea.vmem %s3, %s210
      %s212 = smul.u32 2, %s19
      %p213 = scmp.lt.s32.totalorder %s18, 1
      %s214 = scalar_select %p213, %s18, 1
      %p215 = scmp.lt.s32.totalorder %s212, 1
      %s216 = scalar_select %p215, %s212, 1
      %s217 = smul.addr %s214, 2
      %s218 = sadd.s32 %s216, %s217
      %s219 = smul.addr %s218, 8
      %s220 = scalar_lea.vmem %s0, %s219
      %s221 = smul.u32 2, %s19
      %p222 = scmp.lt.s32.totalorder %s18, 1
      %s223 = scalar_select %p222, %s18, 1
      %s224 = scalar_lea.vmem %s1, %s223
      %p225 = scmp.lt.s32.totalorder %s18, 1
      %s226 = scalar_select %p225, %s18, 1
      %s227 = scalar_lea.vmem %s2, %s226
      %s228 = smul.u32 2, %s19
      %p229 = scmp.lt.s32.totalorder %s18, 1
      %s230 = scalar_select %p229, %s18, 1
      %p231 = scmp.lt.s32.totalorder %s228, 1
      %s232 = scalar_select %p231, %s228, 1
      %s233 = smul.addr %s230, 2
      %s234 = sadd.s32 %s232, %s233
      %s235 = smul.addr %s234, 8
      %s236 = scalar_lea.vmem %s3, %s235
      %s237 = smul.u32 2, %s19
      %v238 = vld [vmem:[%s220] sm:$0xff]
      %v239 = vld [vmem:[%s220 + $0x8] sm:$0xff]
      %240 = vadd.xlane.f32.xlu0 %v238
      %v241 = vpop.xlane.xlu0 %240
      %242 = vadd.xlane.f32.xlu0 %v239
      %v243 = vpop.xlane.xlu0 %242
      %v244 = vrcp.pop 128.0
      %v245 = vmul.f32 128.0, %v244
      %v246 = vsub.f32 1.0, %v245
      %v247 = vmul.f32 %v244, %v246
      %v248 = vadd.f32 %v244, %v247
      %vm249 = vweird.f32 %v244
      %v250 = vsel %vm249, %v244, %v248
      %v251 = vmul.f32 %v241, %v250
      %v252 = vmul.f32 %v243, %v250
      %v253 = vsub.f32 %v238, %v251
      %v254 = vsub.f32 %v239, %v252
      %v255 = vmul.f32 %v253, %v253
      %v256 = vmul.f32 %v254, %v254
      %257 = vadd.xlane.f32.xlu0 %v255
      %v258 = vpop.xlane.xlu0 %257
      %259 = vadd.xlane.f32.xlu0 %v256
      %v260 = vpop.xlane.xlu0 %259
      %v261 = vmul.f32 %v258, %v250
      %v262 = vmul.f32 %v260, %v250
      %v263 = vadd.f32 %v261, 1e-06
      %v264 = vadd.f32 %v262, 1e-06
      %v265 = vrsqrt.pop %v263
      %v266 = vmul.f32 %v265, %v263
      %v267 = vmul.f32 %v266, %v265
      %v268 = vmul.f32 0.5, %v267
      %v269 = vsub.f32 1.5, %v268
      %v270 = vmul.f32 %v265, %v269
      %vm271 = vweird.f32 %v263
      %vm272 = vweird.f32 %v265
      %vm273 = vmor %vm271, %vm272
      %v274 = vsel %vm273, %v265, %v270
      %v275 = vrsqrt.pop %v264
      %v276 = vmul.f32 %v275, %v264
      %v277 = vmul.f32 %v276, %v275
      %v278 = vmul.f32 0.5, %v277
      %v279 = vsub.f32 1.5, %v278
      %v280 = vmul.f32 %v275, %v279
      %vm281 = vweird.f32 %v264
      %vm282 = vweird.f32 %v275
      %vm283 = vmor %vm281, %vm282
      %v284 = vsel %vm283, %v275, %v280
      %v285 = vmul.f32 %v253, %v274
      %v286 = vmul.f32 %v254, %v284
      %v287 = vld [vmem:[%s224] sm:$0x1]
      %v288 = vadd.f32 %v287, 1.0
      %v290 = vperm.slane %v288, 0
      %v292 = vmul.f32 %v290, %v285
      %v293 = vmul.f32 %v290, %v286
      %v294 = vld [vmem:[%s227] sm:$0x1]
      %v296 = vperm.slane %v294, 0
      %v298 = vadd.f32 %v292, %v296
      %v299 = vadd.f32 %v293, %v296
      %300 = vst [vmem:[%s236] sm:$0xff] %v298
      %301 = vst [vmem:[%s236 + $0x8] sm:$0xff] %v299
      %s302 = smul.u32 2, %s19
      %p303 = scmp.lt.s32.totalorder %s18, 1
      %s304 = scalar_select %p303, %s18, 1
      %p305 = scmp.lt.s32.totalorder %s302, 1
      %s306 = scalar_select %p305, %s302, 1
      %s307 = smul.addr %s304, 2
      %s308 = sadd.s32 %s306, %s307
      %s309 = smul.addr %s308, 8
      %s310 = scalar_lea.vmem %s3, %s309
      // Predicated region
      $region33: #{double_stream_block_forward.25} parent=31 // pred_check
        %p311 = pneg %p126
      $region34: #{double_stream_block_forward.25} parent=31 // pred_check_branch
        %313 = sbr.rel (%p311) target = $region36
      $region35: #{double_stream_block_forward.25} parent=31 // pred_region
        %s314 = smul.u32 2, %s19
      $region36: #{double_stream_block_forward.25} parent=31 // pred_fallthru
        _
    $region32: #{double_stream_block_forward.25} parent=5 // pred_fallthru
      _
    %p315 = scmp.le.s32.totalorder 2, %s9
    // Predicated region
    $region37: #{double_stream_block_forward.25} parent=5 // pred_check
      %p316 = pneg %p315
    $region38: #{double_stream_block_forward.25} parent=5 // pred_check_branch
      %318 = sbr.rel (%p316) target = $region40
    $region39: #{double_stream_block_forward.25} parent=5 // pred_region
      %s319 = ssub.s32 %s9, 2
      // Predicated region
      $region41: #{double_stream_block_forward.25} parent=39 // pred_check
        %p320 = pneg %p132
      $region42: #{double_stream_block_forward.25} parent=39 // pred_check_branch
        %322 = sbr.rel (%p320) target = $region44
      $region43: #{double_stream_block_forward.25} parent=39 // pred_region
        %s323 = smul.u32 2, %s21
        %p324 = scmp.lt.s32.totalorder %s20, 1
        %s325 = scalar_select %p324, %s20, 1
        %p326 = scmp.lt.s32.totalorder %s323, 1
        %s327 = scalar_select %p326, %s323, 1
        %s328 = smul.addr %s325, 2
        %s329 = sadd.s32 %s327, %s328
        %s330 = smul.addr %s329, 8
        %s331 = scalar_lea.vmem %s3, %s330
      $region44: #{double_stream_block_forward.25} parent=39 // pred_fallthru
        _
    $region40: #{double_stream_block_forward.25} parent=5 // pred_fallthru
      _
  $region6: #{double_stream_block_forward.25} parent=0 // loop_footer
    %s13 = sadd.s32 1, %s9
  $region7: #{double_stream_block_forward.25} parent=0 // loop_footer_branch
    %8 = sbr.rel target = $region3
  $region8: #{double_stream_block_forward.25} parent=0 // loop_exit
    _

// kernel: double_stream_block_forward.26
$region0: #{double_stream_block_forward.26}
  #allocation0 [shape = 'u32[]', space=smem, size = 0x4, offset = 0x4, fixed_abs, tag = 'smem constant byte address 0x4 - core index']
  #allocation1 [shape = 'u32[72,128]{1,0:T(1,128)}', space=vmem, size = 0x9000, scoped, tag = 'internal scratch']
  %s0 = inlined_call_operand.vmem [shape: f32[32,128], index: 0, kind: input, shape index: {}]
  %s1 = inlined_call_operand.vmem [shape: f32[384,128], index: 1, kind: input, shape index: {}]
  %s2 = inlined_call_operand.vmem [shape: f32[1,384], index: 2, kind: input, shape index: {}]
  %s3 = inlined_call_operand.vmem [shape: f32[32,384], index: 3, kind: output, shape index: {}]
  %s4 = sld [smem:[#allocation0]]
  $region22: #{double_stream_block_forward.26} parent=0
    _
  %s6 = ssub.s32 1, %s4
  %s7 = scalar_select 0, %s6, %s4
  // Predicated region
  $region2: #{double_stream_block_forward.26} parent=0 // pred_check
    _
  $region3: #{double_stream_block_forward.26} parent=0 // pred_check_branch
    %9 = sbr.rel (0) target = $region5
  $region4: #{double_stream_block_forward.26} parent=0 // pred_region
    _
  $region5: #{double_stream_block_forward.26} parent=0 // pred_fallthru
    _
  // Predicated region
  $region6: #{double_stream_block_forward.26} parent=0 // pred_check
    _
  $region7: #{double_stream_block_forward.26} parent=0 // pred_check_branch
    %11 = sbr.rel (0) target = $region9
  $region8: #{double_stream_block_forward.26} parent=0 // pred_region
    _
  $region9: #{double_stream_block_forward.26} parent=0 // pred_fallthru
    _
  // Predicated region
  $region10: #{double_stream_block_forward.26} parent=0 // pred_check
    _
  $region11: #{double_stream_block_forward.26} parent=0 // pred_check_branch
    %13 = sbr.rel (0) target = $region13
  $region12: #{double_stream_block_forward.26} parent=0 // pred_region
    _
  $region13: #{double_stream_block_forward.26} parent=0 // pred_fallthru
    _
  %v14 = vld [vmem:[%s0] sm:$0xff]
  %v15 = vld [vmem:[%s0 + $0x8] sm:$0xff]
  %v16 = vld [vmem:[%s0 + $0x10] sm:$0xff]
  %v17 = vld [vmem:[%s0 + $0x18] sm:$0xff]
  %v18 = vld [vmem:[%s1] sm:$0xff]
  %v19 = vld [vmem:[%s1 + $0x8] sm:$0xff]
  %v20 = vld [vmem:[%s1 + $0x10] sm:$0xff]
  %v21 = vld [vmem:[%s1 + $0x18] sm:$0xff]
  %v22 = vld [vmem:[%s1 + $0x20] sm:$0xff]
  %v23 = vld [vmem:[%s1 + $0x28] sm:$0xff]
  %v24 = vld [vmem:[%s1 + $0x30] sm:$0xff]
  %v25 = vld [vmem:[%s1 + $0x38] sm:$0xff]
  %v26 = vld [vmem:[%s1 + $0x40] sm:$0xff]
  %v27 = vld [vmem:[%s1 + $0x48] sm:$0xff]
  %v28 = vld [vmem:[%s1 + $0x50] sm:$0xff]
  %v29 = vld [vmem:[%s1 + $0x58] sm:$0xff]
  %v30 = vld [vmem:[%s1 + $0x60] sm:$0xff]
  %v31 = vld [vmem:[%s1 + $0x68] sm:$0xff]
  %v32 = vld [vmem:[%s1 + $0x70] sm:$0xff]
  %v33 = vld [vmem:[%s1 + $0x78] sm:$0xff]
  %v34 = vld [vmem:[%s1 + $0x80] sm:$0xff]
  %v35 = vld [vmem:[%s1 + $0x88] sm:$0xff]
  %v36 = vld [vmem:[%s1 + $0x90] sm:$0xff]
  %v37 = vld [vmem:[%s1 + $0x98] sm:$0xff]
  %v38 = vld [vmem:[%s1 + $0xa0] sm:$0xff]
  %v39 = vld [vmem:[%s1 + $0xa8] sm:$0xff]
  %v40 = vld [vmem:[%s1 + $0xb0] sm:$0xff]
  %v41 = vld [vmem:[%s1 + $0xb8] sm:$0xff]
  %v42 = vld [vmem:[%s1 + $0xc0] sm:$0xff]
  %v43 = vld [vmem:[%s1 + $0xc8] sm:$0xff]
  %v44 = vld [vmem:[%s1 + $0xd0] sm:$0xff]
  %v45 = vld [vmem:[%s1 + $0xd8] sm:$0xff]
  %v46 = vld [vmem:[%s1 + $0xe0] sm:$0xff]
  %v47 = vld [vmem:[%s1 + $0xe8] sm:$0xff]
  %v48 = vld [vmem:[%s1 + $0xf0] sm:$0xff]
  %v49 = vld [vmem:[%s1 + $0xf8] sm:$0xff]
  %v50 = vld [vmem:[%s1 + $0x100] sm:$0xff]
  %v51 = vld [vmem:[%s1 + $0x108] sm:$0xff]
  %v52 = vld [vmem:[%s1 + $0x110] sm:$0xff]
  %v53 = vld [vmem:[%s1 + $0x118] sm:$0xff]
  %v54 = vld [vmem:[%s1 + $0x120] sm:$0xff]
  %v55 = vld [vmem:[%s1 + $0x128] sm:$0xff]
  %v56 = vld [vmem:[%s1 + $0x130] sm:$0xff]
  %v57 = vld [vmem:[%s1 + $0x138] sm:$0xff]
  %v58 = vld [vmem:[%s1 + $0x140] sm:$0xff]
  %v59 = vld [vmem:[%s1 + $0x148] sm:$0xff]
  %v60 = vld [vmem:[%s1 + $0x150] sm:$0xff]
  %v61 = vld [vmem:[%s1 + $0x158] sm:$0xff]
  %v62 = vld [vmem:[%s1 + $0x160] sm:$0xff]
  %v63 = vld [vmem:[%s1 + $0x168] sm:$0xff]
  %v64 = vld [vmem:[%s1 + $0x170] sm:$0xff]
  %v65 = vld [vmem:[%s1 + $0x178] sm:$0xff]
  %v66 = vld [vmem:[%s2] sm:$0x7]
  %v68 = vperm.slane %v66, 0
  %v69 = vperm.slane %v66, 1
  %v70 = vperm.slane %v66, 2
  %74 = vmatpush.xpose.msra.mxu0 %v33
  %75 = vmatpush.xpose.msra.mxu0 %v32
  %76 = vmatpush.xpose.msra.mxu0 %v31
  %77 = vmatpush.xpose.msra.mxu0 %v30
  %78 = vmatpush.xpose.msra.mxu0 %v29
  %79 = vmatpush.xpose.msra.mxu0 %v28
  %80 = vmatpush.xpose.msra.mxu0 %v27
  %81 = vmatpush.xpose.msra.mxu0 %v26
  %82 = vmatpush.xpose.msra.mxu0 %v25
  %83 = vmatpush.xpose.msra.mxu0 %v24
  %84 = vmatpush.xpose.msra.mxu0 %v23
  %85 = vmatpush.xpose.msra.mxu0 %v22
  %86 = vmatpush.xpose.msra.mxu0 %v21
  %87 = vmatpush.xpose.msra.mxu0 %v20
  %88 = vmatpush.xpose.msra.mxu0 %v19
  %89 = vmatpush.xpose.msra.mxu0 %v18
  %90 = vmatmul.f32.gmra.mxu0 %v14
  %v91 = vpop.f32.mrf.mxu0
  %v92 = vadd.f32 %v68, %v91
  %93 = vmatmul.f32.gmra.mxu0 %v15
  %v94 = vpop.f32.mrf.mxu0
  %v95 = vadd.f32 %v68, %v94
  %96 = vmatmul.f32.gmra.mxu0 %v16
  %v97 = vpop.f32.mrf.mxu0
  %v98 = vadd.f32 %v68, %v97
  %99 = vmatmul.f32.gmra.mxu0 %v17
  %v100 = vpop.f32.mrf.mxu0
  %v101 = vadd.f32 %v68, %v100
  %102 = vdwg.mxu0
  %103 = vmatpush.xpose.msra.mxu0 %v49
  %104 = vmatpush.xpose.msra.mxu0 %v48
  %105 = vmatpush.xpose.msra.mxu0 %v47
  %106 = vmatpush.xpose.msra.mxu0 %v46
  %107 = vmatpush.xpose.msra.mxu0 %v45
  %108 = vmatpush.xpose.msra.mxu0 %v44
  %109 = vmatpush.xpose.msra.mxu0 %v43
  %110 = vmatpush.xpose.msra.mxu0 %v42
  %111 = vmatpush.xpose.msra.mxu0 %v41
  %112 = vmatpush.xpose.msra.mxu0 %v40
  %113 = vmatpush.xpose.msra.mxu0 %v39
  %114 = vmatpush.xpose.msra.mxu0 %v38
  %115 = vmatpush.xpose.msra.mxu0 %v37
  %116 = vmatpush.xpose.msra.mxu0 %v36
  %117 = vmatpush.xpose.msra.mxu0 %v35
  %118 = vmatpush.xpose.msra.mxu0 %v34
  %119 = vmatmul.f32.gmra.mxu0 %v14
  %v120 = vpop.f32.mrf.mxu0
  %v121 = vadd.f32 %v69, %v120
  %122 = vmatmul.f32.gmra.mxu0 %v15
  %v123 = vpop.f32.mrf.mxu0
  %v124 = vadd.f32 %v69, %v123
  %125 = vmatmul.f32.gmra.mxu0 %v16
  %v126 = vpop.f32.mrf.mxu0
  %v127 = vadd.f32 %v69, %v126
  %128 = vmatmul.f32.gmra.mxu0 %v17
  %v129 = vpop.f32.mrf.mxu0
  %v130 = vadd.f32 %v69, %v129
  %131 = vdwg.mxu0
  %132 = vmatpush.xpose.msra.mxu0 %v65
  %133 = vmatpush.xpose.msra.mxu0 %v64
  %134 = vmatpush.xpose.msra.mxu0 %v63
  %135 = vmatpush.xpose.msra.mxu0 %v62
  %136 = vmatpush.xpose.msra.mxu0 %v61
  %137 = vmatpush.xpose.msra.mxu0 %v60
  %138 = vmatpush.xpose.msra.mxu0 %v59
  %139 = vmatpush.xpose.msra.mxu0 %v58
  %140 = vmatpush.xpose.msra.mxu0 %v57
  %141 = vmatpush.xpose.msra.mxu0 %v56
  %142 = vmatpush.xpose.msra.mxu0 %v55
  %143 = vmatpush.xpose.msra.mxu0 %v54
  %144 = vmatpush.xpose.msra.mxu0 %v53
  %145 = vmatpush.xpose.msra.mxu0 %v52
  %146 = vmatpush.xpose.msra.mxu0 %v51
  %147 = vmatpush.xpose.msra.mxu0 %v50
  %148 = vmatmul.f32.gmra.mxu0 %v14
  %v149 = vpop.f32.mrf.mxu0
  %v150 = vadd.f32 %v70, %v149
  %151 = vmatmul.f32.gmra.mxu0 %v15
  %v152 = vpop.f32.mrf.mxu0
  %v153 = vadd.f32 %v70, %v152
  %154 = vmatmul.f32.gmra.mxu0 %v16
  %v155 = vpop.f32.mrf.mxu0
  %v156 = vadd.f32 %v70, %v155
  %157 = vmatmul.f32.gmra.mxu0 %v17
  %v158 = vpop.f32.mrf.mxu0
  %v159 = vadd.f32 %v70, %v158
  %160 = vdwg.mxu0
  %161 = vst [vmem:[%s3] sm:$0xff] %v92
  %162 = vst [vmem:[%s3 + $0x8] sm:$0xff] %v121
  %163 = vst [vmem:[%s3 + $0x10] sm:$0xff] %v150
  %164 = vst [vmem:[%s3 + $0x18] sm:$0xff] %v95
  %165 = vst [vmem:[%s3 + $0x20] sm:$0xff] %v124
  %166 = vst [vmem:[%s3 + $0x28] sm:$0xff] %v153
  %167 = vst [vmem:[%s3 + $0x30] sm:$0xff] %v98
  %168 = vst [vmem:[%s3 + $0x38] sm:$0xff] %v127
  %169 = vst [vmem:[%s3 + $0x40] sm:$0xff] %v156
  %170 = vst [vmem:[%s3 + $0x48] sm:$0xff] %v101
  %171 = vst [vmem:[%s3 + $0x50] sm:$0xff] %v130
  %172 = vst [vmem:[%s3 + $0x58] sm:$0xff] %v159
  // Predicated region
  $region14: #{double_stream_block_forward.26} parent=0 // pred_check
    _
  $region15: #{double_stream_block_forward.26} parent=0 // pred_check_branch
    %174 = sbr.rel (0) target = $region17
  $region16: #{double_stream_block_forward.26} parent=0 // pred_region
    _
  $region17: #{double_stream_block_forward.26} parent=0 // pred_fallthru
    _
  // Predicated region
  $region18: #{double_stream_block_forward.26} parent=0 // pred_check
    _
  $region19: #{double_stream_block_forward.26} parent=0 // pred_check_branch
    %176 = sbr.rel (0) target = $region21
  $region20: #{double_stream_block_forward.26} parent=0 // pred_region
    _
  $region21: #{double_stream_block_forward.26} parent=0 // pred_fallthru
    _

// kernel: double_stream_block_forward.23
$region0: #{double_stream_block_forward.23}
  #allocation0 [shape = 'u32[]', space=smem, size = 0x4, offset = 0x4, fixed_abs, tag = 'smem constant byte address 0x4 - core index']
  #allocation1 [shape = 'u32[72,128]{1,0:T(1,128)}', space=vmem, size = 0x9000, scoped, tag = 'internal scratch']
  %s0 = inlined_call_operand.vmem [shape: f32[2,128], index: 0, kind: input, shape index: {}]
  %s1 = inlined_call_operand.hbm [shape: f32[768,128], index: 1, kind: input, shape index: {}]
  %s2 = inlined_call_operand.vmem [shape: f32[1,768], index: 2, kind: input, shape index: {}]
  %s3 = inlined_call_operand.vmem [shape: f32[2,768], index: 3, kind: output, shape index: {}]
  %s4 = sld [smem:[#allocation0]]
  $region26: #{double_stream_block_forward.23} parent=0
    _
  %s6 = ssub.s32 1, %s4
  %s7 = scalar_select 0, %s6, %s4
  $region1: #{double_stream_block_forward.23} parent=0
    #allocation2 [shape = 'u8[393216]{0}', space=vmem, size = 0x60000, scoped, tag = 'input window, operand 1, single buffered']
    #allocation3 [shape = 's32[1]{0}', space=sflag, size = 0x4, scoped, tag = 'scoped memory for double_stream_block_forward.23']
    %8 = vsyncpa [#allocation3], 0
    // Predicated region
    $region2: #{double_stream_block_forward.23} parent=1 // pred_check
      _
    $region3: #{double_stream_block_forward.23} parent=1 // pred_check_branch
      %10 = sbr.rel (0) target = $region5
    $region4: #{double_stream_block_forward.23} parent=1 // pred_region
      _
    $region5: #{double_stream_block_forward.23} parent=1 // pred_fallthru
      _
    // Predicated region
    $region6: #{double_stream_block_forward.23} parent=1 // pred_check
      _
    $region7: #{double_stream_block_forward.23} parent=1 // pred_check_branch
      %12 = sbr.rel (0) target = $region9
    $region8: #{double_stream_block_forward.23} parent=1 // pred_region
      %14 = vsyncadd [#allocation3], 0
      %s15 = sshll.u32 %s1, 4
      %s16 = int_to_ptr.hbm [resolvable:$true] %s15
      %s17 = sshll.u32 [#allocation2], 4
      %s18 = int_to_ptr.vmem [resolvable:$true] %s17
      %23 = dma.hbm_to_vmem [thread:$0]  %s16, 12288, %s18, [#allocation3], 128, 128, 8
    $region9: #{double_stream_block_forward.23} parent=1 // pred_fallthru
      _
    // Predicated region
    $region10: #{double_stream_block_forward.23} parent=1 // pred_check
      _
    $region11: #{double_stream_block_forward.23} parent=1 // pred_check_branch
      %25 = sbr.rel (0) target = $region13
    $region12: #{double_stream_block_forward.23} parent=1 // pred_region
      _
    $region13: #{double_stream_block_forward.23} parent=1 // pred_fallthru
      _
    // Predicated region
    $region14: #{double_stream_block_forward.23} parent=1 // pred_check
      _
    $region15: #{double_stream_block_forward.23} parent=1 // pred_check_branch
      %27 = sbr.rel (0) target = $region17
    $region16: #{double_stream_block_forward.23} parent=1 // pred_region
      %29 = dma.done [#allocation3], 12288
    $region17: #{double_stream_block_forward.23} parent=1 // pred_fallthru
      _
    %v30 = vld [vmem:[%s0] sm:$0x3]
    %v31 = vxor.u32 %v30, 2147483648
    %v32 = vmul.f32 %v31, 1.442695
    %v33 = vpow.pop %v32
    %v34 = vadd.f32 %v33, 1.0
    %v35 = vrcp.pop %v34
    %v36 = vmul.f32 %v34, %v35
    %v37 = vsub.f32 1.0, %v36
    %v38 = vmul.f32 %v35, %v37
    %v39 = vadd.f32 %v35, %v38
    %vm40 = vweird.f32 %v34
    %vm41 = vweird.f32 %v35
    %vm42 = vmor %vm40, %vm41
    %v43 = vsel %vm42, %v35, %v39
    %v44 = vand.u32 2147483647, %v34
    %vm45 = vcmp.eq.f32.partialorder %v44, 8.507059e+37
    %v46 = vand.u32 %v34, 2147483648
    %v47 = vor.u32 1.1754944e-38, %v46
    %v48 = vsel %vm45, %v47, %v43
    %v49 = vmul.f32 1.0, %v48
    %v50 = vmul.f32 %v30, %v49
    %v51 = vld [vmem:[#allocation2] sm:$0xff]
    %v52 = vld [vmem:[#allocation2 + $0x8] sm:$0xff]
    %v53 = vld [vmem:[#allocation2 + $0x10] sm:$0xff]
    %v54 = vld [vmem:[#allocation2 + $0x18] sm:$0xff]
    %v55 = vld [vmem:[#allocation2 + $0x20] sm:$0xff]
    %v56 = vld [vmem:[#allocation2 + $0x28] sm:$0xff]
    %v57 = vld [vmem:[#allocation2 + $0x30] sm:$0xff]
    %v58 = vld [vmem:[#allocation2 + $0x38] sm:$0xff]
    %v59 = vld [vmem:[#allocation2 + $0x40] sm:$0xff]
    %v60 = vld [vmem:[#allocation2 + $0x48] sm:$0xff]
    %v61 = vld [vmem:[#allocation2 + $0x50] sm:$0xff]
    %v62 = vld [vmem:[#allocation2 + $0x58] sm:$0xff]
    %v63 = vld [vmem:[#allocation2 + $0x60] sm:$0xff]
    %v64 = vld [vmem:[#allocation2 + $0x68] sm:$0xff]
    %v65 = vld [vmem:[#allocation2 + $0x70] sm:$0xff]
    %v66 = vld [vmem:[#allocation2 + $0x78] sm:$0xff]
    %v67 = vld [vmem:[#allocation2 + $0x80] sm:$0xff]
    %v68 = vld [vmem:[#allocation2 + $0x88] sm:$0xff]
    %v69 = vld [vmem:[#allocation2 + $0x90] sm:$0xff]
    %v70 = vld [vmem:[#allocation2 + $0x98] sm:$0xff]
    %v71 = vld [vmem:[#allocation2 + $0xa0] sm:$0xff]
    %v72 = vld [vmem:[#allocation2 + $0xa8] sm:$0xff]
    %v73 = vld [vmem:[#allocation2 + $0xb0] sm:$0xff]
    %v74 = vld [vmem:[#allocation2 + $0xb8] sm:$0xff]
    %v75 = vld [vmem:[#allocation2 + $0xc0] sm:$0xff]
    %v76 = vld [vmem:[#allocation2 + $0xc8] sm:$0xff]
    %v77 = vld [vmem:[#allocation2 + $0xd0] sm:$0xff]
    %v78 = vld [vmem:[#allocation2 + $0xd8] sm:$0xff]
    %v79 = vld [vmem:[#allocation2 + $0xe0] sm:$0xff]
    %v80 = vld [vmem:[#allocation2 + $0xe8] sm:$0xff]
    %v81 = vld [vmem:[#allocation2 + $0xf0] sm:$0xff]
    %v82 = vld [vmem:[#allocation2 + $0xf8] sm:$0xff]
    %v83 = vld [vmem:[#allocation2 + $0x100] sm:$0xff]
    %v84 = vld [vmem:[#allocation2 + $0x108] sm:$0xff]
    %v85 = vld [vmem:[#allocation2 + $0x110] sm:$0xff]
    %v86 = vld [vmem:[#allocation2 + $0x118] sm:$0xff]
    %v87 = vld [vmem:[#allocation2 + $0x120] sm:$0xff]
    %v88 = vld [vmem:[#allocation2 + $0x128] sm:$0xff]
    %v89 = vld [vmem:[#allocation2 + $0x130] sm:$0xff]
    %v90 = vld [vmem:[#allocation2 + $0x138] sm:$0xff]
    %v91 = vld [vmem:[#allocation2 + $0x140] sm:$0xff]
    %v92 = vld [vmem:[#allocation2 + $0x148] sm:$0xff]
    %v93 = vld [vmem:[#allocation2 + $0x150] sm:$0xff]
    %v94 = vld [vmem:[#allocation2 + $0x158] sm:$0xff]
    %v95 = vld [vmem:[#allocation2 + $0x160] sm:$0xff]
    %v96 = vld [vmem:[#allocation2 + $0x168] sm:$0xff]
    %v97 = vld [vmem:[#allocation2 + $0x170] sm:$0xff]
    %v98 = vld [vmem:[#allocation2 + $0x178] sm:$0xff]
    %v99 = vld [vmem:[#allocation2 + $0x180] sm:$0xff]
    %v100 = vld [vmem:[#allocation2 + $0x188] sm:$0xff]
    %v101 = vld [vmem:[#allocation2 + $0x190] sm:$0xff]
    %v102 = vld [vmem:[#allocation2 + $0x198] sm:$0xff]
    %v103 = vld [vmem:[#allocation2 + $0x1a0] sm:$0xff]
    %v104 = vld [vmem:[#allocation2 + $0x1a8] sm:$0xff]
    %v105 = vld [vmem:[#allocation2 + $0x1b0] sm:$0xff]
    %v106 = vld [vmem:[#allocation2 + $0x1b8] sm:$0xff]
    %v107 = vld [vmem:[#allocation2 + $0x1c0] sm:$0xff]
    %v108 = vld [vmem:[#allocation2 + $0x1c8] sm:$0xff]
    %v109 = vld [vmem:[#allocation2 + $0x1d0] sm:$0xff]
    %v110 = vld [vmem:[#allocation2 + $0x1d8] sm:$0xff]
    %v111 = vld [vmem:[#allocation2 + $0x1e0] sm:$0xff]
    %v112 = vld [vmem:[#allocation2 + $0x1e8] sm:$0xff]
    %v113 = vld [vmem:[#allocation2 + $0x1f0] sm:$0xff]
    %v114 = vld [vmem:[#allocation2 + $0x1f8] sm:$0xff]
    %v115 = vld [vmem:[#allocation2 + $0x200] sm:$0xff]
    %v116 = vld [vmem:[#allocation2 + $0x208] sm:$0xff]
    %v117 = vld [vmem:[#allocation2 + $0x210] sm:$0xff]
    %v118 = vld [vmem:[#allocation2 + $0x218] sm:$0xff]
    %v119 = vld [vmem:[#allocation2 + $0x220] sm:$0xff]
    %v120 = vld [vmem:[#allocation2 + $0x228] sm:$0xff]
    %v121 = vld [vmem:[#allocation2 + $0x230] sm:$0xff]
    %v122 = vld [vmem:[#allocation2 + $0x238] sm:$0xff]
    %v123 = vld [vmem:[#allocation2 + $0x240] sm:$0xff]
    %v124 = vld [vmem:[#allocation2 + $0x248] sm:$0xff]
    %v125 = vld [vmem:[#allocation2 + $0x250] sm:$0xff]
    %v126 = vld [vmem:[#allocation2 + $0x258] sm:$0xff]
    %v127 = vld [vmem:[#allocation2 + $0x260] sm:$0xff]
    %v128 = vld [vmem:[#allocation2 + $0x268] sm:$0xff]
    %v129 = vld [vmem:[#allocation2 + $0x270] sm:$0xff]
    %v130 = vld [vmem:[#allocation2 + $0x278] sm:$0xff]
    %v131 = vld [vmem:[#allocation2 + $0x280] sm:$0xff]
    %v132 = vld [vmem:[#allocation2 + $0x288] sm:$0xff]
    %v133 = vld [vmem:[#allocation2 + $0x290] sm:$0xff]
    %v134 = vld [vmem:[#allocation2 + $0x298] sm:$0xff]
    %v135 = vld [vmem:[#allocation2 + $0x2a0] sm:$0xff]
    %v136 = vld [vmem:[#allocation2 + $0x2a8] sm:$0xff]
    %v137 = vld [vmem:[#allocation2 + $0x2b0] sm:$0xff]
    %v138 = vld [vmem:[#allocation2 + $0x2b8] sm:$0xff]
    %v139 = vld [vmem:[#allocation2 + $0x2c0] sm:$0xff]
    %v140 = vld [vmem:[#allocation2 + $0x2c8] sm:$0xff]
    %v141 = vld [vmem:[#allocation2 + $0x2d0] sm:$0xff]
    %v142 = vld [vmem:[#allocation2 + $0x2d8] sm:$0xff]
    %v143 = vld [vmem:[#allocation2 + $0x2e0] sm:$0xff]
    %v144 = vld [vmem:[#allocation2 + $0x2e8] sm:$0xff]
    %v145 = vld [vmem:[#allocation2 + $0x2f0] sm:$0xff]
    %v146 = vld [vmem:[#allocation2 + $0x2f8] sm:$0xff]
    %v147 = vld [vmem:[%s2] sm:$0x3f]
    %v149 = vperm.slane %v147, 0
    %v150 = vperm.slane %v147, 1
    %v151 = vperm.slane %v147, 2
    %v152 = vperm.slane %v147, 3
    %v153 = vperm.slane %v147, 4
    %v154 = vperm.slane %v147, 5
    %161 = vmatpush.xpose.msra.mxu0 %v66
    %162 = vmatpush.xpose.msra.mxu0 %v65
    %163 = vmatpush.xpose.msra.mxu0 %v64
    %164 = vmatpush.xpose.msra.mxu0 %v63
    %165 = vmatpush.xpose.msra.mxu0 %v62
    %166 = vmatpush.xpose.msra.mxu0 %v61
    %167 = vmatpush.xpose.msra.mxu0 %v60
    %168 = vmatpush.xpose.msra.mxu0 %v59
    %169 = vmatpush.xpose.msra.mxu0 %v58
    %170 = vmatpush.xpose.msra.mxu0 %v57
    %171 = vmatpush.xpose.msra.mxu0 %v56
    %172 = vmatpush.xpose.msra.mxu0 %v55
    %173 = vmatpush.xpose.msra.mxu0 %v54
    %174 = vmatpush.xpose.msra.mxu0 %v53
    %175 = vmatpush.xpose.msra.mxu0 %v52
    %176 = vmatpush.xpose.msra.mxu0 %v51
    %177 = vmatmul.f32.gmra.mxu0 %v50
    %v178 = vpop.f32.mrf.mxu0
    %v179 = vadd.f32 %v149, %v178
    %180 = vdwg.mxu0
    %181 = vmatpush.xpose.msra.mxu0 %v82
    %182 = vmatpush.xpose.msra.mxu0 %v81
    %183 = vmatpush.xpose.msra.mxu0 %v80
    %184 = vmatpush.xpose.msra.mxu0 %v79
    %185 = vmatpush.xpose.msra.mxu0 %v78
    %186 = vmatpush.xpose.msra.mxu0 %v77
    %187 = vmatpush.xpose.msra.mxu0 %v76
    %188 = vmatpush.xpose.msra.mxu0 %v75
    %189 = vmatpush.xpose.msra.mxu0 %v74
    %190 = vmatpush.xpose.msra.mxu0 %v73
    %191 = vmatpush.xpose.msra.mxu0 %v72
    %192 = vmatpush.xpose.msra.mxu0 %v71
    %193 = vmatpush.xpose.msra.mxu0 %v70
    %194 = vmatpush.xpose.msra.mxu0 %v69
    %195 = vmatpush.xpose.msra.mxu0 %v68
    %196 = vmatpush.xpose.msra.mxu0 %v67
    %197 = vmatmul.f32.gmra.mxu0 %v50
    %v198 = vpop.f32.mrf.mxu0
    %v199 = vadd.f32 %v150, %v198
    %200 = vdwg.mxu0
    %201 = vmatpush.xpose.msra.mxu0 %v98
    %202 = vmatpush.xpose.msra.mxu0 %v97
    %203 = vmatpush.xpose.msra.mxu0 %v96
    %204 = vmatpush.xpose.msra.mxu0 %v95
    %205 = vmatpush.xpose.msra.mxu0 %v94
    %206 = vmatpush.xpose.msra.mxu0 %v93
    %207 = vmatpush.xpose.msra.mxu0 %v92
    %208 = vmatpush.xpose.msra.mxu0 %v91
    %209 = vmatpush.xpose.msra.mxu0 %v90
    %210 = vmatpush.xpose.msra.mxu0 %v89
    %211 = vmatpush.xpose.msra.mxu0 %v88
    %212 = vmatpush.xpose.msra.mxu0 %v87
    %213 = vmatpush.xpose.msra.mxu0 %v86
    %214 = vmatpush.xpose.msra.mxu0 %v85
    %215 = vmatpush.xpose.msra.mxu0 %v84
    %216 = vmatpush.xpose.msra.mxu0 %v83
    %217 = vmatmul.f32.gmra.mxu0 %v50
    %v218 = vpop.f32.mrf.mxu0
    %v219 = vadd.f32 %v151, %v218
    %220 = vdwg.mxu0
    %221 = vmatpush.xpose.msra.mxu0 %v114
    %222 = vmatpush.xpose.msra.mxu0 %v113
    %223 = vmatpush.xpose.msra.mxu0 %v112
    %224 = vmatpush.xpose.msra.mxu0 %v111
    %225 = vmatpush.xpose.msra.mxu0 %v110
    %226 = vmatpush.xpose.msra.mxu0 %v109
    %227 = vmatpush.xpose.msra.mxu0 %v108
    %228 = vmatpush.xpose.msra.mxu0 %v107
    %229 = vmatpush.xpose.msra.mxu0 %v106
    %230 = vmatpush.xpose.msra.mxu0 %v105
    %231 = vmatpush.xpose.msra.mxu0 %v104
    %232 = vmatpush.xpose.msra.mxu0 %v103
    %233 = vmatpush.xpose.msra.mxu0 %v102
    %234 = vmatpush.xpose.msra.mxu0 %v101
    %235 = vmatpush.xpose.msra.mxu0 %v100
    %236 = vmatpush.xpose.msra.mxu0 %v99
    %237 = vmatmul.f32.gmra.mxu0 %v50
    %v238 = vpop.f32.mrf.mxu0
    %v239 = vadd.f32 %v152, %v238
    %240 = vdwg.mxu0
    %241 = vmatpush.xpose.msra.mxu0 %v130
    %242 = vmatpush.xpose.msra.mxu0 %v129
    %243 = vmatpush.xpose.msra.mxu0 %v128
    %244 = vmatpush.xpose.msra.mxu0 %v127
    %245 = vmatpush.xpose.msra.mxu0 %v126
    %246 = vmatpush.xpose.msra.mxu0 %v125
    %247 = vmatpush.xpose.msra.mxu0 %v124
    %248 = vmatpush.xpose.msra.mxu0 %v123
    %249 = vmatpush.xpose.msra.mxu0 %v122
    %250 = vmatpush.xpose.msra.mxu0 %v121
    %251 = vmatpush.xpose.msra.mxu0 %v120
    %252 = vmatpush.xpose.msra.mxu0 %v119
    %253 = vmatpush.xpose.msra.mxu0 %v118
    %254 = vmatpush.xpose.msra.mxu0 %v117
    %255 = vmatpush.xpose.msra.mxu0 %v116
    %256 = vmatpush.xpose.msra.mxu0 %v115
    %257 = vmatmul.f32.gmra.mxu0 %v50
    %v258 = vpop.f32.mrf.mxu0
    %v259 = vadd.f32 %v153, %v258
    %260 = vdwg.mxu0
    %261 = vmatpush.xpose.msra.mxu0 %v146
    %262 = vmatpush.xpose.msra.mxu0 %v145
    %263 = vmatpush.xpose.msra.mxu0 %v144
    %264 = vmatpush.xpose.msra.mxu0 %v143
    %265 = vmatpush.xpose.msra.mxu0 %v142
    %266 = vmatpush.xpose.msra.mxu0 %v141
    %267 = vmatpush.xpose.msra.mxu0 %v140
    %268 = vmatpush.xpose.msra.mxu0 %v139
    %269 = vmatpush.xpose.msra.mxu0 %v138
    %270 = vmatpush.xpose.msra.mxu0 %v137
    %271 = vmatpush.xpose.msra.mxu0 %v136
    %272 = vmatpush.xpose.msra.mxu0 %v135
    %273 = vmatpush.xpose.msra.mxu0 %v134
    %274 = vmatpush.xpose.msra.mxu0 %v133
    %275 = vmatpush.xpose.msra.mxu0 %v132
    %276 = vmatpush.xpose.msra.mxu0 %v131
    %277 = vmatmul.f32.gmra.mxu0 %v50
    %v278 = vpop.f32.mrf.mxu0
    %v279 = vadd.f32 %v154, %v278
    %280 = vdwg.mxu0
    %v287 = vrot.slane %v199, 6
    %v288 = vrot.slane %v219, 4
    %v289 = vrot.slane %v239, 2
    %v290 = vrot.slane %v279, 6
    %vm291 = vcmask 1041408
    %v292 = vsel %vm291, %v179, %v287
    %vm293 = vcmask 1045508
    %v294 = vsel %vm293, %v288, %v289
    %vm295 = vcmask 1043456
    %v296 = vsel %vm295, %v292, %v294
    %v297 = vsel %vm291, %v259, %v290
    %300 = vst [vmem:[%s3] sm:$0xff] %v296
    %301 = vst [vmem:[%s3 + $0x8] sm:$0xf] %v297
    // Predicated region
    $region18: #{double_stream_block_forward.23} parent=1 // pred_check
      _
    $region19: #{double_stream_block_forward.23} parent=1 // pred_check_branch
      %303 = sbr.rel (0) target = $region21
    $region20: #{double_stream_block_forward.23} parent=1 // pred_region
      _
    $region21: #{double_stream_block_forward.23} parent=1 // pred_fallthru
      _
    // Predicated region
    $region22: #{double_stream_block_forward.23} parent=1 // pred_check
      _
    $region23: #{double_stream_block_forward.23} parent=1 // pred_check_branch
      %305 = sbr.rel (0) target = $region25
    $region24: #{double_stream_block_forward.23} parent=1 // pred_region
      _
    $region25: #{double_stream_block_forward.23} parent=1 // pred_fallthru
      _
    %306 = vsyncpa [#allocation3], 1

// kernel: double_stream_block_forward.30
$region0: #{double_stream_block_forward.30}
  #allocation0 [shape = 'u32[]', space=smem, size = 0x4, offset = 0x4, fixed_abs, tag = 'smem constant byte address 0x4 - core index']
  #allocation1 [shape = 'u32[72,128]{1,0:T(1,128)}', space=vmem, size = 0x9000, scoped, tag = 'internal scratch']
  %s0 = inlined_call_operand.vmem [shape: f32[2,4,16,32], index: 0, kind: input, shape index: {}]
  %s1 = inlined_call_operand.vmem [shape: f32[1,32], index: 1, kind: input, shape index: {}]
  %s2 = inlined_call_operand.vmem [shape: f32[2,4,16,32], index: 2, kind: output, shape index: {}]
  %s3 = sld [smem:[#allocation0]]
  $region41: #{double_stream_block_forward.30} parent=0
    _
  %s5 = ssub.s32 1, %s3
  %s6 = scalar_select 0, %s5, %s3
  loop: start=0, step=1, limit=10
  $region2: #{double_stream_block_forward.30} parent=0 // loop_pre_header
    _
  $region3: #{double_stream_block_forward.30} parent=0 // loop_header
    %s8 = sphi 0, %s12
    %p9 = scmp.ge.s32.totalorder %s8, 10
    %s15 = sphi 0, %s27
    %s16 = sphi 0, %s23
    %s17 = sphi 0, %s15
    %s18 = sphi 0, %s16
    %s19 = sphi 0, %s17
    %s20 = sphi 0, %s18
    %s32 = sphi 0, %s34
    %s35 = sphi 0, %s32
    %s36 = sphi 0, %s35
    %s52 = sphi 0, %s36
    %s56 = sphi 0, %s56
    %s58 = sphi 0, %s56
    %s59 = sphi 0, %s58
    %s73 = sphi 0, %s59
    %s81 = sphi 0, %s83
    %s84 = sphi 0, %s81
    %s85 = sphi 0, %s84
    %s101 = sphi 0, %s85
  $region4: #{double_stream_block_forward.30} parent=0 // loop_header_branch
    %11 = sbr.rel (%p9) target = $region8
  $region5: #{double_stream_block_forward.30} parent=0 // loop_body
    %s13 = ssub.s32 %s8, 1
    %s14 = ssub.s32 %s8, 2
    %s21 = sadd.s32 1, %s16
    %p22 = scmp.ge.s32.totalorder %s21, 4
    %s23 = scalar_select %p22, 0, %s21
    %s24 = sadd.s32 1, %s15
    %s25 = scalar_select %p22, %s24, %s15
    %p26 = scmp.ge.s32.totalorder %s25, 2
    %s27 = scalar_select %p26, 0, %s25
    %s28 = ssub.s32 %s15, %s27
    %s29 = ssub.s32 %s16, %s23
    %s30 = sor.u32 %s28, %s29
    %p31 = scmp.eq.s32.totalorder %s30, 0
    %s33 = sadd.s32 %s32, 1
    %s34 = scalar_select %p31, %s32, %s33
    %p37 = pneg %p31
    %p38 = scmp.eq.s32.totalorder %s8, 7
    %p39 = por %p37, %p38
    %p40 = scmp.ne.s32.totalorder %s32, %s35
    %p41 = scmp.eq.s32.totalorder %s8, 0
    %p42 = por %p40, %p41
    %p43 = scmp.ne.s32.totalorder %s32, %s35
    %p44 = scmp.eq.s32.totalorder %s13, 7
    %p45 = por %p43, %p44
    %p46 = scmp.ne.s32.totalorder %s35, %s36
    %p47 = scmp.eq.s32.totalorder %s13, 0
    %p48 = por %p46, %p47
    %p49 = scmp.ne.s32.totalorder %s35, %s36
    %p50 = scmp.eq.s32.totalorder %s14, 7
    %p51 = por %p49, %p50
    %p53 = scmp.ne.s32.totalorder %s36, %s52
    %p54 = scmp.eq.s32.totalorder %s14, 0
    %p55 = por %p53, %p54
    %s57 = sadd.s32 %s56, 1
    %p60 = scmp.eq.s32.totalorder %s8, 7
    %p61 = scmp.ne.s32.totalorder %s56, %s58
    %p62 = scmp.eq.s32.totalorder %s8, 0
    %p63 = por %p61, %p62
    %p64 = scmp.ne.s32.totalorder %s56, %s58
    %p65 = scmp.eq.s32.totalorder %s13, 7
    %p66 = por %p64, %p65
    %p67 = scmp.ne.s32.totalorder %s58, %s59
    %p68 = scmp.eq.s32.totalorder %s13, 0
    %p69 = por %p67, %p68
    %p70 = scmp.ne.s32.totalorder %s58, %s59
    %p71 = scmp.eq.s32.totalorder %s14, 7
    %p72 = por %p70, %p71
    %p74 = scmp.ne.s32.totalorder %s59, %s73
    %p75 = scmp.eq.s32.totalorder %s14, 0
    %p76 = por %p74, %p75
    %s77 = ssub.s32 %s15, %s27
    %s78 = ssub.s32 %s16, %s23
    %s79 = sor.u32 %s77, %s78
    %p80 = scmp.eq.s32.totalorder %s79, 0
    %s82 = sadd.s32 %s81, 1
    %s83 = scalar_select %p80, %s81, %s82
    %p86 = pneg %p80
    %p87 = scmp.eq.s32.totalorder %s8, 7
    %p88 = por %p86, %p87
    %p89 = scmp.ne.s32.totalorder %s81, %s84
    %p90 = scmp.eq.s32.totalorder %s8, 0
    %p91 = por %p89, %p90
    %p92 = scmp.ne.s32.totalorder %s81, %s84
    %p93 = scmp.eq.s32.totalorder %s13, 7
    %p94 = por %p92, %p93
    %p95 = scmp.ne.s32.totalorder %s84, %s85
    %p96 = scmp.eq.s32.totalorder %s13, 0
    %p97 = por %p95, %p96
    %p98 = scmp.ne.s32.totalorder %s84, %s85
    %p99 = scmp.eq.s32.totalorder %s14, 7
    %p100 = por %p98, %p99
    %p102 = scmp.ne.s32.totalorder %s85, %s101
    %p103 = scmp.eq.s32.totalorder %s14, 0
    %p104 = por %p102, %p103
    %p105 = scmp.le.s32.totalorder 1, %s8
    %p106 = scmp.lt.s32.totalorder %s8, 9
    %p107 = pnand %p105, %p106
    %p108 = pneg %p107
    // Predicated region
    $region9: #{double_stream_block_forward.30} parent=5 // pred_check
      _
    $region10: #{double_stream_block_forward.30} parent=5 // pred_check_branch
      %110 = sbr.rel (%p107) target = $region12
    $region11: #{double_stream_block_forward.30} parent=5 // pred_region
      %s111 = ssub.s32 %s8, 1
      // Predicated region
      $region13: #{double_stream_block_forward.30} parent=11 // pred_check
        %p112 = pneg %p69
      $region14: #{double_stream_block_forward.30} parent=11 // pred_check_branch
        %114 = sbr.rel (%p112) target = $region16
      $region15: #{double_stream_block_forward.30} parent=11 // pred_region
        _
      $region16: #{double_stream_block_forward.30} parent=11 // pred_fallthru
        _
    $region12: #{double_stream_block_forward.30} parent=5 // pred_fallthru
      _
    %p115 = scmp.lt.s32.totalorder %s8, 8
    // Predicated region
    $region17: #{double_stream_block_forward.30} parent=5 // pred_check
      %p116 = pneg %p115
    $region18: #{double_stream_block_forward.30} parent=5 // pred_check_branch
      %118 = sbr.rel (%p116) target = $region20
    $region19: #{double_stream_block_forward.30} parent=5 // pred_region
      // Predicated region
      $region21: #{double_stream_block_forward.30} parent=19 // pred_check
        %p119 = pneg %p42
      $region22: #{double_stream_block_forward.30} parent=19 // pred_check_branch
        %121 = sbr.rel (%p119) target = $region24
      $region23: #{double_stream_block_forward.30} parent=19 // pred_region
        %p122 = scmp.lt.s32.totalorder %s15, 1
        %s123 = scalar_select %p122, %s15, 1
        %p124 = scmp.lt.s32.totalorder %s16, 3
        %s125 = scalar_select %p124, %s16, 3
        %s126 = smul.addr %s125, 2
        %s127 = smul.addr %s123, 8
        %s128 = sadd.s32 %s126, %s127
        %s129 = smul.addr %s128, 8
        %s130 = scalar_lea.vmem %s0, %s129
      $region24: #{double_stream_block_forward.30} parent=19 // pred_fallthru
        _
    $region20: #{double_stream_block_forward.30} parent=5 // pred_fallthru
      _
    %p131 = scmp.le.s32.totalorder 1, %s8
    %p132 = scmp.lt.s32.totalorder %s8, 9
    %p133 = pnand %p131, %p132
    %p134 = pneg %p133
    // Predicated region
    $region25: #{double_stream_block_forward.30} parent=5 // pred_check
      _
    $region26: #{double_stream_block_forward.30} parent=5 // pred_check_branch
      %136 = sbr.rel (%p133) target = $region28
    $region27: #{double_stream_block_forward.30} parent=5 // pred_region
      %s137 = ssub.s32 %s8, 1
      %p138 = scmp.lt.s32.totalorder %s17, 1
      %s139 = scalar_select %p138, %s17, 1
      %p140 = scmp.lt.s32.totalorder %s18, 3
      %s141 = scalar_select %p140, %s18, 3
      %s142 = smul.addr %s141, 2
      %s143 = smul.addr %s139, 8
      %s144 = sadd.s32 %s142, %s143
      %s145 = smul.addr %s144, 8
      %s146 = scalar_lea.vmem %s0, %s145
      %p147 = pneg %p48
      %p148 = pneg %p45
      %p149 = pneg %p69
      %p150 = pneg %p66
      %p151 = pneg %p97
      %p152 = pneg %p94
      %p153 = scmp.lt.s32.totalorder %s17, 1
      %s154 = scalar_select %p153, %s17, 1
      %p155 = scmp.lt.s32.totalorder %s18, 3
      %s156 = scalar_select %p155, %s18, 3
      %s157 = smul.addr %s156, 2
      %s158 = smul.addr %s154, 8
      %s159 = sadd.s32 %s157, %s158
      %s160 = smul.addr %s159, 8
      %s161 = scalar_lea.vmem %s2, %s160
      %p162 = scmp.lt.s32.totalorder %s17, 1
      %s163 = scalar_select %p162, %s17, 1
      %p164 = scmp.lt.s32.totalorder %s18, 3
      %s165 = scalar_select %p164, %s18, 3
      %s166 = smul.addr %s165, 2
      %s167 = smul.addr %s163, 8
      %s168 = sadd.s32 %s166, %s167
      %s169 = smul.addr %s168, 8
      %s170 = scalar_lea.vmem %s0, %s169
      %p171 = scmp.lt.s32.totalorder %s17, 1
      %s172 = scalar_select %p171, %s17, 1
      %p173 = scmp.lt.s32.totalorder %s18, 3
      %s174 = scalar_select %p173, %s18, 3
      %s175 = smul.addr %s174, 2
      %s176 = smul.addr %s172, 8
      %s177 = sadd.s32 %s175, %s176
      %s178 = smul.addr %s177, 8
      %s179 = scalar_lea.vmem %s2, %s178
      %v180 = vld [vmem:[%s170] sm:$0xff]
      %v181 = vld [vmem:[%s170 + $0x8] sm:$0xff]
      %v182 = vmul.f32 %v180, %v180
      %v183 = vmul.f32 %v181, %v181
      %vm184 = vcmask 261120
      %v185 = vsel %vm184, %v182, 0.0
      %186 = vadd.xlane.f32.xlu0 %v185
      %v187 = vpop.xlane.xlu0 %186
      %v188 = vsel %vm184, %v183, 0.0
      %189 = vadd.xlane.f32.xlu0 %v188
      %v190 = vpop.xlane.xlu0 %189
      %v191 = vrcp.pop 32.0
      %v192 = vmul.f32 32.0, %v191
      %v193 = vsub.f32 1.0, %v192
      %v194 = vmul.f32 %v191, %v193
      %v195 = vadd.f32 %v191, %v194
      %vm196 = vweird.f32 %v191
      %v197 = vsel %vm196, %v191, %v195
      %v198 = vmul.f32 %v187, %v197
      %v199 = vmul.f32 %v190, %v197
      %v200 = vadd.f32 %v198, 1e-06
      %v201 = vadd.f32 %v199, 1e-06
      %v202 = vrsqrt.pop %v200
      %v203 = vmul.f32 %v202, %v200
      %v204 = vmul.f32 %v203, %v202
      %v205 = vmul.f32 0.5, %v204
      %v206 = vsub.f32 1.5, %v205
      %v207 = vmul.f32 %v202, %v206
      %vm208 = vweird.f32 %v200
      %vm209 = vweird.f32 %v202
      %vm210 = vmor %vm208, %vm209
      %v211 = vsel %vm210, %v202, %v207
      %v212 = vrsqrt.pop %v201
      %v213 = vmul.f32 %v212, %v201
      %v214 = vmul.f32 %v213, %v212
      %v215 = vmul.f32 0.5, %v214
      %v216 = vsub.f32 1.5, %v215
      %v217 = vmul.f32 %v212, %v216
      %vm218 = vweird.f32 %v201
      %vm219 = vweird.f32 %v212
      %vm220 = vmor %vm218, %vm219
      %v221 = vsel %vm220, %v212, %v217
      %v222 = vmul.f32 %v180, %v211
      %v223 = vmul.f32 %v181, %v221
      %v224 = vld [vmem:[%s1] sm:$0x1]
      %v226 = vperm.slane %v224, 0
      %v228 = vmul.f32 %v222, %v226
      %v229 = vmul.f32 %v223, %v226
      %230 = vst.msk [vmem:[%s179] sm:$0xff] %vm184, %v228
      %231 = vst.msk [vmem:[%s179 + $0x8] sm:$0xff] %vm184, %v229
      %p232 = scmp.lt.s32.totalorder %s17, 1
      %s233 = scalar_select %p232, %s17, 1
      %p234 = scmp.lt.s32.totalorder %s18, 3
      %s235 = scalar_select %p234, %s18, 3
      %s236 = smul.addr %s235, 2
      %s237 = smul.addr %s233, 8
      %s238 = sadd.s32 %s236, %s237
      %s239 = smul.addr %s238, 8
      %s240 = scalar_lea.vmem %s2, %s239
      // Predicated region
      $region29: #{double_stream_block_forward.30} parent=27 // pred_check
        %p241 = pneg %p94
      $region30: #{double_stream_block_forward.30} parent=27 // pred_check_branch
        %243 = sbr.rel (%p241) target = $region32
      $region31: #{double_stream_block_forward.30} parent=27 // pred_region
        _
      $region32: #{double_stream_block_forward.30} parent=27 // pred_fallthru
        _
    $region28: #{double_stream_block_forward.30} parent=5 // pred_fallthru
      _
    %p244 = scmp.le.s32.totalorder 2, %s8
    // Predicated region
    $region33: #{double_stream_block_forward.30} parent=5 // pred_check
      %p245 = pneg %p244
    $region34: #{double_stream_block_forward.30} parent=5 // pred_check_branch
      %247 = sbr.rel (%p245) target = $region36
    $region35: #{double_stream_block_forward.30} parent=5 // pred_region
      %s248 = ssub.s32 %s8, 2
      // Predicated region
      $region37: #{double_stream_block_forward.30} parent=35 // pred_check
        %p249 = pneg %p100
      $region38: #{double_stream_block_forward.30} parent=35 // pred_check_branch
        %251 = sbr.rel (%p249) target = $region40
      $region39: #{double_stream_block_forward.30} parent=35 // pred_region
        %p252 = scmp.lt.s32.totalorder %s19, 1
        %s253 = scalar_select %p252, %s19, 1
        %p254 = scmp.lt.s32.totalorder %s20, 3
        %s255 = scalar_select %p254, %s20, 3
        %s256 = smul.addr %s255, 2
        %s257 = smul.addr %s253, 8
        %s258 = sadd.s32 %s256, %s257
        %s259 = smul.addr %s258, 8
        %s260 = scalar_lea.vmem %s2, %s259
      $region40: #{double_stream_block_forward.30} parent=35 // pred_fallthru
        _
    $region36: #{double_stream_block_forward.30} parent=5 // pred_fallthru
      _
  $region6: #{double_stream_block_forward.30} parent=0 // loop_footer
    %s12 = sadd.s32 1, %s8
  $region7: #{double_stream_block_forward.30} parent=0 // loop_footer_branch
    %7 = sbr.rel target = $region3
  $region8: #{double_stream_block_forward.30} parent=0 // loop_exit
    _

// kernel: double_stream_block_forward.28
$region0: #{double_stream_block_forward.28}
  #allocation0 [shape = 'u32[]', space=smem, size = 0x4, offset = 0x4, fixed_abs, tag = 'smem constant byte address 0x4 - core index']
  #allocation1 [shape = 'u32[72,128]{1,0:T(1,128)}', space=vmem, size = 0x9000, scoped, tag = 'internal scratch']
  %s0 = inlined_call_operand.vmem [shape: f32[16,128], index: 0, kind: input, shape index: {}]
  %s1 = inlined_call_operand.vmem [shape: f32[384,128], index: 1, kind: input, shape index: {}]
  %s2 = inlined_call_operand.vmem [shape: f32[1,384], index: 2, kind: input, shape index: {}]
  %s3 = inlined_call_operand.vmem [shape: f32[16,384], index: 3, kind: output, shape index: {}]
  %s4 = sld [smem:[#allocation0]]
  $region22: #{double_stream_block_forward.28} parent=0
    _
  %s6 = ssub.s32 1, %s4
  %s7 = scalar_select 0, %s6, %s4
  // Predicated region
  $region2: #{double_stream_block_forward.28} parent=0 // pred_check
    _
  $region3: #{double_stream_block_forward.28} parent=0 // pred_check_branch
    %9 = sbr.rel (0) target = $region5
  $region4: #{double_stream_block_forward.28} parent=0 // pred_region
    _
  $region5: #{double_stream_block_forward.28} parent=0 // pred_fallthru
    _
  // Predicated region
  $region6: #{double_stream_block_forward.28} parent=0 // pred_check
    _
  $region7: #{double_stream_block_forward.28} parent=0 // pred_check_branch
    %11 = sbr.rel (0) target = $region9
  $region8: #{double_stream_block_forward.28} parent=0 // pred_region
    _
  $region9: #{double_stream_block_forward.28} parent=0 // pred_fallthru
    _
  // Predicated region
  $region10: #{double_stream_block_forward.28} parent=0 // pred_check
    _
  $region11: #{double_stream_block_forward.28} parent=0 // pred_check_branch
    %13 = sbr.rel (0) target = $region13
  $region12: #{double_stream_block_forward.28} parent=0 // pred_region
    _
  $region13: #{double_stream_block_forward.28} parent=0 // pred_fallthru
    _
  %v14 = vld [vmem:[%s0] sm:$0xff]
  %v15 = vld [vmem:[%s0 + $0x8] sm:$0xff]
  %v16 = vld [vmem:[%s1] sm:$0xff]
  %v17 = vld [vmem:[%s1 + $0x8] sm:$0xff]
  %v18 = vld [vmem:[%s1 + $0x10] sm:$0xff]
  %v19 = vld [vmem:[%s1 + $0x18] sm:$0xff]
  %v20 = vld [vmem:[%s1 + $0x20] sm:$0xff]
  %v21 = vld [vmem:[%s1 + $0x28] sm:$0xff]
  %v22 = vld [vmem:[%s1 + $0x30] sm:$0xff]
  %v23 = vld [vmem:[%s1 + $0x38] sm:$0xff]
  %v24 = vld [vmem:[%s1 + $0x40] sm:$0xff]
  %v25 = vld [vmem:[%s1 + $0x48] sm:$0xff]
  %v26 = vld [vmem:[%s1 + $0x50] sm:$0xff]
  %v27 = vld [vmem:[%s1 + $0x58] sm:$0xff]
  %v28 = vld [vmem:[%s1 + $0x60] sm:$0xff]
  %v29 = vld [vmem:[%s1 + $0x68] sm:$0xff]
  %v30 = vld [vmem:[%s1 + $0x70] sm:$0xff]
  %v31 = vld [vmem:[%s1 + $0x78] sm:$0xff]
  %v32 = vld [vmem:[%s1 + $0x80] sm:$0xff]
  %v33 = vld [vmem:[%s1 + $0x88] sm:$0xff]
  %v34 = vld [vmem:[%s1 + $0x90] sm:$0xff]
  %v35 = vld [vmem:[%s1 + $0x98] sm:$0xff]
  %v36 = vld [vmem:[%s1 + $0xa0] sm:$0xff]
  %v37 = vld [vmem:[%s1 + $0xa8] sm:$0xff]
  %v38 = vld [vmem:[%s1 + $0xb0] sm:$0xff]
  %v39 = vld [vmem:[%s1 + $0xb8] sm:$0xff]
  %v40 = vld [vmem:[%s1 + $0xc0] sm:$0xff]
  %v41 = vld [vmem:[%s1 + $0xc8] sm:$0xff]
  %v42 = vld [vmem:[%s1 + $0xd0] sm:$0xff]
  %v43 = vld [vmem:[%s1 + $0xd8] sm:$0xff]
  %v44 = vld [vmem:[%s1 + $0xe0] sm:$0xff]
  %v45 = vld [vmem:[%s1 + $0xe8] sm:$0xff]
  %v46 = vld [vmem:[%s1 + $0xf0] sm:$0xff]
  %v47 = vld [vmem:[%s1 + $0xf8] sm:$0xff]
  %v48 = vld [vmem:[%s1 + $0x100] sm:$0xff]
  %v49 = vld [vmem:[%s1 + $0x108] sm:$0xff]
  %v50 = vld [vmem:[%s1 + $0x110] sm:$0xff]
  %v51 = vld [vmem:[%s1 + $0x118] sm:$0xff]
  %v52 = vld [vmem:[%s1 + $0x120] sm:$0xff]
  %v53 = vld [vmem:[%s1 + $0x128] sm:$0xff]
  %v54 = vld [vmem:[%s1 + $0x130] sm:$0xff]
  %v55 = vld [vmem:[%s1 + $0x138] sm:$0xff]
  %v56 = vld [vmem:[%s1 + $0x140] sm:$0xff]
  %v57 = vld [vmem:[%s1 + $0x148] sm:$0xff]
  %v58 = vld [vmem:[%s1 + $0x150] sm:$0xff]
  %v59 = vld [vmem:[%s1 + $0x158] sm:$0xff]
  %v60 = vld [vmem:[%s1 + $0x160] sm:$0xff]
  %v61 = vld [vmem:[%s1 + $0x168] sm:$0xff]
  %v62 = vld [vmem:[%s1 + $0x170] sm:$0xff]
  %v63 = vld [vmem:[%s1 + $0x178] sm:$0xff]
  %v64 = vld [vmem:[%s2] sm:$0x7]
  %v66 = vperm.slane %v64, 0
  %v67 = vperm.slane %v64, 1
  %v68 = vperm.slane %v64, 2
  %72 = vmatpush.xpose.msra.mxu0 %v31
  %73 = vmatpush.xpose.msra.mxu0 %v30
  %74 = vmatpush.xpose.msra.mxu0 %v29
  %75 = vmatpush.xpose.msra.mxu0 %v28
  %76 = vmatpush.xpose.msra.mxu0 %v27
  %77 = vmatpush.xpose.msra.mxu0 %v26
  %78 = vmatpush.xpose.msra.mxu0 %v25
  %79 = vmatpush.xpose.msra.mxu0 %v24
  %80 = vmatpush.xpose.msra.mxu0 %v23
  %81 = vmatpush.xpose.msra.mxu0 %v22
  %82 = vmatpush.xpose.msra.mxu0 %v21
  %83 = vmatpush.xpose.msra.mxu0 %v20
  %84 = vmatpush.xpose.msra.mxu0 %v19
  %85 = vmatpush.xpose.msra.mxu0 %v18
  %86 = vmatpush.xpose.msra.mxu0 %v17
  %87 = vmatpush.xpose.msra.mxu0 %v16
  %88 = vmatmul.f32.gmra.mxu0 %v14
  %v89 = vpop.f32.mrf.mxu0
  %v90 = vadd.f32 %v66, %v89
  %91 = vmatmul.f32.gmra.mxu0 %v15
  %v92 = vpop.f32.mrf.mxu0
  %v93 = vadd.f32 %v66, %v92
  %94 = vdwg.mxu0
  %95 = vmatpush.xpose.msra.mxu0 %v47
  %96 = vmatpush.xpose.msra.mxu0 %v46
  %97 = vmatpush.xpose.msra.mxu0 %v45
  %98 = vmatpush.xpose.msra.mxu0 %v44
  %99 = vmatpush.xpose.msra.mxu0 %v43
  %100 = vmatpush.xpose.msra.mxu0 %v42
  %101 = vmatpush.xpose.msra.mxu0 %v41
  %102 = vmatpush.xpose.msra.mxu0 %v40
  %103 = vmatpush.xpose.msra.mxu0 %v39
  %104 = vmatpush.xpose.msra.mxu0 %v38
  %105 = vmatpush.xpose.msra.mxu0 %v37
  %106 = vmatpush.xpose.msra.mxu0 %v36
  %107 = vmatpush.xpose.msra.mxu0 %v35
  %108 = vmatpush.xpose.msra.mxu0 %v34
  %109 = vmatpush.xpose.msra.mxu0 %v33
  %110 = vmatpush.xpose.msra.mxu0 %v32
  %111 = vmatmul.f32.gmra.mxu0 %v14
  %v112 = vpop.f32.mrf.mxu0
  %v113 = vadd.f32 %v67, %v112
  %114 = vmatmul.f32.gmra.mxu0 %v15
  %v115 = vpop.f32.mrf.mxu0
  %v116 = vadd.f32 %v67, %v115
  %117 = vdwg.mxu0
  %118 = vmatpush.xpose.msra.mxu0 %v63
  %119 = vmatpush.xpose.msra.mxu0 %v62
  %120 = vmatpush.xpose.msra.mxu0 %v61
  %121 = vmatpush.xpose.msra.mxu0 %v60
  %122 = vmatpush.xpose.msra.mxu0 %v59
  %123 = vmatpush.xpose.msra.mxu0 %v58
  %124 = vmatpush.xpose.msra.mxu0 %v57
  %125 = vmatpush.xpose.msra.mxu0 %v56
  %126 = vmatpush.xpose.msra.mxu0 %v55
  %127 = vmatpush.xpose.msra.mxu0 %v54
  %128 = vmatpush.xpose.msra.mxu0 %v53
  %129 = vmatpush.xpose.msra.mxu0 %v52
  %130 = vmatpush.xpose.msra.mxu0 %v51
  %131 = vmatpush.xpose.msra.mxu0 %v50
  %132 = vmatpush.xpose.msra.mxu0 %v49
  %133 = vmatpush.xpose.msra.mxu0 %v48
  %134 = vmatmul.f32.gmra.mxu0 %v14
  %v135 = vpop.f32.mrf.mxu0
  %v136 = vadd.f32 %v68, %v135
  %137 = vmatmul.f32.gmra.mxu0 %v15
  %v138 = vpop.f32.mrf.mxu0
  %v139 = vadd.f32 %v68, %v138
  %140 = vdwg.mxu0
  %141 = vst [vmem:[%s3] sm:$0xff] %v90
  %142 = vst [vmem:[%s3 + $0x8] sm:$0xff] %v113
  %143 = vst [vmem:[%s3 + $0x10] sm:$0xff] %v136
  %144 = vst [vmem:[%s3 + $0x18] sm:$0xff] %v93
  %145 = vst [vmem:[%s3 + $0x20] sm:$0xff] %v116
  %146 = vst [vmem:[%s3 + $0x28] sm:$0xff] %v139
  // Predicated region
  $region14: #{double_stream_block_forward.28} parent=0 // pred_check
    _
  $region15: #{double_stream_block_forward.28} parent=0 // pred_check_branch
    %148 = sbr.rel (0) target = $region17
  $region16: #{double_stream_block_forward.28} parent=0 // pred_region
    _
  $region17: #{double_stream_block_forward.28} parent=0 // pred_fallthru
    _
  // Predicated region
  $region18: #{double_stream_block_forward.28} parent=0 // pred_check
    _
  $region19: #{double_stream_block_forward.28} parent=0 // pred_check_branch
    %150 = sbr.rel (0) target = $region21
  $region20: #{double_stream_block_forward.28} parent=0 // pred_region
    _
  $region21: #{double_stream_block_forward.28} parent=0 // pred_fallthru
    _

// kernel: double_stream_block_forward.27
$region0: #{double_stream_block_forward.27}
  #allocation0 [shape = 'u32[]', space=smem, size = 0x4, offset = 0x4, fixed_abs, tag = 'smem constant byte address 0x4 - core index']
  #allocation1 [shape = 'u32[72,128]{1,0:T(1,128)}', space=vmem, size = 0x9000, scoped, tag = 'internal scratch']
  %s0 = inlined_call_operand.vmem [shape: f32[2,8,128], index: 0, kind: input, shape index: {}]
  %s1 = inlined_call_operand.vmem [shape: f32[2,1,128], index: 1, kind: input, shape index: {}]
  %s2 = inlined_call_operand.vmem [shape: f32[2,1,128], index: 2, kind: input, shape index: {}]
  %s3 = inlined_call_operand.vmem [shape: f32[2,8,128], index: 3, kind: output, shape index: {}]
  %s4 = sld [smem:[#allocation0]]
  $region45: #{double_stream_block_forward.27} parent=0
    _
  %s6 = ssub.s32 1, %s4
  %s7 = scalar_select 0, %s6, %s4
  loop: start=0, step=1, limit=4
  $region2: #{double_stream_block_forward.27} parent=0 // loop_pre_header
    _
  $region3: #{double_stream_block_forward.27} parent=0 // loop_header
    %s9 = sphi 0, %s13
    %p10 = scmp.ge.s32.totalorder %s9, 4
    %s16 = sphi 0, %s28
    %s17 = sphi 0, %s24
    %s18 = sphi 0, %s16
    %s19 = sphi 0, %s17
    %s20 = sphi 0, %s18
    %s21 = sphi 0, %s19
    %s33 = sphi 0, %s35
    %s36 = sphi 0, %s33
    %s37 = sphi 0, %s36
    %s53 = sphi 0, %s37
    %s59 = sphi 0, %s61
    %s62 = sphi 0, %s59
    %s63 = sphi 0, %s62
    %s79 = sphi 0, %s63
    %s85 = sphi 0, %s87
    %s88 = sphi 0, %s85
    %s89 = sphi 0, %s88
    %s105 = sphi 0, %s89
    %s113 = sphi 0, %s115
    %s116 = sphi 0, %s113
    %s117 = sphi 0, %s116
    %s133 = sphi 0, %s117
  $region4: #{double_stream_block_forward.27} parent=0 // loop_header_branch
    %12 = sbr.rel (%p10) target = $region8
  $region5: #{double_stream_block_forward.27} parent=0 // loop_body
    %s14 = ssub.s32 %s9, 1
    %s15 = ssub.s32 %s9, 2
    %s22 = sadd.s32 1, %s17
    %p23 = scmp.ge.s32.totalorder %s22, 1
    %s24 = scalar_select %p23, 0, %s22
    %s25 = sadd.s32 1, %s16
    %s26 = scalar_select %p23, %s25, %s16
    %p27 = scmp.ge.s32.totalorder %s26, 2
    %s28 = scalar_select %p27, 0, %s26
    %s29 = ssub.s32 %s16, %s28
    %s30 = ssub.s32 %s17, %s24
    %s31 = sor.u32 %s29, %s30
    %p32 = scmp.eq.s32.totalorder %s31, 0
    %s34 = sadd.s32 %s33, 1
    %s35 = scalar_select %p32, %s33, %s34
    %p38 = pneg %p32
    %p39 = scmp.eq.s32.totalorder %s9, 1
    %p40 = por %p38, %p39
    %p41 = scmp.ne.s32.totalorder %s33, %s36
    %p42 = scmp.eq.s32.totalorder %s9, 0
    %p43 = por %p41, %p42
    %p44 = scmp.ne.s32.totalorder %s33, %s36
    %p45 = scmp.eq.s32.totalorder %s14, 1
    %p46 = por %p44, %p45
    %p47 = scmp.ne.s32.totalorder %s36, %s37
    %p48 = scmp.eq.s32.totalorder %s14, 0
    %p49 = por %p47, %p48
    %p50 = scmp.ne.s32.totalorder %s36, %s37
    %p51 = scmp.eq.s32.totalorder %s15, 1
    %p52 = por %p50, %p51
    %p54 = scmp.ne.s32.totalorder %s37, %s53
    %p55 = scmp.eq.s32.totalorder %s15, 0
    %p56 = por %p54, %p55
    %s57 = ssub.s32 %s16, %s28
    %p58 = scmp.eq.s32.totalorder %s57, 0
    %s60 = sadd.s32 %s59, 1
    %s61 = scalar_select %p58, %s59, %s60
    %p64 = pneg %p58
    %p65 = scmp.eq.s32.totalorder %s9, 1
    %p66 = por %p64, %p65
    %p67 = scmp.ne.s32.totalorder %s59, %s62
    %p68 = scmp.eq.s32.totalorder %s9, 0
    %p69 = por %p67, %p68
    %p70 = scmp.ne.s32.totalorder %s59, %s62
    %p71 = scmp.eq.s32.totalorder %s14, 1
    %p72 = por %p70, %p71
    %p73 = scmp.ne.s32.totalorder %s62, %s63
    %p74 = scmp.eq.s32.totalorder %s14, 0
    %p75 = por %p73, %p74
    %p76 = scmp.ne.s32.totalorder %s62, %s63
    %p77 = scmp.eq.s32.totalorder %s15, 1
    %p78 = por %p76, %p77
    %p80 = scmp.ne.s32.totalorder %s63, %s79
    %p81 = scmp.eq.s32.totalorder %s15, 0
    %p82 = por %p80, %p81
    %s83 = ssub.s32 %s16, %s28
    %p84 = scmp.eq.s32.totalorder %s83, 0
    %s86 = sadd.s32 %s85, 1
    %s87 = scalar_select %p84, %s85, %s86
    %p90 = pneg %p84
    %p91 = scmp.eq.s32.totalorder %s9, 1
    %p92 = por %p90, %p91
    %p93 = scmp.ne.s32.totalorder %s85, %s88
    %p94 = scmp.eq.s32.totalorder %s9, 0
    %p95 = por %p93, %p94
    %p96 = scmp.ne.s32.totalorder %s85, %s88
    %p97 = scmp.eq.s32.totalorder %s14, 1
    %p98 = por %p96, %p97
    %p99 = scmp.ne.s32.totalorder %s88, %s89
    %p100 = scmp.eq.s32.totalorder %s14, 0
    %p101 = por %p99, %p100
    %p102 = scmp.ne.s32.totalorder %s88, %s89
    %p103 = scmp.eq.s32.totalorder %s15, 1
    %p104 = por %p102, %p103
    %p106 = scmp.ne.s32.totalorder %s89, %s105
    %p107 = scmp.eq.s32.totalorder %s15, 0
    %p108 = por %p106, %p107
    %s109 = ssub.s32 %s16, %s28
    %s110 = ssub.s32 %s17, %s24
    %s111 = sor.u32 %s109, %s110
    %p112 = scmp.eq.s32.totalorder %s111, 0
    %s114 = sadd.s32 %s113, 1
    %s115 = scalar_select %p112, %s113, %s114
    %p118 = pneg %p112
    %p119 = scmp.eq.s32.totalorder %s9, 1
    %p120 = por %p118, %p119
    %p121 = scmp.ne.s32.totalorder %s113, %s116
    %p122 = scmp.eq.s32.totalorder %s9, 0
    %p123 = por %p121, %p122
    %p124 = scmp.ne.s32.totalorder %s113, %s116
    %p125 = scmp.eq.s32.totalorder %s14, 1
    %p126 = por %p124, %p125
    %p127 = scmp.ne.s32.totalorder %s116, %s117
    %p128 = scmp.eq.s32.totalorder %s14, 0
    %p129 = por %p127, %p128
    %p130 = scmp.ne.s32.totalorder %s116, %s117
    %p131 = scmp.eq.s32.totalorder %s15, 1
    %p132 = por %p130, %p131
    %p134 = scmp.ne.s32.totalorder %s117, %s133
    %p135 = scmp.eq.s32.totalorder %s15, 0
    %p136 = por %p134, %p135
    %p137 = scmp.le.s32.totalorder 1, %s9
    %p138 = scmp.lt.s32.totalorder %s9, 3
    %p139 = pnand %p137, %p138
    %p140 = pneg %p139
    // Predicated region
    $region9: #{double_stream_block_forward.27} parent=5 // pred_check
      _
    $region10: #{double_stream_block_forward.27} parent=5 // pred_check_branch
      %142 = sbr.rel (%p139) target = $region12
    $region11: #{double_stream_block_forward.27} parent=5 // pred_region
      %s143 = ssub.s32 %s9, 1
    $region12: #{double_stream_block_forward.27} parent=5 // pred_fallthru
      _
    %p144 = scmp.lt.s32.totalorder %s9, 2
    // Predicated region
    $region13: #{double_stream_block_forward.27} parent=5 // pred_check
      %p145 = pneg %p144
    $region14: #{double_stream_block_forward.27} parent=5 // pred_check_branch
      %147 = sbr.rel (%p145) target = $region16
    $region15: #{double_stream_block_forward.27} parent=5 // pred_region
      // Predicated region
      $region17: #{double_stream_block_forward.27} parent=15 // pred_check
        %p148 = pneg %p43
      $region18: #{double_stream_block_forward.27} parent=15 // pred_check_branch
        %150 = sbr.rel (%p148) target = $region20
      $region19: #{double_stream_block_forward.27} parent=15 // pred_region
        %p151 = scmp.lt.s32.totalorder %s16, 1
        %s152 = scalar_select %p151, %s16, 1
        %p153 = scmp.lt.s32.totalorder %s17, 0
        %s154 = scalar_select %p153, %s17, 0
        %s155 = sadd.s32 %s154, %s152
        %s156 = smul.addr %s155, 8
        %s157 = scalar_lea.vmem %s0, %s156
      $region20: #{double_stream_block_forward.27} parent=15 // pred_fallthru
        _
      // Predicated region
      $region21: #{double_stream_block_forward.27} parent=15 // pred_check
        %p158 = pneg %p69
      $region22: #{double_stream_block_forward.27} parent=15 // pred_check_branch
        %160 = sbr.rel (%p158) target = $region24
      $region23: #{double_stream_block_forward.27} parent=15 // pred_region
        %p161 = scmp.lt.s32.totalorder %s16, 1
        %s162 = scalar_select %p161, %s16, 1
        %s163 = scalar_lea.vmem %s1, %s162
      $region24: #{double_stream_block_forward.27} parent=15 // pred_fallthru
        _
      // Predicated region
      $region25: #{double_stream_block_forward.27} parent=15 // pred_check
        %p164 = pneg %p95
      $region26: #{double_stream_block_forward.27} parent=15 // pred_check_branch
        %166 = sbr.rel (%p164) target = $region28
      $region27: #{double_stream_block_forward.27} parent=15 // pred_region
        %p167 = scmp.lt.s32.totalorder %s16, 1
        %s168 = scalar_select %p167, %s16, 1
        %s169 = scalar_lea.vmem %s2, %s168
      $region28: #{double_stream_block_forward.27} parent=15 // pred_fallthru
        _
    $region16: #{double_stream_block_forward.27} parent=5 // pred_fallthru
      _
    %p170 = scmp.le.s32.totalorder 1, %s9
    %p171 = scmp.lt.s32.totalorder %s9, 3
    %p172 = pnand %p170, %p171
    %p173 = pneg %p172
    // Predicated region
    $region29: #{double_stream_block_forward.27} parent=5 // pred_check
      _
    $region30: #{double_stream_block_forward.27} parent=5 // pred_check_branch
      %175 = sbr.rel (%p172) target = $region32
    $region31: #{double_stream_block_forward.27} parent=5 // pred_region
      %s176 = ssub.s32 %s9, 1
      %p177 = scmp.lt.s32.totalorder %s18, 1
      %s178 = scalar_select %p177, %s18, 1
      %p179 = scmp.lt.s32.totalorder %s19, 0
      %s180 = scalar_select %p179, %s19, 0
      %s181 = sadd.s32 %s180, %s178
      %s182 = smul.addr %s181, 8
      %s183 = scalar_lea.vmem %s0, %s182
      %p184 = pneg %p49
      %p185 = pneg %p46
      %p186 = scmp.lt.s32.totalorder %s18, 1
      %s187 = scalar_select %p186, %s18, 1
      %s188 = scalar_lea.vmem %s1, %s187
      %p189 = pneg %p75
      %p190 = pneg %p72
      %p191 = scmp.lt.s32.totalorder %s18, 1
      %s192 = scalar_select %p191, %s18, 1
      %s193 = scalar_lea.vmem %s2, %s192
      %p194 = pneg %p101
      %p195 = pneg %p98
      %p196 = pneg %p129
      %p197 = pneg %p126
      %p198 = scmp.lt.s32.totalorder %s18, 1
      %s199 = scalar_select %p198, %s18, 1
      %p200 = scmp.lt.s32.totalorder %s19, 0
      %s201 = scalar_select %p200, %s19, 0
      %s202 = sadd.s32 %s201, %s199
      %s203 = smul.addr %s202, 8
      %s204 = scalar_lea.vmem %s3, %s203
      %p205 = scmp.lt.s32.totalorder %s18, 1
      %s206 = scalar_select %p205, %s18, 1
      %p207 = scmp.lt.s32.totalorder %s19, 0
      %s208 = scalar_select %p207, %s19, 0
      %s209 = sadd.s32 %s208, %s206
      %s210 = smul.addr %s209, 8
      %s211 = scalar_lea.vmem %s0, %s210
      %p212 = scmp.lt.s32.totalorder %s18, 1
      %s213 = scalar_select %p212, %s18, 1
      %s214 = scalar_lea.vmem %s1, %s213
      %p215 = scmp.lt.s32.totalorder %s18, 1
      %s216 = scalar_select %p215, %s18, 1
      %s217 = scalar_lea.vmem %s2, %s216
      %p218 = scmp.lt.s32.totalorder %s18, 1
      %s219 = scalar_select %p218, %s18, 1
      %p220 = scmp.lt.s32.totalorder %s19, 0
      %s221 = scalar_select %p220, %s19, 0
      %s222 = sadd.s32 %s221, %s219
      %s223 = smul.addr %s222, 8
      %s224 = scalar_lea.vmem %s3, %s223
      %v225 = vld [vmem:[%s211] sm:$0xff]
      %226 = vadd.xlane.f32.xlu0 %v225
      %v227 = vpop.xlane.xlu0 %226
      %v228 = vrcp.pop 128.0
      %v229 = vmul.f32 128.0, %v228
      %v230 = vsub.f32 1.0, %v229
      %v231 = vmul.f32 %v228, %v230
      %v232 = vadd.f32 %v228, %v231
      %vm233 = vweird.f32 %v228
      %v234 = vsel %vm233, %v228, %v232
      %v235 = vmul.f32 %v227, %v234
      %v236 = vsub.f32 %v225, %v235
      %v237 = vmul.f32 %v236, %v236
      %238 = vadd.xlane.f32.xlu0 %v237
      %v239 = vpop.xlane.xlu0 %238
      %v240 = vmul.f32 %v239, %v234
      %v241 = vadd.f32 %v240, 1e-06
      %v242 = vrsqrt.pop %v241
      %v243 = vmul.f32 %v242, %v241
      %v244 = vmul.f32 %v243, %v242
      %v245 = vmul.f32 0.5, %v244
      %v246 = vsub.f32 1.5, %v245
      %v247 = vmul.f32 %v242, %v246
      %vm248 = vweird.f32 %v241
      %vm249 = vweird.f32 %v242
      %vm250 = vmor %vm248, %vm249
      %v251 = vsel %vm250, %v242, %v247
      %v252 = vmul.f32 %v236, %v251
      %v253 = vld [vmem:[%s214] sm:$0x1]
      %v254 = vadd.f32 %v253, 1.0
      %v256 = vperm.slane %v254, 0
      %v258 = vmul.f32 %v256, %v252
      %v259 = vld [vmem:[%s217] sm:$0x1]
      %v261 = vperm.slane %v259, 0
      %v263 = vadd.f32 %v258, %v261
      %264 = vst [vmem:[%s224] sm:$0xff] %v263
      %p265 = scmp.lt.s32.totalorder %s18, 1
      %s266 = scalar_select %p265, %s18, 1
      %p267 = scmp.lt.s32.totalorder %s19, 0
      %s268 = scalar_select %p267, %s19, 0
      %s269 = sadd.s32 %s268, %s266
      %s270 = smul.addr %s269, 8
      %s271 = scalar_lea.vmem %s3, %s270
      // Predicated region
      $region33: #{double_stream_block_forward.27} parent=31 // pred_check
        %p272 = pneg %p126
      $region34: #{double_stream_block_forward.27} parent=31 // pred_check_branch
        %274 = sbr.rel (%p272) target = $region36
      $region35: #{double_stream_block_forward.27} parent=31 // pred_region
        _
      $region36: #{double_stream_block_forward.27} parent=31 // pred_fallthru
        _
    $region32: #{double_stream_block_forward.27} parent=5 // pred_fallthru
      _
    %p275 = scmp.le.s32.totalorder 2, %s9
    // Predicated region
    $region37: #{double_stream_block_forward.27} parent=5 // pred_check
      %p276 = pneg %p275
    $region38: #{double_stream_block_forward.27} parent=5 // pred_check_branch
      %278 = sbr.rel (%p276) target = $region40
    $region39: #{double_stream_block_forward.27} parent=5 // pred_region
      %s279 = ssub.s32 %s9, 2
      // Predicated region
      $region41: #{double_stream_block_forward.27} parent=39 // pred_check
        %p280 = pneg %p132
      $region42: #{double_stream_block_forward.27} parent=39 // pred_check_branch
        %282 = sbr.rel (%p280) target = $region44
      $region43: #{double_stream_block_forward.27} parent=39 // pred_region
        %p283 = scmp.lt.s32.totalorder %s20, 1
        %s284 = scalar_select %p283, %s20, 1
        %p285 = scmp.lt.s32.totalorder %s21, 0
        %s286 = scalar_select %p285, %s21, 0
        %s287 = sadd.s32 %s286, %s284
        %s288 = smul.addr %s287, 8
        %s289 = scalar_lea.vmem %s3, %s288
      $region44: #{double_stream_block_forward.27} parent=39 // pred_fallthru
        _
    $region40: #{double_stream_block_forward.27} parent=5 // pred_fallthru
      _
  $region6: #{double_stream_block_forward.27} parent=0 // loop_footer
    %s13 = sadd.s32 1, %s9
  $region7: #{double_stream_block_forward.27} parent=0 // loop_footer_branch
    %8 = sbr.rel target = $region3
  $region8: #{double_stream_block_forward.27} parent=0 // loop_exit
    _

// kernel: double_stream_block_forward.24
$region0: #{double_stream_block_forward.24}
  #allocation0 [shape = 'u32[]', space=smem, size = 0x4, offset = 0x4, fixed_abs, tag = 'smem constant byte address 0x4 - core index']
  #allocation1 [shape = 'u32[72,128]{1,0:T(1,128)}', space=vmem, size = 0x9000, scoped, tag = 'internal scratch']
  %s0 = inlined_call_operand.vmem [shape: f32[2,128], index: 0, kind: input, shape index: {}]
  %s1 = inlined_call_operand.vmem [shape: f32[768,128], index: 1, kind: input, shape index: {}]
  %s2 = inlined_call_operand.vmem [shape: f32[1,768], index: 2, kind: input, shape index: {}]
  %s3 = inlined_call_operand.vmem [shape: f32[2,768], index: 3, kind: output, shape index: {}]
  %s4 = sld [smem:[#allocation0]]
  $region22: #{double_stream_block_forward.24} parent=0
    _
  %s6 = ssub.s32 1, %s4
  %s7 = scalar_select 0, %s6, %s4
  // Predicated region
  $region2: #{double_stream_block_forward.24} parent=0 // pred_check
    _
  $region3: #{double_stream_block_forward.24} parent=0 // pred_check_branch
    %9 = sbr.rel (0) target = $region5
  $region4: #{double_stream_block_forward.24} parent=0 // pred_region
    _
  $region5: #{double_stream_block_forward.24} parent=0 // pred_fallthru
    _
  // Predicated region
  $region6: #{double_stream_block_forward.24} parent=0 // pred_check
    _
  $region7: #{double_stream_block_forward.24} parent=0 // pred_check_branch
    %11 = sbr.rel (0) target = $region9
  $region8: #{double_stream_block_forward.24} parent=0 // pred_region
    _
  $region9: #{double_stream_block_forward.24} parent=0 // pred_fallthru
    _
  // Predicated region
  $region10: #{double_stream_block_forward.24} parent=0 // pred_check
    _
  $region11: #{double_stream_block_forward.24} parent=0 // pred_check_branch
    %13 = sbr.rel (0) target = $region13
  $region12: #{double_stream_block_forward.24} parent=0 // pred_region
    _
  $region13: #{double_stream_block_forward.24} parent=0 // pred_fallthru
    _
  %v14 = vld [vmem:[%s0] sm:$0x3]
  %v15 = vxor.u32 %v14, 2147483648
  %v16 = vmul.f32 %v15, 1.442695
  %v17 = vpow.pop %v16
  %v18 = vadd.f32 %v17, 1.0
  %v19 = vrcp.pop %v18
  %v20 = vmul.f32 %v18, %v19
  %v21 = vsub.f32 1.0, %v20
  %v22 = vmul.f32 %v19, %v21
  %v23 = vadd.f32 %v19, %v22
  %vm24 = vweird.f32 %v18
  %vm25 = vweird.f32 %v19
  %vm26 = vmor %vm24, %vm25
  %v27 = vsel %vm26, %v19, %v23
  %v28 = vand.u32 2147483647, %v18
  %vm29 = vcmp.eq.f32.partialorder %v28, 8.507059e+37
  %v30 = vand.u32 %v18, 2147483648
  %v31 = vor.u32 1.1754944e-38, %v30
  %v32 = vsel %vm29, %v31, %v27
  %v33 = vmul.f32 1.0, %v32
  %v34 = vmul.f32 %v14, %v33
  %v35 = vld [vmem:[%s1] sm:$0xff]
  %v36 = vld [vmem:[%s1 + $0x8] sm:$0xff]
  %v37 = vld [vmem:[%s1 + $0x10] sm:$0xff]
  %v38 = vld [vmem:[%s1 + $0x18] sm:$0xff]
  %v39 = vld [vmem:[%s1 + $0x20] sm:$0xff]
  %v40 = vld [vmem:[%s1 + $0x28] sm:$0xff]
  %v41 = vld [vmem:[%s1 + $0x30] sm:$0xff]
  %v42 = vld [vmem:[%s1 + $0x38] sm:$0xff]
  %v43 = vld [vmem:[%s1 + $0x40] sm:$0xff]
  %v44 = vld [vmem:[%s1 + $0x48] sm:$0xff]
  %v45 = vld [vmem:[%s1 + $0x50] sm:$0xff]
  %v46 = vld [vmem:[%s1 + $0x58] sm:$0xff]
  %v47 = vld [vmem:[%s1 + $0x60] sm:$0xff]
  %v48 = vld [vmem:[%s1 + $0x68] sm:$0xff]
  %v49 = vld [vmem:[%s1 + $0x70] sm:$0xff]
  %v50 = vld [vmem:[%s1 + $0x78] sm:$0xff]
  %v51 = vld [vmem:[%s1 + $0x80] sm:$0xff]
  %v52 = vld [vmem:[%s1 + $0x88] sm:$0xff]
  %v53 = vld [vmem:[%s1 + $0x90] sm:$0xff]
  %v54 = vld [vmem:[%s1 + $0x98] sm:$0xff]
  %v55 = vld [vmem:[%s1 + $0xa0] sm:$0xff]
  %v56 = vld [vmem:[%s1 + $0xa8] sm:$0xff]
  %v57 = vld [vmem:[%s1 + $0xb0] sm:$0xff]
  %v58 = vld [vmem:[%s1 + $0xb8] sm:$0xff]
  %v59 = vld [vmem:[%s1 + $0xc0] sm:$0xff]
  %v60 = vld [vmem:[%s1 + $0xc8] sm:$0xff]
  %v61 = vld [vmem:[%s1 + $0xd0] sm:$0xff]
  %v62 = vld [vmem:[%s1 + $0xd8] sm:$0xff]
  %v63 = vld [vmem:[%s1 + $0xe0] sm:$0xff]
  %v64 = vld [vmem:[%s1 + $0xe8] sm:$0xff]
  %v65 = vld [vmem:[%s1 + $0xf0] sm:$0xff]
  %v66 = vld [vmem:[%s1 + $0xf8] sm:$0xff]
  %v67 = vld [vmem:[%s1 + $0x100] sm:$0xff]
  %v68 = vld [vmem:[%s1 + $0x108] sm:$0xff]
  %v69 = vld [vmem:[%s1 + $0x110] sm:$0xff]
  %v70 = vld [vmem:[%s1 + $0x118] sm:$0xff]
  %v71 = vld [vmem:[%s1 + $0x120] sm:$0xff]
  %v72 = vld [vmem:[%s1 + $0x128] sm:$0xff]
  %v73 = vld [vmem:[%s1 + $0x130] sm:$0xff]
  %v74 = vld [vmem:[%s1 + $0x138] sm:$0xff]
  %v75 = vld [vmem:[%s1 + $0x140] sm:$0xff]
  %v76 = vld [vmem:[%s1 + $0x148] sm:$0xff]
  %v77 = vld [vmem:[%s1 + $0x150] sm:$0xff]
  %v78 = vld [vmem:[%s1 + $0x158] sm:$0xff]
  %v79 = vld [vmem:[%s1 + $0x160] sm:$0xff]
  %v80 = vld [vmem:[%s1 + $0x168] sm:$0xff]
  %v81 = vld [vmem:[%s1 + $0x170] sm:$0xff]
  %v82 = vld [vmem:[%s1 + $0x178] sm:$0xff]
  %v83 = vld [vmem:[%s1 + $0x180] sm:$0xff]
  %v84 = vld [vmem:[%s1 + $0x188] sm:$0xff]
  %v85 = vld [vmem:[%s1 + $0x190] sm:$0xff]
  %v86 = vld [vmem:[%s1 + $0x198] sm:$0xff]
  %v87 = vld [vmem:[%s1 + $0x1a0] sm:$0xff]
  %v88 = vld [vmem:[%s1 + $0x1a8] sm:$0xff]
  %v89 = vld [vmem:[%s1 + $0x1b0] sm:$0xff]
  %v90 = vld [vmem:[%s1 + $0x1b8] sm:$0xff]
  %v91 = vld [vmem:[%s1 + $0x1c0] sm:$0xff]
  %v92 = vld [vmem:[%s1 + $0x1c8] sm:$0xff]
  %v93 = vld [vmem:[%s1 + $0x1d0] sm:$0xff]
  %v94 = vld [vmem:[%s1 + $0x1d8] sm:$0xff]
  %v95 = vld [vmem:[%s1 + $0x1e0] sm:$0xff]
  %v96 = vld [vmem:[%s1 + $0x1e8] sm:$0xff]
  %v97 = vld [vmem:[%s1 + $0x1f0] sm:$0xff]
  %v98 = vld [vmem:[%s1 + $0x1f8] sm:$0xff]
  %v99 = vld [vmem:[%s1 + $0x200] sm:$0xff]
  %v100 = vld [vmem:[%s1 + $0x208] sm:$0xff]
  %v101 = vld [vmem:[%s1 + $0x210] sm:$0xff]
  %v102 = vld [vmem:[%s1 + $0x218] sm:$0xff]
  %v103 = vld [vmem:[%s1 + $0x220] sm:$0xff]
  %v104 = vld [vmem:[%s1 + $0x228] sm:$0xff]
  %v105 = vld [vmem:[%s1 + $0x230] sm:$0xff]
  %v106 = vld [vmem:[%s1 + $0x238] sm:$0xff]
  %v107 = vld [vmem:[%s1 + $0x240] sm:$0xff]
  %v108 = vld [vmem:[%s1 + $0x248] sm:$0xff]
  %v109 = vld [vmem:[%s1 + $0x250] sm:$0xff]
  %v110 = vld [vmem:[%s1 + $0x258] sm:$0xff]
  %v111 = vld [vmem:[%s1 + $0x260] sm:$0xff]
  %v112 = vld [vmem:[%s1 + $0x268] sm:$0xff]
  %v113 = vld [vmem:[%s1 + $0x270] sm:$0xff]
  %v114 = vld [vmem:[%s1 + $0x278] sm:$0xff]
  %v115 = vld [vmem:[%s1 + $0x280] sm:$0xff]
  %v116 = vld [vmem:[%s1 + $0x288] sm:$0xff]
  %v117 = vld [vmem:[%s1 + $0x290] sm:$0xff]
  %v118 = vld [vmem:[%s1 + $0x298] sm:$0xff]
  %v119 = vld [vmem:[%s1 + $0x2a0] sm:$0xff]
  %v120 = vld [vmem:[%s1 + $0x2a8] sm:$0xff]
  %v121 = vld [vmem:[%s1 + $0x2b0] sm:$0xff]
  %v122 = vld [vmem:[%s1 + $0x2b8] sm:$0xff]
  %v123 = vld [vmem:[%s1 + $0x2c0] sm:$0xff]
  %v124 = vld [vmem:[%s1 + $0x2c8] sm:$0xff]
  %v125 = vld [vmem:[%s1 + $0x2d0] sm:$0xff]
  %v126 = vld [vmem:[%s1 + $0x2d8] sm:$0xff]
  %v127 = vld [vmem:[%s1 + $0x2e0] sm:$0xff]
  %v128 = vld [vmem:[%s1 + $0x2e8] sm:$0xff]
  %v129 = vld [vmem:[%s1 + $0x2f0] sm:$0xff]
  %v130 = vld [vmem:[%s1 + $0x2f8] sm:$0xff]
  %v131 = vld [vmem:[%s2] sm:$0x3f]
  %v133 = vperm.slane %v131, 0
  %v134 = vperm.slane %v131, 1
  %v135 = vperm.slane %v131, 2
  %v136 = vperm.slane %v131, 3
  %v137 = vperm.slane %v131, 4
  %v138 = vperm.slane %v131, 5
  %145 = vmatpush.xpose.msra.mxu0 %v50
  %146 = vmatpush.xpose.msra.mxu0 %v49
  %147 = vmatpush.xpose.msra.mxu0 %v48
  %148 = vmatpush.xpose.msra.mxu0 %v47
  %149 = vmatpush.xpose.msra.mxu0 %v46
  %150 = vmatpush.xpose.msra.mxu0 %v45
  %151 = vmatpush.xpose.msra.mxu0 %v44
  %152 = vmatpush.xpose.msra.mxu0 %v43
  %153 = vmatpush.xpose.msra.mxu0 %v42
  %154 = vmatpush.xpose.msra.mxu0 %v41
  %155 = vmatpush.xpose.msra.mxu0 %v40
  %156 = vmatpush.xpose.msra.mxu0 %v39
  %157 = vmatpush.xpose.msra.mxu0 %v38
  %158 = vmatpush.xpose.msra.mxu0 %v37
  %159 = vmatpush.xpose.msra.mxu0 %v36
  %160 = vmatpush.xpose.msra.mxu0 %v35
  %161 = vmatmul.f32.gmra.mxu0 %v34
  %v162 = vpop.f32.mrf.mxu0
  %v163 = vadd.f32 %v133, %v162
  %164 = vdwg.mxu0
  %165 = vmatpush.xpose.msra.mxu0 %v66
  %166 = vmatpush.xpose.msra.mxu0 %v65
  %167 = vmatpush.xpose.msra.mxu0 %v64
  %168 = vmatpush.xpose.msra.mxu0 %v63
  %169 = vmatpush.xpose.msra.mxu0 %v62
  %170 = vmatpush.xpose.msra.mxu0 %v61
  %171 = vmatpush.xpose.msra.mxu0 %v60
  %172 = vmatpush.xpose.msra.mxu0 %v59
  %173 = vmatpush.xpose.msra.mxu0 %v58
  %174 = vmatpush.xpose.msra.mxu0 %v57
  %175 = vmatpush.xpose.msra.mxu0 %v56
  %176 = vmatpush.xpose.msra.mxu0 %v55
  %177 = vmatpush.xpose.msra.mxu0 %v54
  %178 = vmatpush.xpose.msra.mxu0 %v53
  %179 = vmatpush.xpose.msra.mxu0 %v52
  %180 = vmatpush.xpose.msra.mxu0 %v51
  %181 = vmatmul.f32.gmra.mxu0 %v34
  %v182 = vpop.f32.mrf.mxu0
  %v183 = vadd.f32 %v134, %v182
  %184 = vdwg.mxu0
  %185 = vmatpush.xpose.msra.mxu0 %v82
  %186 = vmatpush.xpose.msra.mxu0 %v81
  %187 = vmatpush.xpose.msra.mxu0 %v80
  %188 = vmatpush.xpose.msra.mxu0 %v79
  %189 = vmatpush.xpose.msra.mxu0 %v78
  %190 = vmatpush.xpose.msra.mxu0 %v77
  %191 = vmatpush.xpose.msra.mxu0 %v76
  %192 = vmatpush.xpose.msra.mxu0 %v75
  %193 = vmatpush.xpose.msra.mxu0 %v74
  %194 = vmatpush.xpose.msra.mxu0 %v73
  %195 = vmatpush.xpose.msra.mxu0 %v72
  %196 = vmatpush.xpose.msra.mxu0 %v71
  %197 = vmatpush.xpose.msra.mxu0 %v70
  %198 = vmatpush.xpose.msra.mxu0 %v69
  %199 = vmatpush.xpose.msra.mxu0 %v68
  %200 = vmatpush.xpose.msra.mxu0 %v67
  %201 = vmatmul.f32.gmra.mxu0 %v34
  %v202 = vpop.f32.mrf.mxu0
  %v203 = vadd.f32 %v135, %v202
  %204 = vdwg.mxu0
  %205 = vmatpush.xpose.msra.mxu0 %v98
  %206 = vmatpush.xpose.msra.mxu0 %v97
  %207 = vmatpush.xpose.msra.mxu0 %v96
  %208 = vmatpush.xpose.msra.mxu0 %v95
  %209 = vmatpush.xpose.msra.mxu0 %v94
  %210 = vmatpush.xpose.msra.mxu0 %v93
  %211 = vmatpush.xpose.msra.mxu0 %v92
  %212 = vmatpush.xpose.msra.mxu0 %v91
  %213 = vmatpush.xpose.msra.mxu0 %v90
  %214 = vmatpush.xpose.msra.mxu0 %v89
  %215 = vmatpush.xpose.msra.mxu0 %v88
  %216 = vmatpush.xpose.msra.mxu0 %v87
  %217 = vmatpush.xpose.msra.mxu0 %v86
  %218 = vmatpush.xpose.msra.mxu0 %v85
  %219 = vmatpush.xpose.msra.mxu0 %v84
  %220 = vmatpush.xpose.msra.mxu0 %v83
  %221 = vmatmul.f32.gmra.mxu0 %v34
  %v222 = vpop.f32.mrf.mxu0
  %v223 = vadd.f32 %v136, %v222
  %224 = vdwg.mxu0
  %225 = vmatpush.xpose.msra.mxu0 %v114
  %226 = vmatpush.xpose.msra.mxu0 %v113
  %227 = vmatpush.xpose.msra.mxu0 %v112
  %228 = vmatpush.xpose.msra.mxu0 %v111
  %229 = vmatpush.xpose.msra.mxu0 %v110
  %230 = vmatpush.xpose.msra.mxu0 %v109
  %231 = vmatpush.xpose.msra.mxu0 %v108
  %232 = vmatpush.xpose.msra.mxu0 %v107
  %233 = vmatpush.xpose.msra.mxu0 %v106
  %234 = vmatpush.xpose.msra.mxu0 %v105
  %235 = vmatpush.xpose.msra.mxu0 %v104
  %236 = vmatpush.xpose.msra.mxu0 %v103
  %237 = vmatpush.xpose.msra.mxu0 %v102
  %238 = vmatpush.xpose.msra.mxu0 %v101
  %239 = vmatpush.xpose.msra.mxu0 %v100
  %240 = vmatpush.xpose.msra.mxu0 %v99
  %241 = vmatmul.f32.gmra.mxu0 %v34
  %v242 = vpop.f32.mrf.mxu0
  %v243 = vadd.f32 %v137, %v242
  %244 = vdwg.mxu0
  %245 = vmatpush.xpose.msra.mxu0 %v130
  %246 = vmatpush.xpose.msra.mxu0 %v129
  %247 = vmatpush.xpose.msra.mxu0 %v128
  %248 = vmatpush.xpose.msra.mxu0 %v127
  %249 = vmatpush.xpose.msra.mxu0 %v126
  %250 = vmatpush.xpose.msra.mxu0 %v125
  %251 = vmatpush.xpose.msra.mxu0 %v124
  %252 = vmatpush.xpose.msra.mxu0 %v123
  %253 = vmatpush.xpose.msra.mxu0 %v122
  %254 = vmatpush.xpose.msra.mxu0 %v121
  %255 = vmatpush.xpose.msra.mxu0 %v120
  %256 = vmatpush.xpose.msra.mxu0 %v119
  %257 = vmatpush.xpose.msra.mxu0 %v118
  %258 = vmatpush.xpose.msra.mxu0 %v117
  %259 = vmatpush.xpose.msra.mxu0 %v116
  %260 = vmatpush.xpose.msra.mxu0 %v115
  %261 = vmatmul.f32.gmra.mxu0 %v34
  %v262 = vpop.f32.mrf.mxu0
  %v263 = vadd.f32 %v138, %v262
  %264 = vdwg.mxu0
  %v271 = vrot.slane %v183, 6
  %v272 = vrot.slane %v203, 4
  %v273 = vrot.slane %v223, 2
  %v274 = vrot.slane %v263, 6
  %vm275 = vcmask 1041408
  %v276 = vsel %vm275, %v163, %v271
  %vm277 = vcmask 1045508
  %v278 = vsel %vm277, %v272, %v273
  %vm279 = vcmask 1043456
  %v280 = vsel %vm279, %v276, %v278
  %v281 = vsel %vm275, %v243, %v274
  %284 = vst [vmem:[%s3] sm:$0xff] %v280
  %285 = vst [vmem:[%s3 + $0x8] sm:$0xf] %v281
  // Predicated region
  $region14: #{double_stream_block_forward.24} parent=0 // pred_check
    _
  $region15: #{double_stream_block_forward.24} parent=0 // pred_check_branch
    %287 = sbr.rel (0) target = $region17
  $region16: #{double_stream_block_forward.24} parent=0 // pred_region
    _
  $region17: #{double_stream_block_forward.24} parent=0 // pred_fallthru
    _
  // Predicated region
  $region18: #{double_stream_block_forward.24} parent=0 // pred_check
    _
  $region19: #{double_stream_block_forward.24} parent=0 // pred_check_branch
    %289 = sbr.rel (0) target = $region21
  $region20: #{double_stream_block_forward.24} parent=0 // pred_region
    _
  $region21: #{double_stream_block_forward.24} parent=0 // pred_fallthru
    _

// kernel: double_stream_block_forward.40
$region0: #{double_stream_block_forward.40}
  #allocation0 [shape = 'u32[]', space=smem, size = 0x4, offset = 0x4, fixed_abs, tag = 'smem constant byte address 0x4 - core index']
  #allocation1 [shape = 'u32[72,128]{1,0:T(1,128)}', space=vmem, size = 0x9000, scoped, tag = 'internal scratch']
  %s0 = inlined_call_operand.vmem [shape: f32[16,128], index: 0, kind: input, shape index: {}]
  %s1 = inlined_call_operand.vmem [shape: f32[128,128], index: 1, kind: input, shape index: {}]
  %s2 = inlined_call_operand.vmem [shape: f32[1,128], index: 2, kind: input, shape index: {}]
  %s3 = inlined_call_operand.vmem [shape: f32[16,128], index: 3, kind: output, shape index: {}]
  %s4 = sld [smem:[#allocation0]]
  $region22: #{double_stream_block_forward.40} parent=0
    _
  %s6 = ssub.s32 1, %s4
  %s7 = scalar_select 0, %s6, %s4
  // Predicated region
  $region2: #{double_stream_block_forward.40} parent=0 // pred_check
    _
  $region3: #{double_stream_block_forward.40} parent=0 // pred_check_branch
    %9 = sbr.rel (0) target = $region5
  $region4: #{double_stream_block_forward.40} parent=0 // pred_region
    _
  $region5: #{double_stream_block_forward.40} parent=0 // pred_fallthru
    _
  // Predicated region
  $region6: #{double_stream_block_forward.40} parent=0 // pred_check
    _
  $region7: #{double_stream_block_forward.40} parent=0 // pred_check_branch
    %11 = sbr.rel (0) target = $region9
  $region8: #{double_stream_block_forward.40} parent=0 // pred_region
    _
  $region9: #{double_stream_block_forward.40} parent=0 // pred_fallthru
    _
  // Predicated region
  $region10: #{double_stream_block_forward.40} parent=0 // pred_check
    _
  $region11: #{double_stream_block_forward.40} parent=0 // pred_check_branch
    %13 = sbr.rel (0) target = $region13
  $region12: #{double_stream_block_forward.40} parent=0 // pred_region
    _
  $region13: #{double_stream_block_forward.40} parent=0 // pred_fallthru
    _
  %v14 = vld [vmem:[%s0] sm:$0xff]
  %v15 = vld [vmem:[%s0 + $0x8] sm:$0xff]
  %v16 = vld [vmem:[%s1] sm:$0xff]
  %v17 = vld [vmem:[%s1 + $0x8] sm:$0xff]
  %v18 = vld [vmem:[%s1 + $0x10] sm:$0xff]
  %v19 = vld [vmem:[%s1 + $0x18] sm:$0xff]
  %v20 = vld [vmem:[%s1 + $0x20] sm:$0xff]
  %v21 = vld [vmem:[%s1 + $0x28] sm:$0xff]
  %v22 = vld [vmem:[%s1 + $0x30] sm:$0xff]
  %v23 = vld [vmem:[%s1 + $0x38] sm:$0xff]
  %v24 = vld [vmem:[%s1 + $0x40] sm:$0xff]
  %v25 = vld [vmem:[%s1 + $0x48] sm:$0xff]
  %v26 = vld [vmem:[%s1 + $0x50] sm:$0xff]
  %v27 = vld [vmem:[%s1 + $0x58] sm:$0xff]
  %v28 = vld [vmem:[%s1 + $0x60] sm:$0xff]
  %v29 = vld [vmem:[%s1 + $0x68] sm:$0xff]
  %v30 = vld [vmem:[%s1 + $0x70] sm:$0xff]
  %v31 = vld [vmem:[%s1 + $0x78] sm:$0xff]
  %v32 = vld [vmem:[%s2] sm:$0x1]
  %v34 = vperm.slane %v32, 0
  %36 = vmatpush.xpose.msra.mxu0 %v31
  %37 = vmatpush.xpose.msra.mxu0 %v30
  %38 = vmatpush.xpose.msra.mxu0 %v29
  %39 = vmatpush.xpose.msra.mxu0 %v28
  %40 = vmatpush.xpose.msra.mxu0 %v27
  %41 = vmatpush.xpose.msra.mxu0 %v26
  %42 = vmatpush.xpose.msra.mxu0 %v25
  %43 = vmatpush.xpose.msra.mxu0 %v24
  %44 = vmatpush.xpose.msra.mxu0 %v23
  %45 = vmatpush.xpose.msra.mxu0 %v22
  %46 = vmatpush.xpose.msra.mxu0 %v21
  %47 = vmatpush.xpose.msra.mxu0 %v20
  %48 = vmatpush.xpose.msra.mxu0 %v19
  %49 = vmatpush.xpose.msra.mxu0 %v18
  %50 = vmatpush.xpose.msra.mxu0 %v17
  %51 = vmatpush.xpose.msra.mxu0 %v16
  %52 = vmatmul.f32.gmra.mxu0 %v14
  %v53 = vpop.f32.mrf.mxu0
  %v54 = vadd.f32 %v34, %v53
  %55 = vmatmul.f32.gmra.mxu0 %v15
  %v56 = vpop.f32.mrf.mxu0
  %v57 = vadd.f32 %v34, %v56
  %58 = vdwg.mxu0
  %59 = vst [vmem:[%s3] sm:$0xff] %v54
  %60 = vst [vmem:[%s3 + $0x8] sm:$0xff] %v57
  // Predicated region
  $region14: #{double_stream_block_forward.40} parent=0 // pred_check
    _
  $region15: #{double_stream_block_forward.40} parent=0 // pred_check_branch
    %62 = sbr.rel (0) target = $region17
  $region16: #{double_stream_block_forward.40} parent=0 // pred_region
    _
  $region17: #{double_stream_block_forward.40} parent=0 // pred_fallthru
    _
  // Predicated region
  $region18: #{double_stream_block_forward.40} parent=0 // pred_check
    _
  $region19: #{double_stream_block_forward.40} parent=0 // pred_check_branch
    %64 = sbr.rel (0) target = $region21
  $region20: #{double_stream_block_forward.40} parent=0 // pred_region
    _
  $region21: #{double_stream_block_forward.40} parent=0 // pred_fallthru
    _

// kernel: double_stream_block_forward.32
$region0: #{double_stream_block_forward.32}
  #allocation0 [shape = 'u32[]', space=smem, size = 0x4, offset = 0x4, fixed_abs, tag = 'smem constant byte address 0x4 - core index']
  #allocation1 [shape = 'u32[72,128]{1,0:T(1,128)}', space=vmem, size = 0x9000, scoped, tag = 'internal scratch']
  %s0 = inlined_call_operand.vmem [shape: f32[2,4,8,32], index: 0, kind: input, shape index: {}]
  %s1 = inlined_call_operand.vmem [shape: f32[1,32], index: 1, kind: input, shape index: {}]
  %s2 = inlined_call_operand.vmem [shape: f32[2,4,8,32], index: 2, kind: output, shape index: {}]
  %s3 = sld [smem:[#allocation0]]
  $region41: #{double_stream_block_forward.32} parent=0
    _
  %s5 = ssub.s32 1, %s3
  %s6 = scalar_select 0, %s5, %s3
  loop: start=0, step=1, limit=10
  $region2: #{double_stream_block_forward.32} parent=0 // loop_pre_header
    _
  $region3: #{double_stream_block_forward.32} parent=0 // loop_header
    %s8 = sphi 0, %s12
    %p9 = scmp.ge.s32.totalorder %s8, 10
    %s15 = sphi 0, %s27
    %s16 = sphi 0, %s23
    %s17 = sphi 0, %s15
    %s18 = sphi 0, %s16
    %s19 = sphi 0, %s17
    %s20 = sphi 0, %s18
    %s32 = sphi 0, %s34
    %s35 = sphi 0, %s32
    %s36 = sphi 0, %s35
    %s52 = sphi 0, %s36
    %s56 = sphi 0, %s56
    %s58 = sphi 0, %s56
    %s59 = sphi 0, %s58
    %s73 = sphi 0, %s59
    %s81 = sphi 0, %s83
    %s84 = sphi 0, %s81
    %s85 = sphi 0, %s84
    %s101 = sphi 0, %s85
  $region4: #{double_stream_block_forward.32} parent=0 // loop_header_branch
    %11 = sbr.rel (%p9) target = $region8
  $region5: #{double_stream_block_forward.32} parent=0 // loop_body
    %s13 = ssub.s32 %s8, 1
    %s14 = ssub.s32 %s8, 2
    %s21 = sadd.s32 1, %s16
    %p22 = scmp.ge.s32.totalorder %s21, 4
    %s23 = scalar_select %p22, 0, %s21
    %s24 = sadd.s32 1, %s15
    %s25 = scalar_select %p22, %s24, %s15
    %p26 = scmp.ge.s32.totalorder %s25, 2
    %s27 = scalar_select %p26, 0, %s25
    %s28 = ssub.s32 %s15, %s27
    %s29 = ssub.s32 %s16, %s23
    %s30 = sor.u32 %s28, %s29
    %p31 = scmp.eq.s32.totalorder %s30, 0
    %s33 = sadd.s32 %s32, 1
    %s34 = scalar_select %p31, %s32, %s33
    %p37 = pneg %p31
    %p38 = scmp.eq.s32.totalorder %s8, 7
    %p39 = por %p37, %p38
    %p40 = scmp.ne.s32.totalorder %s32, %s35
    %p41 = scmp.eq.s32.totalorder %s8, 0
    %p42 = por %p40, %p41
    %p43 = scmp.ne.s32.totalorder %s32, %s35
    %p44 = scmp.eq.s32.totalorder %s13, 7
    %p45 = por %p43, %p44
    %p46 = scmp.ne.s32.totalorder %s35, %s36
    %p47 = scmp.eq.s32.totalorder %s13, 0
    %p48 = por %p46, %p47
    %p49 = scmp.ne.s32.totalorder %s35, %s36
    %p50 = scmp.eq.s32.totalorder %s14, 7
    %p51 = por %p49, %p50
    %p53 = scmp.ne.s32.totalorder %s36, %s52
    %p54 = scmp.eq.s32.totalorder %s14, 0
    %p55 = por %p53, %p54
    %s57 = sadd.s32 %s56, 1
    %p60 = scmp.eq.s32.totalorder %s8, 7
    %p61 = scmp.ne.s32.totalorder %s56, %s58
    %p62 = scmp.eq.s32.totalorder %s8, 0
    %p63 = por %p61, %p62
    %p64 = scmp.ne.s32.totalorder %s56, %s58
    %p65 = scmp.eq.s32.totalorder %s13, 7
    %p66 = por %p64, %p65
    %p67 = scmp.ne.s32.totalorder %s58, %s59
    %p68 = scmp.eq.s32.totalorder %s13, 0
    %p69 = por %p67, %p68
    %p70 = scmp.ne.s32.totalorder %s58, %s59
    %p71 = scmp.eq.s32.totalorder %s14, 7
    %p72 = por %p70, %p71
    %p74 = scmp.ne.s32.totalorder %s59, %s73
    %p75 = scmp.eq.s32.totalorder %s14, 0
    %p76 = por %p74, %p75
    %s77 = ssub.s32 %s15, %s27
    %s78 = ssub.s32 %s16, %s23
    %s79 = sor.u32 %s77, %s78
    %p80 = scmp.eq.s32.totalorder %s79, 0
    %s82 = sadd.s32 %s81, 1
    %s83 = scalar_select %p80, %s81, %s82
    %p86 = pneg %p80
    %p87 = scmp.eq.s32.totalorder %s8, 7
    %p88 = por %p86, %p87
    %p89 = scmp.ne.s32.totalorder %s81, %s84
    %p90 = scmp.eq.s32.totalorder %s8, 0
    %p91 = por %p89, %p90
    %p92 = scmp.ne.s32.totalorder %s81, %s84
    %p93 = scmp.eq.s32.totalorder %s13, 7
    %p94 = por %p92, %p93
    %p95 = scmp.ne.s32.totalorder %s84, %s85
    %p96 = scmp.eq.s32.totalorder %s13, 0
    %p97 = por %p95, %p96
    %p98 = scmp.ne.s32.totalorder %s84, %s85
    %p99 = scmp.eq.s32.totalorder %s14, 7
    %p100 = por %p98, %p99
    %p102 = scmp.ne.s32.totalorder %s85, %s101
    %p103 = scmp.eq.s32.totalorder %s14, 0
    %p104 = por %p102, %p103
    %p105 = scmp.le.s32.totalorder 1, %s8
    %p106 = scmp.lt.s32.totalorder %s8, 9
    %p107 = pnand %p105, %p106
    %p108 = pneg %p107
    // Predicated region
    $region9: #{double_stream_block_forward.32} parent=5 // pred_check
      _
    $region10: #{double_stream_block_forward.32} parent=5 // pred_check_branch
      %110 = sbr.rel (%p107) target = $region12
    $region11: #{double_stream_block_forward.32} parent=5 // pred_region
      %s111 = ssub.s32 %s8, 1
      // Predicated region
      $region13: #{double_stream_block_forward.32} parent=11 // pred_check
        %p112 = pneg %p69
      $region14: #{double_stream_block_forward.32} parent=11 // pred_check_branch
        %114 = sbr.rel (%p112) target = $region16
      $region15: #{double_stream_block_forward.32} parent=11 // pred_region
        _
      $region16: #{double_stream_block_forward.32} parent=11 // pred_fallthru
        _
    $region12: #{double_stream_block_forward.32} parent=5 // pred_fallthru
      _
    %p115 = scmp.lt.s32.totalorder %s8, 8
    // Predicated region
    $region17: #{double_stream_block_forward.32} parent=5 // pred_check
      %p116 = pneg %p115
    $region18: #{double_stream_block_forward.32} parent=5 // pred_check_branch
      %118 = sbr.rel (%p116) target = $region20
    $region19: #{double_stream_block_forward.32} parent=5 // pred_region
      // Predicated region
      $region21: #{double_stream_block_forward.32} parent=19 // pred_check
        %p119 = pneg %p42
      $region22: #{double_stream_block_forward.32} parent=19 // pred_check_branch
        %121 = sbr.rel (%p119) target = $region24
      $region23: #{double_stream_block_forward.32} parent=19 // pred_region
        %p122 = scmp.lt.s32.totalorder %s15, 1
        %s123 = scalar_select %p122, %s15, 1
        %p124 = scmp.lt.s32.totalorder %s16, 3
        %s125 = scalar_select %p124, %s16, 3
        %s126 = smul.addr %s123, 4
        %s127 = sadd.s32 %s125, %s126
        %s128 = smul.addr %s127, 8
        %s129 = scalar_lea.vmem %s0, %s128
      $region24: #{double_stream_block_forward.32} parent=19 // pred_fallthru
        _
    $region20: #{double_stream_block_forward.32} parent=5 // pred_fallthru
      _
    %p130 = scmp.le.s32.totalorder 1, %s8
    %p131 = scmp.lt.s32.totalorder %s8, 9
    %p132 = pnand %p130, %p131
    %p133 = pneg %p132
    // Predicated region
    $region25: #{double_stream_block_forward.32} parent=5 // pred_check
      _
    $region26: #{double_stream_block_forward.32} parent=5 // pred_check_branch
      %135 = sbr.rel (%p132) target = $region28
    $region27: #{double_stream_block_forward.32} parent=5 // pred_region
      %s136 = ssub.s32 %s8, 1
      %p137 = scmp.lt.s32.totalorder %s17, 1
      %s138 = scalar_select %p137, %s17, 1
      %p139 = scmp.lt.s32.totalorder %s18, 3
      %s140 = scalar_select %p139, %s18, 3
      %s141 = smul.addr %s138, 4
      %s142 = sadd.s32 %s140, %s141
      %s143 = smul.addr %s142, 8
      %s144 = scalar_lea.vmem %s0, %s143
      %p145 = pneg %p48
      %p146 = pneg %p45
      %p147 = pneg %p69
      %p148 = pneg %p66
      %p149 = pneg %p97
      %p150 = pneg %p94
      %p151 = scmp.lt.s32.totalorder %s17, 1
      %s152 = scalar_select %p151, %s17, 1
      %p153 = scmp.lt.s32.totalorder %s18, 3
      %s154 = scalar_select %p153, %s18, 3
      %s155 = smul.addr %s152, 4
      %s156 = sadd.s32 %s154, %s155
      %s157 = smul.addr %s156, 8
      %s158 = scalar_lea.vmem %s2, %s157
      %p159 = scmp.lt.s32.totalorder %s17, 1
      %s160 = scalar_select %p159, %s17, 1
      %p161 = scmp.lt.s32.totalorder %s18, 3
      %s162 = scalar_select %p161, %s18, 3
      %s163 = smul.addr %s160, 4
      %s164 = sadd.s32 %s162, %s163
      %s165 = smul.addr %s164, 8
      %s166 = scalar_lea.vmem %s0, %s165
      %p167 = scmp.lt.s32.totalorder %s17, 1
      %s168 = scalar_select %p167, %s17, 1
      %p169 = scmp.lt.s32.totalorder %s18, 3
      %s170 = scalar_select %p169, %s18, 3
      %s171 = smul.addr %s168, 4
      %s172 = sadd.s32 %s170, %s171
      %s173 = smul.addr %s172, 8
      %s174 = scalar_lea.vmem %s2, %s173
      %v175 = vld [vmem:[%s166] sm:$0xff]
      %v176 = vmul.f32 %v175, %v175
      %vm177 = vcmask 261120
      %v178 = vsel %vm177, %v176, 0.0
      %179 = vadd.xlane.f32.xlu0 %v178
      %v180 = vpop.xlane.xlu0 %179
      %v181 = vrcp.pop 32.0
      %v182 = vmul.f32 32.0, %v181
      %v183 = vsub.f32 1.0, %v182
      %v184 = vmul.f32 %v181, %v183
      %v185 = vadd.f32 %v181, %v184
      %vm186 = vweird.f32 %v181
      %v187 = vsel %vm186, %v181, %v185
      %v188 = vmul.f32 %v180, %v187
      %v189 = vadd.f32 %v188, 1e-06
      %v190 = vrsqrt.pop %v189
      %v191 = vmul.f32 %v190, %v189
      %v192 = vmul.f32 %v191, %v190
      %v193 = vmul.f32 0.5, %v192
      %v194 = vsub.f32 1.5, %v193
      %v195 = vmul.f32 %v190, %v194
      %vm196 = vweird.f32 %v189
      %vm197 = vweird.f32 %v190
      %vm198 = vmor %vm196, %vm197
      %v199 = vsel %vm198, %v190, %v195
      %v200 = vmul.f32 %v175, %v199
      %v201 = vld [vmem:[%s1] sm:$0x1]
      %v203 = vperm.slane %v201, 0
      %v205 = vmul.f32 %v200, %v203
      %206 = vst.msk [vmem:[%s174] sm:$0xff] %vm177, %v205
      %p207 = scmp.lt.s32.totalorder %s17, 1
      %s208 = scalar_select %p207, %s17, 1
      %p209 = scmp.lt.s32.totalorder %s18, 3
      %s210 = scalar_select %p209, %s18, 3
      %s211 = smul.addr %s208, 4
      %s212 = sadd.s32 %s210, %s211
      %s213 = smul.addr %s212, 8
      %s214 = scalar_lea.vmem %s2, %s213
      // Predicated region
      $region29: #{double_stream_block_forward.32} parent=27 // pred_check
        %p215 = pneg %p94
      $region30: #{double_stream_block_forward.32} parent=27 // pred_check_branch
        %217 = sbr.rel (%p215) target = $region32
      $region31: #{double_stream_block_forward.32} parent=27 // pred_region
        _
      $region32: #{double_stream_block_forward.32} parent=27 // pred_fallthru
        _
    $region28: #{double_stream_block_forward.32} parent=5 // pred_fallthru
      _
    %p218 = scmp.le.s32.totalorder 2, %s8
    // Predicated region
    $region33: #{double_stream_block_forward.32} parent=5 // pred_check
      %p219 = pneg %p218
    $region34: #{double_stream_block_forward.32} parent=5 // pred_check_branch
      %221 = sbr.rel (%p219) target = $region36
    $region35: #{double_stream_block_forward.32} parent=5 // pred_region
      %s222 = ssub.s32 %s8, 2
      // Predicated region
      $region37: #{double_stream_block_forward.32} parent=35 // pred_check
        %p223 = pneg %p100
      $region38: #{double_stream_block_forward.32} parent=35 // pred_check_branch
        %225 = sbr.rel (%p223) target = $region40
      $region39: #{double_stream_block_forward.32} parent=35 // pred_region
        %p226 = scmp.lt.s32.totalorder %s19, 1
        %s227 = scalar_select %p226, %s19, 1
        %p228 = scmp.lt.s32.totalorder %s20, 3
        %s229 = scalar_select %p228, %s20, 3
        %s230 = smul.addr %s227, 4
        %s231 = sadd.s32 %s229, %s230
        %s232 = smul.addr %s231, 8
        %s233 = scalar_lea.vmem %s2, %s232
      $region40: #{double_stream_block_forward.32} parent=35 // pred_fallthru
        _
    $region36: #{double_stream_block_forward.32} parent=5 // pred_fallthru
      _
  $region6: #{double_stream_block_forward.32} parent=0 // loop_footer
    %s12 = sadd.s32 1, %s8
  $region7: #{double_stream_block_forward.32} parent=0 // loop_footer_branch
    %7 = sbr.rel target = $region3
  $region8: #{double_stream_block_forward.32} parent=0 // loop_exit
    _

// kernel: double_stream_block_forward.41
$region0: #{double_stream_block_forward.41}
  #allocation0 [shape = 'u32[]', space=smem, size = 0x4, offset = 0x4, fixed_abs, tag = 'smem constant byte address 0x4 - core index']
  #allocation1 [shape = 'u32[72,128]{1,0:T(1,128)}', space=vmem, size = 0x9000, scoped, tag = 'internal scratch']
  %s0 = inlined_call_operand.vmem [shape: f32[2,8,128], index: 0, kind: input, shape index: {}]
  %s1 = inlined_call_operand.vmem [shape: f32[2,8,128], index: 1, kind: input, shape index: {}]
  %s2 = inlined_call_operand.vmem [shape: f32[2,1,128], index: 2, kind: input, shape index: {}]
  %s3 = inlined_call_operand.vmem [shape: f32[2,8,128], index: 3, kind: output, shape index: {}]
  %s4 = sld [smem:[#allocation0]]
  $region45: #{double_stream_block_forward.41} parent=0
    _
  %s6 = ssub.s32 1, %s4
  %s7 = scalar_select 0, %s6, %s4
  loop: start=0, step=1, limit=4
  $region2: #{double_stream_block_forward.41} parent=0 // loop_pre_header
    _
  $region3: #{double_stream_block_forward.41} parent=0 // loop_header
    %s9 = sphi 0, %s13
    %p10 = scmp.ge.s32.totalorder %s9, 4
    %s16 = sphi 0, %s28
    %s17 = sphi 0, %s24
    %s18 = sphi 0, %s16
    %s19 = sphi 0, %s17
    %s20 = sphi 0, %s18
    %s21 = sphi 0, %s19
    %s33 = sphi 0, %s35
    %s36 = sphi 0, %s33
    %s37 = sphi 0, %s36
    %s53 = sphi 0, %s37
    %s61 = sphi 0, %s63
    %s64 = sphi 0, %s61
    %s65 = sphi 0, %s64
    %s81 = sphi 0, %s65
    %s87 = sphi 0, %s89
    %s90 = sphi 0, %s87
    %s91 = sphi 0, %s90
    %s107 = sphi 0, %s91
    %s115 = sphi 0, %s117
    %s118 = sphi 0, %s115
    %s119 = sphi 0, %s118
    %s135 = sphi 0, %s119
  $region4: #{double_stream_block_forward.41} parent=0 // loop_header_branch
    %12 = sbr.rel (%p10) target = $region8
  $region5: #{double_stream_block_forward.41} parent=0 // loop_body
    %s14 = ssub.s32 %s9, 1
    %s15 = ssub.s32 %s9, 2
    %s22 = sadd.s32 1, %s17
    %p23 = scmp.ge.s32.totalorder %s22, 1
    %s24 = scalar_select %p23, 0, %s22
    %s25 = sadd.s32 1, %s16
    %s26 = scalar_select %p23, %s25, %s16
    %p27 = scmp.ge.s32.totalorder %s26, 2
    %s28 = scalar_select %p27, 0, %s26
    %s29 = ssub.s32 %s16, %s28
    %s30 = ssub.s32 %s17, %s24
    %s31 = sor.u32 %s29, %s30
    %p32 = scmp.eq.s32.totalorder %s31, 0
    %s34 = sadd.s32 %s33, 1
    %s35 = scalar_select %p32, %s33, %s34
    %p38 = pneg %p32
    %p39 = scmp.eq.s32.totalorder %s9, 1
    %p40 = por %p38, %p39
    %p41 = scmp.ne.s32.totalorder %s33, %s36
    %p42 = scmp.eq.s32.totalorder %s9, 0
    %p43 = por %p41, %p42
    %p44 = scmp.ne.s32.totalorder %s33, %s36
    %p45 = scmp.eq.s32.totalorder %s14, 1
    %p46 = por %p44, %p45
    %p47 = scmp.ne.s32.totalorder %s36, %s37
    %p48 = scmp.eq.s32.totalorder %s14, 0
    %p49 = por %p47, %p48
    %p50 = scmp.ne.s32.totalorder %s36, %s37
    %p51 = scmp.eq.s32.totalorder %s15, 1
    %p52 = por %p50, %p51
    %p54 = scmp.ne.s32.totalorder %s37, %s53
    %p55 = scmp.eq.s32.totalorder %s15, 0
    %p56 = por %p54, %p55
    %s57 = ssub.s32 %s16, %s28
    %s58 = ssub.s32 %s17, %s24
    %s59 = sor.u32 %s57, %s58
    %p60 = scmp.eq.s32.totalorder %s59, 0
    %s62 = sadd.s32 %s61, 1
    %s63 = scalar_select %p60, %s61, %s62
    %p66 = pneg %p60
    %p67 = scmp.eq.s32.totalorder %s9, 1
    %p68 = por %p66, %p67
    %p69 = scmp.ne.s32.totalorder %s61, %s64
    %p70 = scmp.eq.s32.totalorder %s9, 0
    %p71 = por %p69, %p70
    %p72 = scmp.ne.s32.totalorder %s61, %s64
    %p73 = scmp.eq.s32.totalorder %s14, 1
    %p74 = por %p72, %p73
    %p75 = scmp.ne.s32.totalorder %s64, %s65
    %p76 = scmp.eq.s32.totalorder %s14, 0
    %p77 = por %p75, %p76
    %p78 = scmp.ne.s32.totalorder %s64, %s65
    %p79 = scmp.eq.s32.totalorder %s15, 1
    %p80 = por %p78, %p79
    %p82 = scmp.ne.s32.totalorder %s65, %s81
    %p83 = scmp.eq.s32.totalorder %s15, 0
    %p84 = por %p82, %p83
    %s85 = ssub.s32 %s16, %s28
    %p86 = scmp.eq.s32.totalorder %s85, 0
    %s88 = sadd.s32 %s87, 1
    %s89 = scalar_select %p86, %s87, %s88
    %p92 = pneg %p86
    %p93 = scmp.eq.s32.totalorder %s9, 1
    %p94 = por %p92, %p93
    %p95 = scmp.ne.s32.totalorder %s87, %s90
    %p96 = scmp.eq.s32.totalorder %s9, 0
    %p97 = por %p95, %p96
    %p98 = scmp.ne.s32.totalorder %s87, %s90
    %p99 = scmp.eq.s32.totalorder %s14, 1
    %p100 = por %p98, %p99
    %p101 = scmp.ne.s32.totalorder %s90, %s91
    %p102 = scmp.eq.s32.totalorder %s14, 0
    %p103 = por %p101, %p102
    %p104 = scmp.ne.s32.totalorder %s90, %s91
    %p105 = scmp.eq.s32.totalorder %s15, 1
    %p106 = por %p104, %p105
    %p108 = scmp.ne.s32.totalorder %s91, %s107
    %p109 = scmp.eq.s32.totalorder %s15, 0
    %p110 = por %p108, %p109
    %s111 = ssub.s32 %s16, %s28
    %s112 = ssub.s32 %s17, %s24
    %s113 = sor.u32 %s111, %s112
    %p114 = scmp.eq.s32.totalorder %s113, 0
    %s116 = sadd.s32 %s115, 1
    %s117 = scalar_select %p114, %s115, %s116
    %p120 = pneg %p114
    %p121 = scmp.eq.s32.totalorder %s9, 1
    %p122 = por %p120, %p121
    %p123 = scmp.ne.s32.totalorder %s115, %s118
    %p124 = scmp.eq.s32.totalorder %s9, 0
    %p125 = por %p123, %p124
    %p126 = scmp.ne.s32.totalorder %s115, %s118
    %p127 = scmp.eq.s32.totalorder %s14, 1
    %p128 = por %p126, %p127
    %p129 = scmp.ne.s32.totalorder %s118, %s119
    %p130 = scmp.eq.s32.totalorder %s14, 0
    %p131 = por %p129, %p130
    %p132 = scmp.ne.s32.totalorder %s118, %s119
    %p133 = scmp.eq.s32.totalorder %s15, 1
    %p134 = por %p132, %p133
    %p136 = scmp.ne.s32.totalorder %s119, %s135
    %p137 = scmp.eq.s32.totalorder %s15, 0
    %p138 = por %p136, %p137
    %p139 = scmp.le.s32.totalorder 1, %s9
    %p140 = scmp.lt.s32.totalorder %s9, 3
    %p141 = pnand %p139, %p140
    %p142 = pneg %p141
    // Predicated region
    $region9: #{double_stream_block_forward.41} parent=5 // pred_check
      _
    $region10: #{double_stream_block_forward.41} parent=5 // pred_check_branch
      %144 = sbr.rel (%p141) target = $region12
    $region11: #{double_stream_block_forward.41} parent=5 // pred_region
      %s145 = ssub.s32 %s9, 1
    $region12: #{double_stream_block_forward.41} parent=5 // pred_fallthru
      _
    %p146 = scmp.lt.s32.totalorder %s9, 2
    // Predicated region
    $region13: #{double_stream_block_forward.41} parent=5 // pred_check
      %p147 = pneg %p146
    $region14: #{double_stream_block_forward.41} parent=5 // pred_check_branch
      %149 = sbr.rel (%p147) target = $region16
    $region15: #{double_stream_block_forward.41} parent=5 // pred_region
      // Predicated region
      $region17: #{double_stream_block_forward.41} parent=15 // pred_check
        %p150 = pneg %p43
      $region18: #{double_stream_block_forward.41} parent=15 // pred_check_branch
        %152 = sbr.rel (%p150) target = $region20
      $region19: #{double_stream_block_forward.41} parent=15 // pred_region
        %p153 = scmp.lt.s32.totalorder %s16, 1
        %s154 = scalar_select %p153, %s16, 1
        %p155 = scmp.lt.s32.totalorder %s17, 0
        %s156 = scalar_select %p155, %s17, 0
        %s157 = sadd.s32 %s156, %s154
        %s158 = smul.addr %s157, 8
        %s159 = scalar_lea.vmem %s0, %s158
      $region20: #{double_stream_block_forward.41} parent=15 // pred_fallthru
        _
      // Predicated region
      $region21: #{double_stream_block_forward.41} parent=15 // pred_check
        %p160 = pneg %p71
      $region22: #{double_stream_block_forward.41} parent=15 // pred_check_branch
        %162 = sbr.rel (%p160) target = $region24
      $region23: #{double_stream_block_forward.41} parent=15 // pred_region
        %p163 = scmp.lt.s32.totalorder %s16, 1
        %s164 = scalar_select %p163, %s16, 1
        %p165 = scmp.lt.s32.totalorder %s17, 0
        %s166 = scalar_select %p165, %s17, 0
        %s167 = sadd.s32 %s166, %s164
        %s168 = smul.addr %s167, 8
        %s169 = scalar_lea.vmem %s1, %s168
      $region24: #{double_stream_block_forward.41} parent=15 // pred_fallthru
        _
      // Predicated region
      $region25: #{double_stream_block_forward.41} parent=15 // pred_check
        %p170 = pneg %p97
      $region26: #{double_stream_block_forward.41} parent=15 // pred_check_branch
        %172 = sbr.rel (%p170) target = $region28
      $region27: #{double_stream_block_forward.41} parent=15 // pred_region
        %p173 = scmp.lt.s32.totalorder %s16, 1
        %s174 = scalar_select %p173, %s16, 1
        %s175 = scalar_lea.vmem %s2, %s174
      $region28: #{double_stream_block_forward.41} parent=15 // pred_fallthru
        _
    $region16: #{double_stream_block_forward.41} parent=5 // pred_fallthru
      _
    %p176 = scmp.le.s32.totalorder 1, %s9
    %p177 = scmp.lt.s32.totalorder %s9, 3
    %p178 = pnand %p176, %p177
    %p179 = pneg %p178
    // Predicated region
    $region29: #{double_stream_block_forward.41} parent=5 // pred_check
      _
    $region30: #{double_stream_block_forward.41} parent=5 // pred_check_branch
      %181 = sbr.rel (%p178) target = $region32
    $region31: #{double_stream_block_forward.41} parent=5 // pred_region
      %s182 = ssub.s32 %s9, 1
      %p183 = scmp.lt.s32.totalorder %s18, 1
      %s184 = scalar_select %p183, %s18, 1
      %p185 = scmp.lt.s32.totalorder %s19, 0
      %s186 = scalar_select %p185, %s19, 0
      %s187 = sadd.s32 %s186, %s184
      %s188 = smul.addr %s187, 8
      %s189 = scalar_lea.vmem %s0, %s188
      %p190 = pneg %p49
      %p191 = pneg %p46
      %p192 = scmp.lt.s32.totalorder %s18, 1
      %s193 = scalar_select %p192, %s18, 1
      %p194 = scmp.lt.s32.totalorder %s19, 0
      %s195 = scalar_select %p194, %s19, 0
      %s196 = sadd.s32 %s195, %s193
      %s197 = smul.addr %s196, 8
      %s198 = scalar_lea.vmem %s1, %s197
      %p199 = pneg %p77
      %p200 = pneg %p74
      %p201 = scmp.lt.s32.totalorder %s18, 1
      %s202 = scalar_select %p201, %s18, 1
      %s203 = scalar_lea.vmem %s2, %s202
      %p204 = pneg %p103
      %p205 = pneg %p100
      %p206 = pneg %p131
      %p207 = pneg %p128
      %p208 = scmp.lt.s32.totalorder %s18, 1
      %s209 = scalar_select %p208, %s18, 1
      %p210 = scmp.lt.s32.totalorder %s19, 0
      %s211 = scalar_select %p210, %s19, 0
      %s212 = sadd.s32 %s211, %s209
      %s213 = smul.addr %s212, 8
      %s214 = scalar_lea.vmem %s3, %s213
      %p215 = scmp.lt.s32.totalorder %s18, 1
      %s216 = scalar_select %p215, %s18, 1
      %p217 = scmp.lt.s32.totalorder %s19, 0
      %s218 = scalar_select %p217, %s19, 0
      %s219 = sadd.s32 %s218, %s216
      %s220 = smul.addr %s219, 8
      %s221 = scalar_lea.vmem %s0, %s220
      %p222 = scmp.lt.s32.totalorder %s18, 1
      %s223 = scalar_select %p222, %s18, 1
      %p224 = scmp.lt.s32.totalorder %s19, 0
      %s225 = scalar_select %p224, %s19, 0
      %s226 = sadd.s32 %s225, %s223
      %s227 = smul.addr %s226, 8
      %s228 = scalar_lea.vmem %s1, %s227
      %p229 = scmp.lt.s32.totalorder %s18, 1
      %s230 = scalar_select %p229, %s18, 1
      %s231 = scalar_lea.vmem %s2, %s230
      %p232 = scmp.lt.s32.totalorder %s18, 1
      %s233 = scalar_select %p232, %s18, 1
      %p234 = scmp.lt.s32.totalorder %s19, 0
      %s235 = scalar_select %p234, %s19, 0
      %s236 = sadd.s32 %s235, %s233
      %s237 = smul.addr %s236, 8
      %s238 = scalar_lea.vmem %s3, %s237
      %v239 = vld [vmem:[%s221] sm:$0xff]
      %v240 = vld [vmem:[%s228] sm:$0xff]
      %v241 = vld [vmem:[%s231] sm:$0x1]
      %v243 = vperm.slane %v241, 0
      %v245 = vmul.f32 %v243, %v240
      %v246 = vadd.f32 %v239, %v245
      %247 = vst [vmem:[%s238] sm:$0xff] %v246
      %p248 = scmp.lt.s32.totalorder %s18, 1
      %s249 = scalar_select %p248, %s18, 1
      %p250 = scmp.lt.s32.totalorder %s19, 0
      %s251 = scalar_select %p250, %s19, 0
      %s252 = sadd.s32 %s251, %s249
      %s253 = smul.addr %s252, 8
      %s254 = scalar_lea.vmem %s3, %s253
      // Predicated region
      $region33: #{double_stream_block_forward.41} parent=31 // pred_check
        %p255 = pneg %p128
      $region34: #{double_stream_block_forward.41} parent=31 // pred_check_branch
        %257 = sbr.rel (%p255) target = $region36
      $region35: #{double_stream_block_forward.41} parent=31 // pred_region
        _
      $region36: #{double_stream_block_forward.41} parent=31 // pred_fallthru
        _
    $region32: #{double_stream_block_forward.41} parent=5 // pred_fallthru
      _
    %p258 = scmp.le.s32.totalorder 2, %s9
    // Predicated region
    $region37: #{double_stream_block_forward.41} parent=5 // pred_check
      %p259 = pneg %p258
    $region38: #{double_stream_block_forward.41} parent=5 // pred_check_branch
      %261 = sbr.rel (%p259) target = $region40
    $region39: #{double_stream_block_forward.41} parent=5 // pred_region
      %s262 = ssub.s32 %s9, 2
      // Predicated region
      $region41: #{double_stream_block_forward.41} parent=39 // pred_check
        %p263 = pneg %p134
      $region42: #{double_stream_block_forward.41} parent=39 // pred_check_branch
        %265 = sbr.rel (%p263) target = $region44
      $region43: #{double_stream_block_forward.41} parent=39 // pred_region
        %p266 = scmp.lt.s32.totalorder %s20, 1
        %s267 = scalar_select %p266, %s20, 1
        %p268 = scmp.lt.s32.totalorder %s21, 0
        %s269 = scalar_select %p268, %s21, 0
        %s270 = sadd.s32 %s269, %s267
        %s271 = smul.addr %s270, 8
        %s272 = scalar_lea.vmem %s3, %s271
      $region44: #{double_stream_block_forward.41} parent=39 // pred_fallthru
        _
    $region40: #{double_stream_block_forward.41} parent=5 // pred_fallthru
      _
  $region6: #{double_stream_block_forward.41} parent=0 // loop_footer
    %s13 = sadd.s32 1, %s9
  $region7: #{double_stream_block_forward.41} parent=0 // loop_footer_branch
    %8 = sbr.rel target = $region3
  $region8: #{double_stream_block_forward.41} parent=0 // loop_exit
    _

// kernel: double_stream_block_forward.43
$region0: #{double_stream_block_forward.43}
  #allocation0 [shape = 'u32[]', space=smem, size = 0x4, offset = 0x4, fixed_abs, tag = 'smem constant byte address 0x4 - core index']
  #allocation1 [shape = 'u32[72,128]{1,0:T(1,128)}', space=vmem, size = 0x9000, scoped, tag = 'internal scratch']
  %s0 = inlined_call_operand.vmem [shape: f32[16,128], index: 0, kind: input, shape index: {}]
  %s1 = inlined_call_operand.vmem [shape: f32[512,128], index: 1, kind: input, shape index: {}]
  %s2 = inlined_call_operand.vmem [shape: f32[1,512], index: 2, kind: input, shape index: {}]
  %s3 = inlined_call_operand.vmem [shape: f32[16,512], index: 3, kind: output, shape index: {}]
  %s4 = sld [smem:[#allocation0]]
  $region22: #{double_stream_block_forward.43} parent=0
    _
  %s6 = ssub.s32 1, %s4
  %s7 = scalar_select 0, %s6, %s4
  // Predicated region
  $region2: #{double_stream_block_forward.43} parent=0 // pred_check
    _
  $region3: #{double_stream_block_forward.43} parent=0 // pred_check_branch
    %9 = sbr.rel (0) target = $region5
  $region4: #{double_stream_block_forward.43} parent=0 // pred_region
    _
  $region5: #{double_stream_block_forward.43} parent=0 // pred_fallthru
    _
  // Predicated region
  $region6: #{double_stream_block_forward.43} parent=0 // pred_check
    _
  $region7: #{double_stream_block_forward.43} parent=0 // pred_check_branch
    %11 = sbr.rel (0) target = $region9
  $region8: #{double_stream_block_forward.43} parent=0 // pred_region
    _
  $region9: #{double_stream_block_forward.43} parent=0 // pred_fallthru
    _
  // Predicated region
  $region10: #{double_stream_block_forward.43} parent=0 // pred_check
    _
  $region11: #{double_stream_block_forward.43} parent=0 // pred_check_branch
    %13 = sbr.rel (0) target = $region13
  $region12: #{double_stream_block_forward.43} parent=0 // pred_region
    _
  $region13: #{double_stream_block_forward.43} parent=0 // pred_fallthru
    _
  %v14 = vld [vmem:[%s0] sm:$0xff]
  %v15 = vld [vmem:[%s0 + $0x8] sm:$0xff]
  %v16 = vld [vmem:[%s1] sm:$0xff]
  %v17 = vld [vmem:[%s1 + $0x8] sm:$0xff]
  %v18 = vld [vmem:[%s1 + $0x10] sm:$0xff]
  %v19 = vld [vmem:[%s1 + $0x18] sm:$0xff]
  %v20 = vld [vmem:[%s1 + $0x20] sm:$0xff]
  %v21 = vld [vmem:[%s1 + $0x28] sm:$0xff]
  %v22 = vld [vmem:[%s1 + $0x30] sm:$0xff]
  %v23 = vld [vmem:[%s1 + $0x38] sm:$0xff]
  %v24 = vld [vmem:[%s1 + $0x40] sm:$0xff]
  %v25 = vld [vmem:[%s1 + $0x48] sm:$0xff]
  %v26 = vld [vmem:[%s1 + $0x50] sm:$0xff]
  %v27 = vld [vmem:[%s1 + $0x58] sm:$0xff]
  %v28 = vld [vmem:[%s1 + $0x60] sm:$0xff]
  %v29 = vld [vmem:[%s1 + $0x68] sm:$0xff]
  %v30 = vld [vmem:[%s1 + $0x70] sm:$0xff]
  %v31 = vld [vmem:[%s1 + $0x78] sm:$0xff]
  %v32 = vld [vmem:[%s1 + $0x80] sm:$0xff]
  %v33 = vld [vmem:[%s1 + $0x88] sm:$0xff]
  %v34 = vld [vmem:[%s1 + $0x90] sm:$0xff]
  %v35 = vld [vmem:[%s1 + $0x98] sm:$0xff]
  %v36 = vld [vmem:[%s1 + $0xa0] sm:$0xff]
  %v37 = vld [vmem:[%s1 + $0xa8] sm:$0xff]
  %v38 = vld [vmem:[%s1 + $0xb0] sm:$0xff]
  %v39 = vld [vmem:[%s1 + $0xb8] sm:$0xff]
  %v40 = vld [vmem:[%s1 + $0xc0] sm:$0xff]
  %v41 = vld [vmem:[%s1 + $0xc8] sm:$0xff]
  %v42 = vld [vmem:[%s1 + $0xd0] sm:$0xff]
  %v43 = vld [vmem:[%s1 + $0xd8] sm:$0xff]
  %v44 = vld [vmem:[%s1 + $0xe0] sm:$0xff]
  %v45 = vld [vmem:[%s1 + $0xe8] sm:$0xff]
  %v46 = vld [vmem:[%s1 + $0xf0] sm:$0xff]
  %v47 = vld [vmem:[%s1 + $0xf8] sm:$0xff]
  %v48 = vld [vmem:[%s1 + $0x100] sm:$0xff]
  %v49 = vld [vmem:[%s1 + $0x108] sm:$0xff]
  %v50 = vld [vmem:[%s1 + $0x110] sm:$0xff]
  %v51 = vld [vmem:[%s1 + $0x118] sm:$0xff]
  %v52 = vld [vmem:[%s1 + $0x120] sm:$0xff]
  %v53 = vld [vmem:[%s1 + $0x128] sm:$0xff]
  %v54 = vld [vmem:[%s1 + $0x130] sm:$0xff]
  %v55 = vld [vmem:[%s1 + $0x138] sm:$0xff]
  %v56 = vld [vmem:[%s1 + $0x140] sm:$0xff]
  %v57 = vld [vmem:[%s1 + $0x148] sm:$0xff]
  %v58 = vld [vmem:[%s1 + $0x150] sm:$0xff]
  %v59 = vld [vmem:[%s1 + $0x158] sm:$0xff]
  %v60 = vld [vmem:[%s1 + $0x160] sm:$0xff]
  %v61 = vld [vmem:[%s1 + $0x168] sm:$0xff]
  %v62 = vld [vmem:[%s1 + $0x170] sm:$0xff]
  %v63 = vld [vmem:[%s1 + $0x178] sm:$0xff]
  %v64 = vld [vmem:[%s1 + $0x180] sm:$0xff]
  %v65 = vld [vmem:[%s1 + $0x188] sm:$0xff]
  %v66 = vld [vmem:[%s1 + $0x190] sm:$0xff]
  %v67 = vld [vmem:[%s1 + $0x198] sm:$0xff]
  %v68 = vld [vmem:[%s1 + $0x1a0] sm:$0xff]
  %v69 = vld [vmem:[%s1 + $0x1a8] sm:$0xff]
  %v70 = vld [vmem:[%s1 + $0x1b0] sm:$0xff]
  %v71 = vld [vmem:[%s1 + $0x1b8] sm:$0xff]
  %v72 = vld [vmem:[%s1 + $0x1c0] sm:$0xff]
  %v73 = vld [vmem:[%s1 + $0x1c8] sm:$0xff]
  %v74 = vld [vmem:[%s1 + $0x1d0] sm:$0xff]
  %v75 = vld [vmem:[%s1 + $0x1d8] sm:$0xff]
  %v76 = vld [vmem:[%s1 + $0x1e0] sm:$0xff]
  %v77 = vld [vmem:[%s1 + $0x1e8] sm:$0xff]
  %v78 = vld [vmem:[%s1 + $0x1f0] sm:$0xff]
  %v79 = vld [vmem:[%s1 + $0x1f8] sm:$0xff]
  %v80 = vld [vmem:[%s2] sm:$0xf]
  %v82 = vperm.slane %v80, 0
  %v83 = vperm.slane %v80, 1
  %v84 = vperm.slane %v80, 2
  %v85 = vperm.slane %v80, 3
  %90 = vmatpush.xpose.msra.mxu0 %v31
  %91 = vmatpush.xpose.msra.mxu0 %v30
  %92 = vmatpush.xpose.msra.mxu0 %v29
  %93 = vmatpush.xpose.msra.mxu0 %v28
  %94 = vmatpush.xpose.msra.mxu0 %v27
  %95 = vmatpush.xpose.msra.mxu0 %v26
  %96 = vmatpush.xpose.msra.mxu0 %v25
  %97 = vmatpush.xpose.msra.mxu0 %v24
  %98 = vmatpush.xpose.msra.mxu0 %v23
  %99 = vmatpush.xpose.msra.mxu0 %v22
  %100 = vmatpush.xpose.msra.mxu0 %v21
  %101 = vmatpush.xpose.msra.mxu0 %v20
  %102 = vmatpush.xpose.msra.mxu0 %v19
  %103 = vmatpush.xpose.msra.mxu0 %v18
  %104 = vmatpush.xpose.msra.mxu0 %v17
  %105 = vmatpush.xpose.msra.mxu0 %v16
  %106 = vmatmul.f32.gmra.mxu0 %v14
  %v107 = vpop.f32.mrf.mxu0
  %v108 = vadd.f32 %v82, %v107
  %109 = vmatmul.f32.gmra.mxu0 %v15
  %v110 = vpop.f32.mrf.mxu0
  %v111 = vadd.f32 %v82, %v110
  %112 = vdwg.mxu0
  %113 = vmatpush.xpose.msra.mxu0 %v47
  %114 = vmatpush.xpose.msra.mxu0 %v46
  %115 = vmatpush.xpose.msra.mxu0 %v45
  %116 = vmatpush.xpose.msra.mxu0 %v44
  %117 = vmatpush.xpose.msra.mxu0 %v43
  %118 = vmatpush.xpose.msra.mxu0 %v42
  %119 = vmatpush.xpose.msra.mxu0 %v41
  %120 = vmatpush.xpose.msra.mxu0 %v40
  %121 = vmatpush.xpose.msra.mxu0 %v39
  %122 = vmatpush.xpose.msra.mxu0 %v38
  %123 = vmatpush.xpose.msra.mxu0 %v37
  %124 = vmatpush.xpose.msra.mxu0 %v36
  %125 = vmatpush.xpose.msra.mxu0 %v35
  %126 = vmatpush.xpose.msra.mxu0 %v34
  %127 = vmatpush.xpose.msra.mxu0 %v33
  %128 = vmatpush.xpose.msra.mxu0 %v32
  %129 = vmatmul.f32.gmra.mxu0 %v14
  %v130 = vpop.f32.mrf.mxu0
  %v131 = vadd.f32 %v83, %v130
  %132 = vmatmul.f32.gmra.mxu0 %v15
  %v133 = vpop.f32.mrf.mxu0
  %v134 = vadd.f32 %v83, %v133
  %135 = vdwg.mxu0
  %136 = vmatpush.xpose.msra.mxu0 %v63
  %137 = vmatpush.xpose.msra.mxu0 %v62
  %138 = vmatpush.xpose.msra.mxu0 %v61
  %139 = vmatpush.xpose.msra.mxu0 %v60
  %140 = vmatpush.xpose.msra.mxu0 %v59
  %141 = vmatpush.xpose.msra.mxu0 %v58
  %142 = vmatpush.xpose.msra.mxu0 %v57
  %143 = vmatpush.xpose.msra.mxu0 %v56
  %144 = vmatpush.xpose.msra.mxu0 %v55
  %145 = vmatpush.xpose.msra.mxu0 %v54
  %146 = vmatpush.xpose.msra.mxu0 %v53
  %147 = vmatpush.xpose.msra.mxu0 %v52
  %148 = vmatpush.xpose.msra.mxu0 %v51
  %149 = vmatpush.xpose.msra.mxu0 %v50
  %150 = vmatpush.xpose.msra.mxu0 %v49
  %151 = vmatpush.xpose.msra.mxu0 %v48
  %152 = vmatmul.f32.gmra.mxu0 %v14
  %v153 = vpop.f32.mrf.mxu0
  %v154 = vadd.f32 %v84, %v153
  %155 = vmatmul.f32.gmra.mxu0 %v15
  %v156 = vpop.f32.mrf.mxu0
  %v157 = vadd.f32 %v84, %v156
  %158 = vdwg.mxu0
  %159 = vmatpush.xpose.msra.mxu0 %v79
  %160 = vmatpush.xpose.msra.mxu0 %v78
  %161 = vmatpush.xpose.msra.mxu0 %v77
  %162 = vmatpush.xpose.msra.mxu0 %v76
  %163 = vmatpush.xpose.msra.mxu0 %v75
  %164 = vmatpush.xpose.msra.mxu0 %v74
  %165 = vmatpush.xpose.msra.mxu0 %v73
  %166 = vmatpush.xpose.msra.mxu0 %v72
  %167 = vmatpush.xpose.msra.mxu0 %v71
  %168 = vmatpush.xpose.msra.mxu0 %v70
  %169 = vmatpush.xpose.msra.mxu0 %v69
  %170 = vmatpush.xpose.msra.mxu0 %v68
  %171 = vmatpush.xpose.msra.mxu0 %v67
  %172 = vmatpush.xpose.msra.mxu0 %v66
  %173 = vmatpush.xpose.msra.mxu0 %v65
  %174 = vmatpush.xpose.msra.mxu0 %v64
  %175 = vmatmul.f32.gmra.mxu0 %v14
  %v176 = vpop.f32.mrf.mxu0
  %v177 = vadd.f32 %v85, %v176
  %178 = vmatmul.f32.gmra.mxu0 %v15
  %v179 = vpop.f32.mrf.mxu0
  %v180 = vadd.f32 %v85, %v179
  %181 = vdwg.mxu0
  %v182 = vmul.f32 %v108, %v108
  %v183 = vmul.f32 %v131, %v131
  %v184 = vmul.f32 %v154, %v154
  %v185 = vmul.f32 %v177, %v177
  %v186 = vmul.f32 %v111, %v111
  %v187 = vmul.f32 %v134, %v134
  %v188 = vmul.f32 %v157, %v157
  %v189 = vmul.f32 %v180, %v180
  %v190 = vmul.f32 %v108, %v182
  %v191 = vmul.f32 %v131, %v183
  %v192 = vmul.f32 %v154, %v184
  %v193 = vmul.f32 %v177, %v185
  %v194 = vmul.f32 %v111, %v186
  %v195 = vmul.f32 %v134, %v187
  %v196 = vmul.f32 %v157, %v188
  %v197 = vmul.f32 %v180, %v189
  %v198 = vmul.f32 %v190, 0.044715
  %v199 = vmul.f32 %v191, 0.044715
  %v200 = vmul.f32 %v192, 0.044715
  %v201 = vmul.f32 %v193, 0.044715
  %v202 = vmul.f32 %v194, 0.044715
  %v203 = vmul.f32 %v195, 0.044715
  %v204 = vmul.f32 %v196, 0.044715
  %v205 = vmul.f32 %v197, 0.044715
  %v206 = vadd.f32 %v108, %v198
  %v207 = vadd.f32 %v131, %v199
  %v208 = vadd.f32 %v154, %v200
  %v209 = vadd.f32 %v177, %v201
  %v210 = vadd.f32 %v111, %v202
  %v211 = vadd.f32 %v134, %v203
  %v212 = vadd.f32 %v157, %v204
  %v213 = vadd.f32 %v180, %v205
  %v214 = vmul.f32 %v206, 0.7978846
  %v215 = vmul.f32 %v207, 0.7978846
  %v216 = vmul.f32 %v208, 0.7978846
  %v217 = vmul.f32 %v209, 0.7978846
  %v218 = vmul.f32 %v210, 0.7978846
  %v219 = vmul.f32 %v211, 0.7978846
  %v220 = vmul.f32 %v212, 0.7978846
  %v221 = vmul.f32 %v213, 0.7978846
  %v222 = vtanh.pop %v214
  %v223 = vtanh.pop %v215
  %v224 = vtanh.pop %v216
  %v225 = vtanh.pop %v217
  %v226 = vtanh.pop %v218
  %v227 = vtanh.pop %v219
  %v228 = vtanh.pop %v220
  %v229 = vtanh.pop %v221
  %v230 = vadd.f32 %v222, 1.0
  %v231 = vadd.f32 %v223, 1.0
  %v232 = vadd.f32 %v224, 1.0
  %v233 = vadd.f32 %v225, 1.0
  %v234 = vadd.f32 %v226, 1.0
  %v235 = vadd.f32 %v227, 1.0
  %v236 = vadd.f32 %v228, 1.0
  %v237 = vadd.f32 %v229, 1.0
  %v238 = vmul.f32 %v230, 0.5
  %v239 = vmul.f32 %v231, 0.5
  %v240 = vmul.f32 %v232, 0.5
  %v241 = vmul.f32 %v233, 0.5
  %v242 = vmul.f32 %v234, 0.5
  %v243 = vmul.f32 %v235, 0.5
  %v244 = vmul.f32 %v236, 0.5
  %v245 = vmul.f32 %v237, 0.5
  %v246 = vmul.f32 %v108, %v238
  %v247 = vmul.f32 %v131, %v239
  %v248 = vmul.f32 %v154, %v240
  %v249 = vmul.f32 %v177, %v241
  %v250 = vmul.f32 %v111, %v242
  %v251 = vmul.f32 %v134, %v243
  %v252 = vmul.f32 %v157, %v244
  %v253 = vmul.f32 %v180, %v245
  %254 = vst [vmem:[%s3] sm:$0xff] %v246
  %255 = vst [vmem:[%s3 + $0x8] sm:$0xff] %v247
  %256 = vst [vmem:[%s3 + $0x10] sm:$0xff] %v248
  %257 = vst [vmem:[%s3 + $0x18] sm:$0xff] %v249
  %258 = vst [vmem:[%s3 + $0x20] sm:$0xff] %v250
  %259 = vst [vmem:[%s3 + $0x28] sm:$0xff] %v251
  %260 = vst [vmem:[%s3 + $0x30] sm:$0xff] %v252
  %261 = vst [vmem:[%s3 + $0x38] sm:$0xff] %v253
  // Predicated region
  $region14: #{double_stream_block_forward.43} parent=0 // pred_check
    _
  $region15: #{double_stream_block_forward.43} parent=0 // pred_check_branch
    %263 = sbr.rel (0) target = $region17
  $region16: #{double_stream_block_forward.43} parent=0 // pred_region
    _
  $region17: #{double_stream_block_forward.43} parent=0 // pred_fallthru
    _
  // Predicated region
  $region18: #{double_stream_block_forward.43} parent=0 // pred_check
    _
  $region19: #{double_stream_block_forward.43} parent=0 // pred_check_branch
    %265 = sbr.rel (0) target = $region21
  $region20: #{double_stream_block_forward.43} parent=0 // pred_region
    _
  $region21: #{double_stream_block_forward.43} parent=0 // pred_fallthru
    _

// kernel: double_stream_block_forward.33
$region0: #{double_stream_block_forward.33}
  #allocation0 [shape = 'u32[]', space=smem, size = 0x4, offset = 0x4, fixed_abs, tag = 'smem constant byte address 0x4 - core index']
  #allocation1 [shape = 'u32[72,128]{1,0:T(1,128)}', space=vmem, size = 0x9000, scoped, tag = 'internal scratch']
  %s0 = inlined_call_operand.vmem [shape: f32[2,4,24,32], index: 0, kind: input, shape index: {}]
  %s1 = inlined_call_operand.vmem [shape: f32[2,4,24,32], index: 1, kind: input, shape index: {}]
  %s2 = inlined_call_operand.vmem [shape: f32[2,4,24,32], index: 2, kind: input, shape index: {}]
  %s3 = inlined_call_operand.vmem [shape: f32[2,24,16], index: 3, kind: input, shape index: {}]
  %s4 = inlined_call_operand.vmem [shape: f32[2,24,16], index: 4, kind: input, shape index: {}]
  %s5 = inlined_call_operand.vmem [shape: f32[2,4,24,32], index: 5, kind: output, shape index: {}]
  %s6 = sld [smem:[#allocation0]]
  $region53: #{double_stream_block_forward.33} parent=0
    _
  %s8 = ssub.s32 1, %s6
  %s9 = scalar_select 0, %s8, %s6
  loop: start=0, step=1, limit=10
  $region2: #{double_stream_block_forward.33} parent=0 // loop_pre_header
    _
  $region3: #{double_stream_block_forward.33} parent=0 // loop_header
    %s11 = sphi 0, %s15
    %p12 = scmp.ge.s32.totalorder %s11, 10
    %s18 = sphi 0, %s30
    %s19 = sphi 0, %s26
    %s20 = sphi 0, %s18
    %s21 = sphi 0, %s19
    %s22 = sphi 0, %s20
    %s23 = sphi 0, %s21
    %s35 = sphi 0, %s37
    %s38 = sphi 0, %s35
    %s39 = sphi 0, %s38
    %s55 = sphi 0, %s39
    %s63 = sphi 0, %s65
    %s66 = sphi 0, %s63
    %s67 = sphi 0, %s66
    %s83 = sphi 0, %s67
    %s91 = sphi 0, %s93
    %s94 = sphi 0, %s91
    %s95 = sphi 0, %s94
    %s111 = sphi 0, %s95
    %s117 = sphi 0, %s119
    %s120 = sphi 0, %s117
    %s121 = sphi 0, %s120
    %s137 = sphi 0, %s121
    %s143 = sphi 0, %s145
    %s146 = sphi 0, %s143
    %s147 = sphi 0, %s146
    %s163 = sphi 0, %s147
    %s171 = sphi 0, %s173
    %s174 = sphi 0, %s171
    %s175 = sphi 0, %s174
    %s191 = sphi 0, %s175
  $region4: #{double_stream_block_forward.33} parent=0 // loop_header_branch
    %14 = sbr.rel (%p12) target = $region8
  $region5: #{double_stream_block_forward.33} parent=0 // loop_body
    %s16 = ssub.s32 %s11, 1
    %s17 = ssub.s32 %s11, 2
    %s24 = sadd.s32 1, %s19
    %p25 = scmp.ge.s32.totalorder %s24, 4
    %s26 = scalar_select %p25, 0, %s24
    %s27 = sadd.s32 1, %s18
    %s28 = scalar_select %p25, %s27, %s18
    %p29 = scmp.ge.s32.totalorder %s28, 2
    %s30 = scalar_select %p29, 0, %s28
    %s31 = ssub.s32 %s18, %s30
    %s32 = ssub.s32 %s19, %s26
    %s33 = sor.u32 %s31, %s32
    %p34 = scmp.eq.s32.totalorder %s33, 0
    %s36 = sadd.s32 %s35, 1
    %s37 = scalar_select %p34, %s35, %s36
    %p40 = pneg %p34
    %p41 = scmp.eq.s32.totalorder %s11, 7
    %p42 = por %p40, %p41
    %p43 = scmp.ne.s32.totalorder %s35, %s38
    %p44 = scmp.eq.s32.totalorder %s11, 0
    %p45 = por %p43, %p44
    %p46 = scmp.ne.s32.totalorder %s35, %s38
    %p47 = scmp.eq.s32.totalorder %s16, 7
    %p48 = por %p46, %p47
    %p49 = scmp.ne.s32.totalorder %s38, %s39
    %p50 = scmp.eq.s32.totalorder %s16, 0
    %p51 = por %p49, %p50
    %p52 = scmp.ne.s32.totalorder %s38, %s39
    %p53 = scmp.eq.s32.totalorder %s17, 7
    %p54 = por %p52, %p53
    %p56 = scmp.ne.s32.totalorder %s39, %s55
    %p57 = scmp.eq.s32.totalorder %s17, 0
    %p58 = por %p56, %p57
    %s59 = ssub.s32 %s18, %s30
    %s60 = ssub.s32 %s19, %s26
    %s61 = sor.u32 %s59, %s60
    %p62 = scmp.eq.s32.totalorder %s61, 0
    %s64 = sadd.s32 %s63, 1
    %s65 = scalar_select %p62, %s63, %s64
    %p68 = pneg %p62
    %p69 = scmp.eq.s32.totalorder %s11, 7
    %p70 = por %p68, %p69
    %p71 = scmp.ne.s32.totalorder %s63, %s66
    %p72 = scmp.eq.s32.totalorder %s11, 0
    %p73 = por %p71, %p72
    %p74 = scmp.ne.s32.totalorder %s63, %s66
    %p75 = scmp.eq.s32.totalorder %s16, 7
    %p76 = por %p74, %p75
    %p77 = scmp.ne.s32.totalorder %s66, %s67
    %p78 = scmp.eq.s32.totalorder %s16, 0
    %p79 = por %p77, %p78
    %p80 = scmp.ne.s32.totalorder %s66, %s67
    %p81 = scmp.eq.s32.totalorder %s17, 7
    %p82 = por %p80, %p81
    %p84 = scmp.ne.s32.totalorder %s67, %s83
    %p85 = scmp.eq.s32.totalorder %s17, 0
    %p86 = por %p84, %p85
    %s87 = ssub.s32 %s18, %s30
    %s88 = ssub.s32 %s19, %s26
    %s89 = sor.u32 %s87, %s88
    %p90 = scmp.eq.s32.totalorder %s89, 0
    %s92 = sadd.s32 %s91, 1
    %s93 = scalar_select %p90, %s91, %s92
    %p96 = pneg %p90
    %p97 = scmp.eq.s32.totalorder %s11, 7
    %p98 = por %p96, %p97
    %p99 = scmp.ne.s32.totalorder %s91, %s94
    %p100 = scmp.eq.s32.totalorder %s11, 0
    %p101 = por %p99, %p100
    %p102 = scmp.ne.s32.totalorder %s91, %s94
    %p103 = scmp.eq.s32.totalorder %s16, 7
    %p104 = por %p102, %p103
    %p105 = scmp.ne.s32.totalorder %s94, %s95
    %p106 = scmp.eq.s32.totalorder %s16, 0
    %p107 = por %p105, %p106
    %p108 = scmp.ne.s32.totalorder %s94, %s95
    %p109 = scmp.eq.s32.totalorder %s17, 7
    %p110 = por %p108, %p109
    %p112 = scmp.ne.s32.totalorder %s95, %s111
    %p113 = scmp.eq.s32.totalorder %s17, 0
    %p114 = por %p112, %p113
    %s115 = ssub.s32 %s18, %s30
    %p116 = scmp.eq.s32.totalorder %s115, 0
    %s118 = sadd.s32 %s117, 1
    %s119 = scalar_select %p116, %s117, %s118
    %p122 = pneg %p116
    %p123 = scmp.eq.s32.totalorder %s11, 7
    %p124 = por %p122, %p123
    %p125 = scmp.ne.s32.totalorder %s117, %s120
    %p126 = scmp.eq.s32.totalorder %s11, 0
    %p127 = por %p125, %p126
    %p128 = scmp.ne.s32.totalorder %s117, %s120
    %p129 = scmp.eq.s32.totalorder %s16, 7
    %p130 = por %p128, %p129
    %p131 = scmp.ne.s32.totalorder %s120, %s121
    %p132 = scmp.eq.s32.totalorder %s16, 0
    %p133 = por %p131, %p132
    %p134 = scmp.ne.s32.totalorder %s120, %s121
    %p135 = scmp.eq.s32.totalorder %s17, 7
    %p136 = por %p134, %p135
    %p138 = scmp.ne.s32.totalorder %s121, %s137
    %p139 = scmp.eq.s32.totalorder %s17, 0
    %p140 = por %p138, %p139
    %s141 = ssub.s32 %s18, %s30
    %p142 = scmp.eq.s32.totalorder %s141, 0
    %s144 = sadd.s32 %s143, 1
    %s145 = scalar_select %p142, %s143, %s144
    %p148 = pneg %p142
    %p149 = scmp.eq.s32.totalorder %s11, 7
    %p150 = por %p148, %p149
    %p151 = scmp.ne.s32.totalorder %s143, %s146
    %p152 = scmp.eq.s32.totalorder %s11, 0
    %p153 = por %p151, %p152
    %p154 = scmp.ne.s32.totalorder %s143, %s146
    %p155 = scmp.eq.s32.totalorder %s16, 7
    %p156 = por %p154, %p155
    %p157 = scmp.ne.s32.totalorder %s146, %s147
    %p158 = scmp.eq.s32.totalorder %s16, 0
    %p159 = por %p157, %p158
    %p160 = scmp.ne.s32.totalorder %s146, %s147
    %p161 = scmp.eq.s32.totalorder %s17, 7
    %p162 = por %p160, %p161
    %p164 = scmp.ne.s32.totalorder %s147, %s163
    %p165 = scmp.eq.s32.totalorder %s17, 0
    %p166 = por %p164, %p165
    %s167 = ssub.s32 %s18, %s30
    %s168 = ssub.s32 %s19, %s26
    %s169 = sor.u32 %s167, %s168
    %p170 = scmp.eq.s32.totalorder %s169, 0
    %s172 = sadd.s32 %s171, 1
    %s173 = scalar_select %p170, %s171, %s172
    %p176 = pneg %p170
    %p177 = scmp.eq.s32.totalorder %s11, 7
    %p178 = por %p176, %p177
    %p179 = scmp.ne.s32.totalorder %s171, %s174
    %p180 = scmp.eq.s32.totalorder %s11, 0
    %p181 = por %p179, %p180
    %p182 = scmp.ne.s32.totalorder %s171, %s174
    %p183 = scmp.eq.s32.totalorder %s16, 7
    %p184 = por %p182, %p183
    %p185 = scmp.ne.s32.totalorder %s174, %s175
    %p186 = scmp.eq.s32.totalorder %s16, 0
    %p187 = por %p185, %p186
    %p188 = scmp.ne.s32.totalorder %s174, %s175
    %p189 = scmp.eq.s32.totalorder %s17, 7
    %p190 = por %p188, %p189
    %p192 = scmp.ne.s32.totalorder %s175, %s191
    %p193 = scmp.eq.s32.totalorder %s17, 0
    %p194 = por %p192, %p193
    %p195 = scmp.le.s32.totalorder 1, %s11
    %p196 = scmp.lt.s32.totalorder %s11, 9
    %p197 = pnand %p195, %p196
    %p198 = pneg %p197
    // Predicated region
    $region9: #{double_stream_block_forward.33} parent=5 // pred_check
      _
    $region10: #{double_stream_block_forward.33} parent=5 // pred_check_branch
      %200 = sbr.rel (%p197) target = $region12
    $region11: #{double_stream_block_forward.33} parent=5 // pred_region
      %s201 = ssub.s32 %s11, 1
    $region12: #{double_stream_block_forward.33} parent=5 // pred_fallthru
      _
    %p202 = scmp.lt.s32.totalorder %s11, 8
    // Predicated region
    $region13: #{double_stream_block_forward.33} parent=5 // pred_check
      %p203 = pneg %p202
    $region14: #{double_stream_block_forward.33} parent=5 // pred_check_branch
      %205 = sbr.rel (%p203) target = $region16
    $region15: #{double_stream_block_forward.33} parent=5 // pred_region
      // Predicated region
      $region17: #{double_stream_block_forward.33} parent=15 // pred_check
        %p206 = pneg %p45
      $region18: #{double_stream_block_forward.33} parent=15 // pred_check_branch
        %208 = sbr.rel (%p206) target = $region20
      $region19: #{double_stream_block_forward.33} parent=15 // pred_region
        %p209 = scmp.lt.s32.totalorder %s18, 1
        %s210 = scalar_select %p209, %s18, 1
        %p211 = scmp.lt.s32.totalorder %s19, 3
        %s212 = scalar_select %p211, %s19, 3
        %s213 = smul.addr %s212, 3
        %s214 = smul.addr %s210, 12
        %s215 = sadd.s32 %s213, %s214
        %s216 = smul.addr %s215, 8
        %s217 = scalar_lea.vmem %s0, %s216
      $region20: #{double_stream_block_forward.33} parent=15 // pred_fallthru
        _
      // Predicated region
      $region21: #{double_stream_block_forward.33} parent=15 // pred_check
        %p218 = pneg %p73
      $region22: #{double_stream_block_forward.33} parent=15 // pred_check_branch
        %220 = sbr.rel (%p218) target = $region24
      $region23: #{double_stream_block_forward.33} parent=15 // pred_region
        %p221 = scmp.lt.s32.totalorder %s18, 1
        %s222 = scalar_select %p221, %s18, 1
        %p223 = scmp.lt.s32.totalorder %s19, 3
        %s224 = scalar_select %p223, %s19, 3
        %s225 = smul.addr %s224, 3
        %s226 = smul.addr %s222, 12
        %s227 = sadd.s32 %s225, %s226
        %s228 = smul.addr %s227, 8
        %s229 = scalar_lea.vmem %s1, %s228
      $region24: #{double_stream_block_forward.33} parent=15 // pred_fallthru
        _
      // Predicated region
      $region25: #{double_stream_block_forward.33} parent=15 // pred_check
        %p230 = pneg %p101
      $region26: #{double_stream_block_forward.33} parent=15 // pred_check_branch
        %232 = sbr.rel (%p230) target = $region28
      $region27: #{double_stream_block_forward.33} parent=15 // pred_region
        %p233 = scmp.lt.s32.totalorder %s18, 1
        %s234 = scalar_select %p233, %s18, 1
        %p235 = scmp.lt.s32.totalorder %s19, 3
        %s236 = scalar_select %p235, %s19, 3
        %s237 = smul.addr %s236, 3
        %s238 = smul.addr %s234, 12
        %s239 = sadd.s32 %s237, %s238
        %s240 = smul.addr %s239, 8
        %s241 = scalar_lea.vmem %s2, %s240
      $region28: #{double_stream_block_forward.33} parent=15 // pred_fallthru
        _
      // Predicated region
      $region29: #{double_stream_block_forward.33} parent=15 // pred_check
        %p242 = pneg %p127
      $region30: #{double_stream_block_forward.33} parent=15 // pred_check_branch
        %244 = sbr.rel (%p242) target = $region32
      $region31: #{double_stream_block_forward.33} parent=15 // pred_region
        %p245 = scmp.lt.s32.totalorder %s18, 1
        %s246 = scalar_select %p245, %s18, 1
        %s247 = smul.addr %s246, 3
        %s248 = smul.addr %s247, 8
        %s249 = scalar_lea.vmem %s3, %s248
      $region32: #{double_stream_block_forward.33} parent=15 // pred_fallthru
        _
      // Predicated region
      $region33: #{double_stream_block_forward.33} parent=15 // pred_check
        %p250 = pneg %p153
      $region34: #{double_stream_block_forward.33} parent=15 // pred_check_branch
        %252 = sbr.rel (%p250) target = $region36
      $region35: #{double_stream_block_forward.33} parent=15 // pred_region
        %p253 = scmp.lt.s32.totalorder %s18, 1
        %s254 = scalar_select %p253, %s18, 1
        %s255 = smul.addr %s254, 3
        %s256 = smul.addr %s255, 8
        %s257 = scalar_lea.vmem %s4, %s256
      $region36: #{double_stream_block_forward.33} parent=15 // pred_fallthru
        _
    $region16: #{double_stream_block_forward.33} parent=5 // pred_fallthru
      _
    %p258 = scmp.le.s32.totalorder 1, %s11
    %p259 = scmp.lt.s32.totalorder %s11, 9
    %p260 = pnand %p258, %p259
    %p261 = pneg %p260
    // Predicated region
    $region37: #{double_stream_block_forward.33} parent=5 // pred_check
      _
    $region38: #{double_stream_block_forward.33} parent=5 // pred_check_branch
      %263 = sbr.rel (%p260) target = $region40
    $region39: #{double_stream_block_forward.33} parent=5 // pred_region
      %s264 = ssub.s32 %s11, 1
      %p265 = scmp.lt.s32.totalorder %s20, 1
      %s266 = scalar_select %p265, %s20, 1
      %p267 = scmp.lt.s32.totalorder %s21, 3
      %s268 = scalar_select %p267, %s21, 3
      %s269 = smul.addr %s268, 3
      %s270 = smul.addr %s266, 12
      %s271 = sadd.s32 %s269, %s270
      %s272 = smul.addr %s271, 8
      %s273 = scalar_lea.vmem %s0, %s272
      %p274 = pneg %p51
      %p275 = pneg %p48
      %p276 = scmp.lt.s32.totalorder %s20, 1
      %s277 = scalar_select %p276, %s20, 1
      %p278 = scmp.lt.s32.totalorder %s21, 3
      %s279 = scalar_select %p278, %s21, 3
      %s280 = smul.addr %s279, 3
      %s281 = smul.addr %s277, 12
      %s282 = sadd.s32 %s280, %s281
      %s283 = smul.addr %s282, 8
      %s284 = scalar_lea.vmem %s1, %s283
      %p285 = pneg %p79
      %p286 = pneg %p76
      %p287 = scmp.lt.s32.totalorder %s20, 1
      %s288 = scalar_select %p287, %s20, 1
      %p289 = scmp.lt.s32.totalorder %s21, 3
      %s290 = scalar_select %p289, %s21, 3
      %s291 = smul.addr %s290, 3
      %s292 = smul.addr %s288, 12
      %s293 = sadd.s32 %s291, %s292
      %s294 = smul.addr %s293, 8
      %s295 = scalar_lea.vmem %s2, %s294
      %p296 = pneg %p107
      %p297 = pneg %p104
      %p298 = scmp.lt.s32.totalorder %s20, 1
      %s299 = scalar_select %p298, %s20, 1
      %s300 = smul.addr %s299, 3
      %s301 = smul.addr %s300, 8
      %s302 = scalar_lea.vmem %s3, %s301
      %p303 = pneg %p133
      %p304 = pneg %p130
      %p305 = scmp.lt.s32.totalorder %s20, 1
      %s306 = scalar_select %p305, %s20, 1
      %s307 = smul.addr %s306, 3
      %s308 = smul.addr %s307, 8
      %s309 = scalar_lea.vmem %s4, %s308
      %p310 = pneg %p159
      %p311 = pneg %p156
      %p312 = pneg %p187
      %p313 = pneg %p184
      %p314 = scmp.lt.s32.totalorder %s20, 1
      %s315 = scalar_select %p314, %s20, 1
      %p316 = scmp.lt.s32.totalorder %s21, 3
      %s317 = scalar_select %p316, %s21, 3
      %s318 = smul.addr %s317, 3
      %s319 = smul.addr %s315, 12
      %s320 = sadd.s32 %s318, %s319
      %s321 = smul.addr %s320, 8
      %s322 = scalar_lea.vmem %s5, %s321
      %p323 = scmp.lt.s32.totalorder %s20, 1
      %s324 = scalar_select %p323, %s20, 1
      %p325 = scmp.lt.s32.totalorder %s21, 3
      %s326 = scalar_select %p325, %s21, 3
      %s327 = smul.addr %s326, 3
      %s328 = smul.addr %s324, 12
      %s329 = sadd.s32 %s327, %s328
      %s330 = smul.addr %s329, 8
      %s331 = scalar_lea.vmem %s0, %s330
      %p332 = scmp.lt.s32.totalorder %s20, 1
      %s333 = scalar_select %p332, %s20, 1
      %p334 = scmp.lt.s32.totalorder %s21, 3
      %s335 = scalar_select %p334, %s21, 3
      %s336 = smul.addr %s335, 3
      %s337 = smul.addr %s333, 12
      %s338 = sadd.s32 %s336, %s337
      %s339 = smul.addr %s338, 8
      %s340 = scalar_lea.vmem %s1, %s339
      %p341 = scmp.lt.s32.totalorder %s20, 1
      %s342 = scalar_select %p341, %s20, 1
      %p343 = scmp.lt.s32.totalorder %s21, 3
      %s344 = scalar_select %p343, %s21, 3
      %s345 = smul.addr %s344, 3
      %s346 = smul.addr %s342, 12
      %s347 = sadd.s32 %s345, %s346
      %s348 = smul.addr %s347, 8
      %s349 = scalar_lea.vmem %s2, %s348
      %p350 = scmp.lt.s32.totalorder %s20, 1
      %s351 = scalar_select %p350, %s20, 1
      %s352 = smul.addr %s351, 3
      %s353 = smul.addr %s352, 8
      %s354 = scalar_lea.vmem %s3, %s353
      %p355 = scmp.lt.s32.totalorder %s20, 1
      %s356 = scalar_select %p355, %s20, 1
      %s357 = smul.addr %s356, 3
      %s358 = smul.addr %s357, 8
      %s359 = scalar_lea.vmem %s4, %s358
      %p360 = scmp.lt.s32.totalorder %s20, 1
      %s361 = scalar_select %p360, %s20, 1
      %p362 = scmp.lt.s32.totalorder %s21, 3
      %s363 = scalar_select %p362, %s21, 3
      %s364 = smul.addr %s363, 3
      %s365 = smul.addr %s361, 12
      %s366 = sadd.s32 %s364, %s365
      %s367 = smul.addr %s366, 8
      %s368 = scalar_lea.vmem %s5, %s367
      %v369 = vld [vmem:[%s331] sm:$0xff]
      %v370 = vld [vmem:[%s331 + $0x8] sm:$0xff]
      %v371 = vld [vmem:[%s331 + $0x10] sm:$0xff]
      %v372 = vld [vmem:[%s340] sm:$0xff]
      %v373 = vld [vmem:[%s340 + $0x8] sm:$0xff]
      %v374 = vld [vmem:[%s340 + $0x10] sm:$0xff]
      %v375 = vld [vmem:[%s349] sm:$0xff]
      %v376 = vld [vmem:[%s349 + $0x8] sm:$0xff]
      %v377 = vld [vmem:[%s349 + $0x10] sm:$0xff]
      %v378 = vld [vmem:[%s354] sm:$0xff]
      %v379 = vld [vmem:[%s354 + $0x8] sm:$0xff]
      %v380 = vld [vmem:[%s354 + $0x10] sm:$0xff]
      %v381 = vld [vmem:[%s359] sm:$0xff]
      %v382 = vld [vmem:[%s359 + $0x8] sm:$0xff]
      %v383 = vld [vmem:[%s359 + $0x10] sm:$0xff]
      %v384 = vmul.f32 %v378, %v369
      %v385 = vmul.f32 %v379, %v370
      %v386 = vmul.f32 %v380, %v371
      %390 = vrot.lane.b32.xlu0 %v369, 112
      %v391 = vpop.permute.xlu0 %390
      %392 = vrot.lane.b32.xlu0 %v370, 112
      %v393 = vpop.permute.xlu0 %392
      %394 = vrot.lane.b32.xlu0 %v371, 112
      %v395 = vpop.permute.xlu0 %394
      %v399 = vmul.f32 %v381, %v391
      %v400 = vmul.f32 %v382, %v393
      %v401 = vmul.f32 %v383, %v395
      %v402 = vsub.f32 %v384, %v399
      %v403 = vsub.f32 %v385, %v400
      %v404 = vsub.f32 %v386, %v401
      %v405 = vmul.f32 %v381, %v369
      %v406 = vmul.f32 %v382, %v370
      %v407 = vmul.f32 %v383, %v371
      %v408 = vmul.f32 %v378, %v391
      %v409 = vmul.f32 %v379, %v393
      %v410 = vmul.f32 %v380, %v395
      %v411 = vadd.f32 %v405, %v408
      %v412 = vadd.f32 %v406, %v409
      %v413 = vadd.f32 %v407, %v410
      %v414 = vmul.f32 %v378, %v372
      %v415 = vmul.f32 %v379, %v373
      %v416 = vmul.f32 %v380, %v374
      %420 = vrot.lane.b32.xlu0 %v372, 112
      %v421 = vpop.permute.xlu0 %420
      %422 = vrot.lane.b32.xlu0 %v373, 112
      %v423 = vpop.permute.xlu0 %422
      %424 = vrot.lane.b32.xlu0 %v374, 112
      %v425 = vpop.permute.xlu0 %424
      %v429 = vmul.f32 %v381, %v421
      %v430 = vmul.f32 %v382, %v423
      %v431 = vmul.f32 %v383, %v425
      %v432 = vsub.f32 %v414, %v429
      %v433 = vsub.f32 %v415, %v430
      %v434 = vsub.f32 %v416, %v431
      %v435 = vmul.f32 %v381, %v372
      %v436 = vmul.f32 %v382, %v373
      %v437 = vmul.f32 %v383, %v374
      %v438 = vmul.f32 %v378, %v421
      %v439 = vmul.f32 %v379, %v423
      %v440 = vmul.f32 %v380, %v425
      %v441 = vadd.f32 %v435, %v438
      %v442 = vadd.f32 %v436, %v439
      %v443 = vadd.f32 %v437, %v440
      %vm444 = vcmask 130048
      %v446 = vsel %vm444, %v411, 0
      %v449 = vsel %vm444, %v412, 0
      %v452 = vsel %vm444, %v413, 0
      %v455 = vsel %vm444, %v441, 0
      %v458 = vsel %vm444, %v442, 0
      %v461 = vsel %vm444, %v443, 0
      %463 = vmatpush.xpose.msra.mxu0 0.0
      %464 = vmatpush.xpose.msra.mxu0 0.0
      %465 = vmatpush.xpose.msra.mxu0 0.0
      %466 = vmatpush.xpose.msra.mxu0 0.0
      %467 = vmatpush.xpose.msra.mxu0 0.0
      %468 = vmatpush.xpose.msra.mxu0 0.0
      %469 = vmatpush.xpose.msra.mxu0 0.0
      %470 = vmatpush.xpose.msra.mxu0 0.0
      %471 = vmatpush.xpose.msra.mxu0 0.0
      %472 = vmatpush.xpose.msra.mxu0 0.0
      %473 = vmatpush.xpose.msra.mxu0 0.0
      %474 = vmatpush.xpose.msra.mxu0 0.0
      %475 = vmatpush.xpose.msra.mxu0 0.0
      %476 = vmatpush.xpose.msra.mxu0 %v461
      %477 = vmatpush.xpose.msra.mxu0 %v458
      %478 = vmatpush.xpose.msra.mxu0 %v455
      %479 = vmatmul.f32.gmra.mxu0 %v446
      %v480 = vpop.f32.mrf.mxu0
      %v481 = vadd.f32 0.0, %v480
      %482 = vmatmul.f32.gmra.mxu0 %v449
      %v483 = vpop.f32.mrf.mxu0
      %v484 = vadd.f32 0.0, %v483
      %485 = vmatmul.f32.gmra.mxu0 %v452
      %v486 = vpop.f32.mrf.mxu0
      %v487 = vadd.f32 0.0, %v486
      %488 = vdwg.mxu0
      %v490 = vsel %vm444, %v402, 0
      %v493 = vsel %vm444, %v403, 0
      %v496 = vsel %vm444, %v404, 0
      %v499 = vsel %vm444, %v432, 0
      %v502 = vsel %vm444, %v433, 0
      %v505 = vsel %vm444, %v434, 0
      %507 = vmatpush.xpose.msra.mxu0 0.0
      %508 = vmatpush.xpose.msra.mxu0 0.0
      %509 = vmatpush.xpose.msra.mxu0 0.0
      %510 = vmatpush.xpose.msra.mxu0 0.0
      %511 = vmatpush.xpose.msra.mxu0 0.0
      %512 = vmatpush.xpose.msra.mxu0 0.0
      %513 = vmatpush.xpose.msra.mxu0 0.0
      %514 = vmatpush.xpose.msra.mxu0 0.0
      %515 = vmatpush.xpose.msra.mxu0 0.0
      %516 = vmatpush.xpose.msra.mxu0 0.0
      %517 = vmatpush.xpose.msra.mxu0 0.0
      %518 = vmatpush.xpose.msra.mxu0 0.0
      %519 = vmatpush.xpose.msra.mxu0 0.0
      %520 = vmatpush.xpose.msra.mxu0 %v505
      %521 = vmatpush.xpose.msra.mxu0 %v502
      %522 = vmatpush.xpose.msra.mxu0 %v499
      %523 = vmatmul.f32.gmra.mxu0 %v490
      %v524 = vpop.f32.mrf.mxu0
      %v525 = vadd.f32 %v481, %v524
      %526 = vmatmul.f32.gmra.mxu0 %v493
      %v527 = vpop.f32.mrf.mxu0
      %v528 = vadd.f32 %v484, %v527
      %529 = vmatmul.f32.gmra.mxu0 %v496
      %v530 = vpop.f32.mrf.mxu0
      %v531 = vadd.f32 %v487, %v530
      %532 = vdwg.mxu0
      %v533 = vmul.f32 %v525, 0.17677669
      %v534 = vmul.f32 %v528, 0.17677669
      %v535 = vmul.f32 %v531, 0.17677669
      %vm536 = vcmask 195584
      %v537 = vsel %vm536, %v533, -inf
      %538 = vmax.xlane.f32.xlu0 %v537
      %v539 = vpop.xlane.xlu0 %538
      %v540 = vsel %vm536, %v534, -inf
      %541 = vmax.xlane.f32.xlu0 %v540
      %v542 = vpop.xlane.xlu0 %541
      %v543 = vsel %vm536, %v535, -inf
      %544 = vmax.xlane.f32.xlu0 %v543
      %v545 = vpop.xlane.xlu0 %544
      %v546 = vsub.f32 %v533, %v539
      %v547 = vsub.f32 %v534, %v542
      %v548 = vsub.f32 %v535, %v545
      %v549 = vmul.f32 %v546, 1.442695
      %v550 = vpow.pop %v549
      %v551 = vmul.f32 %v547, 1.442695
      %v552 = vpow.pop %v551
      %v553 = vmul.f32 %v548, 1.442695
      %v554 = vpow.pop %v553
      %v555 = vsel %vm536, %v550, 0.0
      %556 = vadd.xlane.f32.xlu0 %v555
      %v557 = vpop.xlane.xlu0 %556
      %v558 = vsel %vm536, %v552, 0.0
      %559 = vadd.xlane.f32.xlu0 %v558
      %v560 = vpop.xlane.xlu0 %559
      %v561 = vsel %vm536, %v554, 0.0
      %562 = vadd.xlane.f32.xlu0 %v561
      %v563 = vpop.xlane.xlu0 %562
      %v565 = vsel %vm536, %v550, 0
      %v568 = vsel %vm536, %v552, 0
      %v571 = vsel %vm536, %v554, 0
      %573 = vmatpush.msra.mxu0 0.0
      %574 = vmatpush.msra.mxu0 0.0
      %575 = vmatpush.msra.mxu0 0.0
      %576 = vmatpush.msra.mxu0 0.0
      %577 = vmatpush.msra.mxu0 0.0
      %578 = vmatpush.msra.mxu0 0.0
      %579 = vmatpush.msra.mxu0 0.0
      %580 = vmatpush.msra.mxu0 0.0
      %581 = vmatpush.msra.mxu0 0.0
      %582 = vmatpush.msra.mxu0 0.0
      %583 = vmatpush.msra.mxu0 0.0
      %584 = vmatpush.msra.mxu0 0.0
      %585 = vmatpush.msra.mxu0 0.0
      %586 = vmatpush.msra.mxu0 %v377
      %587 = vmatpush.msra.mxu0 %v376
      %588 = vmatpush.msra.mxu0 %v375
      %589 = vmatmul.f32.gmra.mxu0 %v565
      %v590 = vpop.f32.mrf.mxu0
      %v591 = vadd.f32 0.0, %v590
      %592 = vmatmul.f32.gmra.mxu0 %v568
      %v593 = vpop.f32.mrf.mxu0
      %v594 = vadd.f32 0.0, %v593
      %595 = vmatmul.f32.gmra.mxu0 %v571
      %v596 = vpop.f32.mrf.mxu0
      %v597 = vadd.f32 0.0, %v596
      %598 = vdwg.mxu0
      %v599 = vrcp.pop %v557
      %v600 = vmul.f32 %v557, %v599
      %v601 = vsub.f32 1.0, %v600
      %v602 = vmul.f32 %v599, %v601
      %v603 = vadd.f32 %v599, %v602
      %vm604 = vweird.f32 %v557
      %vm605 = vweird.f32 %v599
      %vm606 = vmor %vm604, %vm605
      %v607 = vsel %vm606, %v599, %v603
      %v608 = vand.u32 2147483647, %v557
      %vm609 = vcmp.eq.f32.partialorder %v608, 8.507059e+37
      %v610 = vand.u32 %v557, 2147483648
      %v611 = vor.u32 1.1754944e-38, %v610
      %v612 = vsel %vm609, %v611, %v607
      %v613 = vmul.f32 %v591, %v612
      %v614 = vrcp.pop %v560
      %v615 = vmul.f32 %v560, %v614
      %v616 = vsub.f32 1.0, %v615
      %v617 = vmul.f32 %v614, %v616
      %v618 = vadd.f32 %v614, %v617
      %vm619 = vweird.f32 %v560
      %vm620 = vweird.f32 %v614
      %vm621 = vmor %vm619, %vm620
      %v622 = vsel %vm621, %v614, %v618
      %v623 = vand.u32 2147483647, %v560
      %vm624 = vcmp.eq.f32.partialorder %v623, 8.507059e+37
      %v625 = vand.u32 %v560, 2147483648
      %v626 = vor.u32 1.1754944e-38, %v625
      %v627 = vsel %vm624, %v626, %v622
      %v628 = vmul.f32 %v594, %v627
      %v629 = vrcp.pop %v563
      %v630 = vmul.f32 %v563, %v629
      %v631 = vsub.f32 1.0, %v630
      %v632 = vmul.f32 %v629, %v631
      %v633 = vadd.f32 %v629, %v632
      %vm634 = vweird.f32 %v563
      %vm635 = vweird.f32 %v629
      %vm636 = vmor %vm634, %vm635
      %v637 = vsel %vm636, %v629, %v633
      %v638 = vand.u32 2147483647, %v563
      %vm639 = vcmp.eq.f32.partialorder %v638, 8.507059e+37
      %v640 = vand.u32 %v563, 2147483648
      %v641 = vor.u32 1.1754944e-38, %v640
      %v642 = vsel %vm639, %v641, %v637
      %v643 = vmul.f32 %v597, %v642
      %vm644 = vcmask 261120
      %645 = vst.msk [vmem:[%s368] sm:$0xff] %vm644, %v613
      %646 = vst.msk [vmem:[%s368 + $0x8] sm:$0xff] %vm644, %v628
      %647 = vst.msk [vmem:[%s368 + $0x10] sm:$0xff] %vm644, %v643
      %p648 = scmp.lt.s32.totalorder %s20, 1
      %s649 = scalar_select %p648, %s20, 1
      %p650 = scmp.lt.s32.totalorder %s21, 3
      %s651 = scalar_select %p650, %s21, 3
      %s652 = smul.addr %s651, 3
      %s653 = smul.addr %s649, 12
      %s654 = sadd.s32 %s652, %s653
      %s655 = smul.addr %s654, 8
      %s656 = scalar_lea.vmem %s5, %s655
      // Predicated region
      $region41: #{double_stream_block_forward.33} parent=39 // pred_check
        %p657 = pneg %p184
      $region42: #{double_stream_block_forward.33} parent=39 // pred_check_branch
        %659 = sbr.rel (%p657) target = $region44
      $region43: #{double_stream_block_forward.33} parent=39 // pred_region
        _
      $region44: #{double_stream_block_forward.33} parent=39 // pred_fallthru
        _
    $region40: #{double_stream_block_forward.33} parent=5 // pred_fallthru
      _
    %p660 = scmp.le.s32.totalorder 2, %s11
    // Predicated region
    $region45: #{double_stream_block_forward.33} parent=5 // pred_check
      %p661 = pneg %p660
    $region46: #{double_stream_block_forward.33} parent=5 // pred_check_branch
      %663 = sbr.rel (%p661) target = $region48
    $region47: #{double_stream_block_forward.33} parent=5 // pred_region
      %s664 = ssub.s32 %s11, 2
      // Predicated region
      $region49: #{double_stream_block_forward.33} parent=47 // pred_check
        %p665 = pneg %p190
      $region50: #{double_stream_block_forward.33} parent=47 // pred_check_branch
        %667 = sbr.rel (%p665) target = $region52
      $region51: #{double_stream_block_forward.33} parent=47 // pred_region
        %p668 = scmp.lt.s32.totalorder %s22, 1
        %s669 = scalar_select %p668, %s22, 1
        %p670 = scmp.lt.s32.totalorder %s23, 3
        %s671 = scalar_select %p670, %s23, 3
        %s672 = smul.addr %s671, 3
        %s673 = smul.addr %s669, 12
        %s674 = sadd.s32 %s672, %s673
        %s675 = smul.addr %s674, 8
        %s676 = scalar_lea.vmem %s5, %s675
      $region52: #{double_stream_block_forward.33} parent=47 // pred_fallthru
        _
    $region48: #{double_stream_block_forward.33} parent=5 // pred_fallthru
      _
  $region6: #{double_stream_block_forward.33} parent=0 // loop_footer
    %s15 = sadd.s32 1, %s11
  $region7: #{double_stream_block_forward.33} parent=0 // loop_footer_branch
    %10 = sbr.rel target = $region3
  $region8: #{double_stream_block_forward.33} parent=0 // loop_exit
    _

// kernel: double_stream_block_forward.45
$region0: #{double_stream_block_forward.45}
  #allocation0 [shape = 'u32[]', space=smem, size = 0x4, offset = 0x4, fixed_abs, tag = 'smem constant byte address 0x4 - core index']
  #allocation1 [shape = 'u32[72,128]{1,0:T(1,128)}', space=vmem, size = 0x9000, scoped, tag = 'internal scratch']
  %s0 = inlined_call_operand.vmem [shape: f32[2,8,128], index: 0, kind: input, shape index: {}]
  %s1 = inlined_call_operand.vmem [shape: f32[2,8,128], index: 1, kind: input, shape index: {}]
  %s2 = inlined_call_operand.vmem [shape: f32[2,1,128], index: 2, kind: input, shape index: {}]
  %s3 = inlined_call_operand.hbm [shape: f32[2,8,128], index: 3, kind: output, shape index: {}]
  %s4 = sld [smem:[#allocation0]]
  $region45: #{double_stream_block_forward.45} parent=0
    _
  %s6 = ssub.s32 1, %s4
  %s7 = scalar_select 0, %s6, %s4
  $region1: #{double_stream_block_forward.45} parent=0
    #allocation2 [shape = 'u8[8192]{0}', space=vmem, size = 0x2000, scoped, tag = 'output window, operand 0']
    #allocation3 [shape = 's32[2]{0}', space=sflag, size = 0x8, scoped, tag = 'scoped memory for double_stream_block_forward.45']
    %8 = vsyncpa [#allocation3], 0
    %s9 = scalar_lea.sflag [#allocation3], 1
    %10 = vsyncpa %s9, 0
    loop: start=0, step=1, limit=4
    $region2: #{double_stream_block_forward.45} parent=1 // loop_pre_header
      _
    $region3: #{double_stream_block_forward.45} parent=1 // loop_header
      %s12 = sphi 0, %s16
      %p13 = scmp.ge.s32.totalorder %s12, 4
      %s19 = sphi 0, %s31
      %s20 = sphi 0, %s27
      %s21 = sphi 0, %s19
      %s22 = sphi 0, %s20
      %s23 = sphi 0, %s21
      %s24 = sphi 0, %s22
      %s36 = sphi 0, %s38
      %s39 = sphi 0, %s36
      %s40 = sphi 0, %s39
      %s56 = sphi 0, %s40
      %s64 = sphi 0, %s66
      %s67 = sphi 0, %s64
      %s68 = sphi 0, %s67
      %s84 = sphi 0, %s68
      %s90 = sphi 0, %s92
      %s93 = sphi 0, %s90
      %s94 = sphi 0, %s93
      %s110 = sphi 0, %s94
      %s118 = sphi 0, %s120
      %s121 = sphi 0, %s118
      %s122 = sphi 0, %s121
      %s138 = sphi 0, %s122
    $region4: #{double_stream_block_forward.45} parent=1 // loop_header_branch
      %15 = sbr.rel (%p13) target = $region8
    $region5: #{double_stream_block_forward.45} parent=1 // loop_body
      %s17 = ssub.s32 %s12, 1
      %s18 = ssub.s32 %s12, 2
      %s25 = sadd.s32 1, %s20
      %p26 = scmp.ge.s32.totalorder %s25, 1
      %s27 = scalar_select %p26, 0, %s25
      %s28 = sadd.s32 1, %s19
      %s29 = scalar_select %p26, %s28, %s19
      %p30 = scmp.ge.s32.totalorder %s29, 2
      %s31 = scalar_select %p30, 0, %s29
      %s32 = ssub.s32 %s19, %s31
      %s33 = ssub.s32 %s20, %s27
      %s34 = sor.u32 %s32, %s33
      %p35 = scmp.eq.s32.totalorder %s34, 0
      %s37 = sadd.s32 %s36, 1
      %s38 = scalar_select %p35, %s36, %s37
      %p41 = pneg %p35
      %p42 = scmp.eq.s32.totalorder %s12, 1
      %p43 = por %p41, %p42
      %p44 = scmp.ne.s32.totalorder %s36, %s39
      %p45 = scmp.eq.s32.totalorder %s12, 0
      %p46 = por %p44, %p45
      %p47 = scmp.ne.s32.totalorder %s36, %s39
      %p48 = scmp.eq.s32.totalorder %s17, 1
      %p49 = por %p47, %p48
      %p50 = scmp.ne.s32.totalorder %s39, %s40
      %p51 = scmp.eq.s32.totalorder %s17, 0
      %p52 = por %p50, %p51
      %p53 = scmp.ne.s32.totalorder %s39, %s40
      %p54 = scmp.eq.s32.totalorder %s18, 1
      %p55 = por %p53, %p54
      %p57 = scmp.ne.s32.totalorder %s40, %s56
      %p58 = scmp.eq.s32.totalorder %s18, 0
      %p59 = por %p57, %p58
      %s60 = ssub.s32 %s19, %s31
      %s61 = ssub.s32 %s20, %s27
      %s62 = sor.u32 %s60, %s61
      %p63 = scmp.eq.s32.totalorder %s62, 0
      %s65 = sadd.s32 %s64, 1
      %s66 = scalar_select %p63, %s64, %s65
      %p69 = pneg %p63
      %p70 = scmp.eq.s32.totalorder %s12, 1
      %p71 = por %p69, %p70
      %p72 = scmp.ne.s32.totalorder %s64, %s67
      %p73 = scmp.eq.s32.totalorder %s12, 0
      %p74 = por %p72, %p73
      %p75 = scmp.ne.s32.totalorder %s64, %s67
      %p76 = scmp.eq.s32.totalorder %s17, 1
      %p77 = por %p75, %p76
      %p78 = scmp.ne.s32.totalorder %s67, %s68
      %p79 = scmp.eq.s32.totalorder %s17, 0
      %p80 = por %p78, %p79
      %p81 = scmp.ne.s32.totalorder %s67, %s68
      %p82 = scmp.eq.s32.totalorder %s18, 1
      %p83 = por %p81, %p82
      %p85 = scmp.ne.s32.totalorder %s68, %s84
      %p86 = scmp.eq.s32.totalorder %s18, 0
      %p87 = por %p85, %p86
      %s88 = ssub.s32 %s19, %s31
      %p89 = scmp.eq.s32.totalorder %s88, 0
      %s91 = sadd.s32 %s90, 1
      %s92 = scalar_select %p89, %s90, %s91
      %p95 = pneg %p89
      %p96 = scmp.eq.s32.totalorder %s12, 1
      %p97 = por %p95, %p96
      %p98 = scmp.ne.s32.totalorder %s90, %s93
      %p99 = scmp.eq.s32.totalorder %s12, 0
      %p100 = por %p98, %p99
      %p101 = scmp.ne.s32.totalorder %s90, %s93
      %p102 = scmp.eq.s32.totalorder %s17, 1
      %p103 = por %p101, %p102
      %p104 = scmp.ne.s32.totalorder %s93, %s94
      %p105 = scmp.eq.s32.totalorder %s17, 0
      %p106 = por %p104, %p105
      %p107 = scmp.ne.s32.totalorder %s93, %s94
      %p108 = scmp.eq.s32.totalorder %s18, 1
      %p109 = por %p107, %p108
      %p111 = scmp.ne.s32.totalorder %s94, %s110
      %p112 = scmp.eq.s32.totalorder %s18, 0
      %p113 = por %p111, %p112
      %s114 = ssub.s32 %s19, %s31
      %s115 = ssub.s32 %s20, %s27
      %s116 = sor.u32 %s114, %s115
      %p117 = scmp.eq.s32.totalorder %s116, 0
      %s119 = sadd.s32 %s118, 1
      %s120 = scalar_select %p117, %s118, %s119
      %p123 = pneg %p117
      %p124 = scmp.eq.s32.totalorder %s12, 1
      %p125 = por %p123, %p124
      %p126 = scmp.ne.s32.totalorder %s118, %s121
      %p127 = scmp.eq.s32.totalorder %s12, 0
      %p128 = por %p126, %p127
      %p129 = scmp.ne.s32.totalorder %s118, %s121
      %p130 = scmp.eq.s32.totalorder %s17, 1
      %p131 = por %p129, %p130
      %p132 = scmp.ne.s32.totalorder %s121, %s122
      %p133 = scmp.eq.s32.totalorder %s17, 0
      %p134 = por %p132, %p133
      %p135 = scmp.ne.s32.totalorder %s121, %s122
      %p136 = scmp.eq.s32.totalorder %s18, 1
      %p137 = por %p135, %p136
      %p139 = scmp.ne.s32.totalorder %s122, %s138
      %p140 = scmp.eq.s32.totalorder %s18, 0
      %p141 = por %p139, %p140
      %p142 = scmp.le.s32.totalorder 1, %s12
      %p143 = scmp.lt.s32.totalorder %s12, 3
      %p144 = pnand %p142, %p143
      %p145 = pneg %p144
      // Predicated region
      $region9: #{double_stream_block_forward.45} parent=5 // pred_check
        _
      $region10: #{double_stream_block_forward.45} parent=5 // pred_check_branch
        %147 = sbr.rel (%p144) target = $region12
      $region11: #{double_stream_block_forward.45} parent=5 // pred_region
        %s148 = ssub.s32 %s12, 1
      $region12: #{double_stream_block_forward.45} parent=5 // pred_fallthru
        _
      %p149 = scmp.lt.s32.totalorder %s12, 2
      // Predicated region
      $region13: #{double_stream_block_forward.45} parent=5 // pred_check
        %p150 = pneg %p149
      $region14: #{double_stream_block_forward.45} parent=5 // pred_check_branch
        %152 = sbr.rel (%p150) target = $region16
      $region15: #{double_stream_block_forward.45} parent=5 // pred_region
        // Predicated region
        $region17: #{double_stream_block_forward.45} parent=15 // pred_check
          %p153 = pneg %p46
        $region18: #{double_stream_block_forward.45} parent=15 // pred_check_branch
          %155 = sbr.rel (%p153) target = $region20
        $region19: #{double_stream_block_forward.45} parent=15 // pred_region
          %p156 = scmp.lt.s32.totalorder %s19, 1
          %s157 = scalar_select %p156, %s19, 1
          %p158 = scmp.lt.s32.totalorder %s20, 0
          %s159 = scalar_select %p158, %s20, 0
          %s160 = sadd.s32 %s159, %s157
          %s161 = smul.addr %s160, 8
          %s162 = scalar_lea.vmem %s0, %s161
        $region20: #{double_stream_block_forward.45} parent=15 // pred_fallthru
          _
        // Predicated region
        $region21: #{double_stream_block_forward.45} parent=15 // pred_check
          %p163 = pneg %p74
        $region22: #{double_stream_block_forward.45} parent=15 // pred_check_branch
          %165 = sbr.rel (%p163) target = $region24
        $region23: #{double_stream_block_forward.45} parent=15 // pred_region
          %p166 = scmp.lt.s32.totalorder %s19, 1
          %s167 = scalar_select %p166, %s19, 1
          %p168 = scmp.lt.s32.totalorder %s20, 0
          %s169 = scalar_select %p168, %s20, 0
          %s170 = sadd.s32 %s169, %s167
          %s171 = smul.addr %s170, 8
          %s172 = scalar_lea.vmem %s1, %s171
        $region24: #{double_stream_block_forward.45} parent=15 // pred_fallthru
          _
        // Predicated region
        $region25: #{double_stream_block_forward.45} parent=15 // pred_check
          %p173 = pneg %p100
        $region26: #{double_stream_block_forward.45} parent=15 // pred_check_branch
          %175 = sbr.rel (%p173) target = $region28
        $region27: #{double_stream_block_forward.45} parent=15 // pred_region
          %p176 = scmp.lt.s32.totalorder %s19, 1
          %s177 = scalar_select %p176, %s19, 1
          %s178 = scalar_lea.vmem %s2, %s177
        $region28: #{double_stream_block_forward.45} parent=15 // pred_fallthru
          _
      $region16: #{double_stream_block_forward.45} parent=5 // pred_fallthru
        _
      %p179 = scmp.le.s32.totalorder 1, %s12
      %p180 = scmp.lt.s32.totalorder %s12, 3
      %p181 = pnand %p179, %p180
      %p182 = pneg %p181
      // Predicated region
      $region29: #{double_stream_block_forward.45} parent=5 // pred_check
        _
      $region30: #{double_stream_block_forward.45} parent=5 // pred_check_branch
        %184 = sbr.rel (%p181) target = $region32
      $region31: #{double_stream_block_forward.45} parent=5 // pred_region
        %s185 = ssub.s32 %s12, 1
        %p186 = scmp.lt.s32.totalorder %s21, 1
        %s187 = scalar_select %p186, %s21, 1
        %p188 = scmp.lt.s32.totalorder %s22, 0
        %s189 = scalar_select %p188, %s22, 0
        %s190 = sadd.s32 %s189, %s187
        %s191 = smul.addr %s190, 8
        %s192 = scalar_lea.vmem %s0, %s191
        %p193 = pneg %p52
        %p194 = pneg %p49
        %p195 = scmp.lt.s32.totalorder %s21, 1
        %s196 = scalar_select %p195, %s21, 1
        %p197 = scmp.lt.s32.totalorder %s22, 0
        %s198 = scalar_select %p197, %s22, 0
        %s199 = sadd.s32 %s198, %s196
        %s200 = smul.addr %s199, 8
        %s201 = scalar_lea.vmem %s1, %s200
        %p202 = pneg %p80
        %p203 = pneg %p77
        %p204 = scmp.lt.s32.totalorder %s21, 1
        %s205 = scalar_select %p204, %s21, 1
        %s206 = scalar_lea.vmem %s2, %s205
        %p207 = pneg %p106
        %p208 = pneg %p103
        %p209 = pneg %p134
        %p210 = pneg %p131
        %s211 = sand.u32 %s121, 1
        %s212 = scalar_lea.sflag [#allocation3], %s211
        %s213 = sand.u32 %s121, 1
        %s214 = smul.addr %s213, 8
        %s215 = scalar_lea.vmem [#allocation2], %s214
        %p216 = scmp.lt.s32.totalorder %s21, 1
        %s217 = scalar_select %p216, %s21, 1
        %p218 = scmp.lt.s32.totalorder %s22, 0
        %s219 = scalar_select %p218, %s22, 0
        %s220 = sadd.s32 %s219, %s217
        %s221 = smul.addr %s220, 8
        %s222 = scalar_lea.vmem %s0, %s221
        %p223 = scmp.lt.s32.totalorder %s21, 1
        %s224 = scalar_select %p223, %s21, 1
        %p225 = scmp.lt.s32.totalorder %s22, 0
        %s226 = scalar_select %p225, %s22, 0
        %s227 = sadd.s32 %s226, %s224
        %s228 = smul.addr %s227, 8
        %s229 = scalar_lea.vmem %s1, %s228
        %p230 = scmp.lt.s32.totalorder %s21, 1
        %s231 = scalar_select %p230, %s21, 1
        %s232 = scalar_lea.vmem %s2, %s231
        %v233 = vld [vmem:[%s222] sm:$0xff]
        %v234 = vld [vmem:[%s229] sm:$0xff]
        %v235 = vld [vmem:[%s232] sm:$0x1]
        %v237 = vperm.slane %v235, 0
        %v239 = vmul.f32 %v237, %v234
        %v240 = vadd.f32 %v233, %v239
        %241 = vst [vmem:[%s215] sm:$0xff] %v240
        %s242 = sand.u32 %s121, 1
        %s243 = scalar_lea.sflag [#allocation3], %s242
        %s244 = sand.u32 %s121, 1
        %s245 = smul.addr %s244, 8
        %s246 = scalar_lea.vmem [#allocation2], %s245
        // Predicated region
        $region33: #{double_stream_block_forward.45} parent=31 // pred_check
          %p247 = pneg %p131
        $region34: #{double_stream_block_forward.45} parent=31 // pred_check_branch
          %249 = sbr.rel (%p247) target = $region36
        $region35: #{double_stream_block_forward.45} parent=31 // pred_region
          %251 = vsyncadd %s243, 0
          %s252 = sadd.s32 %s22, %s21
          %s253 = smul.addr %s252, 8
          %s254 = scalar_lea.hbm %s3, %s253
          %s256 = sshll.u32 %s246, 4
          %s257 = int_to_ptr.vmem [resolvable:$true] %s256
          %s258 = sshll.u32 %s254, 4
          %s259 = int_to_ptr.hbm [resolvable:$true] %s258
          %261 = dma.vmem_to_hbm [thread:$0]  %s257, 128, %s259, %s243
        $region36: #{double_stream_block_forward.45} parent=31 // pred_fallthru
          _
      $region32: #{double_stream_block_forward.45} parent=5 // pred_fallthru
        _
      %p262 = scmp.le.s32.totalorder 2, %s12
      // Predicated region
      $region37: #{double_stream_block_forward.45} parent=5 // pred_check
        %p263 = pneg %p262
      $region38: #{double_stream_block_forward.45} parent=5 // pred_check_branch
        %265 = sbr.rel (%p263) target = $region40
      $region39: #{double_stream_block_forward.45} parent=5 // pred_region
        %s266 = ssub.s32 %s12, 2
        // Predicated region
        $region41: #{double_stream_block_forward.45} parent=39 // pred_check
          %p267 = pneg %p137
        $region42: #{double_stream_block_forward.45} parent=39 // pred_check_branch
          %269 = sbr.rel (%p267) target = $region44
        $region43: #{double_stream_block_forward.45} parent=39 // pred_region
          %s270 = sand.u32 %s122, 1
          %s271 = scalar_lea.sflag [#allocation3], %s270
          %s272 = sand.u32 %s122, 1
          %s273 = smul.addr %s272, 8
          %s274 = scalar_lea.vmem [#allocation2], %s273
          %276 = dma.done %s271, 128
        $region44: #{double_stream_block_forward.45} parent=39 // pred_fallthru
          _
      $region40: #{double_stream_block_forward.45} parent=5 // pred_fallthru
        _
    $region6: #{double_stream_block_forward.45} parent=1 // loop_footer
      %s16 = sadd.s32 1, %s12
    $region7: #{double_stream_block_forward.45} parent=1 // loop_footer_branch
      %11 = sbr.rel target = $region3
    $region8: #{double_stream_block_forward.45} parent=1 // loop_exit
      _
    %277 = vsyncpa [#allocation3], 1
    %s278 = scalar_lea.sflag [#allocation3], 1
    %279 = vsyncpa %s278, 1

// kernel: double_stream_block_forward.44
$region0: #{double_stream_block_forward.44}
  #allocation0 [shape = 'u32[]', space=smem, size = 0x4, offset = 0x4, fixed_abs, tag = 'smem constant byte address 0x4 - core index']
  #allocation1 [shape = 'u32[72,128]{1,0:T(1,128)}', space=vmem, size = 0x9000, scoped, tag = 'internal scratch']
  %s0 = inlined_call_operand.vmem [shape: f32[16,512], index: 0, kind: input, shape index: {}]
  %s1 = inlined_call_operand.vmem [shape: f32[128,512], index: 1, kind: input, shape index: {}]
  %s2 = inlined_call_operand.vmem [shape: f32[1,128], index: 2, kind: input, shape index: {}]
  %s3 = inlined_call_operand.vmem [shape: f32[16,128], index: 3, kind: output, shape index: {}]
  %s4 = sld [smem:[#allocation0]]
  $region22: #{double_stream_block_forward.44} parent=0
    _
  %s6 = ssub.s32 1, %s4
  %s7 = scalar_select 0, %s6, %s4
  // Predicated region
  $region2: #{double_stream_block_forward.44} parent=0 // pred_check
    _
  $region3: #{double_stream_block_forward.44} parent=0 // pred_check_branch
    %9 = sbr.rel (0) target = $region5
  $region4: #{double_stream_block_forward.44} parent=0 // pred_region
    _
  $region5: #{double_stream_block_forward.44} parent=0 // pred_fallthru
    _
  // Predicated region
  $region6: #{double_stream_block_forward.44} parent=0 // pred_check
    _
  $region7: #{double_stream_block_forward.44} parent=0 // pred_check_branch
    %11 = sbr.rel (0) target = $region9
  $region8: #{double_stream_block_forward.44} parent=0 // pred_region
    _
  $region9: #{double_stream_block_forward.44} parent=0 // pred_fallthru
    _
  // Predicated region
  $region10: #{double_stream_block_forward.44} parent=0 // pred_check
    _
  $region11: #{double_stream_block_forward.44} parent=0 // pred_check_branch
    %13 = sbr.rel (0) target = $region13
  $region12: #{double_stream_block_forward.44} parent=0 // pred_region
    _
  $region13: #{double_stream_block_forward.44} parent=0 // pred_fallthru
    _
  %v14 = vld [vmem:[%s0] sm:$0xff]
  %v15 = vld [vmem:[%s0 + $0x8] sm:$0xff]
  %v16 = vld [vmem:[%s0 + $0x10] sm:$0xff]
  %v17 = vld [vmem:[%s0 + $0x18] sm:$0xff]
  %v18 = vld [vmem:[%s0 + $0x20] sm:$0xff]
  %v19 = vld [vmem:[%s0 + $0x28] sm:$0xff]
  %v20 = vld [vmem:[%s0 + $0x30] sm:$0xff]
  %v21 = vld [vmem:[%s0 + $0x38] sm:$0xff]
  %v22 = vld [vmem:[%s1] sm:$0xff]
  %v23 = vld [vmem:[%s1 + $0x8] sm:$0xff]
  %v24 = vld [vmem:[%s1 + $0x10] sm:$0xff]
  %v25 = vld [vmem:[%s1 + $0x18] sm:$0xff]
  %v26 = vld [vmem:[%s1 + $0x20] sm:$0xff]
  %v27 = vld [vmem:[%s1 + $0x28] sm:$0xff]
  %v28 = vld [vmem:[%s1 + $0x30] sm:$0xff]
  %v29 = vld [vmem:[%s1 + $0x38] sm:$0xff]
  %v30 = vld [vmem:[%s1 + $0x40] sm:$0xff]
  %v31 = vld [vmem:[%s1 + $0x48] sm:$0xff]
  %v32 = vld [vmem:[%s1 + $0x50] sm:$0xff]
  %v33 = vld [vmem:[%s1 + $0x58] sm:$0xff]
  %v34 = vld [vmem:[%s1 + $0x60] sm:$0xff]
  %v35 = vld [vmem:[%s1 + $0x68] sm:$0xff]
  %v36 = vld [vmem:[%s1 + $0x70] sm:$0xff]
  %v37 = vld [vmem:[%s1 + $0x78] sm:$0xff]
  %v38 = vld [vmem:[%s1 + $0x80] sm:$0xff]
  %v39 = vld [vmem:[%s1 + $0x88] sm:$0xff]
  %v40 = vld [vmem:[%s1 + $0x90] sm:$0xff]
  %v41 = vld [vmem:[%s1 + $0x98] sm:$0xff]
  %v42 = vld [vmem:[%s1 + $0xa0] sm:$0xff]
  %v43 = vld [vmem:[%s1 + $0xa8] sm:$0xff]
  %v44 = vld [vmem:[%s1 + $0xb0] sm:$0xff]
  %v45 = vld [vmem:[%s1 + $0xb8] sm:$0xff]
  %v46 = vld [vmem:[%s1 + $0xc0] sm:$0xff]
  %v47 = vld [vmem:[%s1 + $0xc8] sm:$0xff]
  %v48 = vld [vmem:[%s1 + $0xd0] sm:$0xff]
  %v49 = vld [vmem:[%s1 + $0xd8] sm:$0xff]
  %v50 = vld [vmem:[%s1 + $0xe0] sm:$0xff]
  %v51 = vld [vmem:[%s1 + $0xe8] sm:$0xff]
  %v52 = vld [vmem:[%s1 + $0xf0] sm:$0xff]
  %v53 = vld [vmem:[%s1 + $0xf8] sm:$0xff]
  %v54 = vld [vmem:[%s1 + $0x100] sm:$0xff]
  %v55 = vld [vmem:[%s1 + $0x108] sm:$0xff]
  %v56 = vld [vmem:[%s1 + $0x110] sm:$0xff]
  %v57 = vld [vmem:[%s1 + $0x118] sm:$0xff]
  %v58 = vld [vmem:[%s1 + $0x120] sm:$0xff]
  %v59 = vld [vmem:[%s1 + $0x128] sm:$0xff]
  %v60 = vld [vmem:[%s1 + $0x130] sm:$0xff]
  %v61 = vld [vmem:[%s1 + $0x138] sm:$0xff]
  %v62 = vld [vmem:[%s1 + $0x140] sm:$0xff]
  %v63 = vld [vmem:[%s1 + $0x148] sm:$0xff]
  %v64 = vld [vmem:[%s1 + $0x150] sm:$0xff]
  %v65 = vld [vmem:[%s1 + $0x158] sm:$0xff]
  %v66 = vld [vmem:[%s1 + $0x160] sm:$0xff]
  %v67 = vld [vmem:[%s1 + $0x168] sm:$0xff]
  %v68 = vld [vmem:[%s1 + $0x170] sm:$0xff]
  %v69 = vld [vmem:[%s1 + $0x178] sm:$0xff]
  %v70 = vld [vmem:[%s1 + $0x180] sm:$0xff]
  %v71 = vld [vmem:[%s1 + $0x188] sm:$0xff]
  %v72 = vld [vmem:[%s1 + $0x190] sm:$0xff]
  %v73 = vld [vmem:[%s1 + $0x198] sm:$0xff]
  %v74 = vld [vmem:[%s1 + $0x1a0] sm:$0xff]
  %v75 = vld [vmem:[%s1 + $0x1a8] sm:$0xff]
  %v76 = vld [vmem:[%s1 + $0x1b0] sm:$0xff]
  %v77 = vld [vmem:[%s1 + $0x1b8] sm:$0xff]
  %v78 = vld [vmem:[%s1 + $0x1c0] sm:$0xff]
  %v79 = vld [vmem:[%s1 + $0x1c8] sm:$0xff]
  %v80 = vld [vmem:[%s1 + $0x1d0] sm:$0xff]
  %v81 = vld [vmem:[%s1 + $0x1d8] sm:$0xff]
  %v82 = vld [vmem:[%s1 + $0x1e0] sm:$0xff]
  %v83 = vld [vmem:[%s1 + $0x1e8] sm:$0xff]
  %v84 = vld [vmem:[%s1 + $0x1f0] sm:$0xff]
  %v85 = vld [vmem:[%s1 + $0x1f8] sm:$0xff]
  %v86 = vld [vmem:[%s2] sm:$0x1]
  %v88 = vperm.slane %v86, 0
  %90 = vmatpush.xpose.msra.mxu0 %v82
  %91 = vmatpush.xpose.msra.mxu0 %v78
  %92 = vmatpush.xpose.msra.mxu0 %v74
  %93 = vmatpush.xpose.msra.mxu0 %v70
  %94 = vmatpush.xpose.msra.mxu0 %v66
  %95 = vmatpush.xpose.msra.mxu0 %v62
  %96 = vmatpush.xpose.msra.mxu0 %v58
  %97 = vmatpush.xpose.msra.mxu0 %v54
  %98 = vmatpush.xpose.msra.mxu0 %v50
  %99 = vmatpush.xpose.msra.mxu0 %v46
  %100 = vmatpush.xpose.msra.mxu0 %v42
  %101 = vmatpush.xpose.msra.mxu0 %v38
  %102 = vmatpush.xpose.msra.mxu0 %v34
  %103 = vmatpush.xpose.msra.mxu0 %v30
  %104 = vmatpush.xpose.msra.mxu0 %v26
  %105 = vmatpush.xpose.msra.mxu0 %v22
  %106 = vmatmul.f32.gmra.mxu0 %v14
  %v107 = vpop.f32.mrf.mxu0
  %v108 = vadd.f32 %v88, %v107
  %109 = vmatmul.f32.gmra.mxu0 %v18
  %v110 = vpop.f32.mrf.mxu0
  %v111 = vadd.f32 %v88, %v110
  %112 = vdwg.mxu0
  %113 = vmatpush.xpose.msra.mxu0 %v83
  %114 = vmatpush.xpose.msra.mxu0 %v79
  %115 = vmatpush.xpose.msra.mxu0 %v75
  %116 = vmatpush.xpose.msra.mxu0 %v71
  %117 = vmatpush.xpose.msra.mxu0 %v67
  %118 = vmatpush.xpose.msra.mxu0 %v63
  %119 = vmatpush.xpose.msra.mxu0 %v59
  %120 = vmatpush.xpose.msra.mxu0 %v55
  %121 = vmatpush.xpose.msra.mxu0 %v51
  %122 = vmatpush.xpose.msra.mxu0 %v47
  %123 = vmatpush.xpose.msra.mxu0 %v43
  %124 = vmatpush.xpose.msra.mxu0 %v39
  %125 = vmatpush.xpose.msra.mxu0 %v35
  %126 = vmatpush.xpose.msra.mxu0 %v31
  %127 = vmatpush.xpose.msra.mxu0 %v27
  %128 = vmatpush.xpose.msra.mxu0 %v23
  %129 = vmatmul.f32.gmra.mxu0 %v15
  %v130 = vpop.f32.mrf.mxu0
  %v131 = vadd.f32 %v108, %v130
  %132 = vmatmul.f32.gmra.mxu0 %v19
  %v133 = vpop.f32.mrf.mxu0
  %v134 = vadd.f32 %v111, %v133
  %135 = vdwg.mxu0
  %136 = vmatpush.xpose.msra.mxu0 %v84
  %137 = vmatpush.xpose.msra.mxu0 %v80
  %138 = vmatpush.xpose.msra.mxu0 %v76
  %139 = vmatpush.xpose.msra.mxu0 %v72
  %140 = vmatpush.xpose.msra.mxu0 %v68
  %141 = vmatpush.xpose.msra.mxu0 %v64
  %142 = vmatpush.xpose.msra.mxu0 %v60
  %143 = vmatpush.xpose.msra.mxu0 %v56
  %144 = vmatpush.xpose.msra.mxu0 %v52
  %145 = vmatpush.xpose.msra.mxu0 %v48
  %146 = vmatpush.xpose.msra.mxu0 %v44
  %147 = vmatpush.xpose.msra.mxu0 %v40
  %148 = vmatpush.xpose.msra.mxu0 %v36
  %149 = vmatpush.xpose.msra.mxu0 %v32
  %150 = vmatpush.xpose.msra.mxu0 %v28
  %151 = vmatpush.xpose.msra.mxu0 %v24
  %152 = vmatmul.f32.gmra.mxu0 %v16
  %v153 = vpop.f32.mrf.mxu0
  %v154 = vadd.f32 %v131, %v153
  %155 = vmatmul.f32.gmra.mxu0 %v20
  %v156 = vpop.f32.mrf.mxu0
  %v157 = vadd.f32 %v134, %v156
  %158 = vdwg.mxu0
  %159 = vmatpush.xpose.msra.mxu0 %v85
  %160 = vmatpush.xpose.msra.mxu0 %v81
  %161 = vmatpush.xpose.msra.mxu0 %v77
  %162 = vmatpush.xpose.msra.mxu0 %v73
  %163 = vmatpush.xpose.msra.mxu0 %v69
  %164 = vmatpush.xpose.msra.mxu0 %v65
  %165 = vmatpush.xpose.msra.mxu0 %v61
  %166 = vmatpush.xpose.msra.mxu0 %v57
  %167 = vmatpush.xpose.msra.mxu0 %v53
  %168 = vmatpush.xpose.msra.mxu0 %v49
  %169 = vmatpush.xpose.msra.mxu0 %v45
  %170 = vmatpush.xpose.msra.mxu0 %v41
  %171 = vmatpush.xpose.msra.mxu0 %v37
  %172 = vmatpush.xpose.msra.mxu0 %v33
  %173 = vmatpush.xpose.msra.mxu0 %v29
  %174 = vmatpush.xpose.msra.mxu0 %v25
  %175 = vmatmul.f32.gmra.mxu0 %v17
  %v176 = vpop.f32.mrf.mxu0
  %v177 = vadd.f32 %v154, %v176
  %178 = vmatmul.f32.gmra.mxu0 %v21
  %v179 = vpop.f32.mrf.mxu0
  %v180 = vadd.f32 %v157, %v179
  %181 = vdwg.mxu0
  %182 = vst [vmem:[%s3] sm:$0xff] %v177
  %183 = vst [vmem:[%s3 + $0x8] sm:$0xff] %v180
  // Predicated region
  $region14: #{double_stream_block_forward.44} parent=0 // pred_check
    _
  $region15: #{double_stream_block_forward.44} parent=0 // pred_check_branch
    %185 = sbr.rel (0) target = $region17
  $region16: #{double_stream_block_forward.44} parent=0 // pred_region
    _
  $region17: #{double_stream_block_forward.44} parent=0 // pred_fallthru
    _
  // Predicated region
  $region18: #{double_stream_block_forward.44} parent=0 // pred_check
    _
  $region19: #{double_stream_block_forward.44} parent=0 // pred_check_branch
    %187 = sbr.rel (0) target = $region21
  $region20: #{double_stream_block_forward.44} parent=0 // pred_region
    _
  $region21: #{double_stream_block_forward.44} parent=0 // pred_fallthru
    _

// kernel: double_stream_block_forward.34
$region0: #{double_stream_block_forward.34}
  #allocation0 [shape = 'u32[]', space=smem, size = 0x4, offset = 0x4, fixed_abs, tag = 'smem constant byte address 0x4 - core index']
  #allocation1 [shape = 'u32[72,128]{1,0:T(1,128)}', space=vmem, size = 0x9000, scoped, tag = 'internal scratch']
  %s0 = inlined_call_operand.vmem [shape: f32[32,128], index: 0, kind: input, shape index: {}]
  %s1 = inlined_call_operand.vmem [shape: f32[128,128], index: 1, kind: input, shape index: {}]
  %s2 = inlined_call_operand.vmem [shape: f32[1,128], index: 2, kind: input, shape index: {}]
  %s3 = inlined_call_operand.vmem [shape: f32[32,128], index: 3, kind: output, shape index: {}]
  %s4 = sld [smem:[#allocation0]]
  $region22: #{double_stream_block_forward.34} parent=0
    _
  %s6 = ssub.s32 1, %s4
  %s7 = scalar_select 0, %s6, %s4
  // Predicated region
  $region2: #{double_stream_block_forward.34} parent=0 // pred_check
    _
  $region3: #{double_stream_block_forward.34} parent=0 // pred_check_branch
    %9 = sbr.rel (0) target = $region5
  $region4: #{double_stream_block_forward.34} parent=0 // pred_region
    _
  $region5: #{double_stream_block_forward.34} parent=0 // pred_fallthru
    _
  // Predicated region
  $region6: #{double_stream_block_forward.34} parent=0 // pred_check
    _
  $region7: #{double_stream_block_forward.34} parent=0 // pred_check_branch
    %11 = sbr.rel (0) target = $region9
  $region8: #{double_stream_block_forward.34} parent=0 // pred_region
    _
  $region9: #{double_stream_block_forward.34} parent=0 // pred_fallthru
    _
  // Predicated region
  $region10: #{double_stream_block_forward.34} parent=0 // pred_check
    _
  $region11: #{double_stream_block_forward.34} parent=0 // pred_check_branch
    %13 = sbr.rel (0) target = $region13
  $region12: #{double_stream_block_forward.34} parent=0 // pred_region
    _
  $region13: #{double_stream_block_forward.34} parent=0 // pred_fallthru
    _
  %v14 = vld [vmem:[%s0] sm:$0xff]
  %v15 = vld [vmem:[%s0 + $0x8] sm:$0xff]
  %v16 = vld [vmem:[%s0 + $0x10] sm:$0xff]
  %v17 = vld [vmem:[%s0 + $0x18] sm:$0xff]
  %v18 = vld [vmem:[%s1] sm:$0xff]
  %v19 = vld [vmem:[%s1 + $0x8] sm:$0xff]
  %v20 = vld [vmem:[%s1 + $0x10] sm:$0xff]
  %v21 = vld [vmem:[%s1 + $0x18] sm:$0xff]
  %v22 = vld [vmem:[%s1 + $0x20] sm:$0xff]
  %v23 = vld [vmem:[%s1 + $0x28] sm:$0xff]
  %v24 = vld [vmem:[%s1 + $0x30] sm:$0xff]
  %v25 = vld [vmem:[%s1 + $0x38] sm:$0xff]
  %v26 = vld [vmem:[%s1 + $0x40] sm:$0xff]
  %v27 = vld [vmem:[%s1 + $0x48] sm:$0xff]
  %v28 = vld [vmem:[%s1 + $0x50] sm:$0xff]
  %v29 = vld [vmem:[%s1 + $0x58] sm:$0xff]
  %v30 = vld [vmem:[%s1 + $0x60] sm:$0xff]
  %v31 = vld [vmem:[%s1 + $0x68] sm:$0xff]
  %v32 = vld [vmem:[%s1 + $0x70] sm:$0xff]
  %v33 = vld [vmem:[%s1 + $0x78] sm:$0xff]
  %v34 = vld [vmem:[%s2] sm:$0x1]
  %v36 = vperm.slane %v34, 0
  %38 = vmatpush.xpose.msra.mxu0 %v33
  %39 = vmatpush.xpose.msra.mxu0 %v32
  %40 = vmatpush.xpose.msra.mxu0 %v31
  %41 = vmatpush.xpose.msra.mxu0 %v30
  %42 = vmatpush.xpose.msra.mxu0 %v29
  %43 = vmatpush.xpose.msra.mxu0 %v28
  %44 = vmatpush.xpose.msra.mxu0 %v27
  %45 = vmatpush.xpose.msra.mxu0 %v26
  %46 = vmatpush.xpose.msra.mxu0 %v25
  %47 = vmatpush.xpose.msra.mxu0 %v24
  %48 = vmatpush.xpose.msra.mxu0 %v23
  %49 = vmatpush.xpose.msra.mxu0 %v22
  %50 = vmatpush.xpose.msra.mxu0 %v21
  %51 = vmatpush.xpose.msra.mxu0 %v20
  %52 = vmatpush.xpose.msra.mxu0 %v19
  %53 = vmatpush.xpose.msra.mxu0 %v18
  %54 = vmatmul.f32.gmra.mxu0 %v14
  %v55 = vpop.f32.mrf.mxu0
  %v56 = vadd.f32 %v36, %v55
  %57 = vmatmul.f32.gmra.mxu0 %v15
  %v58 = vpop.f32.mrf.mxu0
  %v59 = vadd.f32 %v36, %v58
  %60 = vmatmul.f32.gmra.mxu0 %v16
  %v61 = vpop.f32.mrf.mxu0
  %v62 = vadd.f32 %v36, %v61
  %63 = vmatmul.f32.gmra.mxu0 %v17
  %v64 = vpop.f32.mrf.mxu0
  %v65 = vadd.f32 %v36, %v64
  %66 = vdwg.mxu0
  %67 = vst [vmem:[%s3] sm:$0xff] %v56
  %68 = vst [vmem:[%s3 + $0x8] sm:$0xff] %v59
  %69 = vst [vmem:[%s3 + $0x10] sm:$0xff] %v62
  %70 = vst [vmem:[%s3 + $0x18] sm:$0xff] %v65
  // Predicated region
  $region14: #{double_stream_block_forward.34} parent=0 // pred_check
    _
  $region15: #{double_stream_block_forward.34} parent=0 // pred_check_branch
    %72 = sbr.rel (0) target = $region17
  $region16: #{double_stream_block_forward.34} parent=0 // pred_region
    _
  $region17: #{double_stream_block_forward.34} parent=0 // pred_fallthru
    _
  // Predicated region
  $region18: #{double_stream_block_forward.34} parent=0 // pred_check
    _
  $region19: #{double_stream_block_forward.34} parent=0 // pred_check_branch
    %74 = sbr.rel (0) target = $region21
  $region20: #{double_stream_block_forward.34} parent=0 // pred_region
    _
  $region21: #{double_stream_block_forward.34} parent=0 // pred_fallthru
    _

// kernel: double_stream_block_forward.35
$region0: #{double_stream_block_forward.35}
  #allocation0 [shape = 'u32[]', space=smem, size = 0x4, offset = 0x4, fixed_abs, tag = 'smem constant byte address 0x4 - core index']
  #allocation1 [shape = 'u32[72,128]{1,0:T(1,128)}', space=vmem, size = 0x9000, scoped, tag = 'internal scratch']
  %s0 = inlined_call_operand.vmem [shape: f32[2,16,128], index: 0, kind: input, shape index: {}]
  %s1 = inlined_call_operand.vmem [shape: f32[2,16,128], index: 1, kind: input, shape index: {}]
  %s2 = inlined_call_operand.vmem [shape: f32[2,1,128], index: 2, kind: input, shape index: {}]
  %s3 = inlined_call_operand.vmem [shape: f32[2,16,128], index: 3, kind: output, shape index: {}]
  %s4 = sld [smem:[#allocation0]]
  $region45: #{double_stream_block_forward.35} parent=0
    _
  %s6 = ssub.s32 1, %s4
  %s7 = scalar_select 0, %s6, %s4
  loop: start=0, step=1, limit=4
  $region2: #{double_stream_block_forward.35} parent=0 // loop_pre_header
    _
  $region3: #{double_stream_block_forward.35} parent=0 // loop_header
    %s9 = sphi 0, %s13
    %p10 = scmp.ge.s32.totalorder %s9, 4
    %s16 = sphi 0, %s28
    %s17 = sphi 0, %s24
    %s18 = sphi 0, %s16
    %s19 = sphi 0, %s17
    %s20 = sphi 0, %s18
    %s21 = sphi 0, %s19
    %s33 = sphi 0, %s35
    %s36 = sphi 0, %s33
    %s37 = sphi 0, %s36
    %s53 = sphi 0, %s37
    %s61 = sphi 0, %s63
    %s64 = sphi 0, %s61
    %s65 = sphi 0, %s64
    %s81 = sphi 0, %s65
    %s87 = sphi 0, %s89
    %s90 = sphi 0, %s87
    %s91 = sphi 0, %s90
    %s107 = sphi 0, %s91
    %s115 = sphi 0, %s117
    %s118 = sphi 0, %s115
    %s119 = sphi 0, %s118
    %s135 = sphi 0, %s119
  $region4: #{double_stream_block_forward.35} parent=0 // loop_header_branch
    %12 = sbr.rel (%p10) target = $region8
  $region5: #{double_stream_block_forward.35} parent=0 // loop_body
    %s14 = ssub.s32 %s9, 1
    %s15 = ssub.s32 %s9, 2
    %s22 = sadd.s32 1, %s17
    %p23 = scmp.ge.s32.totalorder %s22, 1
    %s24 = scalar_select %p23, 0, %s22
    %s25 = sadd.s32 1, %s16
    %s26 = scalar_select %p23, %s25, %s16
    %p27 = scmp.ge.s32.totalorder %s26, 2
    %s28 = scalar_select %p27, 0, %s26
    %s29 = ssub.s32 %s16, %s28
    %s30 = ssub.s32 %s17, %s24
    %s31 = sor.u32 %s29, %s30
    %p32 = scmp.eq.s32.totalorder %s31, 0
    %s34 = sadd.s32 %s33, 1
    %s35 = scalar_select %p32, %s33, %s34
    %p38 = pneg %p32
    %p39 = scmp.eq.s32.totalorder %s9, 1
    %p40 = por %p38, %p39
    %p41 = scmp.ne.s32.totalorder %s33, %s36
    %p42 = scmp.eq.s32.totalorder %s9, 0
    %p43 = por %p41, %p42
    %p44 = scmp.ne.s32.totalorder %s33, %s36
    %p45 = scmp.eq.s32.totalorder %s14, 1
    %p46 = por %p44, %p45
    %p47 = scmp.ne.s32.totalorder %s36, %s37
    %p48 = scmp.eq.s32.totalorder %s14, 0
    %p49 = por %p47, %p48
    %p50 = scmp.ne.s32.totalorder %s36, %s37
    %p51 = scmp.eq.s32.totalorder %s15, 1
    %p52 = por %p50, %p51
    %p54 = scmp.ne.s32.totalorder %s37, %s53
    %p55 = scmp.eq.s32.totalorder %s15, 0
    %p56 = por %p54, %p55
    %s57 = ssub.s32 %s16, %s28
    %s58 = ssub.s32 %s17, %s24
    %s59 = sor.u32 %s57, %s58
    %p60 = scmp.eq.s32.totalorder %s59, 0
    %s62 = sadd.s32 %s61, 1
    %s63 = scalar_select %p60, %s61, %s62
    %p66 = pneg %p60
    %p67 = scmp.eq.s32.totalorder %s9, 1
    %p68 = por %p66, %p67
    %p69 = scmp.ne.s32.totalorder %s61, %s64
    %p70 = scmp.eq.s32.totalorder %s9, 0
    %p71 = por %p69, %p70
    %p72 = scmp.ne.s32.totalorder %s61, %s64
    %p73 = scmp.eq.s32.totalorder %s14, 1
    %p74 = por %p72, %p73
    %p75 = scmp.ne.s32.totalorder %s64, %s65
    %p76 = scmp.eq.s32.totalorder %s14, 0
    %p77 = por %p75, %p76
    %p78 = scmp.ne.s32.totalorder %s64, %s65
    %p79 = scmp.eq.s32.totalorder %s15, 1
    %p80 = por %p78, %p79
    %p82 = scmp.ne.s32.totalorder %s65, %s81
    %p83 = scmp.eq.s32.totalorder %s15, 0
    %p84 = por %p82, %p83
    %s85 = ssub.s32 %s16, %s28
    %p86 = scmp.eq.s32.totalorder %s85, 0
    %s88 = sadd.s32 %s87, 1
    %s89 = scalar_select %p86, %s87, %s88
    %p92 = pneg %p86
    %p93 = scmp.eq.s32.totalorder %s9, 1
    %p94 = por %p92, %p93
    %p95 = scmp.ne.s32.totalorder %s87, %s90
    %p96 = scmp.eq.s32.totalorder %s9, 0
    %p97 = por %p95, %p96
    %p98 = scmp.ne.s32.totalorder %s87, %s90
    %p99 = scmp.eq.s32.totalorder %s14, 1
    %p100 = por %p98, %p99
    %p101 = scmp.ne.s32.totalorder %s90, %s91
    %p102 = scmp.eq.s32.totalorder %s14, 0
    %p103 = por %p101, %p102
    %p104 = scmp.ne.s32.totalorder %s90, %s91
    %p105 = scmp.eq.s32.totalorder %s15, 1
    %p106 = por %p104, %p105
    %p108 = scmp.ne.s32.totalorder %s91, %s107
    %p109 = scmp.eq.s32.totalorder %s15, 0
    %p110 = por %p108, %p109
    %s111 = ssub.s32 %s16, %s28
    %s112 = ssub.s32 %s17, %s24
    %s113 = sor.u32 %s111, %s112
    %p114 = scmp.eq.s32.totalorder %s113, 0
    %s116 = sadd.s32 %s115, 1
    %s117 = scalar_select %p114, %s115, %s116
    %p120 = pneg %p114
    %p121 = scmp.eq.s32.totalorder %s9, 1
    %p122 = por %p120, %p121
    %p123 = scmp.ne.s32.totalorder %s115, %s118
    %p124 = scmp.eq.s32.totalorder %s9, 0
    %p125 = por %p123, %p124
    %p126 = scmp.ne.s32.totalorder %s115, %s118
    %p127 = scmp.eq.s32.totalorder %s14, 1
    %p128 = por %p126, %p127
    %p129 = scmp.ne.s32.totalorder %s118, %s119
    %p130 = scmp.eq.s32.totalorder %s14, 0
    %p131 = por %p129, %p130
    %p132 = scmp.ne.s32.totalorder %s118, %s119
    %p133 = scmp.eq.s32.totalorder %s15, 1
    %p134 = por %p132, %p133
    %p136 = scmp.ne.s32.totalorder %s119, %s135
    %p137 = scmp.eq.s32.totalorder %s15, 0
    %p138 = por %p136, %p137
    %p139 = scmp.le.s32.totalorder 1, %s9
    %p140 = scmp.lt.s32.totalorder %s9, 3
    %p141 = pnand %p139, %p140
    %p142 = pneg %p141
    // Predicated region
    $region9: #{double_stream_block_forward.35} parent=5 // pred_check
      _
    $region10: #{double_stream_block_forward.35} parent=5 // pred_check_branch
      %144 = sbr.rel (%p141) target = $region12
    $region11: #{double_stream_block_forward.35} parent=5 // pred_region
      %s145 = ssub.s32 %s9, 1
    $region12: #{double_stream_block_forward.35} parent=5 // pred_fallthru
      _
    %p146 = scmp.lt.s32.totalorder %s9, 2
    // Predicated region
    $region13: #{double_stream_block_forward.35} parent=5 // pred_check
      %p147 = pneg %p146
    $region14: #{double_stream_block_forward.35} parent=5 // pred_check_branch
      %149 = sbr.rel (%p147) target = $region16
    $region15: #{double_stream_block_forward.35} parent=5 // pred_region
      // Predicated region
      $region17: #{double_stream_block_forward.35} parent=15 // pred_check
        %p150 = pneg %p43
      $region18: #{double_stream_block_forward.35} parent=15 // pred_check_branch
        %152 = sbr.rel (%p150) target = $region20
      $region19: #{double_stream_block_forward.35} parent=15 // pred_region
        %s153 = smul.u32 2, %s17
        %p154 = scmp.lt.s32.totalorder %s16, 1
        %s155 = scalar_select %p154, %s16, 1
        %p156 = scmp.lt.s32.totalorder %s153, 1
        %s157 = scalar_select %p156, %s153, 1
        %s158 = smul.addr %s155, 2
        %s159 = sadd.s32 %s157, %s158
        %s160 = smul.addr %s159, 8
        %s161 = scalar_lea.vmem %s0, %s160
        %s162 = smul.u32 2, %s17
      $region20: #{double_stream_block_forward.35} parent=15 // pred_fallthru
        _
      // Predicated region
      $region21: #{double_stream_block_forward.35} parent=15 // pred_check
        %p163 = pneg %p71
      $region22: #{double_stream_block_forward.35} parent=15 // pred_check_branch
        %165 = sbr.rel (%p163) target = $region24
      $region23: #{double_stream_block_forward.35} parent=15 // pred_region
        %s166 = smul.u32 2, %s17
        %p167 = scmp.lt.s32.totalorder %s16, 1
        %s168 = scalar_select %p167, %s16, 1
        %p169 = scmp.lt.s32.totalorder %s166, 1
        %s170 = scalar_select %p169, %s166, 1
        %s171 = smul.addr %s168, 2
        %s172 = sadd.s32 %s170, %s171
        %s173 = smul.addr %s172, 8
        %s174 = scalar_lea.vmem %s1, %s173
        %s175 = smul.u32 2, %s17
      $region24: #{double_stream_block_forward.35} parent=15 // pred_fallthru
        _
      // Predicated region
      $region25: #{double_stream_block_forward.35} parent=15 // pred_check
        %p176 = pneg %p97
      $region26: #{double_stream_block_forward.35} parent=15 // pred_check_branch
        %178 = sbr.rel (%p176) target = $region28
      $region27: #{double_stream_block_forward.35} parent=15 // pred_region
        %p179 = scmp.lt.s32.totalorder %s16, 1
        %s180 = scalar_select %p179, %s16, 1
        %s181 = scalar_lea.vmem %s2, %s180
      $region28: #{double_stream_block_forward.35} parent=15 // pred_fallthru
        _
    $region16: #{double_stream_block_forward.35} parent=5 // pred_fallthru
      _
    %p182 = scmp.le.s32.totalorder 1, %s9
    %p183 = scmp.lt.s32.totalorder %s9, 3
    %p184 = pnand %p182, %p183
    %p185 = pneg %p184
    // Predicated region
    $region29: #{double_stream_block_forward.35} parent=5 // pred_check
      _
    $region30: #{double_stream_block_forward.35} parent=5 // pred_check_branch
      %187 = sbr.rel (%p184) target = $region32
    $region31: #{double_stream_block_forward.35} parent=5 // pred_region
      %s188 = ssub.s32 %s9, 1
      %s189 = smul.u32 2, %s19
      %p190 = scmp.lt.s32.totalorder %s18, 1
      %s191 = scalar_select %p190, %s18, 1
      %p192 = scmp.lt.s32.totalorder %s189, 1
      %s193 = scalar_select %p192, %s189, 1
      %s194 = smul.addr %s191, 2
      %s195 = sadd.s32 %s193, %s194
      %s196 = smul.addr %s195, 8
      %s197 = scalar_lea.vmem %s0, %s196
      %p198 = pneg %p49
      %p199 = pneg %p46
      %s200 = smul.u32 2, %s19
      %p201 = scmp.lt.s32.totalorder %s18, 1
      %s202 = scalar_select %p201, %s18, 1
      %p203 = scmp.lt.s32.totalorder %s200, 1
      %s204 = scalar_select %p203, %s200, 1
      %s205 = smul.addr %s202, 2
      %s206 = sadd.s32 %s204, %s205
      %s207 = smul.addr %s206, 8
      %s208 = scalar_lea.vmem %s1, %s207
      %p209 = pneg %p77
      %p210 = pneg %p74
      %p211 = scmp.lt.s32.totalorder %s18, 1
      %s212 = scalar_select %p211, %s18, 1
      %s213 = scalar_lea.vmem %s2, %s212
      %p214 = pneg %p103
      %p215 = pneg %p100
      %p216 = pneg %p131
      %p217 = pneg %p128
      %s218 = smul.u32 2, %s19
      %p219 = scmp.lt.s32.totalorder %s18, 1
      %s220 = scalar_select %p219, %s18, 1
      %p221 = scmp.lt.s32.totalorder %s218, 1
      %s222 = scalar_select %p221, %s218, 1
      %s223 = smul.addr %s220, 2
      %s224 = sadd.s32 %s222, %s223
      %s225 = smul.addr %s224, 8
      %s226 = scalar_lea.vmem %s3, %s225
      %s227 = smul.u32 2, %s19
      %p228 = scmp.lt.s32.totalorder %s18, 1
      %s229 = scalar_select %p228, %s18, 1
      %p230 = scmp.lt.s32.totalorder %s227, 1
      %s231 = scalar_select %p230, %s227, 1
      %s232 = smul.addr %s229, 2
      %s233 = sadd.s32 %s231, %s232
      %s234 = smul.addr %s233, 8
      %s235 = scalar_lea.vmem %s0, %s234
      %s236 = smul.u32 2, %s19
      %s237 = smul.u32 2, %s19
      %p238 = scmp.lt.s32.totalorder %s18, 1
      %s239 = scalar_select %p238, %s18, 1
      %p240 = scmp.lt.s32.totalorder %s237, 1
      %s241 = scalar_select %p240, %s237, 1
      %s242 = smul.addr %s239, 2
      %s243 = sadd.s32 %s241, %s242
      %s244 = smul.addr %s243, 8
      %s245 = scalar_lea.vmem %s1, %s244
      %s246 = smul.u32 2, %s19
      %p247 = scmp.lt.s32.totalorder %s18, 1
      %s248 = scalar_select %p247, %s18, 1
      %s249 = scalar_lea.vmem %s2, %s248
      %s250 = smul.u32 2, %s19
      %p251 = scmp.lt.s32.totalorder %s18, 1
      %s252 = scalar_select %p251, %s18, 1
      %p253 = scmp.lt.s32.totalorder %s250, 1
      %s254 = scalar_select %p253, %s250, 1
      %s255 = smul.addr %s252, 2
      %s256 = sadd.s32 %s254, %s255
      %s257 = smul.addr %s256, 8
      %s258 = scalar_lea.vmem %s3, %s257
      %s259 = smul.u32 2, %s19
      %v260 = vld [vmem:[%s235] sm:$0xff]
      %v261 = vld [vmem:[%s235 + $0x8] sm:$0xff]
      %v262 = vld [vmem:[%s245] sm:$0xff]
      %v263 = vld [vmem:[%s245 + $0x8] sm:$0xff]
      %v264 = vld [vmem:[%s249] sm:$0x1]
      %v266 = vperm.slane %v264, 0
      %v268 = vmul.f32 %v266, %v262
      %v269 = vmul.f32 %v266, %v263
      %v270 = vadd.f32 %v260, %v268
      %v271 = vadd.f32 %v261, %v269
      %272 = vst [vmem:[%s258] sm:$0xff] %v270
      %273 = vst [vmem:[%s258 + $0x8] sm:$0xff] %v271
      %s274 = smul.u32 2, %s19
      %p275 = scmp.lt.s32.totalorder %s18, 1
      %s276 = scalar_select %p275, %s18, 1
      %p277 = scmp.lt.s32.totalorder %s274, 1
      %s278 = scalar_select %p277, %s274, 1
      %s279 = smul.addr %s276, 2
      %s280 = sadd.s32 %s278, %s279
      %s281 = smul.addr %s280, 8
      %s282 = scalar_lea.vmem %s3, %s281
      // Predicated region
      $region33: #{double_stream_block_forward.35} parent=31 // pred_check
        %p283 = pneg %p128
      $region34: #{double_stream_block_forward.35} parent=31 // pred_check_branch
        %285 = sbr.rel (%p283) target = $region36
      $region35: #{double_stream_block_forward.35} parent=31 // pred_region
        %s286 = smul.u32 2, %s19
      $region36: #{double_stream_block_forward.35} parent=31 // pred_fallthru
        _
    $region32: #{double_stream_block_forward.35} parent=5 // pred_fallthru
      _
    %p287 = scmp.le.s32.totalorder 2, %s9
    // Predicated region
    $region37: #{double_stream_block_forward.35} parent=5 // pred_check
      %p288 = pneg %p287
    $region38: #{double_stream_block_forward.35} parent=5 // pred_check_branch
      %290 = sbr.rel (%p288) target = $region40
    $region39: #{double_stream_block_forward.35} parent=5 // pred_region
      %s291 = ssub.s32 %s9, 2
      // Predicated region
      $region41: #{double_stream_block_forward.35} parent=39 // pred_check
        %p292 = pneg %p134
      $region42: #{double_stream_block_forward.35} parent=39 // pred_check_branch
        %294 = sbr.rel (%p292) target = $region44
      $region43: #{double_stream_block_forward.35} parent=39 // pred_region
        %s295 = smul.u32 2, %s21
        %p296 = scmp.lt.s32.totalorder %s20, 1
        %s297 = scalar_select %p296, %s20, 1
        %p298 = scmp.lt.s32.totalorder %s295, 1
        %s299 = scalar_select %p298, %s295, 1
        %s300 = smul.addr %s297, 2
        %s301 = sadd.s32 %s299, %s300
        %s302 = smul.addr %s301, 8
        %s303 = scalar_lea.vmem %s3, %s302
      $region44: #{double_stream_block_forward.35} parent=39 // pred_fallthru
        _
    $region40: #{double_stream_block_forward.35} parent=5 // pred_fallthru
      _
  $region6: #{double_stream_block_forward.35} parent=0 // loop_footer
    %s13 = sadd.s32 1, %s9
  $region7: #{double_stream_block_forward.35} parent=0 // loop_footer_branch
    %8 = sbr.rel target = $region3
  $region8: #{double_stream_block_forward.35} parent=0 // loop_exit
    _

// kernel: double_stream_block_forward.39
$region0: #{double_stream_block_forward.39}
  #allocation0 [shape = 'u32[]', space=smem, size = 0x4, offset = 0x4, fixed_abs, tag = 'smem constant byte address 0x4 - core index']
  #allocation1 [shape = 'u32[72,128]{1,0:T(1,128)}', space=vmem, size = 0x9000, scoped, tag = 'internal scratch']
  %s0 = inlined_call_operand.vmem [shape: f32[2,16,128], index: 0, kind: input, shape index: {}]
  %s1 = inlined_call_operand.vmem [shape: f32[2,16,128], index: 1, kind: input, shape index: {}]
  %s2 = inlined_call_operand.vmem [shape: f32[2,1,128], index: 2, kind: input, shape index: {}]
  %s3 = inlined_call_operand.hbm [shape: f32[2,16,128], index: 3, kind: output, shape index: {}]
  %s4 = sld [smem:[#allocation0]]
  $region45: #{double_stream_block_forward.39} parent=0
    _
  %s6 = ssub.s32 1, %s4
  %s7 = scalar_select 0, %s6, %s4
  $region1: #{double_stream_block_forward.39} parent=0
    #allocation2 [shape = 'u8[16384]{0}', space=vmem, size = 0x4000, scoped, tag = 'output window, operand 0']
    #allocation3 [shape = 's32[2]{0}', space=sflag, size = 0x8, scoped, tag = 'scoped memory for double_stream_block_forward.39']
    %8 = vsyncpa [#allocation3], 0
    %s9 = scalar_lea.sflag [#allocation3], 1
    %10 = vsyncpa %s9, 0
    loop: start=0, step=1, limit=4
    $region2: #{double_stream_block_forward.39} parent=1 // loop_pre_header
      _
    $region3: #{double_stream_block_forward.39} parent=1 // loop_header
      %s12 = sphi 0, %s16
      %p13 = scmp.ge.s32.totalorder %s12, 4
      %s19 = sphi 0, %s31
      %s20 = sphi 0, %s27
      %s21 = sphi 0, %s19
      %s22 = sphi 0, %s20
      %s23 = sphi 0, %s21
      %s24 = sphi 0, %s22
      %s36 = sphi 0, %s38
      %s39 = sphi 0, %s36
      %s40 = sphi 0, %s39
      %s56 = sphi 0, %s40
      %s64 = sphi 0, %s66
      %s67 = sphi 0, %s64
      %s68 = sphi 0, %s67
      %s84 = sphi 0, %s68
      %s90 = sphi 0, %s92
      %s93 = sphi 0, %s90
      %s94 = sphi 0, %s93
      %s110 = sphi 0, %s94
      %s118 = sphi 0, %s120
      %s121 = sphi 0, %s118
      %s122 = sphi 0, %s121
      %s138 = sphi 0, %s122
    $region4: #{double_stream_block_forward.39} parent=1 // loop_header_branch
      %15 = sbr.rel (%p13) target = $region8
    $region5: #{double_stream_block_forward.39} parent=1 // loop_body
      %s17 = ssub.s32 %s12, 1
      %s18 = ssub.s32 %s12, 2
      %s25 = sadd.s32 1, %s20
      %p26 = scmp.ge.s32.totalorder %s25, 1
      %s27 = scalar_select %p26, 0, %s25
      %s28 = sadd.s32 1, %s19
      %s29 = scalar_select %p26, %s28, %s19
      %p30 = scmp.ge.s32.totalorder %s29, 2
      %s31 = scalar_select %p30, 0, %s29
      %s32 = ssub.s32 %s19, %s31
      %s33 = ssub.s32 %s20, %s27
      %s34 = sor.u32 %s32, %s33
      %p35 = scmp.eq.s32.totalorder %s34, 0
      %s37 = sadd.s32 %s36, 1
      %s38 = scalar_select %p35, %s36, %s37
      %p41 = pneg %p35
      %p42 = scmp.eq.s32.totalorder %s12, 1
      %p43 = por %p41, %p42
      %p44 = scmp.ne.s32.totalorder %s36, %s39
      %p45 = scmp.eq.s32.totalorder %s12, 0
      %p46 = por %p44, %p45
      %p47 = scmp.ne.s32.totalorder %s36, %s39
      %p48 = scmp.eq.s32.totalorder %s17, 1
      %p49 = por %p47, %p48
      %p50 = scmp.ne.s32.totalorder %s39, %s40
      %p51 = scmp.eq.s32.totalorder %s17, 0
      %p52 = por %p50, %p51
      %p53 = scmp.ne.s32.totalorder %s39, %s40
      %p54 = scmp.eq.s32.totalorder %s18, 1
      %p55 = por %p53, %p54
      %p57 = scmp.ne.s32.totalorder %s40, %s56
      %p58 = scmp.eq.s32.totalorder %s18, 0
      %p59 = por %p57, %p58
      %s60 = ssub.s32 %s19, %s31
      %s61 = ssub.s32 %s20, %s27
      %s62 = sor.u32 %s60, %s61
      %p63 = scmp.eq.s32.totalorder %s62, 0
      %s65 = sadd.s32 %s64, 1
      %s66 = scalar_select %p63, %s64, %s65
      %p69 = pneg %p63
      %p70 = scmp.eq.s32.totalorder %s12, 1
      %p71 = por %p69, %p70
      %p72 = scmp.ne.s32.totalorder %s64, %s67
      %p73 = scmp.eq.s32.totalorder %s12, 0
      %p74 = por %p72, %p73
      %p75 = scmp.ne.s32.totalorder %s64, %s67
      %p76 = scmp.eq.s32.totalorder %s17, 1
      %p77 = por %p75, %p76
      %p78 = scmp.ne.s32.totalorder %s67, %s68
      %p79 = scmp.eq.s32.totalorder %s17, 0
      %p80 = por %p78, %p79
      %p81 = scmp.ne.s32.totalorder %s67, %s68
      %p82 = scmp.eq.s32.totalorder %s18, 1
      %p83 = por %p81, %p82
      %p85 = scmp.ne.s32.totalorder %s68, %s84
      %p86 = scmp.eq.s32.totalorder %s18, 0
      %p87 = por %p85, %p86
      %s88 = ssub.s32 %s19, %s31
      %p89 = scmp.eq.s32.totalorder %s88, 0
      %s91 = sadd.s32 %s90, 1
      %s92 = scalar_select %p89, %s90, %s91
      %p95 = pneg %p89
      %p96 = scmp.eq.s32.totalorder %s12, 1
      %p97 = por %p95, %p96
      %p98 = scmp.ne.s32.totalorder %s90, %s93
      %p99 = scmp.eq.s32.totalorder %s12, 0
      %p100 = por %p98, %p99
      %p101 = scmp.ne.s32.totalorder %s90, %s93
      %p102 = scmp.eq.s32.totalorder %s17, 1
      %p103 = por %p101, %p102
      %p104 = scmp.ne.s32.totalorder %s93, %s94
      %p105 = scmp.eq.s32.totalorder %s17, 0
      %p106 = por %p104, %p105
      %p107 = scmp.ne.s32.totalorder %s93, %s94
      %p108 = scmp.eq.s32.totalorder %s18, 1
      %p109 = por %p107, %p108
      %p111 = scmp.ne.s32.totalorder %s94, %s110
      %p112 = scmp.eq.s32.totalorder %s18, 0
      %p113 = por %p111, %p112
      %s114 = ssub.s32 %s19, %s31
      %s115 = ssub.s32 %s20, %s27
      %s116 = sor.u32 %s114, %s115
      %p117 = scmp.eq.s32.totalorder %s116, 0
      %s119 = sadd.s32 %s118, 1
      %s120 = scalar_select %p117, %s118, %s119
      %p123 = pneg %p117
      %p124 = scmp.eq.s32.totalorder %s12, 1
      %p125 = por %p123, %p124
      %p126 = scmp.ne.s32.totalorder %s118, %s121
      %p127 = scmp.eq.s32.totalorder %s12, 0
      %p128 = por %p126, %p127
      %p129 = scmp.ne.s32.totalorder %s118, %s121
      %p130 = scmp.eq.s32.totalorder %s17, 1
      %p131 = por %p129, %p130
      %p132 = scmp.ne.s32.totalorder %s121, %s122
      %p133 = scmp.eq.s32.totalorder %s17, 0
      %p134 = por %p132, %p133
      %p135 = scmp.ne.s32.totalorder %s121, %s122
      %p136 = scmp.eq.s32.totalorder %s18, 1
      %p137 = por %p135, %p136
      %p139 = scmp.ne.s32.totalorder %s122, %s138
      %p140 = scmp.eq.s32.totalorder %s18, 0
      %p141 = por %p139, %p140
      %p142 = scmp.le.s32.totalorder 1, %s12
      %p143 = scmp.lt.s32.totalorder %s12, 3
      %p144 = pnand %p142, %p143
      %p145 = pneg %p144
      // Predicated region
      $region9: #{double_stream_block_forward.39} parent=5 // pred_check
        _
      $region10: #{double_stream_block_forward.39} parent=5 // pred_check_branch
        %147 = sbr.rel (%p144) target = $region12
      $region11: #{double_stream_block_forward.39} parent=5 // pred_region
        %s148 = ssub.s32 %s12, 1
      $region12: #{double_stream_block_forward.39} parent=5 // pred_fallthru
        _
      %p149 = scmp.lt.s32.totalorder %s12, 2
      // Predicated region
      $region13: #{double_stream_block_forward.39} parent=5 // pred_check
        %p150 = pneg %p149
      $region14: #{double_stream_block_forward.39} parent=5 // pred_check_branch
        %152 = sbr.rel (%p150) target = $region16
      $region15: #{double_stream_block_forward.39} parent=5 // pred_region
        // Predicated region
        $region17: #{double_stream_block_forward.39} parent=15 // pred_check
          %p153 = pneg %p46
        $region18: #{double_stream_block_forward.39} parent=15 // pred_check_branch
          %155 = sbr.rel (%p153) target = $region20
        $region19: #{double_stream_block_forward.39} parent=15 // pred_region
          %s156 = smul.u32 2, %s20
          %p157 = scmp.lt.s32.totalorder %s19, 1
          %s158 = scalar_select %p157, %s19, 1
          %p159 = scmp.lt.s32.totalorder %s156, 1
          %s160 = scalar_select %p159, %s156, 1
          %s161 = smul.addr %s158, 2
          %s162 = sadd.s32 %s160, %s161
          %s163 = smul.addr %s162, 8
          %s164 = scalar_lea.vmem %s0, %s163
          %s165 = smul.u32 2, %s20
        $region20: #{double_stream_block_forward.39} parent=15 // pred_fallthru
          _
        // Predicated region
        $region21: #{double_stream_block_forward.39} parent=15 // pred_check
          %p166 = pneg %p74
        $region22: #{double_stream_block_forward.39} parent=15 // pred_check_branch
          %168 = sbr.rel (%p166) target = $region24
        $region23: #{double_stream_block_forward.39} parent=15 // pred_region
          %s169 = smul.u32 2, %s20
          %p170 = scmp.lt.s32.totalorder %s19, 1
          %s171 = scalar_select %p170, %s19, 1
          %p172 = scmp.lt.s32.totalorder %s169, 1
          %s173 = scalar_select %p172, %s169, 1
          %s174 = smul.addr %s171, 2
          %s175 = sadd.s32 %s173, %s174
          %s176 = smul.addr %s175, 8
          %s177 = scalar_lea.vmem %s1, %s176
          %s178 = smul.u32 2, %s20
        $region24: #{double_stream_block_forward.39} parent=15 // pred_fallthru
          _
        // Predicated region
        $region25: #{double_stream_block_forward.39} parent=15 // pred_check
          %p179 = pneg %p100
        $region26: #{double_stream_block_forward.39} parent=15 // pred_check_branch
          %181 = sbr.rel (%p179) target = $region28
        $region27: #{double_stream_block_forward.39} parent=15 // pred_region
          %p182 = scmp.lt.s32.totalorder %s19, 1
          %s183 = scalar_select %p182, %s19, 1
          %s184 = scalar_lea.vmem %s2, %s183
        $region28: #{double_stream_block_forward.39} parent=15 // pred_fallthru
          _
      $region16: #{double_stream_block_forward.39} parent=5 // pred_fallthru
        _
      %p185 = scmp.le.s32.totalorder 1, %s12
      %p186 = scmp.lt.s32.totalorder %s12, 3
      %p187 = pnand %p185, %p186
      %p188 = pneg %p187
      // Predicated region
      $region29: #{double_stream_block_forward.39} parent=5 // pred_check
        _
      $region30: #{double_stream_block_forward.39} parent=5 // pred_check_branch
        %190 = sbr.rel (%p187) target = $region32
      $region31: #{double_stream_block_forward.39} parent=5 // pred_region
        %s191 = ssub.s32 %s12, 1
        %s192 = smul.u32 2, %s22
        %p193 = scmp.lt.s32.totalorder %s21, 1
        %s194 = scalar_select %p193, %s21, 1
        %p195 = scmp.lt.s32.totalorder %s192, 1
        %s196 = scalar_select %p195, %s192, 1
        %s197 = smul.addr %s194, 2
        %s198 = sadd.s32 %s196, %s197
        %s199 = smul.addr %s198, 8
        %s200 = scalar_lea.vmem %s0, %s199
        %p201 = pneg %p52
        %p202 = pneg %p49
        %s203 = smul.u32 2, %s22
        %p204 = scmp.lt.s32.totalorder %s21, 1
        %s205 = scalar_select %p204, %s21, 1
        %p206 = scmp.lt.s32.totalorder %s203, 1
        %s207 = scalar_select %p206, %s203, 1
        %s208 = smul.addr %s205, 2
        %s209 = sadd.s32 %s207, %s208
        %s210 = smul.addr %s209, 8
        %s211 = scalar_lea.vmem %s1, %s210
        %p212 = pneg %p80
        %p213 = pneg %p77
        %p214 = scmp.lt.s32.totalorder %s21, 1
        %s215 = scalar_select %p214, %s21, 1
        %s216 = scalar_lea.vmem %s2, %s215
        %p217 = pneg %p106
        %p218 = pneg %p103
        %p219 = pneg %p134
        %p220 = pneg %p131
        %s221 = sand.u32 %s121, 1
        %s222 = scalar_lea.sflag [#allocation3], %s221
        %s223 = sand.u32 %s121, 1
        %s224 = smul.addr %s223, 16
        %s225 = scalar_lea.vmem [#allocation2], %s224
        %s226 = smul.u32 2, %s22
        %p227 = scmp.lt.s32.totalorder %s21, 1
        %s228 = scalar_select %p227, %s21, 1
        %p229 = scmp.lt.s32.totalorder %s226, 1
        %s230 = scalar_select %p229, %s226, 1
        %s231 = smul.addr %s228, 2
        %s232 = sadd.s32 %s230, %s231
        %s233 = smul.addr %s232, 8
        %s234 = scalar_lea.vmem %s0, %s233
        %s235 = smul.u32 2, %s22
        %s236 = smul.u32 2, %s22
        %p237 = scmp.lt.s32.totalorder %s21, 1
        %s238 = scalar_select %p237, %s21, 1
        %p239 = scmp.lt.s32.totalorder %s236, 1
        %s240 = scalar_select %p239, %s236, 1
        %s241 = smul.addr %s238, 2
        %s242 = sadd.s32 %s240, %s241
        %s243 = smul.addr %s242, 8
        %s244 = scalar_lea.vmem %s1, %s243
        %s245 = smul.u32 2, %s22
        %p246 = scmp.lt.s32.totalorder %s21, 1
        %s247 = scalar_select %p246, %s21, 1
        %s248 = scalar_lea.vmem %s2, %s247
        %s249 = smul.u32 2, %s22
        %v250 = vld [vmem:[%s234] sm:$0xff]
        %v251 = vld [vmem:[%s234 + $0x8] sm:$0xff]
        %v252 = vld [vmem:[%s244] sm:$0xff]
        %v253 = vld [vmem:[%s244 + $0x8] sm:$0xff]
        %v254 = vld [vmem:[%s248] sm:$0x1]
        %v256 = vperm.slane %v254, 0
        %v258 = vmul.f32 %v256, %v252
        %v259 = vmul.f32 %v256, %v253
        %v260 = vadd.f32 %v250, %v258
        %v261 = vadd.f32 %v251, %v259
        %262 = vst [vmem:[%s225] sm:$0xff] %v260
        %263 = vst [vmem:[%s225 + $0x8] sm:$0xff] %v261
        %s264 = sand.u32 %s121, 1
        %s265 = scalar_lea.sflag [#allocation3], %s264
        %s266 = sand.u32 %s121, 1
        %s267 = smul.addr %s266, 16
        %s268 = scalar_lea.vmem [#allocation2], %s267
        // Predicated region
        $region33: #{double_stream_block_forward.39} parent=31 // pred_check
          %p269 = pneg %p131
        $region34: #{double_stream_block_forward.39} parent=31 // pred_check_branch
          %271 = sbr.rel (%p269) target = $region36
        $region35: #{double_stream_block_forward.39} parent=31 // pred_region
          %s272 = smul.u32 2, %s22
          %274 = vsyncadd %s265, 0
          %s275 = smul.addr %s21, 2
          %s276 = sadd.s32 %s272, %s275
          %s277 = smul.addr %s276, 8
          %s278 = scalar_lea.hbm %s3, %s277
          %s279 = sshll.u32 %s268, 4
          %s280 = int_to_ptr.vmem [resolvable:$true] %s279
          %s281 = sshll.u32 %s278, 4
          %s282 = int_to_ptr.hbm [resolvable:$true] %s281
          %287 = dma.vmem_to_hbm [thread:$0]  %s280, 256, %s282, %s265, 128, 128, 8
        $region36: #{double_stream_block_forward.39} parent=31 // pred_fallthru
          _
      $region32: #{double_stream_block_forward.39} parent=5 // pred_fallthru
        _
      %p288 = scmp.le.s32.totalorder 2, %s12
      // Predicated region
      $region37: #{double_stream_block_forward.39} parent=5 // pred_check
        %p289 = pneg %p288
      $region38: #{double_stream_block_forward.39} parent=5 // pred_check_branch
        %291 = sbr.rel (%p289) target = $region40
      $region39: #{double_stream_block_forward.39} parent=5 // pred_region
        %s292 = ssub.s32 %s12, 2
        // Predicated region
        $region41: #{double_stream_block_forward.39} parent=39 // pred_check
          %p293 = pneg %p137
        $region42: #{double_stream_block_forward.39} parent=39 // pred_check_branch
          %295 = sbr.rel (%p293) target = $region44
        $region43: #{double_stream_block_forward.39} parent=39 // pred_region
          %s296 = sand.u32 %s122, 1
          %s297 = scalar_lea.sflag [#allocation3], %s296
          %s298 = sand.u32 %s122, 1
          %s299 = smul.addr %s298, 16
          %s300 = scalar_lea.vmem [#allocation2], %s299
          %302 = dma.done %s297, 256
        $region44: #{double_stream_block_forward.39} parent=39 // pred_fallthru
          _
      $region40: #{double_stream_block_forward.39} parent=5 // pred_fallthru
        _
    $region6: #{double_stream_block_forward.39} parent=1 // loop_footer
      %s16 = sadd.s32 1, %s12
    $region7: #{double_stream_block_forward.39} parent=1 // loop_footer_branch
      %11 = sbr.rel target = $region3
    $region8: #{double_stream_block_forward.39} parent=1 // loop_exit
      _
    %303 = vsyncpa [#allocation3], 1
    %s304 = scalar_lea.sflag [#allocation3], 1
    %305 = vsyncpa %s304, 1

// kernel: double_stream_block_forward.37
$region0: #{double_stream_block_forward.37}
  #allocation0 [shape = 'u32[]', space=smem, size = 0x4, offset = 0x4, fixed_abs, tag = 'smem constant byte address 0x4 - core index']
  #allocation1 [shape = 'u32[72,128]{1,0:T(1,128)}', space=vmem, size = 0x9000, scoped, tag = 'internal scratch']
  %s0 = inlined_call_operand.vmem [shape: f32[32,128], index: 0, kind: input, shape index: {}]
  %s1 = inlined_call_operand.vmem [shape: f32[512,128], index: 1, kind: input, shape index: {}]
  %s2 = inlined_call_operand.vmem [shape: f32[1,512], index: 2, kind: input, shape index: {}]
  %s3 = inlined_call_operand.vmem [shape: f32[32,512], index: 3, kind: output, shape index: {}]
  %s4 = sld [smem:[#allocation0]]
  $region22: #{double_stream_block_forward.37} parent=0
    _
  %s6 = ssub.s32 1, %s4
  %s7 = scalar_select 0, %s6, %s4
  // Predicated region
  $region2: #{double_stream_block_forward.37} parent=0 // pred_check
    _
  $region3: #{double_stream_block_forward.37} parent=0 // pred_check_branch
    %9 = sbr.rel (0) target = $region5
  $region4: #{double_stream_block_forward.37} parent=0 // pred_region
    _
  $region5: #{double_stream_block_forward.37} parent=0 // pred_fallthru
    _
  // Predicated region
  $region6: #{double_stream_block_forward.37} parent=0 // pred_check
    _
  $region7: #{double_stream_block_forward.37} parent=0 // pred_check_branch
    %11 = sbr.rel (0) target = $region9
  $region8: #{double_stream_block_forward.37} parent=0 // pred_region
    _
  $region9: #{double_stream_block_forward.37} parent=0 // pred_fallthru
    _
  // Predicated region
  $region10: #{double_stream_block_forward.37} parent=0 // pred_check
    _
  $region11: #{double_stream_block_forward.37} parent=0 // pred_check_branch
    %13 = sbr.rel (0) target = $region13
  $region12: #{double_stream_block_forward.37} parent=0 // pred_region
    _
  $region13: #{double_stream_block_forward.37} parent=0 // pred_fallthru
    _
  %v14 = vld [vmem:[%s0] sm:$0xff]
  %v15 = vld [vmem:[%s0 + $0x8] sm:$0xff]
  %v16 = vld [vmem:[%s0 + $0x10] sm:$0xff]
  %v17 = vld [vmem:[%s0 + $0x18] sm:$0xff]
  %v18 = vld [vmem:[%s1] sm:$0xff]
  %v19 = vld [vmem:[%s1 + $0x8] sm:$0xff]
  %v20 = vld [vmem:[%s1 + $0x10] sm:$0xff]
  %v21 = vld [vmem:[%s1 + $0x18] sm:$0xff]
  %v22 = vld [vmem:[%s1 + $0x20] sm:$0xff]
  %v23 = vld [vmem:[%s1 + $0x28] sm:$0xff]
  %v24 = vld [vmem:[%s1 + $0x30] sm:$0xff]
  %v25 = vld [vmem:[%s1 + $0x38] sm:$0xff]
  %v26 = vld [vmem:[%s1 + $0x40] sm:$0xff]
  %v27 = vld [vmem:[%s1 + $0x48] sm:$0xff]
  %v28 = vld [vmem:[%s1 + $0x50] sm:$0xff]
  %v29 = vld [vmem:[%s1 + $0x58] sm:$0xff]
  %v30 = vld [vmem:[%s1 + $0x60] sm:$0xff]
  %v31 = vld [vmem:[%s1 + $0x68] sm:$0xff]
  %v32 = vld [vmem:[%s1 + $0x70] sm:$0xff]
  %v33 = vld [vmem:[%s1 + $0x78] sm:$0xff]
  %v34 = vld [vmem:[%s1 + $0x80] sm:$0xff]
  %v35 = vld [vmem:[%s1 + $0x88] sm:$0xff]
  %v36 = vld [vmem:[%s1 + $0x90] sm:$0xff]
  %v37 = vld [vmem:[%s1 + $0x98] sm:$0xff]
  %v38 = vld [vmem:[%s1 + $0xa0] sm:$0xff]
  %v39 = vld [vmem:[%s1 + $0xa8] sm:$0xff]
  %v40 = vld [vmem:[%s1 + $0xb0] sm:$0xff]
  %v41 = vld [vmem:[%s1 + $0xb8] sm:$0xff]
  %v42 = vld [vmem:[%s1 + $0xc0] sm:$0xff]
  %v43 = vld [vmem:[%s1 + $0xc8] sm:$0xff]
  %v44 = vld [vmem:[%s1 + $0xd0] sm:$0xff]
  %v45 = vld [vmem:[%s1 + $0xd8] sm:$0xff]
  %v46 = vld [vmem:[%s1 + $0xe0] sm:$0xff]
  %v47 = vld [vmem:[%s1 + $0xe8] sm:$0xff]
  %v48 = vld [vmem:[%s1 + $0xf0] sm:$0xff]
  %v49 = vld [vmem:[%s1 + $0xf8] sm:$0xff]
  %v50 = vld [vmem:[%s1 + $0x100] sm:$0xff]
  %v51 = vld [vmem:[%s1 + $0x108] sm:$0xff]
  %v52 = vld [vmem:[%s1 + $0x110] sm:$0xff]
  %v53 = vld [vmem:[%s1 + $0x118] sm:$0xff]
  %v54 = vld [vmem:[%s1 + $0x120] sm:$0xff]
  %v55 = vld [vmem:[%s1 + $0x128] sm:$0xff]
  %v56 = vld [vmem:[%s1 + $0x130] sm:$0xff]
  %v57 = vld [vmem:[%s1 + $0x138] sm:$0xff]
  %v58 = vld [vmem:[%s1 + $0x140] sm:$0xff]
  %v59 = vld [vmem:[%s1 + $0x148] sm:$0xff]
  %v60 = vld [vmem:[%s1 + $0x150] sm:$0xff]
  %v61 = vld [vmem:[%s1 + $0x158] sm:$0xff]
  %v62 = vld [vmem:[%s1 + $0x160] sm:$0xff]
  %v63 = vld [vmem:[%s1 + $0x168] sm:$0xff]
  %v64 = vld [vmem:[%s1 + $0x170] sm:$0xff]
  %v65 = vld [vmem:[%s1 + $0x178] sm:$0xff]
  %v66 = vld [vmem:[%s1 + $0x180] sm:$0xff]
  %v67 = vld [vmem:[%s1 + $0x188] sm:$0xff]
  %v68 = vld [vmem:[%s1 + $0x190] sm:$0xff]
  %v69 = vld [vmem:[%s1 + $0x198] sm:$0xff]
  %v70 = vld [vmem:[%s1 + $0x1a0] sm:$0xff]
  %v71 = vld [vmem:[%s1 + $0x1a8] sm:$0xff]
  %v72 = vld [vmem:[%s1 + $0x1b0] sm:$0xff]
  %v73 = vld [vmem:[%s1 + $0x1b8] sm:$0xff]
  %v74 = vld [vmem:[%s1 + $0x1c0] sm:$0xff]
  %v75 = vld [vmem:[%s1 + $0x1c8] sm:$0xff]
  %v76 = vld [vmem:[%s1 + $0x1d0] sm:$0xff]
  %v77 = vld [vmem:[%s1 + $0x1d8] sm:$0xff]
  %v78 = vld [vmem:[%s1 + $0x1e0] sm:$0xff]
  %v79 = vld [vmem:[%s1 + $0x1e8] sm:$0xff]
  %v80 = vld [vmem:[%s1 + $0x1f0] sm:$0xff]
  %v81 = vld [vmem:[%s1 + $0x1f8] sm:$0xff]
  %v82 = vld [vmem:[%s2] sm:$0xf]
  %v84 = vperm.slane %v82, 0
  %v85 = vperm.slane %v82, 1
  %v86 = vperm.slane %v82, 2
  %v87 = vperm.slane %v82, 3
  %92 = vmatpush.xpose.msra.mxu0 %v33
  %93 = vmatpush.xpose.msra.mxu0 %v32
  %94 = vmatpush.xpose.msra.mxu0 %v31
  %95 = vmatpush.xpose.msra.mxu0 %v30
  %96 = vmatpush.xpose.msra.mxu0 %v29
  %97 = vmatpush.xpose.msra.mxu0 %v28
  %98 = vmatpush.xpose.msra.mxu0 %v27
  %99 = vmatpush.xpose.msra.mxu0 %v26
  %100 = vmatpush.xpose.msra.mxu0 %v25
  %101 = vmatpush.xpose.msra.mxu0 %v24
  %102 = vmatpush.xpose.msra.mxu0 %v23
  %103 = vmatpush.xpose.msra.mxu0 %v22
  %104 = vmatpush.xpose.msra.mxu0 %v21
  %105 = vmatpush.xpose.msra.mxu0 %v20
  %106 = vmatpush.xpose.msra.mxu0 %v19
  %107 = vmatpush.xpose.msra.mxu0 %v18
  %108 = vmatmul.f32.gmra.mxu0 %v14
  %v109 = vpop.f32.mrf.mxu0
  %v110 = vadd.f32 %v84, %v109
  %111 = vmatmul.f32.gmra.mxu0 %v15
  %v112 = vpop.f32.mrf.mxu0
  %v113 = vadd.f32 %v84, %v112
  %114 = vmatmul.f32.gmra.mxu0 %v16
  %v115 = vpop.f32.mrf.mxu0
  %v116 = vadd.f32 %v84, %v115
  %117 = vmatmul.f32.gmra.mxu0 %v17
  %v118 = vpop.f32.mrf.mxu0
  %v119 = vadd.f32 %v84, %v118
  %120 = vdwg.mxu0
  %121 = vmatpush.xpose.msra.mxu0 %v49
  %122 = vmatpush.xpose.msra.mxu0 %v48
  %123 = vmatpush.xpose.msra.mxu0 %v47
  %124 = vmatpush.xpose.msra.mxu0 %v46
  %125 = vmatpush.xpose.msra.mxu0 %v45
  %126 = vmatpush.xpose.msra.mxu0 %v44
  %127 = vmatpush.xpose.msra.mxu0 %v43
  %128 = vmatpush.xpose.msra.mxu0 %v42
  %129 = vmatpush.xpose.msra.mxu0 %v41
  %130 = vmatpush.xpose.msra.mxu0 %v40
  %131 = vmatpush.xpose.msra.mxu0 %v39
  %132 = vmatpush.xpose.msra.mxu0 %v38
  %133 = vmatpush.xpose.msra.mxu0 %v37
  %134 = vmatpush.xpose.msra.mxu0 %v36
  %135 = vmatpush.xpose.msra.mxu0 %v35
  %136 = vmatpush.xpose.msra.mxu0 %v34
  %137 = vmatmul.f32.gmra.mxu0 %v14
  %v138 = vpop.f32.mrf.mxu0
  %v139 = vadd.f32 %v85, %v138
  %140 = vmatmul.f32.gmra.mxu0 %v15
  %v141 = vpop.f32.mrf.mxu0
  %v142 = vadd.f32 %v85, %v141
  %143 = vmatmul.f32.gmra.mxu0 %v16
  %v144 = vpop.f32.mrf.mxu0
  %v145 = vadd.f32 %v85, %v144
  %146 = vmatmul.f32.gmra.mxu0 %v17
  %v147 = vpop.f32.mrf.mxu0
  %v148 = vadd.f32 %v85, %v147
  %149 = vdwg.mxu0
  %150 = vmatpush.xpose.msra.mxu0 %v65
  %151 = vmatpush.xpose.msra.mxu0 %v64
  %152 = vmatpush.xpose.msra.mxu0 %v63
  %153 = vmatpush.xpose.msra.mxu0 %v62
  %154 = vmatpush.xpose.msra.mxu0 %v61
  %155 = vmatpush.xpose.msra.mxu0 %v60
  %156 = vmatpush.xpose.msra.mxu0 %v59
  %157 = vmatpush.xpose.msra.mxu0 %v58
  %158 = vmatpush.xpose.msra.mxu0 %v57
  %159 = vmatpush.xpose.msra.mxu0 %v56
  %160 = vmatpush.xpose.msra.mxu0 %v55
  %161 = vmatpush.xpose.msra.mxu0 %v54
  %162 = vmatpush.xpose.msra.mxu0 %v53
  %163 = vmatpush.xpose.msra.mxu0 %v52
  %164 = vmatpush.xpose.msra.mxu0 %v51
  %165 = vmatpush.xpose.msra.mxu0 %v50
  %166 = vmatmul.f32.gmra.mxu0 %v14
  %v167 = vpop.f32.mrf.mxu0
  %v168 = vadd.f32 %v86, %v167
  %169 = vmatmul.f32.gmra.mxu0 %v15
  %v170 = vpop.f32.mrf.mxu0
  %v171 = vadd.f32 %v86, %v170
  %172 = vmatmul.f32.gmra.mxu0 %v16
  %v173 = vpop.f32.mrf.mxu0
  %v174 = vadd.f32 %v86, %v173
  %175 = vmatmul.f32.gmra.mxu0 %v17
  %v176 = vpop.f32.mrf.mxu0
  %v177 = vadd.f32 %v86, %v176
  %178 = vdwg.mxu0
  %179 = vmatpush.xpose.msra.mxu0 %v81
  %180 = vmatpush.xpose.msra.mxu0 %v80
  %181 = vmatpush.xpose.msra.mxu0 %v79
  %182 = vmatpush.xpose.msra.mxu0 %v78
  %183 = vmatpush.xpose.msra.mxu0 %v77
  %184 = vmatpush.xpose.msra.mxu0 %v76
  %185 = vmatpush.xpose.msra.mxu0 %v75
  %186 = vmatpush.xpose.msra.mxu0 %v74
  %187 = vmatpush.xpose.msra.mxu0 %v73
  %188 = vmatpush.xpose.msra.mxu0 %v72
  %189 = vmatpush.xpose.msra.mxu0 %v71
  %190 = vmatpush.xpose.msra.mxu0 %v70
  %191 = vmatpush.xpose.msra.mxu0 %v69
  %192 = vmatpush.xpose.msra.mxu0 %v68
  %193 = vmatpush.xpose.msra.mxu0 %v67
  %194 = vmatpush.xpose.msra.mxu0 %v66
  %195 = vmatmul.f32.gmra.mxu0 %v14
  %v196 = vpop.f32.mrf.mxu0
  %v197 = vadd.f32 %v87, %v196
  %198 = vmatmul.f32.gmra.mxu0 %v15
  %v199 = vpop.f32.mrf.mxu0
  %v200 = vadd.f32 %v87, %v199
  %201 = vmatmul.f32.gmra.mxu0 %v16
  %v202 = vpop.f32.mrf.mxu0
  %v203 = vadd.f32 %v87, %v202
  %204 = vmatmul.f32.gmra.mxu0 %v17
  %v205 = vpop.f32.mrf.mxu0
  %v206 = vadd.f32 %v87, %v205
  %207 = vdwg.mxu0
  %v208 = vmul.f32 %v110, %v110
  %v209 = vmul.f32 %v139, %v139
  %v210 = vmul.f32 %v168, %v168
  %v211 = vmul.f32 %v197, %v197
  %v212 = vmul.f32 %v113, %v113
  %v213 = vmul.f32 %v142, %v142
  %v214 = vmul.f32 %v171, %v171
  %v215 = vmul.f32 %v200, %v200
  %v216 = vmul.f32 %v116, %v116
  %v217 = vmul.f32 %v145, %v145
  %v218 = vmul.f32 %v174, %v174
  %v219 = vmul.f32 %v203, %v203
  %v220 = vmul.f32 %v119, %v119
  %v221 = vmul.f32 %v148, %v148
  %v222 = vmul.f32 %v177, %v177
  %v223 = vmul.f32 %v206, %v206
  %v224 = vmul.f32 %v110, %v208
  %v225 = vmul.f32 %v139, %v209
  %v226 = vmul.f32 %v168, %v210
  %v227 = vmul.f32 %v197, %v211
  %v228 = vmul.f32 %v113, %v212
  %v229 = vmul.f32 %v142, %v213
  %v230 = vmul.f32 %v171, %v214
  %v231 = vmul.f32 %v200, %v215
  %v232 = vmul.f32 %v116, %v216
  %v233 = vmul.f32 %v145, %v217
  %v234 = vmul.f32 %v174, %v218
  %v235 = vmul.f32 %v203, %v219
  %v236 = vmul.f32 %v119, %v220
  %v237 = vmul.f32 %v148, %v221
  %v238 = vmul.f32 %v177, %v222
  %v239 = vmul.f32 %v206, %v223
  %v240 = vmul.f32 %v224, 0.044715
  %v241 = vmul.f32 %v225, 0.044715
  %v242 = vmul.f32 %v226, 0.044715
  %v243 = vmul.f32 %v227, 0.044715
  %v244 = vmul.f32 %v228, 0.044715
  %v245 = vmul.f32 %v229, 0.044715
  %v246 = vmul.f32 %v230, 0.044715
  %v247 = vmul.f32 %v231, 0.044715
  %v248 = vmul.f32 %v232, 0.044715
  %v249 = vmul.f32 %v233, 0.044715
  %v250 = vmul.f32 %v234, 0.044715
  %v251 = vmul.f32 %v235, 0.044715
  %v252 = vmul.f32 %v236, 0.044715
  %v253 = vmul.f32 %v237, 0.044715
  %v254 = vmul.f32 %v238, 0.044715
  %v255 = vmul.f32 %v239, 0.044715
  %v256 = vadd.f32 %v110, %v240
  %v257 = vadd.f32 %v139, %v241
  %v258 = vadd.f32 %v168, %v242
  %v259 = vadd.f32 %v197, %v243
  %v260 = vadd.f32 %v113, %v244
  %v261 = vadd.f32 %v142, %v245
  %v262 = vadd.f32 %v171, %v246
  %v263 = vadd.f32 %v200, %v247
  %v264 = vadd.f32 %v116, %v248
  %v265 = vadd.f32 %v145, %v249
  %v266 = vadd.f32 %v174, %v250
  %v267 = vadd.f32 %v203, %v251
  %v268 = vadd.f32 %v119, %v252
  %v269 = vadd.f32 %v148, %v253
  %v270 = vadd.f32 %v177, %v254
  %v271 = vadd.f32 %v206, %v255
  %v272 = vmul.f32 %v256, 0.7978846
  %v273 = vmul.f32 %v257, 0.7978846
  %v274 = vmul.f32 %v258, 0.7978846
  %v275 = vmul.f32 %v259, 0.7978846
  %v276 = vmul.f32 %v260, 0.7978846
  %v277 = vmul.f32 %v261, 0.7978846
  %v278 = vmul.f32 %v262, 0.7978846
  %v279 = vmul.f32 %v263, 0.7978846
  %v280 = vmul.f32 %v264, 0.7978846
  %v281 = vmul.f32 %v265, 0.7978846
  %v282 = vmul.f32 %v266, 0.7978846
  %v283 = vmul.f32 %v267, 0.7978846
  %v284 = vmul.f32 %v268, 0.7978846
  %v285 = vmul.f32 %v269, 0.7978846
  %v286 = vmul.f32 %v270, 0.7978846
  %v287 = vmul.f32 %v271, 0.7978846
  %v288 = vtanh.pop %v272
  %v289 = vtanh.pop %v273
  %v290 = vtanh.pop %v274
  %v291 = vtanh.pop %v275
  %v292 = vtanh.pop %v276
  %v293 = vtanh.pop %v277
  %v294 = vtanh.pop %v278
  %v295 = vtanh.pop %v279
  %v296 = vtanh.pop %v280
  %v297 = vtanh.pop %v281
  %v298 = vtanh.pop %v282
  %v299 = vtanh.pop %v283
  %v300 = vtanh.pop %v284
  %v301 = vtanh.pop %v285
  %v302 = vtanh.pop %v286
  %v303 = vtanh.pop %v287
  %v304 = vadd.f32 %v288, 1.0
  %v305 = vadd.f32 %v289, 1.0
  %v306 = vadd.f32 %v290, 1.0
  %v307 = vadd.f32 %v291, 1.0
  %v308 = vadd.f32 %v292, 1.0
  %v309 = vadd.f32 %v293, 1.0
  %v310 = vadd.f32 %v294, 1.0
  %v311 = vadd.f32 %v295, 1.0
  %v312 = vadd.f32 %v296, 1.0
  %v313 = vadd.f32 %v297, 1.0
  %v314 = vadd.f32 %v298, 1.0
  %v315 = vadd.f32 %v299, 1.0
  %v316 = vadd.f32 %v300, 1.0
  %v317 = vadd.f32 %v301, 1.0
  %v318 = vadd.f32 %v302, 1.0
  %v319 = vadd.f32 %v303, 1.0
  %v320 = vmul.f32 %v304, 0.5
  %v321 = vmul.f32 %v305, 0.5
  %v322 = vmul.f32 %v306, 0.5
  %v323 = vmul.f32 %v307, 0.5
  %v324 = vmul.f32 %v308, 0.5
  %v325 = vmul.f32 %v309, 0.5
  %v326 = vmul.f32 %v310, 0.5
  %v327 = vmul.f32 %v311, 0.5
  %v328 = vmul.f32 %v312, 0.5
  %v329 = vmul.f32 %v313, 0.5
  %v330 = vmul.f32 %v314, 0.5
  %v331 = vmul.f32 %v315, 0.5
  %v332 = vmul.f32 %v316, 0.5
  %v333 = vmul.f32 %v317, 0.5
  %v334 = vmul.f32 %v318, 0.5
  %v335 = vmul.f32 %v319, 0.5
  %v336 = vmul.f32 %v110, %v320
  %v337 = vmul.f32 %v139, %v321
  %v338 = vmul.f32 %v168, %v322
  %v339 = vmul.f32 %v197, %v323
  %v340 = vmul.f32 %v113, %v324
  %v341 = vmul.f32 %v142, %v325
  %v342 = vmul.f32 %v171, %v326
  %v343 = vmul.f32 %v200, %v327
  %v344 = vmul.f32 %v116, %v328
  %v345 = vmul.f32 %v145, %v329
  %v346 = vmul.f32 %v174, %v330
  %v347 = vmul.f32 %v203, %v331
  %v348 = vmul.f32 %v119, %v332
  %v349 = vmul.f32 %v148, %v333
  %v350 = vmul.f32 %v177, %v334
  %v351 = vmul.f32 %v206, %v335
  %352 = vst [vmem:[%s3] sm:$0xff] %v336
  %353 = vst [vmem:[%s3 + $0x8] sm:$0xff] %v337
  %354 = vst [vmem:[%s3 + $0x10] sm:$0xff] %v338
  %355 = vst [vmem:[%s3 + $0x18] sm:$0xff] %v339
  %356 = vst [vmem:[%s3 + $0x20] sm:$0xff] %v340
  %357 = vst [vmem:[%s3 + $0x28] sm:$0xff] %v341
  %358 = vst [vmem:[%s3 + $0x30] sm:$0xff] %v342
  %359 = vst [vmem:[%s3 + $0x38] sm:$0xff] %v343
  %360 = vst [vmem:[%s3 + $0x40] sm:$0xff] %v344
  %361 = vst [vmem:[%s3 + $0x48] sm:$0xff] %v345
  %362 = vst [vmem:[%s3 + $0x50] sm:$0xff] %v346
  %363 = vst [vmem:[%s3 + $0x58] sm:$0xff] %v347
  %364 = vst [vmem:[%s3 + $0x60] sm:$0xff] %v348
  %365 = vst [vmem:[%s3 + $0x68] sm:$0xff] %v349
  %366 = vst [vmem:[%s3 + $0x70] sm:$0xff] %v350
  %367 = vst [vmem:[%s3 + $0x78] sm:$0xff] %v351
  // Predicated region
  $region14: #{double_stream_block_forward.37} parent=0 // pred_check
    _
  $region15: #{double_stream_block_forward.37} parent=0 // pred_check_branch
    %369 = sbr.rel (0) target = $region17
  $region16: #{double_stream_block_forward.37} parent=0 // pred_region
    _
  $region17: #{double_stream_block_forward.37} parent=0 // pred_fallthru
    _
  // Predicated region
  $region18: #{double_stream_block_forward.37} parent=0 // pred_check
    _
  $region19: #{double_stream_block_forward.37} parent=0 // pred_check_branch
    %371 = sbr.rel (0) target = $region21
  $region20: #{double_stream_block_forward.37} parent=0 // pred_region
    _
  $region21: #{double_stream_block_forward.37} parent=0 // pred_fallthru
    _

// kernel: double_stream_block_forward.38
$region0: #{double_stream_block_forward.38}
  #allocation0 [shape = 'u32[]', space=smem, size = 0x4, offset = 0x4, fixed_abs, tag = 'smem constant byte address 0x4 - core index']
  #allocation1 [shape = 'u32[72,128]{1,0:T(1,128)}', space=vmem, size = 0x9000, scoped, tag = 'internal scratch']
  %s0 = inlined_call_operand.vmem [shape: f32[32,512], index: 0, kind: input, shape index: {}]
  %s1 = inlined_call_operand.vmem [shape: f32[128,512], index: 1, kind: input, shape index: {}]
  %s2 = inlined_call_operand.vmem [shape: f32[1,128], index: 2, kind: input, shape index: {}]
  %s3 = inlined_call_operand.vmem [shape: f32[32,128], index: 3, kind: output, shape index: {}]
  %s4 = sld [smem:[#allocation0]]
  $region22: #{double_stream_block_forward.38} parent=0
    _
  %s6 = ssub.s32 1, %s4
  %s7 = scalar_select 0, %s6, %s4
  // Predicated region
  $region2: #{double_stream_block_forward.38} parent=0 // pred_check
    _
  $region3: #{double_stream_block_forward.38} parent=0 // pred_check_branch
    %9 = sbr.rel (0) target = $region5
  $region4: #{double_stream_block_forward.38} parent=0 // pred_region
    _
  $region5: #{double_stream_block_forward.38} parent=0 // pred_fallthru
    _
  // Predicated region
  $region6: #{double_stream_block_forward.38} parent=0 // pred_check
    _
  $region7: #{double_stream_block_forward.38} parent=0 // pred_check_branch
    %11 = sbr.rel (0) target = $region9
  $region8: #{double_stream_block_forward.38} parent=0 // pred_region
    _
  $region9: #{double_stream_block_forward.38} parent=0 // pred_fallthru
    _
  // Predicated region
  $region10: #{double_stream_block_forward.38} parent=0 // pred_check
    _
  $region11: #{double_stream_block_forward.38} parent=0 // pred_check_branch
    %13 = sbr.rel (0) target = $region13
  $region12: #{double_stream_block_forward.38} parent=0 // pred_region
    _
  $region13: #{double_stream_block_forward.38} parent=0 // pred_fallthru
    _
  %v14 = vld [vmem:[%s0] sm:$0xff]
  %v15 = vld [vmem:[%s0 + $0x8] sm:$0xff]
  %v16 = vld [vmem:[%s0 + $0x10] sm:$0xff]
  %v17 = vld [vmem:[%s0 + $0x18] sm:$0xff]
  %v18 = vld [vmem:[%s0 + $0x20] sm:$0xff]
  %v19 = vld [vmem:[%s0 + $0x28] sm:$0xff]
  %v20 = vld [vmem:[%s0 + $0x30] sm:$0xff]
  %v21 = vld [vmem:[%s0 + $0x38] sm:$0xff]
  %v22 = vld [vmem:[%s0 + $0x40] sm:$0xff]
  %v23 = vld [vmem:[%s0 + $0x48] sm:$0xff]
  %v24 = vld [vmem:[%s0 + $0x50] sm:$0xff]
  %v25 = vld [vmem:[%s0 + $0x58] sm:$0xff]
  %v26 = vld [vmem:[%s0 + $0x60] sm:$0xff]
  %v27 = vld [vmem:[%s0 + $0x68] sm:$0xff]
  %v28 = vld [vmem:[%s0 + $0x70] sm:$0xff]
  %v29 = vld [vmem:[%s0 + $0x78] sm:$0xff]
  %v30 = vld [vmem:[%s1] sm:$0xff]
  %v31 = vld [vmem:[%s1 + $0x8] sm:$0xff]
  %v32 = vld [vmem:[%s1 + $0x10] sm:$0xff]
  %v33 = vld [vmem:[%s1 + $0x18] sm:$0xff]
  %v34 = vld [vmem:[%s1 + $0x20] sm:$0xff]
  %v35 = vld [vmem:[%s1 + $0x28] sm:$0xff]
  %v36 = vld [vmem:[%s1 + $0x30] sm:$0xff]
  %v37 = vld [vmem:[%s1 + $0x38] sm:$0xff]
  %v38 = vld [vmem:[%s1 + $0x40] sm:$0xff]
  %v39 = vld [vmem:[%s1 + $0x48] sm:$0xff]
  %v40 = vld [vmem:[%s1 + $0x50] sm:$0xff]
  %v41 = vld [vmem:[%s1 + $0x58] sm:$0xff]
  %v42 = vld [vmem:[%s1 + $0x60] sm:$0xff]
  %v43 = vld [vmem:[%s1 + $0x68] sm:$0xff]
  %v44 = vld [vmem:[%s1 + $0x70] sm:$0xff]
  %v45 = vld [vmem:[%s1 + $0x78] sm:$0xff]
  %v46 = vld [vmem:[%s1 + $0x80] sm:$0xff]
  %v47 = vld [vmem:[%s1 + $0x88] sm:$0xff]
  %v48 = vld [vmem:[%s1 + $0x90] sm:$0xff]
  %v49 = vld [vmem:[%s1 + $0x98] sm:$0xff]
  %v50 = vld [vmem:[%s1 + $0xa0] sm:$0xff]
  %v51 = vld [vmem:[%s1 + $0xa8] sm:$0xff]
  %v52 = vld [vmem:[%s1 + $0xb0] sm:$0xff]
  %v53 = vld [vmem:[%s1 + $0xb8] sm:$0xff]
  %v54 = vld [vmem:[%s1 + $0xc0] sm:$0xff]
  %v55 = vld [vmem:[%s1 + $0xc8] sm:$0xff]
  %v56 = vld [vmem:[%s1 + $0xd0] sm:$0xff]
  %v57 = vld [vmem:[%s1 + $0xd8] sm:$0xff]
  %v58 = vld [vmem:[%s1 + $0xe0] sm:$0xff]
  %v59 = vld [vmem:[%s1 + $0xe8] sm:$0xff]
  %v60 = vld [vmem:[%s1 + $0xf0] sm:$0xff]
  %v61 = vld [vmem:[%s1 + $0xf8] sm:$0xff]
  %v62 = vld [vmem:[%s1 + $0x100] sm:$0xff]
  %v63 = vld [vmem:[%s1 + $0x108] sm:$0xff]
  %v64 = vld [vmem:[%s1 + $0x110] sm:$0xff]
  %v65 = vld [vmem:[%s1 + $0x118] sm:$0xff]
  %v66 = vld [vmem:[%s1 + $0x120] sm:$0xff]
  %v67 = vld [vmem:[%s1 + $0x128] sm:$0xff]
  %v68 = vld [vmem:[%s1 + $0x130] sm:$0xff]
  %v69 = vld [vmem:[%s1 + $0x138] sm:$0xff]
  %v70 = vld [vmem:[%s1 + $0x140] sm:$0xff]
  %v71 = vld [vmem:[%s1 + $0x148] sm:$0xff]
  %v72 = vld [vmem:[%s1 + $0x150] sm:$0xff]
  %v73 = vld [vmem:[%s1 + $0x158] sm:$0xff]
  %v74 = vld [vmem:[%s1 + $0x160] sm:$0xff]
  %v75 = vld [vmem:[%s1 + $0x168] sm:$0xff]
  %v76 = vld [vmem:[%s1 + $0x170] sm:$0xff]
  %v77 = vld [vmem:[%s1 + $0x178] sm:$0xff]
  %v78 = vld [vmem:[%s1 + $0x180] sm:$0xff]
  %v79 = vld [vmem:[%s1 + $0x188] sm:$0xff]
  %v80 = vld [vmem:[%s1 + $0x190] sm:$0xff]
  %v81 = vld [vmem:[%s1 + $0x198] sm:$0xff]
  %v82 = vld [vmem:[%s1 + $0x1a0] sm:$0xff]
  %v83 = vld [vmem:[%s1 + $0x1a8] sm:$0xff]
  %v84 = vld [vmem:[%s1 + $0x1b0] sm:$0xff]
  %v85 = vld [vmem:[%s1 + $0x1b8] sm:$0xff]
  %v86 = vld [vmem:[%s1 + $0x1c0] sm:$0xff]
  %v87 = vld [vmem:[%s1 + $0x1c8] sm:$0xff]
  %v88 = vld [vmem:[%s1 + $0x1d0] sm:$0xff]
  %v89 = vld [vmem:[%s1 + $0x1d8] sm:$0xff]
  %v90 = vld [vmem:[%s1 + $0x1e0] sm:$0xff]
  %v91 = vld [vmem:[%s1 + $0x1e8] sm:$0xff]
  %v92 = vld [vmem:[%s1 + $0x1f0] sm:$0xff]
  %v93 = vld [vmem:[%s1 + $0x1f8] sm:$0xff]
  %v94 = vld [vmem:[%s2] sm:$0x1]
  %v96 = vperm.slane %v94, 0
  %98 = vmatpush.xpose.msra.mxu0 %v90
  %99 = vmatpush.xpose.msra.mxu0 %v86
  %100 = vmatpush.xpose.msra.mxu0 %v82
  %101 = vmatpush.xpose.msra.mxu0 %v78
  %102 = vmatpush.xpose.msra.mxu0 %v74
  %103 = vmatpush.xpose.msra.mxu0 %v70
  %104 = vmatpush.xpose.msra.mxu0 %v66
  %105 = vmatpush.xpose.msra.mxu0 %v62
  %106 = vmatpush.xpose.msra.mxu0 %v58
  %107 = vmatpush.xpose.msra.mxu0 %v54
  %108 = vmatpush.xpose.msra.mxu0 %v50
  %109 = vmatpush.xpose.msra.mxu0 %v46
  %110 = vmatpush.xpose.msra.mxu0 %v42
  %111 = vmatpush.xpose.msra.mxu0 %v38
  %112 = vmatpush.xpose.msra.mxu0 %v34
  %113 = vmatpush.xpose.msra.mxu0 %v30
  %114 = vmatmul.f32.gmra.mxu0 %v14
  %v115 = vpop.f32.mrf.mxu0
  %v116 = vadd.f32 %v96, %v115
  %117 = vmatmul.f32.gmra.mxu0 %v18
  %v118 = vpop.f32.mrf.mxu0
  %v119 = vadd.f32 %v96, %v118
  %120 = vmatmul.f32.gmra.mxu0 %v22
  %v121 = vpop.f32.mrf.mxu0
  %v122 = vadd.f32 %v96, %v121
  %123 = vmatmul.f32.gmra.mxu0 %v26
  %v124 = vpop.f32.mrf.mxu0
  %v125 = vadd.f32 %v96, %v124
  %126 = vdwg.mxu0
  %127 = vmatpush.xpose.msra.mxu0 %v91
  %128 = vmatpush.xpose.msra.mxu0 %v87
  %129 = vmatpush.xpose.msra.mxu0 %v83
  %130 = vmatpush.xpose.msra.mxu0 %v79
  %131 = vmatpush.xpose.msra.mxu0 %v75
  %132 = vmatpush.xpose.msra.mxu0 %v71
  %133 = vmatpush.xpose.msra.mxu0 %v67
  %134 = vmatpush.xpose.msra.mxu0 %v63
  %135 = vmatpush.xpose.msra.mxu0 %v59
  %136 = vmatpush.xpose.msra.mxu0 %v55
  %137 = vmatpush.xpose.msra.mxu0 %v51
  %138 = vmatpush.xpose.msra.mxu0 %v47
  %139 = vmatpush.xpose.msra.mxu0 %v43
  %140 = vmatpush.xpose.msra.mxu0 %v39
  %141 = vmatpush.xpose.msra.mxu0 %v35
  %142 = vmatpush.xpose.msra.mxu0 %v31
  %143 = vmatmul.f32.gmra.mxu0 %v15
  %v144 = vpop.f32.mrf.mxu0
  %v145 = vadd.f32 %v116, %v144
  %146 = vmatmul.f32.gmra.mxu0 %v19
  %v147 = vpop.f32.mrf.mxu0
  %v148 = vadd.f32 %v119, %v147
  %149 = vmatmul.f32.gmra.mxu0 %v23
  %v150 = vpop.f32.mrf.mxu0
  %v151 = vadd.f32 %v122, %v150
  %152 = vmatmul.f32.gmra.mxu0 %v27
  %v153 = vpop.f32.mrf.mxu0
  %v154 = vadd.f32 %v125, %v153
  %155 = vdwg.mxu0
  %156 = vmatpush.xpose.msra.mxu0 %v92
  %157 = vmatpush.xpose.msra.mxu0 %v88
  %158 = vmatpush.xpose.msra.mxu0 %v84
  %159 = vmatpush.xpose.msra.mxu0 %v80
  %160 = vmatpush.xpose.msra.mxu0 %v76
  %161 = vmatpush.xpose.msra.mxu0 %v72
  %162 = vmatpush.xpose.msra.mxu0 %v68
  %163 = vmatpush.xpose.msra.mxu0 %v64
  %164 = vmatpush.xpose.msra.mxu0 %v60
  %165 = vmatpush.xpose.msra.mxu0 %v56
  %166 = vmatpush.xpose.msra.mxu0 %v52
  %167 = vmatpush.xpose.msra.mxu0 %v48
  %168 = vmatpush.xpose.msra.mxu0 %v44
  %169 = vmatpush.xpose.msra.mxu0 %v40
  %170 = vmatpush.xpose.msra.mxu0 %v36
  %171 = vmatpush.xpose.msra.mxu0 %v32
  %172 = vmatmul.f32.gmra.mxu0 %v16
  %v173 = vpop.f32.mrf.mxu0
  %v174 = vadd.f32 %v145, %v173
  %175 = vmatmul.f32.gmra.mxu0 %v20
  %v176 = vpop.f32.mrf.mxu0
  %v177 = vadd.f32 %v148, %v176
  %178 = vmatmul.f32.gmra.mxu0 %v24
  %v179 = vpop.f32.mrf.mxu0
  %v180 = vadd.f32 %v151, %v179
  %181 = vmatmul.f32.gmra.mxu0 %v28
  %v182 = vpop.f32.mrf.mxu0
  %v183 = vadd.f32 %v154, %v182
  %184 = vdwg.mxu0
  %185 = vmatpush.xpose.msra.mxu0 %v93
  %186 = vmatpush.xpose.msra.mxu0 %v89
  %187 = vmatpush.xpose.msra.mxu0 %v85
  %188 = vmatpush.xpose.msra.mxu0 %v81
  %189 = vmatpush.xpose.msra.mxu0 %v77
  %190 = vmatpush.xpose.msra.mxu0 %v73
  %191 = vmatpush.xpose.msra.mxu0 %v69
  %192 = vmatpush.xpose.msra.mxu0 %v65
  %193 = vmatpush.xpose.msra.mxu0 %v61
  %194 = vmatpush.xpose.msra.mxu0 %v57
  %195 = vmatpush.xpose.msra.mxu0 %v53
  %196 = vmatpush.xpose.msra.mxu0 %v49
  %197 = vmatpush.xpose.msra.mxu0 %v45
  %198 = vmatpush.xpose.msra.mxu0 %v41
  %199 = vmatpush.xpose.msra.mxu0 %v37
  %200 = vmatpush.xpose.msra.mxu0 %v33
  %201 = vmatmul.f32.gmra.mxu0 %v17
  %v202 = vpop.f32.mrf.mxu0
  %v203 = vadd.f32 %v174, %v202
  %204 = vmatmul.f32.gmra.mxu0 %v21
  %v205 = vpop.f32.mrf.mxu0
  %v206 = vadd.f32 %v177, %v205
  %207 = vmatmul.f32.gmra.mxu0 %v25
  %v208 = vpop.f32.mrf.mxu0
  %v209 = vadd.f32 %v180, %v208
  %210 = vmatmul.f32.gmra.mxu0 %v29
  %v211 = vpop.f32.mrf.mxu0
  %v212 = vadd.f32 %v183, %v211
  %213 = vdwg.mxu0
  %214 = vst [vmem:[%s3] sm:$0xff] %v203
  %215 = vst [vmem:[%s3 + $0x8] sm:$0xff] %v206
  %216 = vst [vmem:[%s3 + $0x10] sm:$0xff] %v209
  %217 = vst [vmem:[%s3 + $0x18] sm:$0xff] %v212
  // Predicated region
  $region14: #{double_stream_block_forward.38} parent=0 // pred_check
    _
  $region15: #{double_stream_block_forward.38} parent=0 // pred_check_branch
    %219 = sbr.rel (0) target = $region17
  $region16: #{double_stream_block_forward.38} parent=0 // pred_region
    _
  $region17: #{double_stream_block_forward.38} parent=0 // pred_fallthru
    _
  // Predicated region
  $region18: #{double_stream_block_forward.38} parent=0 // pred_check
    _
  $region19: #{double_stream_block_forward.38} parent=0 // pred_check_branch
    %221 = sbr.rel (0) target = $region21
  $region20: #{double_stream_block_forward.38} parent=0 // pred_region
    _
  $region21: #{double_stream_block_forward.38} parent=0 // pred_fallthru
    _

</llo_original>
